<compile_context>
chip_gen: v7x
topology: tpu7x:2x2x1
jax: 0.10.0
libtpu: 0.0.40
codegen_flags: <defaults>
</compile_context>

<pallas_src>
import functools

import numpy as np
import jax
import jax.numpy as jnp
from jax import lax
from jax.experimental import pallas as pl
from jax.experimental.pallas import tpu as pltpu


FLAT_FEATURES = 64 * 7 * 7
_VMEM_LIMIT = 64 * 1024 * 1024   # far above any tile plan below; safe on v5e/v6e/v7x


def _round_up(x, m):
    return ((x + m - 1) // m) * m


# ----------------------------------------------------------------------------
# Kernel 1: fused  out = relu?(x @ w + b)
#   bf16 MXU inputs, f32 accumulate/bias/ReLU, grid tiled over M with the
#   weight + bias blocks fully resident in VMEM.
# ----------------------------------------------------------------------------
def _fused_matmul_kernel(x_ref, w_ref, b_ref, o_ref, *, apply_relu):
    acc = jnp.dot(x_ref[...], w_ref[...], preferred_element_type=jnp.float32)
    acc = acc + b_ref[...]                    # (1, N) bias broadcasts over rows
    if apply_relu:
        acc = jnp.maximum(acc, 0.0)
    o_ref[...] = acc.astype(o_ref.dtype)


def fused_matmul(x, w, b, *, apply_relu, out_dtype=jnp.bfloat16, tm_max=512):
    """x: (M, K) bf16, w: (K, N) bf16, b: (1, N) f32 -> (M, N) out_dtype."""
    M, K = x.shape
    K2, N = w.shape
    assert K == K2, (K, K2)

    if M <= tm_max:
        tm, m_pad = M, M                       # single block == full array dims
    else:
        tm = tm_max                            # multiple of 8 -> valid block
        m_pad = _round_up(M, tm)
        if m_pad != M:
            x = jnp.pad(x, ((0, m_pad - M), (0, 0)))

    out = pl.pallas_call(
        functools.partial(_fused_matmul_kernel, apply_relu=apply_relu),
        out_shape=jax.ShapeDtypeStruct((m_pad, N), out_dtype),
        grid=(m_pad // tm,),
        in_specs=[
            pl.BlockSpec((tm, K), lambda i: (i, 0)),   # activations: tiled over M
            pl.BlockSpec((K, N), lambda i: (0, 0)),    # weight: resident
            pl.BlockSpec((1, N), lambda i: (0, 0)),    # bias: resident
        ],
        out_specs=pl.BlockSpec((tm, N), lambda i: (i, 0)),
        compiler_params=pltpu.CompilerParams(
            dimension_semantics=("parallel",),
            vmem_limit_bytes=_VMEM_LIMIT),
        cost_estimate=pl.CostEstimate(
            flops=2 * m_pad * K * N,
            transcendentals=0,
            bytes_accessed=(m_pad * K + K * N) * 2 + 4 * N
            + m_pad * N * jnp.dtype(out_dtype).itemsize),
    )(x, w, b)
    return out[:M] if m_pad != M else out


# ----------------------------------------------------------------------------
# Kernel 2: fused MLP tail  out = relu(x @ wfc + bfc) @ wout + bout
#   Both weights resident in VMEM; output N is pre-padded to 128 lanes.
# ----------------------------------------------------------------------------
def _mlp_tail_kernel(x_ref, wfc_ref, bfc_ref, wout_ref, bout_ref, o_ref):
    h = jnp.dot(x_ref[...], wfc_ref[...], preferred_element_type=jnp.float32)
    h = jnp.maximum(h + bfc_ref[...], 0.0)
    o = jnp.dot(h.astype(wout_ref.dtype), wout_ref[...],
                preferred_element_type=jnp.float32)
    o_ref[...] = (o + bout_ref[...]).astype(o_ref.dtype)


def fused_mlp_tail(x, wfc, bfc, wout, bout, *, tm_max=256):
    """x: (M, 3136) bf16 -> (M, N_pad) f32, N_pad a multiple of 128."""
    M, K = x.shape
    _, H = wfc.shape
    _, N = wout.shape

    if M <= tm_max:
        tm, m_pad = M, M
    else:
        tm = tm_max
        m_pad = _round_up(M, tm)
        if m_pad != M:
            x = jnp.pad(x, ((0, m_pad - M), (0, 0)))

    out = pl.pallas_call(
        _mlp_tail_kernel,
        out_shape=jax.ShapeDtypeStruct((m_pad, N), jnp.float32),
        grid=(m_pad // tm,),
        in_specs=[
            pl.BlockSpec((tm, K), lambda i: (i, 0)),   # flattened conv3 acts
            pl.BlockSpec((K, H), lambda i: (0, 0)),    # fc weight, resident
            pl.BlockSpec((1, H), lambda i: (0, 0)),    # fc bias
            pl.BlockSpec((H, N), lambda i: (0, 0)),    # out weight (padded N)
            pl.BlockSpec((1, N), lambda i: (0, 0)),    # out bias (padded N)
        ],
        out_specs=pl.BlockSpec((tm, N), lambda i: (i, 0)),
        compiler_params=pltpu.CompilerParams(
            dimension_semantics=("parallel",),
            vmem_limit_bytes=_VMEM_LIMIT),
        cost_estimate=pl.CostEstimate(
            flops=2 * m_pad * (K * H + H * N),
            transcendentals=0,
            bytes_accessed=(m_pad * K + K * H + H * N) * 2 + 4 * (H + N)
            + m_pad * N * 4),
    )(x, wfc, bfc, wout, bout)
    return out[:M] if m_pad != M else out


# ----------------------------------------------------------------------------
# Conv2d (valid padding, square stride) = im2col (bf16 glue) + Pallas matmul.
# TODO(synk): patch extraction stays as plain-JAX glue (bf16, fused by jit); an
# in-kernel strided gather would remove the duplicated HBM bytes but needs
# strided VMEM loads that are not worth the lowering risk at these sizes.
# ----------------------------------------------------------------------------
def _im2col_nhwc(x, kh, kw, stride):
    """x: (B, H, W, C) -> patches (B*OH*OW, kh*kw*C), ordered (i, j, c)."""
    B, H, W, C = x.shape
    oh = (H - kh) // stride + 1
    ow = (W - kw) // stride + 1
    cols = []
    for i in range(kh):
        for j in range(kw):
            cols.append(x[:, i:i + stride * oh:stride, j:j + stride * ow:stride, :])
    p = jnp.stack(cols, axis=3)                      # (B, oh, ow, kh*kw, C)
    return p.reshape(B * oh * ow, kh * kw * C), oh, ow


def conv2d_relu(x_nhwc, w_mat, b, stride, kh, kw):
    """w_mat: pre-reshaped (kh*kw*I, O) bf16 weight, b: (1, O) f32."""
    patches, oh, ow = _im2col_nhwc(x_nhwc, kh, kw, stride)
    out = fused_matmul(patches, w_mat, b, apply_relu=True, out_dtype=jnp.bfloat16)
    B = x_nhwc.shape[0]
    return out.reshape(B, oh, ow, w_mat.shape[1])


# ----------------------------------------------------------------------------
# Parameter init (PyTorch layout) + one-time kernel-layout preparation.
# ----------------------------------------------------------------------------
def init_params(key, input_channels, output_size):
    ks = jax.random.split(key, 10)

    def u(k, shape, fan_in):
        bound = 1.0 / np.sqrt(fan_in)
        return jax.random.uniform(k, shape, jnp.float32, -bound, bound)

    p = {}
    p["w1"] = u(ks[0], (32, input_channels, 8, 8), input_channels * 8 * 8)
    p["b1"] = u(ks[1], (32,), input_channels * 8 * 8)
    p["w2"] = u(ks[2], (64, 32, 4, 4), 32 * 4 * 4)
    p["b2"] = u(ks[3], (64,), 32 * 4 * 4)
    p["w3"] = u(ks[4], (64, 64, 3, 3), 64 * 3 * 3)
    p["b3"] = u(ks[5], (64,), 64 * 3 * 3)
    p["wfc"] = u(ks[6], (512, FLAT_FEATURES), FLAT_FEATURES)  # Linear: (out, in)
    p["bfc"] = u(ks[7], (512,), FLAT_FEATURES)
    p["wout"] = u(ks[8], (output_size, 512), 512)
    p["bout"] = u(ks[9], (output_size,), 512)
    return p


def prepare_params(p, output_size):
    """Reshape/transpose/cast all weights ONCE into kernel-ready layout."""
    def conv_w(w):  # OIHW -> (kh*kw*I, O), matching (i, j, c) im2col patch order
        O, I, kh, kw = w.shape
        return jnp.transpose(w, (2, 3, 1, 0)).reshape(kh * kw * I, O).astype(jnp.bfloat16)

    kp = {}
    kp["w1"], kp["b1"] = conv_w(p["w1"]), p["b1"].reshape(1, -1).astype(jnp.float32)
    kp["w2"], kp["b2"] = conv_w(p["w2"]), p["b2"].reshape(1, -1).astype(jnp.float32)
    kp["w3"], kp["b3"] = conv_w(p["w3"]), p["b3"].reshape(1, -1).astype(jnp.float32)

    # Fold PyTorch's NCHW flatten (c*49 + h*7 + w) into the fc weight so the
    # NHWC conv3 output can be flattened directly (no activation transpose).
    wfc = p["wfc"].reshape(512, 64, 7, 7)                   # (out, c, h, w)
    wfc = jnp.transpose(wfc, (2, 3, 1, 0)).reshape(FLAT_FEATURES, 512)  # (h,w,c,out)
    kp["wfc"] = wfc.astype(jnp.bfloat16)
    kp["bfc"] = p["bfc"].reshape(1, -1).astype(jnp.float32)

    # Output layer: transpose once, zero-pad N up to a lane-dense multiple of 128.
    n_pad = _round_up(max(output_size, 1), 128)
    wout = jnp.zeros((512, n_pad), jnp.float32).at[:, :output_size].set(p["wout"].T)
    bout = jnp.zeros((1, n_pad), jnp.float32).at[0, :output_size].set(p["bout"])
    kp["wout"] = wout.astype(jnp.bfloat16)
    kp["bout"] = bout
    return kp


# ----------------------------------------------------------------------------
# Forward pass (Pallas) and pure-JAX f32 reference.
# ----------------------------------------------------------------------------
def simple_cnn_forward(kparams, x_nchw, *, output_size):
    """x_nchw: (B, C, 84, 84) f32 -> (B, output_size) f32."""
    x = jnp.transpose(x_nchw, (0, 2, 3, 1)).astype(jnp.bfloat16)   # NCHW -> NHWC
    x = conv2d_relu(x, kparams["w1"], kparams["b1"], 4, 8, 8)      # (B,20,20,32)
    x = conv2d_relu(x, kparams["w2"], kparams["b2"], 2, 4, 4)      # (B, 9, 9,64)
    x = conv2d_relu(x, kparams["w3"], kparams["b3"], 1, 3, 3)      # (B, 7, 7,64)
    x = x.reshape(-1, FLAT_FEATURES)      # NHWC flatten; NCHW order folded in wfc
    out = fused_mlp_tail(x, kparams["wfc"], kparams["bfc"],
                         kparams["wout"], kparams["bout"])
    return out[:, :output_size]


def simple_cnn_reference(params, x_nchw):
    dn = ("NCHW", "OIHW", "NCHW")

    def conv(x, w, b, s):
        y = lax.conv_general_dilated(x, w, (s, s), "VALID", dimension_numbers=dn)
        return jax.nn.relu(y + b[None, :, None, None])

    x = conv(x_nchw, params["w1"], params["b1"], 4)
    x = conv(x, params["w2"], params["b2"], 2)
    x = conv(x, params["w3"], params["b3"], 1)
    x = x.reshape(-1, FLAT_FEATURES)
    x = jax.nn.relu(x @ params["wfc"].T + params["bfc"])
    return x @ params["wout"].T + params["bout"]


if __name__ == "__main__":
    key = jax.random.PRNGKey(0)
    k_param, k_x = jax.random.split(key)

    batch, input_channels, output_size = 2, 4, 6
    # Spatial size must be 84: the module hard-codes flat_features = 64*7*7.
    x = jax.random.normal(k_x, (batch, input_channels, 84, 84), jnp.float32)

    params = init_params(k_param, input_channels, output_size)
    kparams = prepare_params(params, output_size)

    fwd = jax.jit(functools.partial(simple_cnn_forward, output_size=output_size))
    out = jax.block_until_ready(fwd(kparams, x))
    assert out.shape == (batch, output_size), out.shape

    ref = jax.block_until_ready(simple_cnn_reference(params, x))
    # bf16 MXU inputs / bf16 inter-layer activations with f32 accumulation:
    # compare against the f32 reference with a bf16-appropriate tolerance.
    np.testing.assert_allclose(np.asarray(out), np.asarray(ref),
                               rtol=2e-2, atol=2e-2)

    print("KERNEL_OK")
</pallas_src>

<mosaic_0001>
module attributes {stable_mosaic.version = 11 : i64} {
  func.func @_fused_matmul_kernel(%arg0: i32, %arg1: memref<512x256xbf16, #tpu.memory_space<vmem>>, %arg2: memref<256x32xbf16, #tpu.memory_space<vmem>>, %arg3: memref<1x32xf32, #tpu.memory_space<vmem>>, %arg4: memref<512x32xbf16, #tpu.memory_space<vmem>>) attributes {dimension_semantics = [#tpu.dimension_semantics<parallel>], iteration_bounds = array<i64: 2>, scalar_prefetch = 0 : i64, scratch_operands = 0 : i64, tpu.core_type = #tpu.core_type<tc>, window_params = [{transform_indices = @transform_0, window_bounds = array<i64: 512, 256>}, {pipeline_mode = #tpu.pipeline_mode<synchronous>, transform_indices = @transform_1, window_bounds = array<i64: 256, 32>}, {pipeline_mode = #tpu.pipeline_mode<synchronous>, transform_indices = @transform_2, window_bounds = array<i64: 1, 32>}, {transform_indices = @transform_3, window_bounds = array<i64: 512, 32>}]} {
    %c0 = arith.constant 0 : index
    %c0_0 = arith.constant 0 : index
    %0 = vector.load %arg1[%c0, %c0_0] : memref<512x256xbf16, #tpu.memory_space<vmem>>, vector<512x256xbf16>
    %c0_1 = arith.constant 0 : index
    %c0_2 = arith.constant 0 : index
    %1 = vector.load %arg2[%c0_1, %c0_2] : memref<256x32xbf16, #tpu.memory_space<vmem>>, vector<256x32xbf16>
    %cst = arith.constant dense<0.000000e+00> : vector<512x32xf32>
    %2 = tpu.matmul %0, %1, %cst {dimension_numbers = #tpu.dot_dimension_numbers<[1], [0], [0], [1], [0, 0, 1, 1], [], []>} : vector<512x256xbf16>, vector<256x32xbf16>, vector<512x32xf32> -> vector<512x32xf32>
    %c0_3 = arith.constant 0 : index
    %c0_4 = arith.constant 0 : index
    %3 = vector.load %arg3[%c0_3, %c0_4] : memref<1x32xf32, #tpu.memory_space<vmem>>, vector<1x32xf32>
    %4 = vector.broadcast %3 : vector<1x32xf32> to vector<512x32xf32>
    %5 = arith.addf %2, %4 : vector<512x32xf32>
    %cst_5 = arith.constant 0.000000e+00 : f32
    %6 = vector.broadcast %cst_5 : f32 to vector<512x32xf32>
    %7 = arith.maximumf %5, %6 : vector<512x32xf32>
    %8 = arith.truncf %7 : vector<512x32xf32> to vector<512x32xbf16>
    %c0_6 = arith.constant 0 : index
    %c0_7 = arith.constant 0 : index
    %9 = vector.load %arg4[%c0_6, %c0_7] : memref<512x32xbf16, #tpu.memory_space<vmem>>, vector<512x32xbf16>
    tpu.vector_store %arg4[%c0_6, %c0_7], %8 {strides = array<i32>} : memref<512x32xbf16, #tpu.memory_space<vmem>>, vector<512x32xbf16>,
    return
  }
  func.func @transform_0(%arg0: i32) -> (i32, i32) {
    %c0_i32 = arith.constant 0 : i32
    %c0_i32_0 = arith.constant 0 : i32
    return %arg0, %c0_i32 : i32, i32
  }
  func.func @transform_1(%arg0: i32) -> (i32, i32) {
    %c0_i32 = arith.constant 0 : i32
    %c0_i32_0 = arith.constant 0 : i32
    %c0_i32_1 = arith.constant 0 : i32
    return %c0_i32, %c0_i32_0 : i32, i32
  }
  func.func @transform_2(%arg0: i32) -> (i32, i32) {
    %c0_i32 = arith.constant 0 : i32
    %c0_i32_0 = arith.constant 0 : i32
    %c0_i32_1 = arith.constant 0 : i32
    return %c0_i32, %c0_i32_0 : i32, i32
  }
  func.func @transform_3(%arg0: i32) -> (i32, i32) {
    %c0_i32 = arith.constant 0 : i32
    %c0_i32_0 = arith.constant 0 : i32
    return %arg0, %c0_i32 : i32, i32
  }
}

module attributes {stable_mosaic.version = 11 : i64} {
  func.func @_fused_matmul_kernel(%arg0: i32, %arg1: memref<162x512xbf16, #tpu.memory_space<vmem>>, %arg2: memref<512x64xbf16, #tpu.memory_space<vmem>>, %arg3: memref<1x64xf32, #tpu.memory_space<vmem>>, %arg4: memref<162x64xbf16, #tpu.memory_space<vmem>>) attributes {dimension_semantics = [#tpu.dimension_semantics<parallel>], iteration_bounds = array<i64: 1>, scalar_prefetch = 0 : i64, scratch_operands = 0 : i64, tpu.core_type = #tpu.core_type<tc>, window_params = [{transform_indices = @transform_0, window_bounds = array<i64: 162, 512>}, {pipeline_mode = #tpu.pipeline_mode<synchronous>, transform_indices = @transform_1, window_bounds = array<i64: 512, 64>}, {pipeline_mode = #tpu.pipeline_mode<synchronous>, transform_indices = @transform_2, window_bounds = array<i64: 1, 64>}, {transform_indices = @transform_3, window_bounds = array<i64: 162, 64>}]} {
    %c0 = arith.constant 0 : index
    %c0_0 = arith.constant 0 : index
    %0 = vector.load %arg1[%c0, %c0_0] : memref<162x512xbf16, #tpu.memory_space<vmem>>, vector<162x512xbf16>
    %c0_1 = arith.constant 0 : index
    %c0_2 = arith.constant 0 : index
    %1 = vector.load %arg2[%c0_1, %c0_2] : memref<512x64xbf16, #tpu.memory_space<vmem>>, vector<512x64xbf16>
    %cst = arith.constant dense<0.000000e+00> : vector<162x64xf32>
    %2 = tpu.matmul %0, %1, %cst {dimension_numbers = #tpu.dot_dimension_numbers<[1], [0], [0], [1], [0, 0, 1, 1], [], []>} : vector<162x512xbf16>, vector<512x64xbf16>, vector<162x64xf32> -> vector<162x64xf32>
    %c0_3 = arith.constant 0 : index
    %c0_4 = arith.constant 0 : index
    %3 = vector.load %arg3[%c0_3, %c0_4] : memref<1x64xf32, #tpu.memory_space<vmem>>, vector<1x64xf32>
    %4 = vector.broadcast %3 : vector<1x64xf32> to vector<162x64xf32>
    %5 = arith.addf %2, %4 : vector<162x64xf32>
    %cst_5 = arith.constant 0.000000e+00 : f32
    %6 = vector.broadcast %cst_5 : f32 to vector<162x64xf32>
    %7 = arith.maximumf %5, %6 : vector<162x64xf32>
    %8 = arith.truncf %7 : vector<162x64xf32> to vector<162x64xbf16>
    %c0_6 = arith.constant 0 : index
    %c0_7 = arith.constant 0 : index
    %9 = vector.load %arg4[%c0_6, %c0_7] : memref<162x64xbf16, #tpu.memory_space<vmem>>, vector<162x64xbf16>
    tpu.vector_store %arg4[%c0_6, %c0_7], %8 {strides = array<i32>} : memref<162x64xbf16, #tpu.memory_space<vmem>>, vector<162x64xbf16>,
    return
  }
  func.func @transform_0(%arg0: i32) -> (i32, i32) {
    %c0_i32 = arith.constant 0 : i32
    %c0_i32_0 = arith.constant 0 : i32
    return %arg0, %c0_i32 : i32, i32
  }
  func.func @transform_1(%arg0: i32) -> (i32, i32) {
    %c0_i32 = arith.constant 0 : i32
    %c0_i32_0 = arith.constant 0 : i32
    %c0_i32_1 = arith.constant 0 : i32
    return %c0_i32, %c0_i32_0 : i32, i32
  }
  func.func @transform_2(%arg0: i32) -> (i32, i32) {
    %c0_i32 = arith.constant 0 : i32
    %c0_i32_0 = arith.constant 0 : i32
    %c0_i32_1 = arith.constant 0 : i32
    return %c0_i32, %c0_i32_0 : i32, i32
  }
  func.func @transform_3(%arg0: i32) -> (i32, i32) {
    %c0_i32 = arith.constant 0 : i32
    %c0_i32_0 = arith.constant 0 : i32
    return %arg0, %c0_i32 : i32, i32
  }
}

module attributes {stable_mosaic.version = 11 : i64} {
  func.func @_fused_matmul_kernel(%arg0: i32, %arg1: memref<98x576xbf16, #tpu.memory_space<vmem>>, %arg2: memref<576x64xbf16, #tpu.memory_space<vmem>>, %arg3: memref<1x64xf32, #tpu.memory_space<vmem>>, %arg4: memref<98x64xbf16, #tpu.memory_space<vmem>>) attributes {dimension_semantics = [#tpu.dimension_semantics<parallel>], iteration_bounds = array<i64: 1>, scalar_prefetch = 0 : i64, scratch_operands = 0 : i64, tpu.core_type = #tpu.core_type<tc>, window_params = [{transform_indices = @transform_0, window_bounds = array<i64: 98, 576>}, {pipeline_mode = #tpu.pipeline_mode<synchronous>, transform_indices = @transform_1, window_bounds = array<i64: 576, 64>}, {pipeline_mode = #tpu.pipeline_mode<synchronous>, transform_indices = @transform_2, window_bounds = array<i64: 1, 64>}, {transform_indices = @transform_3, window_bounds = array<i64: 98, 64>}]} {
    %c0 = arith.constant 0 : index
    %c0_0 = arith.constant 0 : index
    %0 = vector.load %arg1[%c0, %c0_0] : memref<98x576xbf16, #tpu.memory_space<vmem>>, vector<98x576xbf16>
    %c0_1 = arith.constant 0 : index
    %c0_2 = arith.constant 0 : index
    %1 = vector.load %arg2[%c0_1, %c0_2] : memref<576x64xbf16, #tpu.memory_space<vmem>>, vector<576x64xbf16>
    %cst = arith.constant dense<0.000000e+00> : vector<98x64xf32>
    %2 = tpu.matmul %0, %1, %cst {dimension_numbers = #tpu.dot_dimension_numbers<[1], [0], [0], [1], [0, 0, 1, 1], [], []>} : vector<98x576xbf16>, vector<576x64xbf16>, vector<98x64xf32> -> vector<98x64xf32>
    %c0_3 = arith.constant 0 : index
    %c0_4 = arith.constant 0 : index
    %3 = vector.load %arg3[%c0_3, %c0_4] : memref<1x64xf32, #tpu.memory_space<vmem>>, vector<1x64xf32>
    %4 = vector.broadcast %3 : vector<1x64xf32> to vector<98x64xf32>
    %5 = arith.addf %2, %4 : vector<98x64xf32>
    %cst_5 = arith.constant 0.000000e+00 : f32
    %6 = vector.broadcast %cst_5 : f32 to vector<98x64xf32>
    %7 = arith.maximumf %5, %6 : vector<98x64xf32>
    %8 = arith.truncf %7 : vector<98x64xf32> to vector<98x64xbf16>
    %c0_6 = arith.constant 0 : index
    %c0_7 = arith.constant 0 : index
    %9 = vector.load %arg4[%c0_6, %c0_7] : memref<98x64xbf16, #tpu.memory_space<vmem>>, vector<98x64xbf16>
    tpu.vector_store %arg4[%c0_6, %c0_7], %8 {strides = array<i32>} : memref<98x64xbf16, #tpu.memory_space<vmem>>, vector<98x64xbf16>,
    return
  }
  func.func @transform_0(%arg0: i32) -> (i32, i32) {
    %c0_i32 = arith.constant 0 : i32
    %c0_i32_0 = arith.constant 0 : i32
    return %arg0, %c0_i32 : i32, i32
  }
  func.func @transform_1(%arg0: i32) -> (i32, i32) {
    %c0_i32 = arith.constant 0 : i32
    %c0_i32_0 = arith.constant 0 : i32
    %c0_i32_1 = arith.constant 0 : i32
    return %c0_i32, %c0_i32_0 : i32, i32
  }
  func.func @transform_2(%arg0: i32) -> (i32, i32) {
    %c0_i32 = arith.constant 0 : i32
    %c0_i32_0 = arith.constant 0 : i32
    %c0_i32_1 = arith.constant 0 : i32
    return %c0_i32, %c0_i32_0 : i32, i32
  }
  func.func @transform_3(%arg0: i32) -> (i32, i32) {
    %c0_i32 = arith.constant 0 : i32
    %c0_i32_0 = arith.constant 0 : i32
    return %arg0, %c0_i32 : i32, i32
  }
}

module attributes {stable_mosaic.version = 11 : i64} {
  func.func @_mlp_tail_kernel(%arg0: i32, %arg1: memref<2x3136xbf16, #tpu.memory_space<vmem>>, %arg2: memref<3136x512xbf16, #tpu.memory_space<vmem>>, %arg3: memref<1x512xf32, #tpu.memory_space<vmem>>, %arg4: memref<512x128xbf16, #tpu.memory_space<vmem>>, %arg5: memref<1x128xf32, #tpu.memory_space<vmem>>, %arg6: memref<2x128xf32, #tpu.memory_space<vmem>>) attributes {dimension_semantics = [#tpu.dimension_semantics<parallel>], iteration_bounds = array<i64: 1>, scalar_prefetch = 0 : i64, scratch_operands = 0 : i64, tpu.core_type = #tpu.core_type<tc>, window_params = [{transform_indices = @transform_0, window_bounds = array<i64: 2, 3136>}, {pipeline_mode = #tpu.pipeline_mode<synchronous>, transform_indices = @transform_1, window_bounds = array<i64: 3136, 512>}, {pipeline_mode = #tpu.pipeline_mode<synchronous>, transform_indices = @transform_2, window_bounds = array<i64: 1, 512>}, {pipeline_mode = #tpu.pipeline_mode<synchronous>, transform_indices = @transform_3, window_bounds = array<i64: 512, 128>}, {pipeline_mode = #tpu.pipeline_mode<synchronous>, transform_indices = @transform_4, window_bounds = array<i64: 1, 128>}, {transform_indices = @transform_5, window_bounds = array<i64: 2, 128>}]} {
    %c0 = arith.constant 0 : index
    %c0_0 = arith.constant 0 : index
    %0 = vector.load %arg1[%c0, %c0_0] : memref<2x3136xbf16, #tpu.memory_space<vmem>>, vector<2x3136xbf16>
    %c0_1 = arith.constant 0 : index
    %c0_2 = arith.constant 0 : index
    %1 = vector.load %arg2[%c0_1, %c0_2] : memref<3136x512xbf16, #tpu.memory_space<vmem>>, vector<3136x512xbf16>
    %cst = arith.constant dense<0.000000e+00> : vector<2x512xf32>
    %2 = tpu.matmul %0, %1, %cst {dimension_numbers = #tpu.dot_dimension_numbers<[1], [0], [0], [1], [0, 0, 1, 1], [], []>} : vector<2x3136xbf16>, vector<3136x512xbf16>, vector<2x512xf32> -> vector<2x512xf32>
    %c0_3 = arith.constant 0 : index
    %c0_4 = arith.constant 0 : index
    %3 = vector.load %arg3[%c0_3, %c0_4] : memref<1x512xf32, #tpu.memory_space<vmem>>, vector<1x512xf32>
    %4 = vector.broadcast %3 : vector<1x512xf32> to vector<2x512xf32>
    %5 = arith.addf %2, %4 : vector<2x512xf32>
    %cst_5 = arith.constant 0.000000e+00 : f32
    %6 = vector.broadcast %cst_5 : f32 to vector<2x512xf32>
    %7 = arith.maximumf %5, %6 : vector<2x512xf32>
    %8 = arith.truncf %7 : vector<2x512xf32> to vector<2x512xbf16>
    %c0_6 = arith.constant 0 : index
    %c0_7 = arith.constant 0 : index
    %9 = vector.load %arg4[%c0_6, %c0_7] : memref<512x128xbf16, #tpu.memory_space<vmem>>, vector<512x128xbf16>
    %cst_8 = arith.constant dense<0.000000e+00> : vector<2x128xf32>
    %10 = tpu.matmul %8, %9, %cst_8 {dimension_numbers = #tpu.dot_dimension_numbers<[1], [0], [0], [1], [0, 0, 1, 1], [], []>} : vector<2x512xbf16>, vector<512x128xbf16>, vector<2x128xf32> -> vector<2x128xf32>
    %c0_9 = arith.constant 0 : index
    %c0_10 = arith.constant 0 : index
    %11 = vector.load %arg5[%c0_9, %c0_10] : memref<1x128xf32, #tpu.memory_space<vmem>>, vector<1x128xf32>
    %12 = vector.broadcast %11 : vector<1x128xf32> to vector<2x128xf32>
    %13 = arith.addf %10, %12 : vector<2x128xf32>
    %c0_11 = arith.constant 0 : index
    %c0_12 = arith.constant 0 : index
    %14 = vector.load %arg6[%c0_11, %c0_12] : memref<2x128xf32, #tpu.memory_space<vmem>>, vector<2x128xf32>
    tpu.vector_store %arg6[%c0_11, %c0_12], %13 {strides = array<i32>} : memref<2x128xf32, #tpu.memory_space<vmem>>, vector<2x128xf32>,
    return
  }
  func.func @transform_0(%arg0: i32) -> (i32, i32) {
    %c0_i32 = arith.constant 0 : i32
    %c0_i32_0 = arith.constant 0 : i32
    return %arg0, %c0_i32 : i32, i32
  }
  func.func @transform_1(%arg0: i32) -> (i32, i32) {
    %c0_i32 = arith.constant 0 : i32
    %c0_i32_0 = arith.constant 0 : i32
    %c0_i32_1 = arith.constant 0 : i32
    return %c0_i32, %c0_i32_0 : i32, i32
  }
  func.func @transform_2(%arg0: i32) -> (i32, i32) {
    %c0_i32 = arith.constant 0 : i32
    %c0_i32_0 = arith.constant 0 : i32
    %c0_i32_1 = arith.constant 0 : i32
    return %c0_i32, %c0_i32_0 : i32, i32
  }
  func.func @transform_3(%arg0: i32) -> (i32, i32) {
    %c0_i32 = arith.constant 0 : i32
    %c0_i32_0 = arith.constant 0 : i32
    %c0_i32_1 = arith.constant 0 : i32
    return %c0_i32, %c0_i32_0 : i32, i32
  }
  func.func @transform_4(%arg0: i32) -> (i32, i32) {
    %c0_i32 = arith.constant 0 : i32
    %c0_i32_0 = arith.constant 0 : i32
    %c0_i32_1 = arith.constant 0 : i32
    return %c0_i32, %c0_i32_0 : i32, i32
  }
  func.func @transform_5(%arg0: i32) -> (i32, i32) {
    %c0_i32 = arith.constant 0 : i32
    %c0_i32_0 = arith.constant 0 : i32
    return %arg0, %c0_i32 : i32, i32
  }
}

</mosaic_0001>

<llo_original>
// kernel: simple_cnn_forward.4
$region0: #{simple_cnn_forward.4}
  #allocation0 [shape = 'u32[]', space=smem, size = 0x4, offset = 0x4, fixed_abs, tag = 'smem constant byte address 0x4 - core index']
  #allocation1 [shape = 'u32[144,128]{1,0:T(1,128)}', space=vmem, size = 0x12000, scoped, tag = 'internal scratch']
  %s0 = inlined_call_operand.hbm [shape: bf16[1024,256], index: 0, kind: input, shape index: {}]
  %s1 = inlined_call_operand.hbm [shape: bf16[256,32], index: 1, kind: input, shape index: {}]
  %s2 = inlined_call_operand.hbm [shape: f32[1,32], index: 2, kind: input, shape index: {}]
  %s3 = inlined_call_operand.hbm [shape: bf16[1024,32], index: 3, kind: output, shape index: {}]
  %s4 = sld [smem:[#allocation0]]
  $region57: #{simple_cnn_forward.4} parent=0
    _
  %s6 = ssub.s32 1, %s4
  %s7 = scalar_select 0, %s6, %s4
  $region1: #{simple_cnn_forward.4} parent=0
    #allocation2 [shape = 'u8[524288]{0}', space=vmem, size = 0x80000, scoped, tag = 'input window, operand 0']
    #allocation3 [shape = 's32[2]{0}', space=sflag, size = 0x8, scoped, tag = 'scoped memory for simple_cnn_forward.4']
    #allocation4 [shape = 's32[2]{0}', space=sflag, size = 0x8, scoped, tag = 'scoped memory for simple_cnn_forward.4']
    #allocation5 [shape = 'u8[65536]{0}', space=vmem, size = 0x10000, scoped, tag = 'input window, operand 1, single buffered']
    #allocation6 [shape = 's32[1]{0}', space=sflag, size = 0x4, scoped, tag = 'scoped memory for simple_cnn_forward.4']
    #allocation7 [shape = 'u8[512]{0}', space=vmem, size = 0x400, scoped, tag = 'input window, operand 2, single buffered']
    #allocation8 [shape = 'u8[262144]{0}', space=vmem, size = 0x40000, scoped, tag = 'output window, operand 0']
    %8 = vsyncpa [#allocation3], 0
    %s9 = scalar_lea.sflag [#allocation3], 1
    %10 = vsyncpa %s9, 0
    %11 = vsyncpa [#allocation6], 0
    %12 = vsyncpa [#allocation4], 0
    %s13 = scalar_lea.sflag [#allocation4], 1
    %14 = vsyncpa %s13, 0
    loop: start=0, step=1, limit=4
    $region2: #{simple_cnn_forward.4} parent=1 // loop_pre_header
      _
    $region3: #{simple_cnn_forward.4} parent=1 // loop_header
      %s16 = sphi 0, %s20
      %p17 = scmp.ge.s32.totalorder %s16, 4
      %s26 = sphi 0, %s28
      %s29 = sphi 0, %s26
      %s30 = sphi 0, %s29
      %s46 = sphi 0, %s30
      %s50 = sphi 0, %s50
      %s52 = sphi 0, %s50
      %s53 = sphi 0, %s52
      %s67 = sphi 0, %s53
      %s71 = sphi 0, %s71
      %s73 = sphi 0, %s71
      %s74 = sphi 0, %s73
      %s88 = sphi 0, %s74
      %s94 = sphi 0, %s96
      %s97 = sphi 0, %s94
      %s98 = sphi 0, %s97
      %s114 = sphi 0, %s98
    $region4: #{simple_cnn_forward.4} parent=1 // loop_header_branch
      %19 = sbr.rel (%p17) target = $region8
    $region5: #{simple_cnn_forward.4} parent=1 // loop_body
      %s21 = ssub.s32 %s16, 1
      %s22 = ssub.s32 %s16, 2
      %s23 = sadd.s32 %s16, 1
      %s24 = ssub.s32 %s16, %s23
      %p25 = scmp.eq.s32.totalorder %s24, 0
      %s27 = sadd.s32 %s26, 1
      %s28 = scalar_select %p25, %s26, %s27
      %p31 = pneg %p25
      %p32 = scmp.eq.s32.totalorder %s16, 1
      %p33 = por %p31, %p32
      %p34 = scmp.ne.s32.totalorder %s26, %s29
      %p35 = scmp.eq.s32.totalorder %s16, 0
      %p36 = por %p34, %p35
      %p37 = scmp.ne.s32.totalorder %s26, %s29
      %p38 = scmp.eq.s32.totalorder %s21, 1
      %p39 = por %p37, %p38
      %p40 = scmp.ne.s32.totalorder %s29, %s30
      %p41 = scmp.eq.s32.totalorder %s21, 0
      %p42 = por %p40, %p41
      %p43 = scmp.ne.s32.totalorder %s29, %s30
      %p44 = scmp.eq.s32.totalorder %s22, 1
      %p45 = por %p43, %p44
      %p47 = scmp.ne.s32.totalorder %s30, %s46
      %p48 = scmp.eq.s32.totalorder %s22, 0
      %p49 = por %p47, %p48
      %s51 = sadd.s32 %s50, 1
      %p54 = scmp.eq.s32.totalorder %s16, 1
      %p55 = scmp.ne.s32.totalorder %s50, %s52
      %p56 = scmp.eq.s32.totalorder %s16, 0
      %p57 = por %p55, %p56
      %p58 = scmp.ne.s32.totalorder %s50, %s52
      %p59 = scmp.eq.s32.totalorder %s21, 1
      %p60 = por %p58, %p59
      %p61 = scmp.ne.s32.totalorder %s52, %s53
      %p62 = scmp.eq.s32.totalorder %s21, 0
      %p63 = por %p61, %p62
      %p64 = scmp.ne.s32.totalorder %s52, %s53
      %p65 = scmp.eq.s32.totalorder %s22, 1
      %p66 = por %p64, %p65
      %p68 = scmp.ne.s32.totalorder %s53, %s67
      %p69 = scmp.eq.s32.totalorder %s22, 0
      %p70 = por %p68, %p69
      %s72 = sadd.s32 %s71, 1
      %p75 = scmp.eq.s32.totalorder %s16, 1
      %p76 = scmp.ne.s32.totalorder %s71, %s73
      %p77 = scmp.eq.s32.totalorder %s16, 0
      %p78 = por %p76, %p77
      %p79 = scmp.ne.s32.totalorder %s71, %s73
      %p80 = scmp.eq.s32.totalorder %s21, 1
      %p81 = por %p79, %p80
      %p82 = scmp.ne.s32.totalorder %s73, %s74
      %p83 = scmp.eq.s32.totalorder %s21, 0
      %p84 = por %p82, %p83
      %p85 = scmp.ne.s32.totalorder %s73, %s74
      %p86 = scmp.eq.s32.totalorder %s22, 1
      %p87 = por %p85, %p86
      %p89 = scmp.ne.s32.totalorder %s74, %s88
      %p90 = scmp.eq.s32.totalorder %s22, 0
      %p91 = por %p89, %p90
      %s92 = ssub.s32 %s16, %s23
      %p93 = scmp.eq.s32.totalorder %s92, 0
      %s95 = sadd.s32 %s94, 1
      %s96 = scalar_select %p93, %s94, %s95
      %p99 = pneg %p93
      %p100 = scmp.eq.s32.totalorder %s16, 1
      %p101 = por %p99, %p100
      %p102 = scmp.ne.s32.totalorder %s94, %s97
      %p103 = scmp.eq.s32.totalorder %s16, 0
      %p104 = por %p102, %p103
      %p105 = scmp.ne.s32.totalorder %s94, %s97
      %p106 = scmp.eq.s32.totalorder %s21, 1
      %p107 = por %p105, %p106
      %p108 = scmp.ne.s32.totalorder %s97, %s98
      %p109 = scmp.eq.s32.totalorder %s21, 0
      %p110 = por %p108, %p109
      %p111 = scmp.ne.s32.totalorder %s97, %s98
      %p112 = scmp.eq.s32.totalorder %s22, 1
      %p113 = por %p111, %p112
      %p115 = scmp.ne.s32.totalorder %s98, %s114
      %p116 = scmp.eq.s32.totalorder %s22, 0
      %p117 = por %p115, %p116
      %p118 = scmp.le.s32.totalorder 1, %s16
      %p119 = scmp.lt.s32.totalorder %s16, 3
      %p120 = pnand %p118, %p119
      %p121 = pneg %p120
      // Predicated region
      $region9: #{simple_cnn_forward.4} parent=5 // pred_check
        _
      $region10: #{simple_cnn_forward.4} parent=5 // pred_check_branch
        %123 = sbr.rel (%p120) target = $region12
      $region11: #{simple_cnn_forward.4} parent=5 // pred_region
        %s124 = ssub.s32 %s16, 1
        // Predicated region
        $region13: #{simple_cnn_forward.4} parent=11 // pred_check
          %p125 = pneg %p63
        $region14: #{simple_cnn_forward.4} parent=11 // pred_check_branch
          %127 = sbr.rel (%p125) target = $region16
        $region15: #{simple_cnn_forward.4} parent=11 // pred_region
          %s129 = ssub.s32 2048, 2048
          %130 = vsyncadd [#allocation6], %s129
          %s131 = sshll.u32 [#allocation5], 4
          %s132 = int_to_ptr.vmem [resolvable:$true] %s131
          %137 = dma.hbm_to_vmem [thread:$0]  %s1, 2048, %s132, [#allocation6], 64, 64, 4
        $region16: #{simple_cnn_forward.4} parent=11 // pred_fallthru
          _
        // Predicated region
        $region17: #{simple_cnn_forward.4} parent=11 // pred_check
          %p138 = pneg %p84
        $region18: #{simple_cnn_forward.4} parent=11 // pred_check_branch
          %140 = sbr.rel (%p138) target = $region20
        $region19: #{simple_cnn_forward.4} parent=11 // pred_region
          %s142 = ssub.s32 16, 16
          %143 = vsyncadd [#allocation6], %s142
          %s145 = sshll.u32 [#allocation7], 4
          %s146 = int_to_ptr.vmem [resolvable:$true] %s145
          %148 = dma.hbm_to_vmem [thread:$0]  %s2, 16, %s146, [#allocation6]
        $region20: #{simple_cnn_forward.4} parent=11 // pred_fallthru
          _
      $region12: #{simple_cnn_forward.4} parent=5 // pred_fallthru
        _
      %p149 = scmp.lt.s32.totalorder %s16, 2
      // Predicated region
      $region21: #{simple_cnn_forward.4} parent=5 // pred_check
        %p150 = pneg %p149
      $region22: #{simple_cnn_forward.4} parent=5 // pred_check_branch
        %152 = sbr.rel (%p150) target = $region24
      $region23: #{simple_cnn_forward.4} parent=5 // pred_region
        // Predicated region
        $region25: #{simple_cnn_forward.4} parent=23 // pred_check
          %p153 = pneg %p36
        $region26: #{simple_cnn_forward.4} parent=23 // pred_check_branch
          %155 = sbr.rel (%p153) target = $region28
        $region27: #{simple_cnn_forward.4} parent=23 // pred_region
          %s156 = sand.u32 %s26, 1
          %s157 = scalar_lea.sflag [#allocation3], %s156
          %s158 = sand.u32 %s26, 1
          %s159 = smul.addr %s158, 512
          %s160 = scalar_lea.vmem [#allocation2], %s159
          %s161 = smul.u32 64, %s16
          %s163 = ssub.s32 8192, 8192
          %164 = vsyncadd %s157, %s163
          %s165 = smul.addr %s161, 2
          %s166 = smul.addr %s165, 64
          %s167 = scalar_lea.hbm %s0, %s166
          %s168 = sshll.u32 %s160, 4
          %s169 = int_to_ptr.vmem [resolvable:$true] %s168
          %174 = dma.hbm_to_vmem [thread:$0]  %s167, 8192, %s169, %s157, 128, 128, 8
        $region28: #{simple_cnn_forward.4} parent=23 // pred_fallthru
          _
      $region24: #{simple_cnn_forward.4} parent=5 // pred_fallthru
        _
      %p175 = scmp.le.s32.totalorder 1, %s16
      %p176 = scmp.lt.s32.totalorder %s16, 3
      %p177 = pnand %p175, %p176
      %p178 = pneg %p177
      // Predicated region
      $region29: #{simple_cnn_forward.4} parent=5 // pred_check
        _
      $region30: #{simple_cnn_forward.4} parent=5 // pred_check_branch
        %180 = sbr.rel (%p177) target = $region32
      $region31: #{simple_cnn_forward.4} parent=5 // pred_region
        %s181 = ssub.s32 %s16, 1
        %s182 = sand.u32 %s29, 1
        %s183 = scalar_lea.sflag [#allocation3], %s182
        %s184 = sand.u32 %s29, 1
        %s185 = smul.addr %s184, 512
        %s186 = scalar_lea.vmem [#allocation2], %s185
        // Predicated region
        $region33: #{simple_cnn_forward.4} parent=31 // pred_check
          %p187 = pneg %p42
        $region34: #{simple_cnn_forward.4} parent=31 // pred_check_branch
          %189 = sbr.rel (%p187) target = $region36
        $region35: #{simple_cnn_forward.4} parent=31 // pred_region
          %190 = dma.done %s183, 8192
        $region36: #{simple_cnn_forward.4} parent=31 // pred_fallthru
          _
        // Predicated region
        $region37: #{simple_cnn_forward.4} parent=31 // pred_check
          %p191 = pneg %p63
        $region38: #{simple_cnn_forward.4} parent=31 // pred_check_branch
          %193 = sbr.rel (%p191) target = $region40
        $region39: #{simple_cnn_forward.4} parent=31 // pred_region
          %194 = dma.done [#allocation6], 2048
        $region40: #{simple_cnn_forward.4} parent=31 // pred_fallthru
          _
        // Predicated region
        $region41: #{simple_cnn_forward.4} parent=31 // pred_check
          %p195 = pneg %p84
        $region42: #{simple_cnn_forward.4} parent=31 // pred_check_branch
          %197 = sbr.rel (%p195) target = $region44
        $region43: #{simple_cnn_forward.4} parent=31 // pred_region
          %198 = dma.done [#allocation6], 16
        $region44: #{simple_cnn_forward.4} parent=31 // pred_fallthru
          _
        %s199 = sand.u32 %s29, 1
        %s200 = scalar_lea.sflag [#allocation3], %s199
        %s201 = sand.u32 %s29, 1
        %s202 = smul.addr %s201, 512
        %s203 = scalar_lea.vmem [#allocation2], %s202
        %p204 = pneg %p42
        %p205 = pneg %p39
        %p206 = pneg %p63
        %p207 = pneg %p60
        %p208 = pneg %p84
        %p209 = pneg %p81
        %p210 = pneg %p110
        %p211 = pneg %p107
        %s212 = sand.u32 %s97, 1
        %s213 = scalar_lea.sflag [#allocation4], %s212
        %s214 = sand.u32 %s97, 1
        %s215 = smul.addr %s214, 256
        %s216 = scalar_lea.vmem [#allocation8], %s215
        %s217 = smul.u32 64, %s21
        %s218 = smul.u32 64, %s21
        %v220 = vld [vmem:[%s186] sm:$0xff]
        %v221 = vld [vmem:[%s186 + $0x8] sm:$0xff]
        %v222 = vld [vmem:[%s186 + $0x10] sm:$0xff]
        %v223 = vld [vmem:[%s186 + $0x18] sm:$0xff]
        %v224 = vld [vmem:[%s186 + $0x20] sm:$0xff]
        %v225 = vld [vmem:[%s186 + $0x28] sm:$0xff]
        %v226 = vld [vmem:[%s186 + $0x30] sm:$0xff]
        %v227 = vld [vmem:[%s186 + $0x38] sm:$0xff]
        %v228 = vld [vmem:[%s186 + $0x40] sm:$0xff]
        %v229 = vld [vmem:[%s186 + $0x48] sm:$0xff]
        %v230 = vld [vmem:[%s186 + $0x50] sm:$0xff]
        %v231 = vld [vmem:[%s186 + $0x58] sm:$0xff]
        %v232 = vld [vmem:[%s186 + $0x60] sm:$0xff]
        %v233 = vld [vmem:[%s186 + $0x68] sm:$0xff]
        %v234 = vld [vmem:[%s186 + $0x70] sm:$0xff]
        %v235 = vld [vmem:[%s186 + $0x78] sm:$0xff]
        %v236 = vld [vmem:[%s186 + $0x80] sm:$0xff]
        %v237 = vld [vmem:[%s186 + $0x88] sm:$0xff]
        %v238 = vld [vmem:[%s186 + $0x90] sm:$0xff]
        %v239 = vld [vmem:[%s186 + $0x98] sm:$0xff]
        %v240 = vld [vmem:[%s186 + $0xa0] sm:$0xff]
        %v241 = vld [vmem:[%s186 + $0xa8] sm:$0xff]
        %v242 = vld [vmem:[%s186 + $0xb0] sm:$0xff]
        %v243 = vld [vmem:[%s186 + $0xb8] sm:$0xff]
        %v244 = vld [vmem:[%s186 + $0xc0] sm:$0xff]
        %v245 = vld [vmem:[%s186 + $0xc8] sm:$0xff]
        %v246 = vld [vmem:[%s186 + $0xd0] sm:$0xff]
        %v247 = vld [vmem:[%s186 + $0xd8] sm:$0xff]
        %v248 = vld [vmem:[%s186 + $0xe0] sm:$0xff]
        %v249 = vld [vmem:[%s186 + $0xe8] sm:$0xff]
        %v250 = vld [vmem:[%s186 + $0xf0] sm:$0xff]
        %v251 = vld [vmem:[%s186 + $0xf8] sm:$0xff]
        %v252 = vld [vmem:[%s186 + $0x100] sm:$0xff]
        %v253 = vld [vmem:[%s186 + $0x108] sm:$0xff]
        %v254 = vld [vmem:[%s186 + $0x110] sm:$0xff]
        %v255 = vld [vmem:[%s186 + $0x118] sm:$0xff]
        %v256 = vld [vmem:[%s186 + $0x120] sm:$0xff]
        %v257 = vld [vmem:[%s186 + $0x128] sm:$0xff]
        %v258 = vld [vmem:[%s186 + $0x130] sm:$0xff]
        %v259 = vld [vmem:[%s186 + $0x138] sm:$0xff]
        %v260 = vld [vmem:[%s186 + $0x140] sm:$0xff]
        %v261 = vld [vmem:[%s186 + $0x148] sm:$0xff]
        %v262 = vld [vmem:[%s186 + $0x150] sm:$0xff]
        %v263 = vld [vmem:[%s186 + $0x158] sm:$0xff]
        %v264 = vld [vmem:[%s186 + $0x160] sm:$0xff]
        %v265 = vld [vmem:[%s186 + $0x168] sm:$0xff]
        %v266 = vld [vmem:[%s186 + $0x170] sm:$0xff]
        %v267 = vld [vmem:[%s186 + $0x178] sm:$0xff]
        %v268 = vld [vmem:[%s186 + $0x180] sm:$0xff]
        %v269 = vld [vmem:[%s186 + $0x188] sm:$0xff]
        %v270 = vld [vmem:[%s186 + $0x190] sm:$0xff]
        %v271 = vld [vmem:[%s186 + $0x198] sm:$0xff]
        %v272 = vld [vmem:[%s186 + $0x1a0] sm:$0xff]
        %v273 = vld [vmem:[%s186 + $0x1a8] sm:$0xff]
        %v274 = vld [vmem:[%s186 + $0x1b0] sm:$0xff]
        %v275 = vld [vmem:[%s186 + $0x1b8] sm:$0xff]
        %v276 = vld [vmem:[%s186 + $0x1c0] sm:$0xff]
        %v277 = vld [vmem:[%s186 + $0x1c8] sm:$0xff]
        %v278 = vld [vmem:[%s186 + $0x1d0] sm:$0xff]
        %v279 = vld [vmem:[%s186 + $0x1d8] sm:$0xff]
        %v280 = vld [vmem:[%s186 + $0x1e0] sm:$0xff]
        %v281 = vld [vmem:[%s186 + $0x1e8] sm:$0xff]
        %v282 = vld [vmem:[%s186 + $0x1f0] sm:$0xff]
        %v283 = vld [vmem:[%s186 + $0x1f8] sm:$0xff]
        %v284 = vld [vmem:[#allocation5] sm:$0xf]
        %v285 = vld [vmem:[#allocation5 + $0x4] sm:$0xf]
        %v286 = vld [vmem:[#allocation5 + $0x8] sm:$0xf]
        %v287 = vld [vmem:[#allocation5 + $0xc] sm:$0xf]
        %v288 = vld [vmem:[#allocation5 + $0x10] sm:$0xf]
        %v289 = vld [vmem:[#allocation5 + $0x14] sm:$0xf]
        %v290 = vld [vmem:[#allocation5 + $0x18] sm:$0xf]
        %v291 = vld [vmem:[#allocation5 + $0x1c] sm:$0xf]
        %v292 = vld [vmem:[#allocation5 + $0x20] sm:$0xf]
        %v293 = vld [vmem:[#allocation5 + $0x24] sm:$0xf]
        %v294 = vld [vmem:[#allocation5 + $0x28] sm:$0xf]
        %v295 = vld [vmem:[#allocation5 + $0x2c] sm:$0xf]
        %v296 = vld [vmem:[#allocation5 + $0x30] sm:$0xf]
        %v297 = vld [vmem:[#allocation5 + $0x34] sm:$0xf]
        %v298 = vld [vmem:[#allocation5 + $0x38] sm:$0xf]
        %v299 = vld [vmem:[#allocation5 + $0x3c] sm:$0xf]
        %v300 = vld [vmem:[#allocation5 + $0x40] sm:$0xf]
        %v301 = vld [vmem:[#allocation5 + $0x44] sm:$0xf]
        %v302 = vld [vmem:[#allocation5 + $0x48] sm:$0xf]
        %v303 = vld [vmem:[#allocation5 + $0x4c] sm:$0xf]
        %v304 = vld [vmem:[#allocation5 + $0x50] sm:$0xf]
        %v305 = vld [vmem:[#allocation5 + $0x54] sm:$0xf]
        %v306 = vld [vmem:[#allocation5 + $0x58] sm:$0xf]
        %v307 = vld [vmem:[#allocation5 + $0x5c] sm:$0xf]
        %v308 = vld [vmem:[#allocation5 + $0x60] sm:$0xf]
        %v309 = vld [vmem:[#allocation5 + $0x64] sm:$0xf]
        %v310 = vld [vmem:[#allocation5 + $0x68] sm:$0xf]
        %v311 = vld [vmem:[#allocation5 + $0x6c] sm:$0xf]
        %v312 = vld [vmem:[#allocation5 + $0x70] sm:$0xf]
        %v313 = vld [vmem:[#allocation5 + $0x74] sm:$0xf]
        %v314 = vld [vmem:[#allocation5 + $0x78] sm:$0xf]
        %v315 = vld [vmem:[#allocation5 + $0x7c] sm:$0xf]
        %v316 = vld [vmem:[#allocation7] sm:$0x1]
        %v318 = vlaneseq
        %v319 = vshrl.u32 %v318, 7
        %v320 = vsub.s32 0, %v319
        %v321 = vrot.slane %v316, %v320
        %v387 = vunpack.c.l.b16 %v220
        %v388 = vunpack.c.h.b16 %v220
        %v389 = vunpack.c.l.b16 %v221
        %v390 = vunpack.c.h.b16 %v221
        %v391 = vunpack.c.l.b16 %v222
        %v392 = vunpack.c.h.b16 %v222
        %v393 = vunpack.c.l.b16 %v223
        %v394 = vunpack.c.h.b16 %v223
        %v395 = vunpack.c.l.b16 %v224
        %v396 = vunpack.c.h.b16 %v224
        %v397 = vunpack.c.l.b16 %v225
        %v398 = vunpack.c.h.b16 %v225
        %v399 = vunpack.c.l.b16 %v226
        %v400 = vunpack.c.h.b16 %v226
        %v401 = vunpack.c.l.b16 %v227
        %v402 = vunpack.c.h.b16 %v227
        %v403 = vunpack.c.l.b16 %v228
        %v404 = vunpack.c.h.b16 %v228
        %v405 = vunpack.c.l.b16 %v229
        %v406 = vunpack.c.h.b16 %v229
        %v407 = vunpack.c.l.b16 %v230
        %v408 = vunpack.c.h.b16 %v230
        %v409 = vunpack.c.l.b16 %v231
        %v410 = vunpack.c.h.b16 %v231
        %v411 = vunpack.c.l.b16 %v232
        %v412 = vunpack.c.h.b16 %v232
        %v413 = vunpack.c.l.b16 %v233
        %v414 = vunpack.c.h.b16 %v233
        %v415 = vunpack.c.l.b16 %v234
        %v416 = vunpack.c.h.b16 %v234
        %v417 = vunpack.c.l.b16 %v235
        %v418 = vunpack.c.h.b16 %v235
        %v419 = vunpack.c.l.b16 %v236
        %v420 = vunpack.c.h.b16 %v236
        %v421 = vunpack.c.l.b16 %v237
        %v422 = vunpack.c.h.b16 %v237
        %v423 = vunpack.c.l.b16 %v238
        %v424 = vunpack.c.h.b16 %v238
        %v425 = vunpack.c.l.b16 %v239
        %v426 = vunpack.c.h.b16 %v239
        %v427 = vunpack.c.l.b16 %v240
        %v428 = vunpack.c.h.b16 %v240
        %v429 = vunpack.c.l.b16 %v241
        %v430 = vunpack.c.h.b16 %v241
        %v431 = vunpack.c.l.b16 %v242
        %v432 = vunpack.c.h.b16 %v242
        %v433 = vunpack.c.l.b16 %v243
        %v434 = vunpack.c.h.b16 %v243
        %v435 = vunpack.c.l.b16 %v244
        %v436 = vunpack.c.h.b16 %v244
        %v437 = vunpack.c.l.b16 %v245
        %v438 = vunpack.c.h.b16 %v245
        %v439 = vunpack.c.l.b16 %v246
        %v440 = vunpack.c.h.b16 %v246
        %v441 = vunpack.c.l.b16 %v247
        %v442 = vunpack.c.h.b16 %v247
        %v443 = vunpack.c.l.b16 %v248
        %v444 = vunpack.c.h.b16 %v248
        %v445 = vunpack.c.l.b16 %v249
        %v446 = vunpack.c.h.b16 %v249
        %v447 = vunpack.c.l.b16 %v250
        %v448 = vunpack.c.h.b16 %v250
        %v449 = vunpack.c.l.b16 %v251
        %v450 = vunpack.c.h.b16 %v251
        %v451 = vunpack.c.l.b16 %v252
        %v452 = vunpack.c.h.b16 %v252
        %v453 = vunpack.c.l.b16 %v253
        %v454 = vunpack.c.h.b16 %v253
        %v455 = vunpack.c.l.b16 %v254
        %v456 = vunpack.c.h.b16 %v254
        %v457 = vunpack.c.l.b16 %v255
        %v458 = vunpack.c.h.b16 %v255
        %v459 = vunpack.c.l.b16 %v256
        %v460 = vunpack.c.h.b16 %v256
        %v461 = vunpack.c.l.b16 %v257
        %v462 = vunpack.c.h.b16 %v257
        %v463 = vunpack.c.l.b16 %v258
        %v464 = vunpack.c.h.b16 %v258
        %v465 = vunpack.c.l.b16 %v259
        %v466 = vunpack.c.h.b16 %v259
        %v467 = vunpack.c.l.b16 %v260
        %v468 = vunpack.c.h.b16 %v260
        %v469 = vunpack.c.l.b16 %v261
        %v470 = vunpack.c.h.b16 %v261
        %v471 = vunpack.c.l.b16 %v262
        %v472 = vunpack.c.h.b16 %v262
        %v473 = vunpack.c.l.b16 %v263
        %v474 = vunpack.c.h.b16 %v263
        %v475 = vunpack.c.l.b16 %v264
        %v476 = vunpack.c.h.b16 %v264
        %v477 = vunpack.c.l.b16 %v265
        %v478 = vunpack.c.h.b16 %v265
        %v479 = vunpack.c.l.b16 %v266
        %v480 = vunpack.c.h.b16 %v266
        %v481 = vunpack.c.l.b16 %v267
        %v482 = vunpack.c.h.b16 %v267
        %v483 = vunpack.c.l.b16 %v268
        %v484 = vunpack.c.h.b16 %v268
        %v485 = vunpack.c.l.b16 %v269
        %v486 = vunpack.c.h.b16 %v269
        %v487 = vunpack.c.l.b16 %v270
        %v488 = vunpack.c.h.b16 %v270
        %v489 = vunpack.c.l.b16 %v271
        %v490 = vunpack.c.h.b16 %v271
        %v491 = vunpack.c.l.b16 %v272
        %v492 = vunpack.c.h.b16 %v272
        %v493 = vunpack.c.l.b16 %v273
        %v494 = vunpack.c.h.b16 %v273
        %v495 = vunpack.c.l.b16 %v274
        %v496 = vunpack.c.h.b16 %v274
        %v497 = vunpack.c.l.b16 %v275
        %v498 = vunpack.c.h.b16 %v275
        %v499 = vunpack.c.l.b16 %v276
        %v500 = vunpack.c.h.b16 %v276
        %v501 = vunpack.c.l.b16 %v277
        %v502 = vunpack.c.h.b16 %v277
        %v503 = vunpack.c.l.b16 %v278
        %v504 = vunpack.c.h.b16 %v278
        %v505 = vunpack.c.l.b16 %v279
        %v506 = vunpack.c.h.b16 %v279
        %v507 = vunpack.c.l.b16 %v280
        %v508 = vunpack.c.h.b16 %v280
        %v509 = vunpack.c.l.b16 %v281
        %v510 = vunpack.c.h.b16 %v281
        %v511 = vunpack.c.l.b16 %v282
        %v512 = vunpack.c.h.b16 %v282
        %v513 = vunpack.c.l.b16 %v283
        %v514 = vunpack.c.h.b16 %v283
        %v515 = vpack.c.b16 %v389, %v387
        %v516 = vpack.c.b16 %v390, %v388
        %v517 = vpack.c.b16 %v393, %v391
        %v518 = vpack.c.b16 %v394, %v392
        %v519 = vpack.c.b16 %v397, %v395
        %v520 = vpack.c.b16 %v398, %v396
        %v521 = vpack.c.b16 %v401, %v399
        %v522 = vpack.c.b16 %v402, %v400
        %v523 = vpack.c.b16 %v405, %v403
        %v524 = vpack.c.b16 %v406, %v404
        %v525 = vpack.c.b16 %v409, %v407
        %v526 = vpack.c.b16 %v410, %v408
        %v527 = vpack.c.b16 %v413, %v411
        %v528 = vpack.c.b16 %v414, %v412
        %v529 = vpack.c.b16 %v417, %v415
        %v530 = vpack.c.b16 %v418, %v416
        %v531 = vpack.c.b16 %v421, %v419
        %v532 = vpack.c.b16 %v422, %v420
        %v533 = vpack.c.b16 %v425, %v423
        %v534 = vpack.c.b16 %v426, %v424
        %v535 = vpack.c.b16 %v429, %v427
        %v536 = vpack.c.b16 %v430, %v428
        %v537 = vpack.c.b16 %v433, %v431
        %v538 = vpack.c.b16 %v434, %v432
        %v539 = vpack.c.b16 %v437, %v435
        %v540 = vpack.c.b16 %v438, %v436
        %v541 = vpack.c.b16 %v441, %v439
        %v542 = vpack.c.b16 %v442, %v440
        %v543 = vpack.c.b16 %v445, %v443
        %v544 = vpack.c.b16 %v446, %v444
        %v545 = vpack.c.b16 %v449, %v447
        %v546 = vpack.c.b16 %v450, %v448
        %v547 = vpack.c.b16 %v453, %v451
        %v548 = vpack.c.b16 %v454, %v452
        %v549 = vpack.c.b16 %v457, %v455
        %v550 = vpack.c.b16 %v458, %v456
        %v551 = vpack.c.b16 %v461, %v459
        %v552 = vpack.c.b16 %v462, %v460
        %v553 = vpack.c.b16 %v465, %v463
        %v554 = vpack.c.b16 %v466, %v464
        %v555 = vpack.c.b16 %v469, %v467
        %v556 = vpack.c.b16 %v470, %v468
        %v557 = vpack.c.b16 %v473, %v471
        %v558 = vpack.c.b16 %v474, %v472
        %v559 = vpack.c.b16 %v477, %v475
        %v560 = vpack.c.b16 %v478, %v476
        %v561 = vpack.c.b16 %v481, %v479
        %v562 = vpack.c.b16 %v482, %v480
        %v563 = vpack.c.b16 %v485, %v483
        %v564 = vpack.c.b16 %v486, %v484
        %v565 = vpack.c.b16 %v489, %v487
        %v566 = vpack.c.b16 %v490, %v488
        %v567 = vpack.c.b16 %v493, %v491
        %v568 = vpack.c.b16 %v494, %v492
        %v569 = vpack.c.b16 %v497, %v495
        %v570 = vpack.c.b16 %v498, %v496
        %v571 = vpack.c.b16 %v501, %v499
        %v572 = vpack.c.b16 %v502, %v500
        %v573 = vpack.c.b16 %v505, %v503
        %v574 = vpack.c.b16 %v506, %v504
        %v575 = vpack.c.b16 %v509, %v507
        %v576 = vpack.c.b16 %v510, %v508
        %v577 = vpack.c.b16 %v513, %v511
        %v578 = vpack.c.b16 %v514, %v512
        %v675 = vunpack.c.l.b16 %v284
        %v676 = vunpack.c.l.b16 %v285
        %v677 = vunpack.c.l.b16 %v286
        %v678 = vunpack.c.l.b16 %v287
        %v679 = vunpack.c.l.b16 %v288
        %v680 = vunpack.c.l.b16 %v289
        %v681 = vunpack.c.l.b16 %v290
        %v682 = vunpack.c.l.b16 %v291
        %v683 = vunpack.c.l.b16 %v292
        %v684 = vunpack.c.l.b16 %v293
        %v685 = vunpack.c.l.b16 %v294
        %v686 = vunpack.c.l.b16 %v295
        %v687 = vunpack.c.l.b16 %v296
        %v688 = vunpack.c.l.b16 %v297
        %v689 = vunpack.c.l.b16 %v298
        %v690 = vunpack.c.l.b16 %v299
        %v691 = vunpack.c.l.b16 %v300
        %v692 = vunpack.c.l.b16 %v301
        %v693 = vunpack.c.l.b16 %v302
        %v694 = vunpack.c.l.b16 %v303
        %v695 = vunpack.c.l.b16 %v304
        %v696 = vunpack.c.l.b16 %v305
        %v697 = vunpack.c.l.b16 %v306
        %v698 = vunpack.c.l.b16 %v307
        %v699 = vunpack.c.l.b16 %v308
        %v700 = vunpack.c.l.b16 %v309
        %v701 = vunpack.c.l.b16 %v310
        %v702 = vunpack.c.l.b16 %v311
        %v703 = vunpack.c.l.b16 %v312
        %v704 = vunpack.c.l.b16 %v313
        %v705 = vunpack.c.l.b16 %v314
        %v706 = vunpack.c.l.b16 %v315
        %v707 = vpack.c.b16 %v676, %v675
        %v708 = vpack.c.b16 %v678, %v677
        %v709 = vpack.c.b16 %v680, %v679
        %v710 = vpack.c.b16 %v682, %v681
        %v711 = vpack.c.b16 %v684, %v683
        %v712 = vpack.c.b16 %v686, %v685
        %v713 = vpack.c.b16 %v688, %v687
        %v714 = vpack.c.b16 %v690, %v689
        %v715 = vpack.c.b16 %v692, %v691
        %v716 = vpack.c.b16 %v694, %v693
        %v717 = vpack.c.b16 %v696, %v695
        %v718 = vpack.c.b16 %v698, %v697
        %v719 = vpack.c.b16 %v700, %v699
        %v720 = vpack.c.b16 %v702, %v701
        %v721 = vpack.c.b16 %v704, %v703
        %v722 = vpack.c.b16 %v706, %v705
        %739 = vmatprep.subr.bf16.mxu0 0
        %740 = vmatpush1.bf16.msra.mxu0 %v707
        %741 = vmatprep.subr.bf16.mxu0 0
        %742 = vmatpush1.bf16.msra.mxu0 %v708
        %743 = vmatprep.subr.bf16.mxu0 0
        %744 = vmatpush1.bf16.msra.mxu0 %v709
        %745 = vmatprep.subr.bf16.mxu0 0
        %746 = vmatpush1.bf16.msra.mxu0 %v710
        %747 = vmatprep.subr.bf16.mxu0 0
        %748 = vmatpush1.bf16.msra.mxu0 %v711
        %749 = vmatprep.subr.bf16.mxu0 0
        %750 = vmatpush1.bf16.msra.mxu0 %v712
        %751 = vmatprep.subr.bf16.mxu0 0
        %752 = vmatpush1.bf16.msra.mxu0 %v713
        %753 = vmatprep.subr.bf16.mxu0 0
        %754 = vmatpush1.bf16.msra.mxu0 %v714
        %755 = vmatprep.subr.bf16.mxu0 0
        %756 = vmatpush1.bf16.msra.mxu0 %v715
        %757 = vmatprep.subr.bf16.mxu0 0
        %758 = vmatpush1.bf16.msra.mxu0 %v716
        %759 = vmatprep.subr.bf16.mxu0 0
        %760 = vmatpush1.bf16.msra.mxu0 %v717
        %761 = vmatprep.subr.bf16.mxu0 0
        %762 = vmatpush1.bf16.msra.mxu0 %v718
        %763 = vmatprep.subr.bf16.mxu0 0
        %764 = vmatpush1.bf16.msra.mxu0 %v719
        %765 = vmatprep.subr.bf16.mxu0 0
        %766 = vmatpush1.bf16.msra.mxu0 %v720
        %767 = vmatprep.subr.bf16.mxu0 0
        %768 = vmatpush1.bf16.msra.mxu0 %v721
        %769 = vmatprep.subr.bf16.mxu0 0
        %770 = vmatpush1.bf16.msra.mxu0 %v722
        %771 = vmatprep.mubr.bf16.mxu0 %v516
        %772 = vmatmul.mubr.bf16.gmra.mrb[0].mxu0 %v515
        %v773 = vpop.f32.mrb[0].mxu0
        %v774 = vadd.f32 %v321, %v773
        %v775 = vpop.f32.mrb[0].mxu0
        %v776 = vpop.f32.mrb[0].mxu0
        %v777 = vadd.f32 %v321, %v776
        %v778 = vpop.f32.mrb[0].mxu0
        %779 = vmatprep.mubr.bf16.mxu0 %v518
        %780 = vmatmul.mubr.bf16.gmra.mrb[0].mxu0 %v517
        %v781 = vpop.f32.mrb[0].mxu0
        %v782 = vadd.f32 %v321, %v781
        %v783 = vpop.f32.mrb[0].mxu0
        %v784 = vpop.f32.mrb[0].mxu0
        %v785 = vadd.f32 %v321, %v784
        %v786 = vpop.f32.mrb[0].mxu0
        %787 = vmatprep.mubr.bf16.mxu0 %v520
        %788 = vmatmul.mubr.bf16.gmra.mrb[0].mxu0 %v519
        %v789 = vpop.f32.mrb[0].mxu0
        %v790 = vadd.f32 %v321, %v789
        %v791 = vpop.f32.mrb[0].mxu0
        %v792 = vpop.f32.mrb[0].mxu0
        %v793 = vadd.f32 %v321, %v792
        %v794 = vpop.f32.mrb[0].mxu0
        %795 = vmatprep.mubr.bf16.mxu0 %v522
        %796 = vmatmul.mubr.bf16.gmra.mrb[0].mxu0 %v521
        %v797 = vpop.f32.mrb[0].mxu0
        %v798 = vadd.f32 %v321, %v797
        %v799 = vpop.f32.mrb[0].mxu0
        %v800 = vpop.f32.mrb[0].mxu0
        %v801 = vadd.f32 %v321, %v800
        %v802 = vpop.f32.mrb[0].mxu0
        %803 = vmatprep.mubr.bf16.mxu0 %v524
        %804 = vmatmul.mubr.bf16.gmra.mrb[0].mxu0 %v523
        %v805 = vpop.f32.mrb[0].mxu0
        %v806 = vadd.f32 %v321, %v805
        %v807 = vpop.f32.mrb[0].mxu0
        %v808 = vpop.f32.mrb[0].mxu0
        %v809 = vadd.f32 %v321, %v808
        %v810 = vpop.f32.mrb[0].mxu0
        %811 = vmatprep.mubr.bf16.mxu0 %v526
        %812 = vmatmul.mubr.bf16.gmra.mrb[0].mxu0 %v525
        %v813 = vpop.f32.mrb[0].mxu0
        %v814 = vadd.f32 %v321, %v813
        %v815 = vpop.f32.mrb[0].mxu0
        %v816 = vpop.f32.mrb[0].mxu0
        %v817 = vadd.f32 %v321, %v816
        %v818 = vpop.f32.mrb[0].mxu0
        %819 = vmatprep.mubr.bf16.mxu0 %v528
        %820 = vmatmul.mubr.bf16.gmra.mrb[0].mxu0 %v527
        %v821 = vpop.f32.mrb[0].mxu0
        %v822 = vadd.f32 %v321, %v821
        %v823 = vpop.f32.mrb[0].mxu0
        %v824 = vpop.f32.mrb[0].mxu0
        %v825 = vadd.f32 %v321, %v824
        %v826 = vpop.f32.mrb[0].mxu0
        %827 = vmatprep.mubr.bf16.mxu0 %v530
        %828 = vmatmul.mubr.bf16.gmra.mrb[0].mxu0 %v529
        %v829 = vpop.f32.mrb[0].mxu0
        %v830 = vadd.f32 %v321, %v829
        %v831 = vpop.f32.mrb[0].mxu0
        %v832 = vpop.f32.mrb[0].mxu0
        %v833 = vadd.f32 %v321, %v832
        %v834 = vpop.f32.mrb[0].mxu0
        %835 = vmatprep.mubr.bf16.mxu0 %v532
        %836 = vmatmul.mubr.bf16.gmra.mrb[0].mxu0 %v531
        %v837 = vpop.f32.mrb[0].mxu0
        %v838 = vadd.f32 %v321, %v837
        %v839 = vpop.f32.mrb[0].mxu0
        %v840 = vpop.f32.mrb[0].mxu0
        %v841 = vadd.f32 %v321, %v840
        %v842 = vpop.f32.mrb[0].mxu0
        %843 = vmatprep.mubr.bf16.mxu0 %v534
        %844 = vmatmul.mubr.bf16.gmra.mrb[0].mxu0 %v533
        %v845 = vpop.f32.mrb[0].mxu0
        %v846 = vadd.f32 %v321, %v845
        %v847 = vpop.f32.mrb[0].mxu0
        %v848 = vpop.f32.mrb[0].mxu0
        %v849 = vadd.f32 %v321, %v848
        %v850 = vpop.f32.mrb[0].mxu0
        %851 = vmatprep.mubr.bf16.mxu0 %v536
        %852 = vmatmul.mubr.bf16.gmra.mrb[0].mxu0 %v535
        %v853 = vpop.f32.mrb[0].mxu0
        %v854 = vadd.f32 %v321, %v853
        %v855 = vpop.f32.mrb[0].mxu0
        %v856 = vpop.f32.mrb[0].mxu0
        %v857 = vadd.f32 %v321, %v856
        %v858 = vpop.f32.mrb[0].mxu0
        %859 = vmatprep.mubr.bf16.mxu0 %v538
        %860 = vmatmul.mubr.bf16.gmra.mrb[0].mxu0 %v537
        %v861 = vpop.f32.mrb[0].mxu0
        %v862 = vadd.f32 %v321, %v861
        %v863 = vpop.f32.mrb[0].mxu0
        %v864 = vpop.f32.mrb[0].mxu0
        %v865 = vadd.f32 %v321, %v864
        %v866 = vpop.f32.mrb[0].mxu0
        %867 = vmatprep.mubr.bf16.mxu0 %v540
        %868 = vmatmul.mubr.bf16.gmra.mrb[0].mxu0 %v539
        %v869 = vpop.f32.mrb[0].mxu0
        %v870 = vadd.f32 %v321, %v869
        %v871 = vpop.f32.mrb[0].mxu0
        %v872 = vpop.f32.mrb[0].mxu0
        %v873 = vadd.f32 %v321, %v872
        %v874 = vpop.f32.mrb[0].mxu0
        %875 = vmatprep.mubr.bf16.mxu0 %v542
        %876 = vmatmul.mubr.bf16.gmra.mrb[0].mxu0 %v541
        %v877 = vpop.f32.mrb[0].mxu0
        %v878 = vadd.f32 %v321, %v877
        %v879 = vpop.f32.mrb[0].mxu0
        %v880 = vpop.f32.mrb[0].mxu0
        %v881 = vadd.f32 %v321, %v880
        %v882 = vpop.f32.mrb[0].mxu0
        %883 = vmatprep.mubr.bf16.mxu0 %v544
        %884 = vmatmul.mubr.bf16.gmra.mrb[0].mxu0 %v543
        %v885 = vpop.f32.mrb[0].mxu0
        %v886 = vadd.f32 %v321, %v885
        %v887 = vpop.f32.mrb[0].mxu0
        %v888 = vpop.f32.mrb[0].mxu0
        %v889 = vadd.f32 %v321, %v888
        %v890 = vpop.f32.mrb[0].mxu0
        %891 = vmatprep.mubr.bf16.mxu0 %v546
        %892 = vmatmul.mubr.bf16.gmra.mrb[0].mxu0 %v545
        %v893 = vpop.f32.mrb[0].mxu0
        %v894 = vadd.f32 %v321, %v893
        %v895 = vpop.f32.mrb[0].mxu0
        %v896 = vpop.f32.mrb[0].mxu0
        %v897 = vadd.f32 %v321, %v896
        %v898 = vpop.f32.mrb[0].mxu0
        %899 = vmatprep.mubr.bf16.mxu0 %v548
        %900 = vmatmul.mubr.bf16.gmra.mrb[0].mxu0 %v547
        %v901 = vpop.f32.mrb[0].mxu0
        %v902 = vadd.f32 %v321, %v901
        %v903 = vpop.f32.mrb[0].mxu0
        %v904 = vpop.f32.mrb[0].mxu0
        %v905 = vadd.f32 %v321, %v904
        %v906 = vpop.f32.mrb[0].mxu0
        %907 = vmatprep.mubr.bf16.mxu0 %v550
        %908 = vmatmul.mubr.bf16.gmra.mrb[0].mxu0 %v549
        %v909 = vpop.f32.mrb[0].mxu0
        %v910 = vadd.f32 %v321, %v909
        %v911 = vpop.f32.mrb[0].mxu0
        %v912 = vpop.f32.mrb[0].mxu0
        %v913 = vadd.f32 %v321, %v912
        %v914 = vpop.f32.mrb[0].mxu0
        %915 = vmatprep.mubr.bf16.mxu0 %v552
        %916 = vmatmul.mubr.bf16.gmra.mrb[0].mxu0 %v551
        %v917 = vpop.f32.mrb[0].mxu0
        %v918 = vadd.f32 %v321, %v917
        %v919 = vpop.f32.mrb[0].mxu0
        %v920 = vpop.f32.mrb[0].mxu0
        %v921 = vadd.f32 %v321, %v920
        %v922 = vpop.f32.mrb[0].mxu0
        %923 = vmatprep.mubr.bf16.mxu0 %v554
        %924 = vmatmul.mubr.bf16.gmra.mrb[0].mxu0 %v553
        %v925 = vpop.f32.mrb[0].mxu0
        %v926 = vadd.f32 %v321, %v925
        %v927 = vpop.f32.mrb[0].mxu0
        %v928 = vpop.f32.mrb[0].mxu0
        %v929 = vadd.f32 %v321, %v928
        %v930 = vpop.f32.mrb[0].mxu0
        %931 = vmatprep.mubr.bf16.mxu0 %v556
        %932 = vmatmul.mubr.bf16.gmra.mrb[0].mxu0 %v555
        %v933 = vpop.f32.mrb[0].mxu0
        %v934 = vadd.f32 %v321, %v933
        %v935 = vpop.f32.mrb[0].mxu0
        %v936 = vpop.f32.mrb[0].mxu0
        %v937 = vadd.f32 %v321, %v936
        %v938 = vpop.f32.mrb[0].mxu0
        %939 = vmatprep.mubr.bf16.mxu0 %v558
        %940 = vmatmul.mubr.bf16.gmra.mrb[0].mxu0 %v557
        %v941 = vpop.f32.mrb[0].mxu0
        %v942 = vadd.f32 %v321, %v941
        %v943 = vpop.f32.mrb[0].mxu0
        %v944 = vpop.f32.mrb[0].mxu0
        %v945 = vadd.f32 %v321, %v944
        %v946 = vpop.f32.mrb[0].mxu0
        %947 = vmatprep.mubr.bf16.mxu0 %v560
        %948 = vmatmul.mubr.bf16.gmra.mrb[0].mxu0 %v559
        %v949 = vpop.f32.mrb[0].mxu0
        %v950 = vadd.f32 %v321, %v949
        %v951 = vpop.f32.mrb[0].mxu0
        %v952 = vpop.f32.mrb[0].mxu0
        %v953 = vadd.f32 %v321, %v952
        %v954 = vpop.f32.mrb[0].mxu0
        %955 = vmatprep.mubr.bf16.mxu0 %v562
        %956 = vmatmul.mubr.bf16.gmra.mrb[0].mxu0 %v561
        %v957 = vpop.f32.mrb[0].mxu0
        %v958 = vadd.f32 %v321, %v957
        %v959 = vpop.f32.mrb[0].mxu0
        %v960 = vpop.f32.mrb[0].mxu0
        %v961 = vadd.f32 %v321, %v960
        %v962 = vpop.f32.mrb[0].mxu0
        %963 = vmatprep.mubr.bf16.mxu0 %v564
        %964 = vmatmul.mubr.bf16.gmra.mrb[0].mxu0 %v563
        %v965 = vpop.f32.mrb[0].mxu0
        %v966 = vadd.f32 %v321, %v965
        %v967 = vpop.f32.mrb[0].mxu0
        %v968 = vpop.f32.mrb[0].mxu0
        %v969 = vadd.f32 %v321, %v968
        %v970 = vpop.f32.mrb[0].mxu0
        %971 = vmatprep.mubr.bf16.mxu0 %v566
        %972 = vmatmul.mubr.bf16.gmra.mrb[0].mxu0 %v565
        %v973 = vpop.f32.mrb[0].mxu0
        %v974 = vadd.f32 %v321, %v973
        %v975 = vpop.f32.mrb[0].mxu0
        %v976 = vpop.f32.mrb[0].mxu0
        %v977 = vadd.f32 %v321, %v976
        %v978 = vpop.f32.mrb[0].mxu0
        %979 = vmatprep.mubr.bf16.mxu0 %v568
        %980 = vmatmul.mubr.bf16.gmra.mrb[0].mxu0 %v567
        %v981 = vpop.f32.mrb[0].mxu0
        %v982 = vadd.f32 %v321, %v981
        %v983 = vpop.f32.mrb[0].mxu0
        %v984 = vpop.f32.mrb[0].mxu0
        %v985 = vadd.f32 %v321, %v984
        %v986 = vpop.f32.mrb[0].mxu0
        %987 = vmatprep.mubr.bf16.mxu0 %v570
        %988 = vmatmul.mubr.bf16.gmra.mrb[0].mxu0 %v569
        %v989 = vpop.f32.mrb[0].mxu0
        %v990 = vadd.f32 %v321, %v989
        %v991 = vpop.f32.mrb[0].mxu0
        %v992 = vpop.f32.mrb[0].mxu0
        %v993 = vadd.f32 %v321, %v992
        %v994 = vpop.f32.mrb[0].mxu0
        %995 = vmatprep.mubr.bf16.mxu0 %v572
        %996 = vmatmul.mubr.bf16.gmra.mrb[0].mxu0 %v571
        %v997 = vpop.f32.mrb[0].mxu0
        %v998 = vadd.f32 %v321, %v997
        %v999 = vpop.f32.mrb[0].mxu0
        %v1000 = vpop.f32.mrb[0].mxu0
        %v1001 = vadd.f32 %v321, %v1000
        %v1002 = vpop.f32.mrb[0].mxu0
        %1003 = vmatprep.mubr.bf16.mxu0 %v574
        %1004 = vmatmul.mubr.bf16.gmra.mrb[0].mxu0 %v573
        %v1005 = vpop.f32.mrb[0].mxu0
        %v1006 = vadd.f32 %v321, %v1005
        %v1007 = vpop.f32.mrb[0].mxu0
        %v1008 = vpop.f32.mrb[0].mxu0
        %v1009 = vadd.f32 %v321, %v1008
        %v1010 = vpop.f32.mrb[0].mxu0
        %1011 = vmatprep.mubr.bf16.mxu0 %v576
        %1012 = vmatmul.mubr.bf16.gmra.mrb[0].mxu0 %v575
        %v1013 = vpop.f32.mrb[0].mxu0
        %v1014 = vadd.f32 %v321, %v1013
        %v1015 = vpop.f32.mrb[0].mxu0
        %v1016 = vpop.f32.mrb[0].mxu0
        %v1017 = vadd.f32 %v321, %v1016
        %v1018 = vpop.f32.mrb[0].mxu0
        %1019 = vmatprep.mubr.bf16.mxu0 %v578
        %1020 = vmatmul.mubr.bf16.gmra.mrb[0].mxu0 %v577
        %v1021 = vpop.f32.mrb[0].mxu0
        %v1022 = vadd.f32 %v321, %v1021
        %v1023 = vpop.f32.mrb[0].mxu0
        %v1024 = vpop.f32.mrb[0].mxu0
        %v1025 = vadd.f32 %v321, %v1024
        %v1026 = vpop.f32.mrb[0].mxu0
        %1027 = vdwg.mxu0
        %v1028 = vmax.f32 %v774, 0.0
        %v1029 = vmax.f32 %v777, 0.0
        %v1030 = vmax.f32 %v782, 0.0
        %v1031 = vmax.f32 %v785, 0.0
        %v1032 = vmax.f32 %v790, 0.0
        %v1033 = vmax.f32 %v793, 0.0
        %v1034 = vmax.f32 %v798, 0.0
        %v1035 = vmax.f32 %v801, 0.0
        %v1036 = vmax.f32 %v806, 0.0
        %v1037 = vmax.f32 %v809, 0.0
        %v1038 = vmax.f32 %v814, 0.0
        %v1039 = vmax.f32 %v817, 0.0
        %v1040 = vmax.f32 %v822, 0.0
        %v1041 = vmax.f32 %v825, 0.0
        %v1042 = vmax.f32 %v830, 0.0
        %v1043 = vmax.f32 %v833, 0.0
        %v1044 = vmax.f32 %v838, 0.0
        %v1045 = vmax.f32 %v841, 0.0
        %v1046 = vmax.f32 %v846, 0.0
        %v1047 = vmax.f32 %v849, 0.0
        %v1048 = vmax.f32 %v854, 0.0
        %v1049 = vmax.f32 %v857, 0.0
        %v1050 = vmax.f32 %v862, 0.0
        %v1051 = vmax.f32 %v865, 0.0
        %v1052 = vmax.f32 %v870, 0.0
        %v1053 = vmax.f32 %v873, 0.0
        %v1054 = vmax.f32 %v878, 0.0
        %v1055 = vmax.f32 %v881, 0.0
        %v1056 = vmax.f32 %v886, 0.0
        %v1057 = vmax.f32 %v889, 0.0
        %v1058 = vmax.f32 %v894, 0.0
        %v1059 = vmax.f32 %v897, 0.0
        %v1060 = vmax.f32 %v902, 0.0
        %v1061 = vmax.f32 %v905, 0.0
        %v1062 = vmax.f32 %v910, 0.0
        %v1063 = vmax.f32 %v913, 0.0
        %v1064 = vmax.f32 %v918, 0.0
        %v1065 = vmax.f32 %v921, 0.0
        %v1066 = vmax.f32 %v926, 0.0
        %v1067 = vmax.f32 %v929, 0.0
        %v1068 = vmax.f32 %v934, 0.0
        %v1069 = vmax.f32 %v937, 0.0
        %v1070 = vmax.f32 %v942, 0.0
        %v1071 = vmax.f32 %v945, 0.0
        %v1072 = vmax.f32 %v950, 0.0
        %v1073 = vmax.f32 %v953, 0.0
        %v1074 = vmax.f32 %v958, 0.0
        %v1075 = vmax.f32 %v961, 0.0
        %v1076 = vmax.f32 %v966, 0.0
        %v1077 = vmax.f32 %v969, 0.0
        %v1078 = vmax.f32 %v974, 0.0
        %v1079 = vmax.f32 %v977, 0.0
        %v1080 = vmax.f32 %v982, 0.0
        %v1081 = vmax.f32 %v985, 0.0
        %v1082 = vmax.f32 %v990, 0.0
        %v1083 = vmax.f32 %v993, 0.0
        %v1084 = vmax.f32 %v998, 0.0
        %v1085 = vmax.f32 %v1001, 0.0
        %v1086 = vmax.f32 %v1006, 0.0
        %v1087 = vmax.f32 %v1009, 0.0
        %v1088 = vmax.f32 %v1014, 0.0
        %v1089 = vmax.f32 %v1017, 0.0
        %v1090 = vmax.f32 %v1022, 0.0
        %v1091 = vmax.f32 %v1025, 0.0
        %v1092 = vpack.c.bf16 %v1029, %v1028
        %v1093 = vpack.c.bf16 %v1031, %v1030
        %v1094 = vpack.c.bf16 %v1033, %v1032
        %v1095 = vpack.c.bf16 %v1035, %v1034
        %v1096 = vpack.c.bf16 %v1037, %v1036
        %v1097 = vpack.c.bf16 %v1039, %v1038
        %v1098 = vpack.c.bf16 %v1041, %v1040
        %v1099 = vpack.c.bf16 %v1043, %v1042
        %v1100 = vpack.c.bf16 %v1045, %v1044
        %v1101 = vpack.c.bf16 %v1047, %v1046
        %v1102 = vpack.c.bf16 %v1049, %v1048
        %v1103 = vpack.c.bf16 %v1051, %v1050
        %v1104 = vpack.c.bf16 %v1053, %v1052
        %v1105 = vpack.c.bf16 %v1055, %v1054
        %v1106 = vpack.c.bf16 %v1057, %v1056
        %v1107 = vpack.c.bf16 %v1059, %v1058
        %v1108 = vpack.c.bf16 %v1061, %v1060
        %v1109 = vpack.c.bf16 %v1063, %v1062
        %v1110 = vpack.c.bf16 %v1065, %v1064
        %v1111 = vpack.c.bf16 %v1067, %v1066
        %v1112 = vpack.c.bf16 %v1069, %v1068
        %v1113 = vpack.c.bf16 %v1071, %v1070
        %v1114 = vpack.c.bf16 %v1073, %v1072
        %v1115 = vpack.c.bf16 %v1075, %v1074
        %v1116 = vpack.c.bf16 %v1077, %v1076
        %v1117 = vpack.c.bf16 %v1079, %v1078
        %v1118 = vpack.c.bf16 %v1081, %v1080
        %v1119 = vpack.c.bf16 %v1083, %v1082
        %v1120 = vpack.c.bf16 %v1085, %v1084
        %v1121 = vpack.c.bf16 %v1087, %v1086
        %v1122 = vpack.c.bf16 %v1089, %v1088
        %v1123 = vpack.c.bf16 %v1091, %v1090
        %v1156 = vunpack.c.l.b16 %v1092
        %v1157 = vunpack.c.h.b16 %v1092
        %v1158 = vunpack.c.l.b16 %v1093
        %v1159 = vunpack.c.h.b16 %v1093
        %v1160 = vunpack.c.l.b16 %v1094
        %v1161 = vunpack.c.h.b16 %v1094
        %v1162 = vunpack.c.l.b16 %v1095
        %v1163 = vunpack.c.h.b16 %v1095
        %v1164 = vunpack.c.l.b16 %v1096
        %v1165 = vunpack.c.h.b16 %v1096
        %v1166 = vunpack.c.l.b16 %v1097
        %v1167 = vunpack.c.h.b16 %v1097
        %v1168 = vunpack.c.l.b16 %v1098
        %v1169 = vunpack.c.h.b16 %v1098
        %v1170 = vunpack.c.l.b16 %v1099
        %v1171 = vunpack.c.h.b16 %v1099
        %v1172 = vunpack.c.l.b16 %v1100
        %v1173 = vunpack.c.h.b16 %v1100
        %v1174 = vunpack.c.l.b16 %v1101
        %v1175 = vunpack.c.h.b16 %v1101
        %v1176 = vunpack.c.l.b16 %v1102
        %v1177 = vunpack.c.h.b16 %v1102
        %v1178 = vunpack.c.l.b16 %v1103
        %v1179 = vunpack.c.h.b16 %v1103
        %v1180 = vunpack.c.l.b16 %v1104
        %v1181 = vunpack.c.h.b16 %v1104
        %v1182 = vunpack.c.l.b16 %v1105
        %v1183 = vunpack.c.h.b16 %v1105
        %v1184 = vunpack.c.l.b16 %v1106
        %v1185 = vunpack.c.h.b16 %v1106
        %v1186 = vunpack.c.l.b16 %v1107
        %v1187 = vunpack.c.h.b16 %v1107
        %v1188 = vunpack.c.l.b16 %v1108
        %v1189 = vunpack.c.h.b16 %v1108
        %v1190 = vunpack.c.l.b16 %v1109
        %v1191 = vunpack.c.h.b16 %v1109
        %v1192 = vunpack.c.l.b16 %v1110
        %v1193 = vunpack.c.h.b16 %v1110
        %v1194 = vunpack.c.l.b16 %v1111
        %v1195 = vunpack.c.h.b16 %v1111
        %v1196 = vunpack.c.l.b16 %v1112
        %v1197 = vunpack.c.h.b16 %v1112
        %v1198 = vunpack.c.l.b16 %v1113
        %v1199 = vunpack.c.h.b16 %v1113
        %v1200 = vunpack.c.l.b16 %v1114
        %v1201 = vunpack.c.h.b16 %v1114
        %v1202 = vunpack.c.l.b16 %v1115
        %v1203 = vunpack.c.h.b16 %v1115
        %v1204 = vunpack.c.l.b16 %v1116
        %v1205 = vunpack.c.h.b16 %v1116
        %v1206 = vunpack.c.l.b16 %v1117
        %v1207 = vunpack.c.h.b16 %v1117
        %v1208 = vunpack.c.l.b16 %v1118
        %v1209 = vunpack.c.h.b16 %v1118
        %v1210 = vunpack.c.l.b16 %v1119
        %v1211 = vunpack.c.h.b16 %v1119
        %v1212 = vunpack.c.l.b16 %v1120
        %v1213 = vunpack.c.h.b16 %v1120
        %v1214 = vunpack.c.l.b16 %v1121
        %v1215 = vunpack.c.h.b16 %v1121
        %v1216 = vunpack.c.l.b16 %v1122
        %v1217 = vunpack.c.h.b16 %v1122
        %v1218 = vunpack.c.l.b16 %v1123
        %v1219 = vunpack.c.h.b16 %v1123
        %v1220 = vpack.c.b16 %v1156, %v1156
        %v1221 = vpack.c.b16 %v1157, %v1157
        %v1222 = vpack.c.b16 %v1158, %v1158
        %v1223 = vpack.c.b16 %v1159, %v1159
        %v1224 = vpack.c.b16 %v1160, %v1160
        %v1225 = vpack.c.b16 %v1161, %v1161
        %v1226 = vpack.c.b16 %v1162, %v1162
        %v1227 = vpack.c.b16 %v1163, %v1163
        %v1228 = vpack.c.b16 %v1164, %v1164
        %v1229 = vpack.c.b16 %v1165, %v1165
        %v1230 = vpack.c.b16 %v1166, %v1166
        %v1231 = vpack.c.b16 %v1167, %v1167
        %v1232 = vpack.c.b16 %v1168, %v1168
        %v1233 = vpack.c.b16 %v1169, %v1169
        %v1234 = vpack.c.b16 %v1170, %v1170
        %v1235 = vpack.c.b16 %v1171, %v1171
        %v1236 = vpack.c.b16 %v1172, %v1172
        %v1237 = vpack.c.b16 %v1173, %v1173
        %v1238 = vpack.c.b16 %v1174, %v1174
        %v1239 = vpack.c.b16 %v1175, %v1175
        %v1240 = vpack.c.b16 %v1176, %v1176
        %v1241 = vpack.c.b16 %v1177, %v1177
        %v1242 = vpack.c.b16 %v1178, %v1178
        %v1243 = vpack.c.b16 %v1179, %v1179
        %v1244 = vpack.c.b16 %v1180, %v1180
        %v1245 = vpack.c.b16 %v1181, %v1181
        %v1246 = vpack.c.b16 %v1182, %v1182
        %v1247 = vpack.c.b16 %v1183, %v1183
        %v1248 = vpack.c.b16 %v1184, %v1184
        %v1249 = vpack.c.b16 %v1185, %v1185
        %v1250 = vpack.c.b16 %v1186, %v1186
        %v1251 = vpack.c.b16 %v1187, %v1187
        %v1252 = vpack.c.b16 %v1188, %v1188
        %v1253 = vpack.c.b16 %v1189, %v1189
        %v1254 = vpack.c.b16 %v1190, %v1190
        %v1255 = vpack.c.b16 %v1191, %v1191
        %v1256 = vpack.c.b16 %v1192, %v1192
        %v1257 = vpack.c.b16 %v1193, %v1193
        %v1258 = vpack.c.b16 %v1194, %v1194
        %v1259 = vpack.c.b16 %v1195, %v1195
        %v1260 = vpack.c.b16 %v1196, %v1196
        %v1261 = vpack.c.b16 %v1197, %v1197
        %v1262 = vpack.c.b16 %v1198, %v1198
        %v1263 = vpack.c.b16 %v1199, %v1199
        %v1264 = vpack.c.b16 %v1200, %v1200
        %v1265 = vpack.c.b16 %v1201, %v1201
        %v1266 = vpack.c.b16 %v1202, %v1202
        %v1267 = vpack.c.b16 %v1203, %v1203
        %v1268 = vpack.c.b16 %v1204, %v1204
        %v1269 = vpack.c.b16 %v1205, %v1205
        %v1270 = vpack.c.b16 %v1206, %v1206
        %v1271 = vpack.c.b16 %v1207, %v1207
        %v1272 = vpack.c.b16 %v1208, %v1208
        %v1273 = vpack.c.b16 %v1209, %v1209
        %v1274 = vpack.c.b16 %v1210, %v1210
        %v1275 = vpack.c.b16 %v1211, %v1211
        %v1276 = vpack.c.b16 %v1212, %v1212
        %v1277 = vpack.c.b16 %v1213, %v1213
        %v1278 = vpack.c.b16 %v1214, %v1214
        %v1279 = vpack.c.b16 %v1215, %v1215
        %v1280 = vpack.c.b16 %v1216, %v1216
        %v1281 = vpack.c.b16 %v1217, %v1217
        %v1282 = vpack.c.b16 %v1218, %v1218
        %v1283 = vpack.c.b16 %v1219, %v1219
        %vm1348 = vcmask 257024
        %1349 = vst.msk [vmem:[%s216] sm:$0xf] %vm1348, %v1220
        %1350 = vst.msk [vmem:[%s216 + $0x4] sm:$0xf] %vm1348, %v1221
        %1351 = vst.msk [vmem:[%s216 + $0x8] sm:$0xf] %vm1348, %v1222
        %1352 = vst.msk [vmem:[%s216 + $0xc] sm:$0xf] %vm1348, %v1223
        %1353 = vst.msk [vmem:[%s216 + $0x10] sm:$0xf] %vm1348, %v1224
        %1354 = vst.msk [vmem:[%s216 + $0x14] sm:$0xf] %vm1348, %v1225
        %1355 = vst.msk [vmem:[%s216 + $0x18] sm:$0xf] %vm1348, %v1226
        %1356 = vst.msk [vmem:[%s216 + $0x1c] sm:$0xf] %vm1348, %v1227
        %1357 = vst.msk [vmem:[%s216 + $0x20] sm:$0xf] %vm1348, %v1228
        %1358 = vst.msk [vmem:[%s216 + $0x24] sm:$0xf] %vm1348, %v1229
        %1359 = vst.msk [vmem:[%s216 + $0x28] sm:$0xf] %vm1348, %v1230
        %1360 = vst.msk [vmem:[%s216 + $0x2c] sm:$0xf] %vm1348, %v1231
        %1361 = vst.msk [vmem:[%s216 + $0x30] sm:$0xf] %vm1348, %v1232
        %1362 = vst.msk [vmem:[%s216 + $0x34] sm:$0xf] %vm1348, %v1233
        %1363 = vst.msk [vmem:[%s216 + $0x38] sm:$0xf] %vm1348, %v1234
        %1364 = vst.msk [vmem:[%s216 + $0x3c] sm:$0xf] %vm1348, %v1235
        %1365 = vst.msk [vmem:[%s216 + $0x40] sm:$0xf] %vm1348, %v1236
        %1366 = vst.msk [vmem:[%s216 + $0x44] sm:$0xf] %vm1348, %v1237
        %1367 = vst.msk [vmem:[%s216 + $0x48] sm:$0xf] %vm1348, %v1238
        %1368 = vst.msk [vmem:[%s216 + $0x4c] sm:$0xf] %vm1348, %v1239
        %1369 = vst.msk [vmem:[%s216 + $0x50] sm:$0xf] %vm1348, %v1240
        %1370 = vst.msk [vmem:[%s216 + $0x54] sm:$0xf] %vm1348, %v1241
        %1371 = vst.msk [vmem:[%s216 + $0x58] sm:$0xf] %vm1348, %v1242
        %1372 = vst.msk [vmem:[%s216 + $0x5c] sm:$0xf] %vm1348, %v1243
        %1373 = vst.msk [vmem:[%s216 + $0x60] sm:$0xf] %vm1348, %v1244
        %1374 = vst.msk [vmem:[%s216 + $0x64] sm:$0xf] %vm1348, %v1245
        %1375 = vst.msk [vmem:[%s216 + $0x68] sm:$0xf] %vm1348, %v1246
        %1376 = vst.msk [vmem:[%s216 + $0x6c] sm:$0xf] %vm1348, %v1247
        %1377 = vst.msk [vmem:[%s216 + $0x70] sm:$0xf] %vm1348, %v1248
        %1378 = vst.msk [vmem:[%s216 + $0x74] sm:$0xf] %vm1348, %v1249
        %1379 = vst.msk [vmem:[%s216 + $0x78] sm:$0xf] %vm1348, %v1250
        %1380 = vst.msk [vmem:[%s216 + $0x7c] sm:$0xf] %vm1348, %v1251
        %1381 = vst.msk [vmem:[%s216 + $0x80] sm:$0xf] %vm1348, %v1252
        %1382 = vst.msk [vmem:[%s216 + $0x84] sm:$0xf] %vm1348, %v1253
        %1383 = vst.msk [vmem:[%s216 + $0x88] sm:$0xf] %vm1348, %v1254
        %1384 = vst.msk [vmem:[%s216 + $0x8c] sm:$0xf] %vm1348, %v1255
        %1385 = vst.msk [vmem:[%s216 + $0x90] sm:$0xf] %vm1348, %v1256
        %1386 = vst.msk [vmem:[%s216 + $0x94] sm:$0xf] %vm1348, %v1257
        %1387 = vst.msk [vmem:[%s216 + $0x98] sm:$0xf] %vm1348, %v1258
        %1388 = vst.msk [vmem:[%s216 + $0x9c] sm:$0xf] %vm1348, %v1259
        %1389 = vst.msk [vmem:[%s216 + $0xa0] sm:$0xf] %vm1348, %v1260
        %1390 = vst.msk [vmem:[%s216 + $0xa4] sm:$0xf] %vm1348, %v1261
        %1391 = vst.msk [vmem:[%s216 + $0xa8] sm:$0xf] %vm1348, %v1262
        %1392 = vst.msk [vmem:[%s216 + $0xac] sm:$0xf] %vm1348, %v1263
        %1393 = vst.msk [vmem:[%s216 + $0xb0] sm:$0xf] %vm1348, %v1264
        %1394 = vst.msk [vmem:[%s216 + $0xb4] sm:$0xf] %vm1348, %v1265
        %1395 = vst.msk [vmem:[%s216 + $0xb8] sm:$0xf] %vm1348, %v1266
        %1396 = vst.msk [vmem:[%s216 + $0xbc] sm:$0xf] %vm1348, %v1267
        %1397 = vst.msk [vmem:[%s216 + $0xc0] sm:$0xf] %vm1348, %v1268
        %1398 = vst.msk [vmem:[%s216 + $0xc4] sm:$0xf] %vm1348, %v1269
        %1399 = vst.msk [vmem:[%s216 + $0xc8] sm:$0xf] %vm1348, %v1270
        %1400 = vst.msk [vmem:[%s216 + $0xcc] sm:$0xf] %vm1348, %v1271
        %1401 = vst.msk [vmem:[%s216 + $0xd0] sm:$0xf] %vm1348, %v1272
        %1402 = vst.msk [vmem:[%s216 + $0xd4] sm:$0xf] %vm1348, %v1273
        %1403 = vst.msk [vmem:[%s216 + $0xd8] sm:$0xf] %vm1348, %v1274
        %1404 = vst.msk [vmem:[%s216 + $0xdc] sm:$0xf] %vm1348, %v1275
        %1405 = vst.msk [vmem:[%s216 + $0xe0] sm:$0xf] %vm1348, %v1276
        %1406 = vst.msk [vmem:[%s216 + $0xe4] sm:$0xf] %vm1348, %v1277
        %1407 = vst.msk [vmem:[%s216 + $0xe8] sm:$0xf] %vm1348, %v1278
        %1408 = vst.msk [vmem:[%s216 + $0xec] sm:$0xf] %vm1348, %v1279
        %1409 = vst.msk [vmem:[%s216 + $0xf0] sm:$0xf] %vm1348, %v1280
        %1410 = vst.msk [vmem:[%s216 + $0xf4] sm:$0xf] %vm1348, %v1281
        %1411 = vst.msk [vmem:[%s216 + $0xf8] sm:$0xf] %vm1348, %v1282
        %1412 = vst.msk [vmem:[%s216 + $0xfc] sm:$0xf] %vm1348, %v1283
        %s1413 = sand.u32 %s97, 1
        %s1414 = scalar_lea.sflag [#allocation4], %s1413
        %s1415 = sand.u32 %s97, 1
        %s1416 = smul.addr %s1415, 256
        %s1417 = scalar_lea.vmem [#allocation8], %s1416
        // Predicated region
        $region45: #{simple_cnn_forward.4} parent=31 // pred_check
          %p1418 = pneg %p107
        $region46: #{simple_cnn_forward.4} parent=31 // pred_check_branch
          %1420 = sbr.rel (%p1418) target = $region48
        $region47: #{simple_cnn_forward.4} parent=31 // pred_region
          %s1421 = smul.u32 64, %s21
          %s1423 = ssub.s32 4096, 4096
          %1424 = vsyncadd %s1414, %s1423
          %s1425 = smul.addr %s1421, 64
          %s1426 = scalar_lea.hbm %s3, %s1425
          %s1427 = sshll.u32 %s1417, 4
          %s1428 = int_to_ptr.vmem [resolvable:$true] %s1427
          %1433 = dma.vmem_to_hbm [thread:$0]  %s1428, 4096, %s1426, %s1414, 64, 64, 4
        $region48: #{simple_cnn_forward.4} parent=31 // pred_fallthru
          _
      $region32: #{simple_cnn_forward.4} parent=5 // pred_fallthru
        _
      %p1434 = scmp.le.s32.totalorder 2, %s16
      // Predicated region
      $region49: #{simple_cnn_forward.4} parent=5 // pred_check
        %p1435 = pneg %p1434
      $region50: #{simple_cnn_forward.4} parent=5 // pred_check_branch
        %1437 = sbr.rel (%p1435) target = $region52
      $region51: #{simple_cnn_forward.4} parent=5 // pred_region
        %s1438 = ssub.s32 %s16, 2
        // Predicated region
        $region53: #{simple_cnn_forward.4} parent=51 // pred_check
          %p1439 = pneg %p113
        $region54: #{simple_cnn_forward.4} parent=51 // pred_check_branch
          %1441 = sbr.rel (%p1439) target = $region56
        $region55: #{simple_cnn_forward.4} parent=51 // pred_region
          %s1442 = sand.u32 %s98, 1
          %s1443 = scalar_lea.sflag [#allocation4], %s1442
          %s1444 = sand.u32 %s98, 1
          %s1445 = smul.addr %s1444, 256
          %s1446 = scalar_lea.vmem [#allocation8], %s1445
          %1447 = dma.done %s1443, 4096
        $region56: #{simple_cnn_forward.4} parent=51 // pred_fallthru
          _
      $region52: #{simple_cnn_forward.4} parent=5 // pred_fallthru
        _
    $region6: #{simple_cnn_forward.4} parent=1 // loop_footer
      %s20 = sadd.s32 1, %s16
    $region7: #{simple_cnn_forward.4} parent=1 // loop_footer_branch
      %15 = sbr.rel target = $region3
    $region8: #{simple_cnn_forward.4} parent=1 // loop_exit
      _
    %1448 = vsyncpa [#allocation3], 1
    %s1449 = scalar_lea.sflag [#allocation3], 1
    %1450 = vsyncpa %s1449, 1
    %1451 = vsyncpa [#allocation6], 1
    %1452 = vsyncpa [#allocation4], 1
    %s1453 = scalar_lea.sflag [#allocation4], 1
    %1454 = vsyncpa %s1453, 1

// kernel: simple_cnn_forward.5
$region0: #{simple_cnn_forward.5}
  #allocation0 [shape = 'u32[]', space=smem, size = 0x4, offset = 0x4, fixed_abs, tag = 'smem constant byte address 0x4 - core index']
  #allocation1 [shape = 'u32[144,128]{1,0:T(1,128)}', space=vmem, size = 0x12000, scoped, tag = 'internal scratch']
  %s0 = inlined_call_operand.hbm [shape: bf16[162,512], index: 0, kind: input, shape index: {}]
  %s1 = inlined_call_operand.hbm [shape: bf16[512,64], index: 1, kind: input, shape index: {}]
  %s2 = inlined_call_operand.hbm [shape: f32[1,64], index: 2, kind: input, shape index: {}]
  %s3 = inlined_call_operand.hbm [shape: bf16[162,64], index: 3, kind: output, shape index: {}]
  %s4 = sld [smem:[#allocation0]]
  $region34: #{simple_cnn_forward.5} parent=0
    _
  %s6 = ssub.s32 1, %s4
  %s7 = scalar_select 0, %s6, %s4
  $region1: #{simple_cnn_forward.5} parent=0
    #allocation2 [shape = 'u8[172032]{0}', space=vmem, size = 0x2a000, scoped, tag = 'input window, operand 0, single buffered']
    #allocation3 [shape = 's32[1]{0}', space=sflag, size = 0x4, scoped, tag = 'scoped memory for simple_cnn_forward.5']
    #allocation4 [shape = 's32[1]{0}', space=sflag, size = 0x4, scoped, tag = 'scoped memory for simple_cnn_forward.5']
    #allocation5 [shape = 'u8[131072]{0}', space=vmem, size = 0x20000, scoped, tag = 'input window, operand 1, single buffered']
    #allocation6 [shape = 's32[1]{0}', space=sflag, size = 0x4, scoped, tag = 'scoped memory for simple_cnn_forward.5']
    #allocation7 [shape = 'u8[512]{0}', space=vmem, size = 0x400, scoped, tag = 'input window, operand 2, single buffered']
    #allocation8 [shape = 'u8[43008]{0}', space=vmem, size = 0xa800, scoped, tag = 'output window, operand 0, single buffered']
    %8 = vsyncpa [#allocation3], 0
    %9 = vsyncpa [#allocation6], 0
    %10 = vsyncpa [#allocation4], 0
    // Predicated region
    $region2: #{simple_cnn_forward.5} parent=1 // pred_check
      _
    $region3: #{simple_cnn_forward.5} parent=1 // pred_check_branch
      %12 = sbr.rel (0) target = $region5
    $region4: #{simple_cnn_forward.5} parent=1 // pred_region
      %s14 = ssub.s32 5376, 5376
      %15 = vsyncadd [#allocation3], %s14
      %s16 = sshll.u32 [#allocation2], 4
      %s17 = int_to_ptr.vmem [resolvable:$true] %s16
      %22 = dma.hbm_to_vmem [thread:$0]  %s0, 5376, %s17, [#allocation3], 256, 256, 16
    $region5: #{simple_cnn_forward.5} parent=1 // pred_fallthru
      _
    // Predicated region
    $region6: #{simple_cnn_forward.5} parent=1 // pred_check
      _
    $region7: #{simple_cnn_forward.5} parent=1 // pred_check_branch
      %24 = sbr.rel (0) target = $region9
    $region8: #{simple_cnn_forward.5} parent=1 // pred_region
      %s26 = ssub.s32 4096, 4096
      %27 = vsyncadd [#allocation6], %s26
      %s28 = sshll.u32 [#allocation5], 4
      %s29 = int_to_ptr.vmem [resolvable:$true] %s28
      %34 = dma.hbm_to_vmem [thread:$0]  %s1, 4096, %s29, [#allocation6], 64, 64, 4
    $region9: #{simple_cnn_forward.5} parent=1 // pred_fallthru
      _
    // Predicated region
    $region10: #{simple_cnn_forward.5} parent=1 // pred_check
      _
    $region11: #{simple_cnn_forward.5} parent=1 // pred_check_branch
      %36 = sbr.rel (0) target = $region13
    $region12: #{simple_cnn_forward.5} parent=1 // pred_region
      %s38 = ssub.s32 16, 16
      %39 = vsyncadd [#allocation6], %s38
      %s41 = sshll.u32 [#allocation7], 4
      %s42 = int_to_ptr.vmem [resolvable:$true] %s41
      %44 = dma.hbm_to_vmem [thread:$0]  %s2, 16, %s42, [#allocation6]
    $region13: #{simple_cnn_forward.5} parent=1 // pred_fallthru
      _
    // Predicated region
    $region14: #{simple_cnn_forward.5} parent=1 // pred_check
      _
    $region15: #{simple_cnn_forward.5} parent=1 // pred_check_branch
      %46 = sbr.rel (0) target = $region17
    $region16: #{simple_cnn_forward.5} parent=1 // pred_region
      %47 = dma.done [#allocation3], 5376
    $region17: #{simple_cnn_forward.5} parent=1 // pred_fallthru
      _
    // Predicated region
    $region18: #{simple_cnn_forward.5} parent=1 // pred_check
      _
    $region19: #{simple_cnn_forward.5} parent=1 // pred_check_branch
      %49 = sbr.rel (0) target = $region21
    $region20: #{simple_cnn_forward.5} parent=1 // pred_region
      %50 = dma.done [#allocation6], 4096
    $region21: #{simple_cnn_forward.5} parent=1 // pred_fallthru
      _
    // Predicated region
    $region22: #{simple_cnn_forward.5} parent=1 // pred_check
      _
    $region23: #{simple_cnn_forward.5} parent=1 // pred_check_branch
      %52 = sbr.rel (0) target = $region25
    $region24: #{simple_cnn_forward.5} parent=1 // pred_region
      %53 = dma.done [#allocation6], 16
    $region25: #{simple_cnn_forward.5} parent=1 // pred_fallthru
      _
    %v55 = vld [vmem:[#allocation2] sm:$0xff]
    %v56 = vld [vmem:[#allocation2 + $0x8] sm:$0xff]
    %v57 = vld [vmem:[#allocation2 + $0x10] sm:$0xff]
    %v58 = vld [vmem:[#allocation2 + $0x18] sm:$0xff]
    %v59 = vld [vmem:[#allocation2 + $0x20] sm:$0xff]
    %v60 = vld [vmem:[#allocation2 + $0x28] sm:$0xff]
    %v61 = vld [vmem:[#allocation2 + $0x30] sm:$0xff]
    %v62 = vld [vmem:[#allocation2 + $0x38] sm:$0xff]
    %v63 = vld [vmem:[#allocation2 + $0x40] sm:$0xff]
    %v64 = vld [vmem:[#allocation2 + $0x48] sm:$0xff]
    %v65 = vld [vmem:[#allocation2 + $0x50] sm:$0xff]
    %v66 = vld [vmem:[#allocation2 + $0x58] sm:$0xff]
    %v67 = vld [vmem:[#allocation2 + $0x60] sm:$0xff]
    %v68 = vld [vmem:[#allocation2 + $0x68] sm:$0xff]
    %v69 = vld [vmem:[#allocation2 + $0x70] sm:$0xff]
    %v70 = vld [vmem:[#allocation2 + $0x78] sm:$0xff]
    %v71 = vld [vmem:[#allocation2 + $0x80] sm:$0xff]
    %v72 = vld [vmem:[#allocation2 + $0x88] sm:$0xff]
    %v73 = vld [vmem:[#allocation2 + $0x90] sm:$0xff]
    %v74 = vld [vmem:[#allocation2 + $0x98] sm:$0xff]
    %v75 = vld [vmem:[#allocation2 + $0xa0] sm:$0xff]
    %v76 = vld [vmem:[#allocation2 + $0xa8] sm:$0xff]
    %v77 = vld [vmem:[#allocation2 + $0xb0] sm:$0xff]
    %v78 = vld [vmem:[#allocation2 + $0xb8] sm:$0xff]
    %v79 = vld [vmem:[#allocation2 + $0xc0] sm:$0xff]
    %v80 = vld [vmem:[#allocation2 + $0xc8] sm:$0xff]
    %v81 = vld [vmem:[#allocation2 + $0xd0] sm:$0xff]
    %v82 = vld [vmem:[#allocation2 + $0xd8] sm:$0xff]
    %v83 = vld [vmem:[#allocation2 + $0xe0] sm:$0xff]
    %v84 = vld [vmem:[#allocation2 + $0xe8] sm:$0xff]
    %v85 = vld [vmem:[#allocation2 + $0xf0] sm:$0xff]
    %v86 = vld [vmem:[#allocation2 + $0xf8] sm:$0xff]
    %v87 = vld [vmem:[#allocation2 + $0x100] sm:$0xff]
    %v88 = vld [vmem:[#allocation2 + $0x108] sm:$0xff]
    %v89 = vld [vmem:[#allocation2 + $0x110] sm:$0xff]
    %v90 = vld [vmem:[#allocation2 + $0x118] sm:$0xff]
    %v91 = vld [vmem:[#allocation2 + $0x120] sm:$0xff]
    %v92 = vld [vmem:[#allocation2 + $0x128] sm:$0xff]
    %v93 = vld [vmem:[#allocation2 + $0x130] sm:$0xff]
    %v94 = vld [vmem:[#allocation2 + $0x138] sm:$0xff]
    %v95 = vld [vmem:[#allocation2 + $0x140] sm:$0x11]
    %v96 = vld [vmem:[#allocation2 + $0x148] sm:$0x11]
    %v97 = vld [vmem:[#allocation5] sm:$0xf]
    %v98 = vld [vmem:[#allocation5 + $0x4] sm:$0xf]
    %v99 = vld [vmem:[#allocation5 + $0x8] sm:$0xf]
    %v100 = vld [vmem:[#allocation5 + $0xc] sm:$0xf]
    %v101 = vld [vmem:[#allocation5 + $0x10] sm:$0xf]
    %v102 = vld [vmem:[#allocation5 + $0x14] sm:$0xf]
    %v103 = vld [vmem:[#allocation5 + $0x18] sm:$0xf]
    %v104 = vld [vmem:[#allocation5 + $0x1c] sm:$0xf]
    %v105 = vld [vmem:[#allocation5 + $0x20] sm:$0xf]
    %v106 = vld [vmem:[#allocation5 + $0x24] sm:$0xf]
    %v107 = vld [vmem:[#allocation5 + $0x28] sm:$0xf]
    %v108 = vld [vmem:[#allocation5 + $0x2c] sm:$0xf]
    %v109 = vld [vmem:[#allocation5 + $0x30] sm:$0xf]
    %v110 = vld [vmem:[#allocation5 + $0x34] sm:$0xf]
    %v111 = vld [vmem:[#allocation5 + $0x38] sm:$0xf]
    %v112 = vld [vmem:[#allocation5 + $0x3c] sm:$0xf]
    %v113 = vld [vmem:[#allocation5 + $0x40] sm:$0xf]
    %v114 = vld [vmem:[#allocation5 + $0x44] sm:$0xf]
    %v115 = vld [vmem:[#allocation5 + $0x48] sm:$0xf]
    %v116 = vld [vmem:[#allocation5 + $0x4c] sm:$0xf]
    %v117 = vld [vmem:[#allocation5 + $0x50] sm:$0xf]
    %v118 = vld [vmem:[#allocation5 + $0x54] sm:$0xf]
    %v119 = vld [vmem:[#allocation5 + $0x58] sm:$0xf]
    %v120 = vld [vmem:[#allocation5 + $0x5c] sm:$0xf]
    %v121 = vld [vmem:[#allocation5 + $0x60] sm:$0xf]
    %v122 = vld [vmem:[#allocation5 + $0x64] sm:$0xf]
    %v123 = vld [vmem:[#allocation5 + $0x68] sm:$0xf]
    %v124 = vld [vmem:[#allocation5 + $0x6c] sm:$0xf]
    %v125 = vld [vmem:[#allocation5 + $0x70] sm:$0xf]
    %v126 = vld [vmem:[#allocation5 + $0x74] sm:$0xf]
    %v127 = vld [vmem:[#allocation5 + $0x78] sm:$0xf]
    %v128 = vld [vmem:[#allocation5 + $0x7c] sm:$0xf]
    %v129 = vld [vmem:[#allocation5 + $0x80] sm:$0xf]
    %v130 = vld [vmem:[#allocation5 + $0x84] sm:$0xf]
    %v131 = vld [vmem:[#allocation5 + $0x88] sm:$0xf]
    %v132 = vld [vmem:[#allocation5 + $0x8c] sm:$0xf]
    %v133 = vld [vmem:[#allocation5 + $0x90] sm:$0xf]
    %v134 = vld [vmem:[#allocation5 + $0x94] sm:$0xf]
    %v135 = vld [vmem:[#allocation5 + $0x98] sm:$0xf]
    %v136 = vld [vmem:[#allocation5 + $0x9c] sm:$0xf]
    %v137 = vld [vmem:[#allocation5 + $0xa0] sm:$0xf]
    %v138 = vld [vmem:[#allocation5 + $0xa4] sm:$0xf]
    %v139 = vld [vmem:[#allocation5 + $0xa8] sm:$0xf]
    %v140 = vld [vmem:[#allocation5 + $0xac] sm:$0xf]
    %v141 = vld [vmem:[#allocation5 + $0xb0] sm:$0xf]
    %v142 = vld [vmem:[#allocation5 + $0xb4] sm:$0xf]
    %v143 = vld [vmem:[#allocation5 + $0xb8] sm:$0xf]
    %v144 = vld [vmem:[#allocation5 + $0xbc] sm:$0xf]
    %v145 = vld [vmem:[#allocation5 + $0xc0] sm:$0xf]
    %v146 = vld [vmem:[#allocation5 + $0xc4] sm:$0xf]
    %v147 = vld [vmem:[#allocation5 + $0xc8] sm:$0xf]
    %v148 = vld [vmem:[#allocation5 + $0xcc] sm:$0xf]
    %v149 = vld [vmem:[#allocation5 + $0xd0] sm:$0xf]
    %v150 = vld [vmem:[#allocation5 + $0xd4] sm:$0xf]
    %v151 = vld [vmem:[#allocation5 + $0xd8] sm:$0xf]
    %v152 = vld [vmem:[#allocation5 + $0xdc] sm:$0xf]
    %v153 = vld [vmem:[#allocation5 + $0xe0] sm:$0xf]
    %v154 = vld [vmem:[#allocation5 + $0xe4] sm:$0xf]
    %v155 = vld [vmem:[#allocation5 + $0xe8] sm:$0xf]
    %v156 = vld [vmem:[#allocation5 + $0xec] sm:$0xf]
    %v157 = vld [vmem:[#allocation5 + $0xf0] sm:$0xf]
    %v158 = vld [vmem:[#allocation5 + $0xf4] sm:$0xf]
    %v159 = vld [vmem:[#allocation5 + $0xf8] sm:$0xf]
    %v160 = vld [vmem:[#allocation5 + $0xfc] sm:$0xf]
    %v161 = vld [vmem:[#allocation7] sm:$0x1]
    %v163 = vlaneseq
    %v164 = vshrl.u32 %v163, 7
    %v165 = vsub.s32 0, %v164
    %v166 = vrot.slane %v161, %v165
    %v210 = vunpack.c.l.b16 %v55
    %v211 = vunpack.c.h.b16 %v55
    %v212 = vunpack.c.l.b16 %v56
    %v213 = vunpack.c.h.b16 %v56
    %v214 = vunpack.c.l.b16 %v57
    %v215 = vunpack.c.h.b16 %v57
    %v216 = vunpack.c.l.b16 %v58
    %v217 = vunpack.c.h.b16 %v58
    %v218 = vunpack.c.l.b16 %v59
    %v219 = vunpack.c.h.b16 %v59
    %v220 = vunpack.c.l.b16 %v60
    %v221 = vunpack.c.h.b16 %v60
    %v222 = vunpack.c.l.b16 %v61
    %v223 = vunpack.c.h.b16 %v61
    %v224 = vunpack.c.l.b16 %v62
    %v225 = vunpack.c.h.b16 %v62
    %v226 = vunpack.c.l.b16 %v63
    %v227 = vunpack.c.h.b16 %v63
    %v228 = vunpack.c.l.b16 %v64
    %v229 = vunpack.c.h.b16 %v64
    %v230 = vunpack.c.l.b16 %v65
    %v231 = vunpack.c.h.b16 %v65
    %v232 = vunpack.c.l.b16 %v66
    %v233 = vunpack.c.h.b16 %v66
    %v234 = vunpack.c.l.b16 %v67
    %v235 = vunpack.c.h.b16 %v67
    %v236 = vunpack.c.l.b16 %v68
    %v237 = vunpack.c.h.b16 %v68
    %v238 = vunpack.c.l.b16 %v69
    %v239 = vunpack.c.h.b16 %v69
    %v240 = vunpack.c.l.b16 %v70
    %v241 = vunpack.c.h.b16 %v70
    %v242 = vunpack.c.l.b16 %v71
    %v243 = vunpack.c.h.b16 %v71
    %v244 = vunpack.c.l.b16 %v72
    %v245 = vunpack.c.h.b16 %v72
    %v246 = vunpack.c.l.b16 %v73
    %v247 = vunpack.c.h.b16 %v73
    %v248 = vunpack.c.l.b16 %v74
    %v249 = vunpack.c.h.b16 %v74
    %v250 = vunpack.c.l.b16 %v75
    %v251 = vunpack.c.h.b16 %v75
    %v252 = vunpack.c.l.b16 %v76
    %v253 = vunpack.c.h.b16 %v76
    %v254 = vunpack.c.l.b16 %v77
    %v255 = vunpack.c.h.b16 %v77
    %v256 = vunpack.c.l.b16 %v78
    %v257 = vunpack.c.h.b16 %v78
    %v258 = vunpack.c.l.b16 %v79
    %v259 = vunpack.c.h.b16 %v79
    %v260 = vunpack.c.l.b16 %v80
    %v261 = vunpack.c.h.b16 %v80
    %v262 = vunpack.c.l.b16 %v81
    %v263 = vunpack.c.h.b16 %v81
    %v264 = vunpack.c.l.b16 %v82
    %v265 = vunpack.c.h.b16 %v82
    %v266 = vunpack.c.l.b16 %v83
    %v267 = vunpack.c.h.b16 %v83
    %v268 = vunpack.c.l.b16 %v84
    %v269 = vunpack.c.h.b16 %v84
    %v270 = vunpack.c.l.b16 %v85
    %v271 = vunpack.c.h.b16 %v85
    %v272 = vunpack.c.l.b16 %v86
    %v273 = vunpack.c.h.b16 %v86
    %v274 = vunpack.c.l.b16 %v87
    %v275 = vunpack.c.h.b16 %v87
    %v276 = vunpack.c.l.b16 %v88
    %v277 = vunpack.c.h.b16 %v88
    %v278 = vunpack.c.l.b16 %v89
    %v279 = vunpack.c.h.b16 %v89
    %v280 = vunpack.c.l.b16 %v90
    %v281 = vunpack.c.h.b16 %v90
    %v282 = vunpack.c.l.b16 %v91
    %v283 = vunpack.c.h.b16 %v91
    %v284 = vunpack.c.l.b16 %v92
    %v285 = vunpack.c.h.b16 %v92
    %v286 = vunpack.c.l.b16 %v93
    %v287 = vunpack.c.h.b16 %v93
    %v288 = vunpack.c.l.b16 %v94
    %v289 = vunpack.c.h.b16 %v94
    %v290 = vunpack.c.l.b16 %v95
    %v291 = vunpack.c.h.b16 %v95
    %v292 = vunpack.c.l.b16 %v96
    %v293 = vunpack.c.h.b16 %v96
    %v294 = vpack.c.b16 %v214, %v210
    %v295 = vpack.c.b16 %v215, %v211
    %v296 = vpack.c.b16 %v216, %v212
    %v297 = vpack.c.b16 %v217, %v213
    %v298 = vpack.c.b16 %v222, %v218
    %v299 = vpack.c.b16 %v223, %v219
    %v300 = vpack.c.b16 %v224, %v220
    %v301 = vpack.c.b16 %v225, %v221
    %v302 = vpack.c.b16 %v230, %v226
    %v303 = vpack.c.b16 %v231, %v227
    %v304 = vpack.c.b16 %v232, %v228
    %v305 = vpack.c.b16 %v233, %v229
    %v306 = vpack.c.b16 %v238, %v234
    %v307 = vpack.c.b16 %v239, %v235
    %v308 = vpack.c.b16 %v240, %v236
    %v309 = vpack.c.b16 %v241, %v237
    %v310 = vpack.c.b16 %v246, %v242
    %v311 = vpack.c.b16 %v247, %v243
    %v312 = vpack.c.b16 %v248, %v244
    %v313 = vpack.c.b16 %v249, %v245
    %v314 = vpack.c.b16 %v254, %v250
    %v315 = vpack.c.b16 %v255, %v251
    %v316 = vpack.c.b16 %v256, %v252
    %v317 = vpack.c.b16 %v257, %v253
    %v318 = vpack.c.b16 %v262, %v258
    %v319 = vpack.c.b16 %v263, %v259
    %v320 = vpack.c.b16 %v264, %v260
    %v321 = vpack.c.b16 %v265, %v261
    %v322 = vpack.c.b16 %v270, %v266
    %v323 = vpack.c.b16 %v271, %v267
    %v324 = vpack.c.b16 %v272, %v268
    %v325 = vpack.c.b16 %v273, %v269
    %v326 = vpack.c.b16 %v278, %v274
    %v327 = vpack.c.b16 %v279, %v275
    %v328 = vpack.c.b16 %v280, %v276
    %v329 = vpack.c.b16 %v281, %v277
    %v330 = vpack.c.b16 %v286, %v282
    %v331 = vpack.c.b16 %v287, %v283
    %v332 = vpack.c.b16 %v288, %v284
    %v333 = vpack.c.b16 %v289, %v285
    %v334 = vpack.c.b16 %v290, %v290
    %v335 = vpack.c.b16 %v291, %v291
    %v336 = vpack.c.b16 %v292, %v292
    %v337 = vpack.c.b16 %v293, %v293
    %v446 = vunpack.c.l.b16 %v97
    %v447 = vunpack.c.l.b16 %v98
    %v448 = vunpack.c.l.b16 %v99
    %v449 = vunpack.c.l.b16 %v100
    %v450 = vunpack.c.l.b16 %v101
    %v451 = vunpack.c.l.b16 %v102
    %v452 = vunpack.c.l.b16 %v103
    %v453 = vunpack.c.l.b16 %v104
    %v454 = vunpack.c.l.b16 %v105
    %v455 = vunpack.c.l.b16 %v106
    %v456 = vunpack.c.l.b16 %v107
    %v457 = vunpack.c.l.b16 %v108
    %v458 = vunpack.c.l.b16 %v109
    %v459 = vunpack.c.l.b16 %v110
    %v460 = vunpack.c.l.b16 %v111
    %v461 = vunpack.c.l.b16 %v112
    %v462 = vunpack.c.l.b16 %v113
    %v463 = vunpack.c.l.b16 %v114
    %v464 = vunpack.c.l.b16 %v115
    %v465 = vunpack.c.l.b16 %v116
    %v466 = vunpack.c.l.b16 %v117
    %v467 = vunpack.c.l.b16 %v118
    %v468 = vunpack.c.l.b16 %v119
    %v469 = vunpack.c.l.b16 %v120
    %v470 = vunpack.c.l.b16 %v121
    %v471 = vunpack.c.l.b16 %v122
    %v472 = vunpack.c.l.b16 %v123
    %v473 = vunpack.c.l.b16 %v124
    %v474 = vunpack.c.l.b16 %v125
    %v475 = vunpack.c.l.b16 %v126
    %v476 = vunpack.c.l.b16 %v127
    %v477 = vunpack.c.l.b16 %v128
    %v478 = vunpack.c.l.b16 %v129
    %v479 = vunpack.c.l.b16 %v130
    %v480 = vunpack.c.l.b16 %v131
    %v481 = vunpack.c.l.b16 %v132
    %v482 = vunpack.c.l.b16 %v133
    %v483 = vunpack.c.l.b16 %v134
    %v484 = vunpack.c.l.b16 %v135
    %v485 = vunpack.c.l.b16 %v136
    %v486 = vunpack.c.l.b16 %v137
    %v487 = vunpack.c.l.b16 %v138
    %v488 = vunpack.c.l.b16 %v139
    %v489 = vunpack.c.l.b16 %v140
    %v490 = vunpack.c.l.b16 %v141
    %v491 = vunpack.c.l.b16 %v142
    %v492 = vunpack.c.l.b16 %v143
    %v493 = vunpack.c.l.b16 %v144
    %v494 = vunpack.c.l.b16 %v145
    %v495 = vunpack.c.l.b16 %v146
    %v496 = vunpack.c.l.b16 %v147
    %v497 = vunpack.c.l.b16 %v148
    %v498 = vunpack.c.l.b16 %v149
    %v499 = vunpack.c.l.b16 %v150
    %v500 = vunpack.c.l.b16 %v151
    %v501 = vunpack.c.l.b16 %v152
    %v502 = vunpack.c.l.b16 %v153
    %v503 = vunpack.c.l.b16 %v154
    %v504 = vunpack.c.l.b16 %v155
    %v505 = vunpack.c.l.b16 %v156
    %v506 = vunpack.c.l.b16 %v157
    %v507 = vunpack.c.l.b16 %v158
    %v508 = vunpack.c.l.b16 %v159
    %v509 = vunpack.c.l.b16 %v160
    %v510 = vpack.c.b16 %v447, %v446
    %v511 = vpack.c.b16 %v449, %v448
    %v512 = vpack.c.b16 %v451, %v450
    %v513 = vpack.c.b16 %v453, %v452
    %v514 = vpack.c.b16 %v455, %v454
    %v515 = vpack.c.b16 %v457, %v456
    %v516 = vpack.c.b16 %v459, %v458
    %v517 = vpack.c.b16 %v461, %v460
    %v518 = vpack.c.b16 %v463, %v462
    %v519 = vpack.c.b16 %v465, %v464
    %v520 = vpack.c.b16 %v467, %v466
    %v521 = vpack.c.b16 %v469, %v468
    %v522 = vpack.c.b16 %v471, %v470
    %v523 = vpack.c.b16 %v473, %v472
    %v524 = vpack.c.b16 %v475, %v474
    %v525 = vpack.c.b16 %v477, %v476
    %v526 = vpack.c.b16 %v479, %v478
    %v527 = vpack.c.b16 %v481, %v480
    %v528 = vpack.c.b16 %v483, %v482
    %v529 = vpack.c.b16 %v485, %v484
    %v530 = vpack.c.b16 %v487, %v486
    %v531 = vpack.c.b16 %v489, %v488
    %v532 = vpack.c.b16 %v491, %v490
    %v533 = vpack.c.b16 %v493, %v492
    %v534 = vpack.c.b16 %v495, %v494
    %v535 = vpack.c.b16 %v497, %v496
    %v536 = vpack.c.b16 %v499, %v498
    %v537 = vpack.c.b16 %v501, %v500
    %v538 = vpack.c.b16 %v503, %v502
    %v539 = vpack.c.b16 %v505, %v504
    %v540 = vpack.c.b16 %v507, %v506
    %v541 = vpack.c.b16 %v509, %v508
    %574 = vmatprep.subr.bf16.mxu0 0
    %575 = vmatpush1.bf16.msra.mxu0 %v510
    %576 = vmatprep.subr.bf16.mxu0 0
    %577 = vmatpush1.bf16.msra.mxu0 %v511
    %578 = vmatprep.subr.bf16.mxu0 0
    %579 = vmatpush1.bf16.msra.mxu0 %v512
    %580 = vmatprep.subr.bf16.mxu0 0
    %581 = vmatpush1.bf16.msra.mxu0 %v513
    %582 = vmatprep.subr.bf16.mxu0 0
    %583 = vmatpush1.bf16.msra.mxu0 %v514
    %584 = vmatprep.subr.bf16.mxu0 0
    %585 = vmatpush1.bf16.msra.mxu0 %v515
    %586 = vmatprep.subr.bf16.mxu0 0
    %587 = vmatpush1.bf16.msra.mxu0 %v516
    %588 = vmatprep.subr.bf16.mxu0 0
    %589 = vmatpush1.bf16.msra.mxu0 %v517
    %590 = vmatprep.subr.bf16.mxu0 0
    %591 = vmatpush1.bf16.msra.mxu0 %v518
    %592 = vmatprep.subr.bf16.mxu0 0
    %593 = vmatpush1.bf16.msra.mxu0 %v519
    %594 = vmatprep.subr.bf16.mxu0 0
    %595 = vmatpush1.bf16.msra.mxu0 %v520
    %596 = vmatprep.subr.bf16.mxu0 0
    %597 = vmatpush1.bf16.msra.mxu0 %v521
    %598 = vmatprep.subr.bf16.mxu0 0
    %599 = vmatpush1.bf16.msra.mxu0 %v522
    %600 = vmatprep.subr.bf16.mxu0 0
    %601 = vmatpush1.bf16.msra.mxu0 %v523
    %602 = vmatprep.subr.bf16.mxu0 0
    %603 = vmatpush1.bf16.msra.mxu0 %v524
    %604 = vmatprep.subr.bf16.mxu0 0
    %605 = vmatpush1.bf16.msra.mxu0 %v525
    %606 = vmatprep.mubr.bf16.mxu0 %v295
    %607 = vmatmul.mubr.bf16.gmra.mrb[0].mxu0 %v294
    %v608 = vpop.f32.mrb[0].mxu0
    %v609 = vadd.f32 %v166, %v608
    %v610 = vpop.f32.mrb[0].mxu0
    %v611 = vpop.f32.mrb[0].mxu0
    %v612 = vadd.f32 %v166, %v611
    %v613 = vpop.f32.mrb[0].mxu0
    %614 = vmatprep.mubr.bf16.mxu0 %v299
    %615 = vmatmul.mubr.bf16.gmra.mrb[0].mxu0 %v298
    %v616 = vpop.f32.mrb[0].mxu0
    %v617 = vadd.f32 %v166, %v616
    %v618 = vpop.f32.mrb[0].mxu0
    %v619 = vpop.f32.mrb[0].mxu0
    %v620 = vadd.f32 %v166, %v619
    %v621 = vpop.f32.mrb[0].mxu0
    %622 = vmatprep.mubr.bf16.mxu0 %v303
    %623 = vmatmul.mubr.bf16.gmra.mrb[0].mxu0 %v302
    %v624 = vpop.f32.mrb[0].mxu0
    %v625 = vadd.f32 %v166, %v624
    %v626 = vpop.f32.mrb[0].mxu0
    %v627 = vpop.f32.mrb[0].mxu0
    %v628 = vadd.f32 %v166, %v627
    %v629 = vpop.f32.mrb[0].mxu0
    %630 = vmatprep.mubr.bf16.mxu0 %v307
    %631 = vmatmul.mubr.bf16.gmra.mrb[0].mxu0 %v306
    %v632 = vpop.f32.mrb[0].mxu0
    %v633 = vadd.f32 %v166, %v632
    %v634 = vpop.f32.mrb[0].mxu0
    %v635 = vpop.f32.mrb[0].mxu0
    %v636 = vadd.f32 %v166, %v635
    %v637 = vpop.f32.mrb[0].mxu0
    %638 = vmatprep.mubr.bf16.mxu0 %v311
    %639 = vmatmul.mubr.bf16.gmra.mrb[0].mxu0 %v310
    %v640 = vpop.f32.mrb[0].mxu0
    %v641 = vadd.f32 %v166, %v640
    %v642 = vpop.f32.mrb[0].mxu0
    %v643 = vpop.f32.mrb[0].mxu0
    %v644 = vadd.f32 %v166, %v643
    %v645 = vpop.f32.mrb[0].mxu0
    %646 = vmatprep.mubr.bf16.mxu0 %v315
    %647 = vmatmul.mubr.bf16.gmra.mrb[0].mxu0 %v314
    %v648 = vpop.f32.mrb[0].mxu0
    %v649 = vadd.f32 %v166, %v648
    %v650 = vpop.f32.mrb[0].mxu0
    %v651 = vpop.f32.mrb[0].mxu0
    %v652 = vadd.f32 %v166, %v651
    %v653 = vpop.f32.mrb[0].mxu0
    %654 = vmatprep.mubr.bf16.mxu0 %v319
    %655 = vmatmul.mubr.bf16.gmra.mrb[0].mxu0 %v318
    %v656 = vpop.f32.mrb[0].mxu0
    %v657 = vadd.f32 %v166, %v656
    %v658 = vpop.f32.mrb[0].mxu0
    %v659 = vpop.f32.mrb[0].mxu0
    %v660 = vadd.f32 %v166, %v659
    %v661 = vpop.f32.mrb[0].mxu0
    %662 = vmatprep.mubr.bf16.mxu0 %v323
    %663 = vmatmul.mubr.bf16.gmra.mrb[0].mxu0 %v322
    %v664 = vpop.f32.mrb[0].mxu0
    %v665 = vadd.f32 %v166, %v664
    %v666 = vpop.f32.mrb[0].mxu0
    %v667 = vpop.f32.mrb[0].mxu0
    %v668 = vadd.f32 %v166, %v667
    %v669 = vpop.f32.mrb[0].mxu0
    %670 = vmatprep.mubr.bf16.mxu0 %v327
    %671 = vmatmul.mubr.bf16.gmra.mrb[0].mxu0 %v326
    %v672 = vpop.f32.mrb[0].mxu0
    %v673 = vadd.f32 %v166, %v672
    %v674 = vpop.f32.mrb[0].mxu0
    %v675 = vpop.f32.mrb[0].mxu0
    %v676 = vadd.f32 %v166, %v675
    %v677 = vpop.f32.mrb[0].mxu0
    %678 = vmatprep.mubr.bf16.mxu0 %v331
    %679 = vmatmul.mubr.bf16.gmra.mrb[0].mxu0 %v330
    %v680 = vpop.f32.mrb[0].mxu0
    %v681 = vadd.f32 %v166, %v680
    %v682 = vpop.f32.mrb[0].mxu0
    %v683 = vpop.f32.mrb[0].mxu0
    %v684 = vadd.f32 %v166, %v683
    %v685 = vpop.f32.mrb[0].mxu0
    %686 = vmatprep.mubr.bf16.mxu0 %v335
    %687 = vmatmul.mubr.bf16.gmra.mrb[0].mxu0 %v334
    %v688 = vpop.f32.mrb[0].mxu0
    %v689 = vadd.f32 %v166, %v688
    %v690 = vpop.f32.mrb[0].mxu0
    %v691 = vpop.f32.mrb[0].mxu0
    %v692 = vpop.f32.mrb[0].mxu0
    %693 = vdwg.mxu0
    %694 = vmatprep.subr.bf16.mxu0 0
    %695 = vmatpush1.bf16.msra.mxu0 %v526
    %696 = vmatprep.subr.bf16.mxu0 0
    %697 = vmatpush1.bf16.msra.mxu0 %v527
    %698 = vmatprep.subr.bf16.mxu0 0
    %699 = vmatpush1.bf16.msra.mxu0 %v528
    %700 = vmatprep.subr.bf16.mxu0 0
    %701 = vmatpush1.bf16.msra.mxu0 %v529
    %702 = vmatprep.subr.bf16.mxu0 0
    %703 = vmatpush1.bf16.msra.mxu0 %v530
    %704 = vmatprep.subr.bf16.mxu0 0
    %705 = vmatpush1.bf16.msra.mxu0 %v531
    %706 = vmatprep.subr.bf16.mxu0 0
    %707 = vmatpush1.bf16.msra.mxu0 %v532
    %708 = vmatprep.subr.bf16.mxu0 0
    %709 = vmatpush1.bf16.msra.mxu0 %v533
    %710 = vmatprep.subr.bf16.mxu0 0
    %711 = vmatpush1.bf16.msra.mxu0 %v534
    %712 = vmatprep.subr.bf16.mxu0 0
    %713 = vmatpush1.bf16.msra.mxu0 %v535
    %714 = vmatprep.subr.bf16.mxu0 0
    %715 = vmatpush1.bf16.msra.mxu0 %v536
    %716 = vmatprep.subr.bf16.mxu0 0
    %717 = vmatpush1.bf16.msra.mxu0 %v537
    %718 = vmatprep.subr.bf16.mxu0 0
    %719 = vmatpush1.bf16.msra.mxu0 %v538
    %720 = vmatprep.subr.bf16.mxu0 0
    %721 = vmatpush1.bf16.msra.mxu0 %v539
    %722 = vmatprep.subr.bf16.mxu0 0
    %723 = vmatpush1.bf16.msra.mxu0 %v540
    %724 = vmatprep.subr.bf16.mxu0 0
    %725 = vmatpush1.bf16.msra.mxu0 %v541
    %726 = vmatprep.mubr.bf16.mxu0 %v297
    %727 = vmatmul.mubr.bf16.gmra.mrb[0].mxu0 %v296
    %v728 = vpop.f32.mrb[0].mxu0
    %v729 = vadd.f32 %v609, %v728
    %v730 = vpop.f32.mrb[0].mxu0
    %v731 = vpop.f32.mrb[0].mxu0
    %v732 = vadd.f32 %v612, %v731
    %v733 = vpop.f32.mrb[0].mxu0
    %734 = vmatprep.mubr.bf16.mxu0 %v301
    %735 = vmatmul.mubr.bf16.gmra.mrb[0].mxu0 %v300
    %v736 = vpop.f32.mrb[0].mxu0
    %v737 = vadd.f32 %v617, %v736
    %v738 = vpop.f32.mrb[0].mxu0
    %v739 = vpop.f32.mrb[0].mxu0
    %v740 = vadd.f32 %v620, %v739
    %v741 = vpop.f32.mrb[0].mxu0
    %742 = vmatprep.mubr.bf16.mxu0 %v305
    %743 = vmatmul.mubr.bf16.gmra.mrb[0].mxu0 %v304
    %v744 = vpop.f32.mrb[0].mxu0
    %v745 = vadd.f32 %v625, %v744
    %v746 = vpop.f32.mrb[0].mxu0
    %v747 = vpop.f32.mrb[0].mxu0
    %v748 = vadd.f32 %v628, %v747
    %v749 = vpop.f32.mrb[0].mxu0
    %750 = vmatprep.mubr.bf16.mxu0 %v309
    %751 = vmatmul.mubr.bf16.gmra.mrb[0].mxu0 %v308
    %v752 = vpop.f32.mrb[0].mxu0
    %v753 = vadd.f32 %v633, %v752
    %v754 = vpop.f32.mrb[0].mxu0
    %v755 = vpop.f32.mrb[0].mxu0
    %v756 = vadd.f32 %v636, %v755
    %v757 = vpop.f32.mrb[0].mxu0
    %758 = vmatprep.mubr.bf16.mxu0 %v313
    %759 = vmatmul.mubr.bf16.gmra.mrb[0].mxu0 %v312
    %v760 = vpop.f32.mrb[0].mxu0
    %v761 = vadd.f32 %v641, %v760
    %v762 = vpop.f32.mrb[0].mxu0
    %v763 = vpop.f32.mrb[0].mxu0
    %v764 = vadd.f32 %v644, %v763
    %v765 = vpop.f32.mrb[0].mxu0
    %766 = vmatprep.mubr.bf16.mxu0 %v317
    %767 = vmatmul.mubr.bf16.gmra.mrb[0].mxu0 %v316
    %v768 = vpop.f32.mrb[0].mxu0
    %v769 = vadd.f32 %v649, %v768
    %v770 = vpop.f32.mrb[0].mxu0
    %v771 = vpop.f32.mrb[0].mxu0
    %v772 = vadd.f32 %v652, %v771
    %v773 = vpop.f32.mrb[0].mxu0
    %774 = vmatprep.mubr.bf16.mxu0 %v321
    %775 = vmatmul.mubr.bf16.gmra.mrb[0].mxu0 %v320
    %v776 = vpop.f32.mrb[0].mxu0
    %v777 = vadd.f32 %v657, %v776
    %v778 = vpop.f32.mrb[0].mxu0
    %v779 = vpop.f32.mrb[0].mxu0
    %v780 = vadd.f32 %v660, %v779
    %v781 = vpop.f32.mrb[0].mxu0
    %782 = vmatprep.mubr.bf16.mxu0 %v325
    %783 = vmatmul.mubr.bf16.gmra.mrb[0].mxu0 %v324
    %v784 = vpop.f32.mrb[0].mxu0
    %v785 = vadd.f32 %v665, %v784
    %v786 = vpop.f32.mrb[0].mxu0
    %v787 = vpop.f32.mrb[0].mxu0
    %v788 = vadd.f32 %v668, %v787
    %v789 = vpop.f32.mrb[0].mxu0
    %790 = vmatprep.mubr.bf16.mxu0 %v329
    %791 = vmatmul.mubr.bf16.gmra.mrb[0].mxu0 %v328
    %v792 = vpop.f32.mrb[0].mxu0
    %v793 = vadd.f32 %v673, %v792
    %v794 = vpop.f32.mrb[0].mxu0
    %v795 = vpop.f32.mrb[0].mxu0
    %v796 = vadd.f32 %v676, %v795
    %v797 = vpop.f32.mrb[0].mxu0
    %798 = vmatprep.mubr.bf16.mxu0 %v333
    %799 = vmatmul.mubr.bf16.gmra.mrb[0].mxu0 %v332
    %v800 = vpop.f32.mrb[0].mxu0
    %v801 = vadd.f32 %v681, %v800
    %v802 = vpop.f32.mrb[0].mxu0
    %v803 = vpop.f32.mrb[0].mxu0
    %v804 = vadd.f32 %v684, %v803
    %v805 = vpop.f32.mrb[0].mxu0
    %806 = vmatprep.mubr.bf16.mxu0 %v337
    %807 = vmatmul.mubr.bf16.gmra.mrb[0].mxu0 %v336
    %v808 = vpop.f32.mrb[0].mxu0
    %v809 = vadd.f32 %v689, %v808
    %v810 = vpop.f32.mrb[0].mxu0
    %v811 = vpop.f32.mrb[0].mxu0
    %v812 = vpop.f32.mrb[0].mxu0
    %813 = vdwg.mxu0
    %v814 = vmax.f32 %v729, 0.0
    %v815 = vmax.f32 %v732, 0.0
    %v816 = vmax.f32 %v737, 0.0
    %v817 = vmax.f32 %v740, 0.0
    %v818 = vmax.f32 %v745, 0.0
    %v819 = vmax.f32 %v748, 0.0
    %v820 = vmax.f32 %v753, 0.0
    %v821 = vmax.f32 %v756, 0.0
    %v822 = vmax.f32 %v761, 0.0
    %v823 = vmax.f32 %v764, 0.0
    %v824 = vmax.f32 %v769, 0.0
    %v825 = vmax.f32 %v772, 0.0
    %v826 = vmax.f32 %v777, 0.0
    %v827 = vmax.f32 %v780, 0.0
    %v828 = vmax.f32 %v785, 0.0
    %v829 = vmax.f32 %v788, 0.0
    %v830 = vmax.f32 %v793, 0.0
    %v831 = vmax.f32 %v796, 0.0
    %v832 = vmax.f32 %v801, 0.0
    %v833 = vmax.f32 %v804, 0.0
    %v834 = vmax.f32 %v809, 0.0
    %v835 = vpack.c.bf16 %v815, %v814
    %v836 = vpack.c.bf16 %v817, %v816
    %v837 = vpack.c.bf16 %v819, %v818
    %v838 = vpack.c.bf16 %v821, %v820
    %v839 = vpack.c.bf16 %v823, %v822
    %v840 = vpack.c.bf16 %v825, %v824
    %v841 = vpack.c.bf16 %v827, %v826
    %v842 = vpack.c.bf16 %v829, %v828
    %v843 = vpack.c.bf16 %v831, %v830
    %v844 = vpack.c.bf16 %v833, %v832
    %v845 = vpack.c.bf16 %v834, %v834
    %v857 = vunpack.c.l.b16 %v835
    %v858 = vunpack.c.h.b16 %v835
    %v859 = vunpack.c.l.b16 %v836
    %v860 = vunpack.c.h.b16 %v836
    %v861 = vunpack.c.l.b16 %v837
    %v862 = vunpack.c.h.b16 %v837
    %v863 = vunpack.c.l.b16 %v838
    %v864 = vunpack.c.h.b16 %v838
    %v865 = vunpack.c.l.b16 %v839
    %v866 = vunpack.c.h.b16 %v839
    %v867 = vunpack.c.l.b16 %v840
    %v868 = vunpack.c.h.b16 %v840
    %v869 = vunpack.c.l.b16 %v841
    %v870 = vunpack.c.h.b16 %v841
    %v871 = vunpack.c.l.b16 %v842
    %v872 = vunpack.c.h.b16 %v842
    %v873 = vunpack.c.l.b16 %v843
    %v874 = vunpack.c.h.b16 %v843
    %v875 = vunpack.c.l.b16 %v844
    %v876 = vunpack.c.h.b16 %v844
    %v877 = vunpack.c.l.b16 %v845
    %v878 = vpack.c.b16 %v857, %v857
    %v879 = vpack.c.b16 %v858, %v858
    %v880 = vpack.c.b16 %v859, %v859
    %v881 = vpack.c.b16 %v860, %v860
    %v882 = vpack.c.b16 %v861, %v861
    %v883 = vpack.c.b16 %v862, %v862
    %v884 = vpack.c.b16 %v863, %v863
    %v885 = vpack.c.b16 %v864, %v864
    %v886 = vpack.c.b16 %v865, %v865
    %v887 = vpack.c.b16 %v866, %v866
    %v888 = vpack.c.b16 %v867, %v867
    %v889 = vpack.c.b16 %v868, %v868
    %v890 = vpack.c.b16 %v869, %v869
    %v891 = vpack.c.b16 %v870, %v870
    %v892 = vpack.c.b16 %v871, %v871
    %v893 = vpack.c.b16 %v872, %v872
    %v894 = vpack.c.b16 %v873, %v873
    %v895 = vpack.c.b16 %v874, %v874
    %v896 = vpack.c.b16 %v875, %v875
    %v897 = vpack.c.b16 %v876, %v876
    %v898 = vpack.c.b16 %v877, %v877
    %vm920 = vcmask 519168
    %921 = vst.msk [vmem:[#allocation8] sm:$0xf] %vm920, %v878
    %922 = vst.msk [vmem:[#allocation8 + $0x4] sm:$0xf] %vm920, %v879
    %923 = vst.msk [vmem:[#allocation8 + $0x8] sm:$0xf] %vm920, %v880
    %924 = vst.msk [vmem:[#allocation8 + $0xc] sm:$0xf] %vm920, %v881
    %925 = vst.msk [vmem:[#allocation8 + $0x10] sm:$0xf] %vm920, %v882
    %926 = vst.msk [vmem:[#allocation8 + $0x14] sm:$0xf] %vm920, %v883
    %927 = vst.msk [vmem:[#allocation8 + $0x18] sm:$0xf] %vm920, %v884
    %928 = vst.msk [vmem:[#allocation8 + $0x1c] sm:$0xf] %vm920, %v885
    %929 = vst.msk [vmem:[#allocation8 + $0x20] sm:$0xf] %vm920, %v886
    %930 = vst.msk [vmem:[#allocation8 + $0x24] sm:$0xf] %vm920, %v887
    %931 = vst.msk [vmem:[#allocation8 + $0x28] sm:$0xf] %vm920, %v888
    %932 = vst.msk [vmem:[#allocation8 + $0x2c] sm:$0xf] %vm920, %v889
    %933 = vst.msk [vmem:[#allocation8 + $0x30] sm:$0xf] %vm920, %v890
    %934 = vst.msk [vmem:[#allocation8 + $0x34] sm:$0xf] %vm920, %v891
    %935 = vst.msk [vmem:[#allocation8 + $0x38] sm:$0xf] %vm920, %v892
    %936 = vst.msk [vmem:[#allocation8 + $0x3c] sm:$0xf] %vm920, %v893
    %937 = vst.msk [vmem:[#allocation8 + $0x40] sm:$0xf] %vm920, %v894
    %938 = vst.msk [vmem:[#allocation8 + $0x44] sm:$0xf] %vm920, %v895
    %939 = vst.msk [vmem:[#allocation8 + $0x48] sm:$0xf] %vm920, %v896
    %940 = vst.msk [vmem:[#allocation8 + $0x4c] sm:$0xf] %vm920, %v897
    %vm941 = vcmask 516096
    %942 = vst.msk [vmem:[#allocation8 + $0x50] sm:$0x1] %vm941, %v898
    // Predicated region
    $region26: #{simple_cnn_forward.5} parent=1 // pred_check
      _
    $region27: #{simple_cnn_forward.5} parent=1 // pred_check_branch
      %944 = sbr.rel (0) target = $region29
    $region28: #{simple_cnn_forward.5} parent=1 // pred_region
      %s946 = ssub.s32 1344, 1344
      %947 = vsyncadd [#allocation4], %s946
      %s948 = sshll.u32 [#allocation8], 4
      %s949 = int_to_ptr.vmem [resolvable:$true] %s948
      %954 = dma.vmem_to_hbm [thread:$0]  %s949, 1344, %s3, [#allocation4], 64, 64, 4
    $region29: #{simple_cnn_forward.5} parent=1 // pred_fallthru
      _
    // Predicated region
    $region30: #{simple_cnn_forward.5} parent=1 // pred_check
      _
    $region31: #{simple_cnn_forward.5} parent=1 // pred_check_branch
      %956 = sbr.rel (0) target = $region33
    $region32: #{simple_cnn_forward.5} parent=1 // pred_region
      %957 = dma.done [#allocation4], 1344
    $region33: #{simple_cnn_forward.5} parent=1 // pred_fallthru
      _
    %958 = vsyncpa [#allocation3], 1
    %959 = vsyncpa [#allocation6], 1
    %960 = vsyncpa [#allocation4], 1

// kernel: simple_cnn_forward.6
$region0: #{simple_cnn_forward.6}
  #allocation0 [shape = 'u32[]', space=smem, size = 0x4, offset = 0x4, fixed_abs, tag = 'smem constant byte address 0x4 - core index']
  #allocation1 [shape = 'u32[144,128]{1,0:T(1,128)}', space=vmem, size = 0x12000, scoped, tag = 'internal scratch']
  %s0 = inlined_call_operand.hbm [shape: bf16[98,576], index: 0, kind: input, shape index: {}]
  %s1 = inlined_call_operand.hbm [shape: bf16[576,64], index: 1, kind: input, shape index: {}]
  %s2 = inlined_call_operand.hbm [shape: f32[1,64], index: 2, kind: input, shape index: {}]
  %s3 = inlined_call_operand.hbm [shape: bf16[98,64], index: 3, kind: output, shape index: {}]
  %s4 = sld [smem:[#allocation0]]
  $region34: #{simple_cnn_forward.6} parent=0
    _
  %s6 = ssub.s32 1, %s4
  %s7 = scalar_select 0, %s6, %s4
  $region1: #{simple_cnn_forward.6} parent=0
    #allocation2 [shape = 'u8[133120]{0}', space=vmem, size = 0x20800, scoped, tag = 'input window, operand 0, single buffered']
    #allocation3 [shape = 's32[1]{0}', space=sflag, size = 0x4, scoped, tag = 'scoped memory for simple_cnn_forward.6']
    #allocation4 [shape = 's32[1]{0}', space=sflag, size = 0x4, scoped, tag = 'scoped memory for simple_cnn_forward.6']
    #allocation5 [shape = 'u8[147456]{0}', space=vmem, size = 0x24000, scoped, tag = 'input window, operand 1, single buffered']
    #allocation6 [shape = 's32[1]{0}', space=sflag, size = 0x4, scoped, tag = 'scoped memory for simple_cnn_forward.6']
    #allocation7 [shape = 'u8[512]{0}', space=vmem, size = 0x400, scoped, tag = 'input window, operand 2, single buffered']
    #allocation8 [shape = 'u8[26624]{0}', space=vmem, size = 0x6800, scoped, tag = 'output window, operand 0, single buffered']
    %8 = vsyncpa [#allocation3], 0
    %9 = vsyncpa [#allocation6], 0
    %10 = vsyncpa [#allocation4], 0
    // Predicated region
    $region2: #{simple_cnn_forward.6} parent=1 // pred_check
      _
    $region3: #{simple_cnn_forward.6} parent=1 // pred_check_branch
      %12 = sbr.rel (0) target = $region5
    $region4: #{simple_cnn_forward.6} parent=1 // pred_region
      %s14 = ssub.s32 4160, 4160
      %15 = vsyncadd [#allocation3], %s14
      %s16 = sshll.u32 [#allocation2], 4
      %s17 = int_to_ptr.vmem [resolvable:$true] %s16
      %22 = dma.hbm_to_vmem [thread:$0]  %s0, 4160, %s17, [#allocation3], 320, 320, 20
    $region5: #{simple_cnn_forward.6} parent=1 // pred_fallthru
      _
    // Predicated region
    $region6: #{simple_cnn_forward.6} parent=1 // pred_check
      _
    $region7: #{simple_cnn_forward.6} parent=1 // pred_check_branch
      %24 = sbr.rel (0) target = $region9
    $region8: #{simple_cnn_forward.6} parent=1 // pred_region
      %s26 = ssub.s32 4608, 4608
      %27 = vsyncadd [#allocation6], %s26
      %s28 = sshll.u32 [#allocation5], 4
      %s29 = int_to_ptr.vmem [resolvable:$true] %s28
      %34 = dma.hbm_to_vmem [thread:$0]  %s1, 4608, %s29, [#allocation6], 64, 64, 4
    $region9: #{simple_cnn_forward.6} parent=1 // pred_fallthru
      _
    // Predicated region
    $region10: #{simple_cnn_forward.6} parent=1 // pred_check
      _
    $region11: #{simple_cnn_forward.6} parent=1 // pred_check_branch
      %36 = sbr.rel (0) target = $region13
    $region12: #{simple_cnn_forward.6} parent=1 // pred_region
      %s38 = ssub.s32 16, 16
      %39 = vsyncadd [#allocation6], %s38
      %s41 = sshll.u32 [#allocation7], 4
      %s42 = int_to_ptr.vmem [resolvable:$true] %s41
      %44 = dma.hbm_to_vmem [thread:$0]  %s2, 16, %s42, [#allocation6]
    $region13: #{simple_cnn_forward.6} parent=1 // pred_fallthru
      _
    // Predicated region
    $region14: #{simple_cnn_forward.6} parent=1 // pred_check
      _
    $region15: #{simple_cnn_forward.6} parent=1 // pred_check_branch
      %46 = sbr.rel (0) target = $region17
    $region16: #{simple_cnn_forward.6} parent=1 // pred_region
      %47 = dma.done [#allocation3], 4160
    $region17: #{simple_cnn_forward.6} parent=1 // pred_fallthru
      _
    // Predicated region
    $region18: #{simple_cnn_forward.6} parent=1 // pred_check
      _
    $region19: #{simple_cnn_forward.6} parent=1 // pred_check_branch
      %49 = sbr.rel (0) target = $region21
    $region20: #{simple_cnn_forward.6} parent=1 // pred_region
      %50 = dma.done [#allocation6], 4608
    $region21: #{simple_cnn_forward.6} parent=1 // pred_fallthru
      _
    // Predicated region
    $region22: #{simple_cnn_forward.6} parent=1 // pred_check
      _
    $region23: #{simple_cnn_forward.6} parent=1 // pred_check_branch
      %52 = sbr.rel (0) target = $region25
    $region24: #{simple_cnn_forward.6} parent=1 // pred_region
      %53 = dma.done [#allocation6], 16
    $region25: #{simple_cnn_forward.6} parent=1 // pred_fallthru
      _
    %v55 = vld [vmem:[#allocation2] sm:$0xff]
    %v56 = vld [vmem:[#allocation2 + $0x8] sm:$0xff]
    %v57 = vld [vmem:[#allocation2 + $0x10] sm:$0xf]
    %v58 = vld [vmem:[#allocation2 + $0x14] sm:$0xff]
    %v59 = vld [vmem:[#allocation2 + $0x1c] sm:$0xff]
    %v60 = vld [vmem:[#allocation2 + $0x24] sm:$0xf]
    %v61 = vld [vmem:[#allocation2 + $0x28] sm:$0xff]
    %v62 = vld [vmem:[#allocation2 + $0x30] sm:$0xff]
    %v63 = vld [vmem:[#allocation2 + $0x38] sm:$0xf]
    %v64 = vld [vmem:[#allocation2 + $0x3c] sm:$0xff]
    %v65 = vld [vmem:[#allocation2 + $0x44] sm:$0xff]
    %v66 = vld [vmem:[#allocation2 + $0x4c] sm:$0xf]
    %v67 = vld [vmem:[#allocation2 + $0x50] sm:$0xff]
    %v68 = vld [vmem:[#allocation2 + $0x58] sm:$0xff]
    %v69 = vld [vmem:[#allocation2 + $0x60] sm:$0xf]
    %v70 = vld [vmem:[#allocation2 + $0x64] sm:$0xff]
    %v71 = vld [vmem:[#allocation2 + $0x6c] sm:$0xff]
    %v72 = vld [vmem:[#allocation2 + $0x74] sm:$0xf]
    %v73 = vld [vmem:[#allocation2 + $0x78] sm:$0xff]
    %v74 = vld [vmem:[#allocation2 + $0x80] sm:$0xff]
    %v75 = vld [vmem:[#allocation2 + $0x88] sm:$0xf]
    %v76 = vld [vmem:[#allocation2 + $0x8c] sm:$0xff]
    %v77 = vld [vmem:[#allocation2 + $0x94] sm:$0xff]
    %v78 = vld [vmem:[#allocation2 + $0x9c] sm:$0xf]
    %v79 = vld [vmem:[#allocation2 + $0xa0] sm:$0xff]
    %v80 = vld [vmem:[#allocation2 + $0xa8] sm:$0xff]
    %v81 = vld [vmem:[#allocation2 + $0xb0] sm:$0xf]
    %v82 = vld [vmem:[#allocation2 + $0xb4] sm:$0xff]
    %v83 = vld [vmem:[#allocation2 + $0xbc] sm:$0xff]
    %v84 = vld [vmem:[#allocation2 + $0xc4] sm:$0xf]
    %v85 = vld [vmem:[#allocation2 + $0xc8] sm:$0xff]
    %v86 = vld [vmem:[#allocation2 + $0xd0] sm:$0xff]
    %v87 = vld [vmem:[#allocation2 + $0xd8] sm:$0xf]
    %v88 = vld [vmem:[#allocation2 + $0xdc] sm:$0xff]
    %v89 = vld [vmem:[#allocation2 + $0xe4] sm:$0xff]
    %v90 = vld [vmem:[#allocation2 + $0xec] sm:$0xf]
    %v91 = vld [vmem:[#allocation2 + $0xf0] sm:$0x11]
    %v92 = vld [vmem:[#allocation2 + $0xf8] sm:$0x11]
    %v93 = vld [vmem:[#allocation2 + $0x100] sm:$0x1]
    %v94 = vld [vmem:[#allocation5] sm:$0xf]
    %v95 = vld [vmem:[#allocation5 + $0x4] sm:$0xf]
    %v96 = vld [vmem:[#allocation5 + $0x8] sm:$0xf]
    %v97 = vld [vmem:[#allocation5 + $0xc] sm:$0xf]
    %v98 = vld [vmem:[#allocation5 + $0x10] sm:$0xf]
    %v99 = vld [vmem:[#allocation5 + $0x14] sm:$0xf]
    %v100 = vld [vmem:[#allocation5 + $0x18] sm:$0xf]
    %v101 = vld [vmem:[#allocation5 + $0x1c] sm:$0xf]
    %v102 = vld [vmem:[#allocation5 + $0x20] sm:$0xf]
    %v103 = vld [vmem:[#allocation5 + $0x24] sm:$0xf]
    %v104 = vld [vmem:[#allocation5 + $0x28] sm:$0xf]
    %v105 = vld [vmem:[#allocation5 + $0x2c] sm:$0xf]
    %v106 = vld [vmem:[#allocation5 + $0x30] sm:$0xf]
    %v107 = vld [vmem:[#allocation5 + $0x34] sm:$0xf]
    %v108 = vld [vmem:[#allocation5 + $0x38] sm:$0xf]
    %v109 = vld [vmem:[#allocation5 + $0x3c] sm:$0xf]
    %v110 = vld [vmem:[#allocation5 + $0x40] sm:$0xf]
    %v111 = vld [vmem:[#allocation5 + $0x44] sm:$0xf]
    %v112 = vld [vmem:[#allocation5 + $0x48] sm:$0xf]
    %v113 = vld [vmem:[#allocation5 + $0x4c] sm:$0xf]
    %v114 = vld [vmem:[#allocation5 + $0x50] sm:$0xf]
    %v115 = vld [vmem:[#allocation5 + $0x54] sm:$0xf]
    %v116 = vld [vmem:[#allocation5 + $0x58] sm:$0xf]
    %v117 = vld [vmem:[#allocation5 + $0x5c] sm:$0xf]
    %v118 = vld [vmem:[#allocation5 + $0x60] sm:$0xf]
    %v119 = vld [vmem:[#allocation5 + $0x64] sm:$0xf]
    %v120 = vld [vmem:[#allocation5 + $0x68] sm:$0xf]
    %v121 = vld [vmem:[#allocation5 + $0x6c] sm:$0xf]
    %v122 = vld [vmem:[#allocation5 + $0x70] sm:$0xf]
    %v123 = vld [vmem:[#allocation5 + $0x74] sm:$0xf]
    %v124 = vld [vmem:[#allocation5 + $0x78] sm:$0xf]
    %v125 = vld [vmem:[#allocation5 + $0x7c] sm:$0xf]
    %v126 = vld [vmem:[#allocation5 + $0x80] sm:$0xf]
    %v127 = vld [vmem:[#allocation5 + $0x84] sm:$0xf]
    %v128 = vld [vmem:[#allocation5 + $0x88] sm:$0xf]
    %v129 = vld [vmem:[#allocation5 + $0x8c] sm:$0xf]
    %v130 = vld [vmem:[#allocation5 + $0x90] sm:$0xf]
    %v131 = vld [vmem:[#allocation5 + $0x94] sm:$0xf]
    %v132 = vld [vmem:[#allocation5 + $0x98] sm:$0xf]
    %v133 = vld [vmem:[#allocation5 + $0x9c] sm:$0xf]
    %v134 = vld [vmem:[#allocation5 + $0xa0] sm:$0xf]
    %v135 = vld [vmem:[#allocation5 + $0xa4] sm:$0xf]
    %v136 = vld [vmem:[#allocation5 + $0xa8] sm:$0xf]
    %v137 = vld [vmem:[#allocation5 + $0xac] sm:$0xf]
    %v138 = vld [vmem:[#allocation5 + $0xb0] sm:$0xf]
    %v139 = vld [vmem:[#allocation5 + $0xb4] sm:$0xf]
    %v140 = vld [vmem:[#allocation5 + $0xb8] sm:$0xf]
    %v141 = vld [vmem:[#allocation5 + $0xbc] sm:$0xf]
    %v142 = vld [vmem:[#allocation5 + $0xc0] sm:$0xf]
    %v143 = vld [vmem:[#allocation5 + $0xc4] sm:$0xf]
    %v144 = vld [vmem:[#allocation5 + $0xc8] sm:$0xf]
    %v145 = vld [vmem:[#allocation5 + $0xcc] sm:$0xf]
    %v146 = vld [vmem:[#allocation5 + $0xd0] sm:$0xf]
    %v147 = vld [vmem:[#allocation5 + $0xd4] sm:$0xf]
    %v148 = vld [vmem:[#allocation5 + $0xd8] sm:$0xf]
    %v149 = vld [vmem:[#allocation5 + $0xdc] sm:$0xf]
    %v150 = vld [vmem:[#allocation5 + $0xe0] sm:$0xf]
    %v151 = vld [vmem:[#allocation5 + $0xe4] sm:$0xf]
    %v152 = vld [vmem:[#allocation5 + $0xe8] sm:$0xf]
    %v153 = vld [vmem:[#allocation5 + $0xec] sm:$0xf]
    %v154 = vld [vmem:[#allocation5 + $0xf0] sm:$0xf]
    %v155 = vld [vmem:[#allocation5 + $0xf4] sm:$0xf]
    %v156 = vld [vmem:[#allocation5 + $0xf8] sm:$0xf]
    %v157 = vld [vmem:[#allocation5 + $0xfc] sm:$0xf]
    %v158 = vld [vmem:[#allocation5 + $0x100] sm:$0xf]
    %v159 = vld [vmem:[#allocation5 + $0x104] sm:$0xf]
    %v160 = vld [vmem:[#allocation5 + $0x108] sm:$0xf]
    %v161 = vld [vmem:[#allocation5 + $0x10c] sm:$0xf]
    %v162 = vld [vmem:[#allocation5 + $0x110] sm:$0xf]
    %v163 = vld [vmem:[#allocation5 + $0x114] sm:$0xf]
    %v164 = vld [vmem:[#allocation5 + $0x118] sm:$0xf]
    %v165 = vld [vmem:[#allocation5 + $0x11c] sm:$0xf]
    %v166 = vld [vmem:[#allocation7] sm:$0x1]
    %v168 = vlaneseq
    %v169 = vshrl.u32 %v168, 7
    %v170 = vsub.s32 0, %v169
    %v171 = vrot.slane %v166, %v170
    %v212 = vunpack.c.l.b16 %v55
    %v213 = vunpack.c.h.b16 %v55
    %v214 = vunpack.c.l.b16 %v56
    %v215 = vunpack.c.h.b16 %v56
    %v216 = vunpack.c.l.b16 %v57
    %v217 = vunpack.c.l.b16 %v58
    %v218 = vunpack.c.h.b16 %v58
    %v219 = vunpack.c.l.b16 %v59
    %v220 = vunpack.c.h.b16 %v59
    %v221 = vunpack.c.l.b16 %v60
    %v222 = vunpack.c.l.b16 %v61
    %v223 = vunpack.c.h.b16 %v61
    %v224 = vunpack.c.l.b16 %v62
    %v225 = vunpack.c.h.b16 %v62
    %v226 = vunpack.c.l.b16 %v63
    %v227 = vunpack.c.l.b16 %v64
    %v228 = vunpack.c.h.b16 %v64
    %v229 = vunpack.c.l.b16 %v65
    %v230 = vunpack.c.h.b16 %v65
    %v231 = vunpack.c.l.b16 %v66
    %v232 = vunpack.c.l.b16 %v67
    %v233 = vunpack.c.h.b16 %v67
    %v234 = vunpack.c.l.b16 %v68
    %v235 = vunpack.c.h.b16 %v68
    %v236 = vunpack.c.l.b16 %v69
    %v237 = vunpack.c.l.b16 %v70
    %v238 = vunpack.c.h.b16 %v70
    %v239 = vunpack.c.l.b16 %v71
    %v240 = vunpack.c.h.b16 %v71
    %v241 = vunpack.c.l.b16 %v72
    %v242 = vunpack.c.l.b16 %v73
    %v243 = vunpack.c.h.b16 %v73
    %v244 = vunpack.c.l.b16 %v74
    %v245 = vunpack.c.h.b16 %v74
    %v246 = vunpack.c.l.b16 %v75
    %v247 = vunpack.c.l.b16 %v76
    %v248 = vunpack.c.h.b16 %v76
    %v249 = vunpack.c.l.b16 %v77
    %v250 = vunpack.c.h.b16 %v77
    %v251 = vunpack.c.l.b16 %v78
    %v252 = vunpack.c.l.b16 %v79
    %v253 = vunpack.c.h.b16 %v79
    %v254 = vunpack.c.l.b16 %v80
    %v255 = vunpack.c.h.b16 %v80
    %v256 = vunpack.c.l.b16 %v81
    %v257 = vunpack.c.l.b16 %v82
    %v258 = vunpack.c.h.b16 %v82
    %v259 = vunpack.c.l.b16 %v83
    %v260 = vunpack.c.h.b16 %v83
    %v261 = vunpack.c.l.b16 %v84
    %v262 = vunpack.c.l.b16 %v85
    %v263 = vunpack.c.h.b16 %v85
    %v264 = vunpack.c.l.b16 %v86
    %v265 = vunpack.c.h.b16 %v86
    %v266 = vunpack.c.l.b16 %v87
    %v267 = vunpack.c.l.b16 %v88
    %v268 = vunpack.c.h.b16 %v88
    %v269 = vunpack.c.l.b16 %v89
    %v270 = vunpack.c.h.b16 %v89
    %v271 = vunpack.c.l.b16 %v90
    %v272 = vunpack.c.l.b16 %v91
    %v273 = vunpack.c.h.b16 %v91
    %v274 = vunpack.c.l.b16 %v92
    %v275 = vunpack.c.h.b16 %v92
    %v276 = vunpack.c.l.b16 %v93
    %v277 = vpack.c.b16 %v217, %v212
    %v278 = vpack.c.b16 %v218, %v213
    %v279 = vpack.c.b16 %v219, %v214
    %v280 = vpack.c.b16 %v220, %v215
    %v281 = vpack.c.b16 %v221, %v216
    %v282 = vpack.c.b16 %v227, %v222
    %v283 = vpack.c.b16 %v228, %v223
    %v284 = vpack.c.b16 %v229, %v224
    %v285 = vpack.c.b16 %v230, %v225
    %v286 = vpack.c.b16 %v231, %v226
    %v287 = vpack.c.b16 %v237, %v232
    %v288 = vpack.c.b16 %v238, %v233
    %v289 = vpack.c.b16 %v239, %v234
    %v290 = vpack.c.b16 %v240, %v235
    %v291 = vpack.c.b16 %v241, %v236
    %v292 = vpack.c.b16 %v247, %v242
    %v293 = vpack.c.b16 %v248, %v243
    %v294 = vpack.c.b16 %v249, %v244
    %v295 = vpack.c.b16 %v250, %v245
    %v296 = vpack.c.b16 %v251, %v246
    %v297 = vpack.c.b16 %v257, %v252
    %v298 = vpack.c.b16 %v258, %v253
    %v299 = vpack.c.b16 %v259, %v254
    %v300 = vpack.c.b16 %v260, %v255
    %v301 = vpack.c.b16 %v261, %v256
    %v302 = vpack.c.b16 %v267, %v262
    %v303 = vpack.c.b16 %v268, %v263
    %v304 = vpack.c.b16 %v269, %v264
    %v305 = vpack.c.b16 %v270, %v265
    %v306 = vpack.c.b16 %v271, %v266
    %v307 = vpack.c.b16 %v272, %v272
    %v308 = vpack.c.b16 %v273, %v273
    %v309 = vpack.c.b16 %v274, %v274
    %v310 = vpack.c.b16 %v275, %v275
    %v311 = vpack.c.b16 %v276, %v276
    %v412 = vunpack.c.l.b16 %v94
    %v413 = vunpack.c.l.b16 %v95
    %v414 = vunpack.c.l.b16 %v96
    %v415 = vunpack.c.l.b16 %v97
    %v416 = vunpack.c.l.b16 %v98
    %v417 = vunpack.c.l.b16 %v99
    %v418 = vunpack.c.l.b16 %v100
    %v419 = vunpack.c.l.b16 %v101
    %v420 = vunpack.c.l.b16 %v102
    %v421 = vunpack.c.l.b16 %v103
    %v422 = vunpack.c.l.b16 %v104
    %v423 = vunpack.c.l.b16 %v105
    %v424 = vunpack.c.l.b16 %v106
    %v425 = vunpack.c.l.b16 %v107
    %v426 = vunpack.c.l.b16 %v108
    %v427 = vunpack.c.l.b16 %v109
    %v428 = vunpack.c.l.b16 %v110
    %v429 = vunpack.c.l.b16 %v111
    %v430 = vunpack.c.l.b16 %v112
    %v431 = vunpack.c.l.b16 %v113
    %v432 = vunpack.c.l.b16 %v114
    %v433 = vunpack.c.l.b16 %v115
    %v434 = vunpack.c.l.b16 %v116
    %v435 = vunpack.c.l.b16 %v117
    %v436 = vunpack.c.l.b16 %v118
    %v437 = vunpack.c.l.b16 %v119
    %v438 = vunpack.c.l.b16 %v120
    %v439 = vunpack.c.l.b16 %v121
    %v440 = vunpack.c.l.b16 %v122
    %v441 = vunpack.c.l.b16 %v123
    %v442 = vunpack.c.l.b16 %v124
    %v443 = vunpack.c.l.b16 %v125
    %v444 = vunpack.c.l.b16 %v126
    %v445 = vunpack.c.l.b16 %v127
    %v446 = vunpack.c.l.b16 %v128
    %v447 = vunpack.c.l.b16 %v129
    %v448 = vunpack.c.l.b16 %v130
    %v449 = vunpack.c.l.b16 %v131
    %v450 = vunpack.c.l.b16 %v132
    %v451 = vunpack.c.l.b16 %v133
    %v452 = vunpack.c.l.b16 %v134
    %v453 = vunpack.c.l.b16 %v135
    %v454 = vunpack.c.l.b16 %v136
    %v455 = vunpack.c.l.b16 %v137
    %v456 = vunpack.c.l.b16 %v138
    %v457 = vunpack.c.l.b16 %v139
    %v458 = vunpack.c.l.b16 %v140
    %v459 = vunpack.c.l.b16 %v141
    %v460 = vunpack.c.l.b16 %v142
    %v461 = vunpack.c.l.b16 %v143
    %v462 = vunpack.c.l.b16 %v144
    %v463 = vunpack.c.l.b16 %v145
    %v464 = vunpack.c.l.b16 %v146
    %v465 = vunpack.c.l.b16 %v147
    %v466 = vunpack.c.l.b16 %v148
    %v467 = vunpack.c.l.b16 %v149
    %v468 = vunpack.c.l.b16 %v150
    %v469 = vunpack.c.l.b16 %v151
    %v470 = vunpack.c.l.b16 %v152
    %v471 = vunpack.c.l.b16 %v153
    %v472 = vunpack.c.l.b16 %v154
    %v473 = vunpack.c.l.b16 %v155
    %v474 = vunpack.c.l.b16 %v156
    %v475 = vunpack.c.l.b16 %v157
    %v476 = vunpack.c.l.b16 %v158
    %v477 = vunpack.c.l.b16 %v159
    %v478 = vunpack.c.l.b16 %v160
    %v479 = vunpack.c.l.b16 %v161
    %v480 = vunpack.c.l.b16 %v162
    %v481 = vunpack.c.l.b16 %v163
    %v482 = vunpack.c.l.b16 %v164
    %v483 = vunpack.c.l.b16 %v165
    %v484 = vpack.c.b16 %v413, %v412
    %v485 = vpack.c.b16 %v415, %v414
    %v486 = vpack.c.b16 %v417, %v416
    %v487 = vpack.c.b16 %v419, %v418
    %v488 = vpack.c.b16 %v421, %v420
    %v489 = vpack.c.b16 %v423, %v422
    %v490 = vpack.c.b16 %v425, %v424
    %v491 = vpack.c.b16 %v427, %v426
    %v492 = vpack.c.b16 %v429, %v428
    %v493 = vpack.c.b16 %v431, %v430
    %v494 = vpack.c.b16 %v433, %v432
    %v495 = vpack.c.b16 %v435, %v434
    %v496 = vpack.c.b16 %v437, %v436
    %v497 = vpack.c.b16 %v439, %v438
    %v498 = vpack.c.b16 %v441, %v440
    %v499 = vpack.c.b16 %v443, %v442
    %v500 = vpack.c.b16 %v445, %v444
    %v501 = vpack.c.b16 %v447, %v446
    %v502 = vpack.c.b16 %v449, %v448
    %v503 = vpack.c.b16 %v451, %v450
    %v504 = vpack.c.b16 %v453, %v452
    %v505 = vpack.c.b16 %v455, %v454
    %v506 = vpack.c.b16 %v457, %v456
    %v507 = vpack.c.b16 %v459, %v458
    %v508 = vpack.c.b16 %v461, %v460
    %v509 = vpack.c.b16 %v463, %v462
    %v510 = vpack.c.b16 %v465, %v464
    %v511 = vpack.c.b16 %v467, %v466
    %v512 = vpack.c.b16 %v469, %v468
    %v513 = vpack.c.b16 %v471, %v470
    %v514 = vpack.c.b16 %v473, %v472
    %v515 = vpack.c.b16 %v475, %v474
    %v516 = vpack.c.b16 %v477, %v476
    %v517 = vpack.c.b16 %v479, %v478
    %v518 = vpack.c.b16 %v481, %v480
    %v519 = vpack.c.b16 %v483, %v482
    %vm556 = vcmask 523264
    %v558 = vsel %vm556, %v281, 0
    %v561 = vsel %vm556, %v286, 0
    %v564 = vsel %vm556, %v291, 0
    %v567 = vsel %vm556, %v296, 0
    %v570 = vsel %vm556, %v301, 0
    %v573 = vsel %vm556, %v306, 0
    %v576 = vsel %vm556, %v311, 0
    %578 = vmatprep.subr.bf16.mxu0 0
    %579 = vmatpush1.bf16.msra.mxu0 %v484
    %580 = vmatprep.subr.bf16.mxu0 0
    %581 = vmatpush1.bf16.msra.mxu0 %v485
    %582 = vmatprep.subr.bf16.mxu0 0
    %583 = vmatpush1.bf16.msra.mxu0 %v486
    %584 = vmatprep.subr.bf16.mxu0 0
    %585 = vmatpush1.bf16.msra.mxu0 %v487
    %586 = vmatprep.subr.bf16.mxu0 0
    %587 = vmatpush1.bf16.msra.mxu0 %v488
    %588 = vmatprep.subr.bf16.mxu0 0
    %589 = vmatpush1.bf16.msra.mxu0 %v489
    %590 = vmatprep.subr.bf16.mxu0 0
    %591 = vmatpush1.bf16.msra.mxu0 %v490
    %592 = vmatprep.subr.bf16.mxu0 0
    %593 = vmatpush1.bf16.msra.mxu0 %v491
    %594 = vmatprep.subr.bf16.mxu0 0
    %595 = vmatpush1.bf16.msra.mxu0 %v492
    %596 = vmatprep.subr.bf16.mxu0 0
    %597 = vmatpush1.bf16.msra.mxu0 %v493
    %598 = vmatprep.subr.bf16.mxu0 0
    %599 = vmatpush1.bf16.msra.mxu0 %v494
    %600 = vmatprep.subr.bf16.mxu0 0
    %601 = vmatpush1.bf16.msra.mxu0 %v495
    %602 = vmatprep.subr.bf16.mxu0 0
    %603 = vmatpush1.bf16.msra.mxu0 %v496
    %604 = vmatprep.subr.bf16.mxu0 0
    %605 = vmatpush1.bf16.msra.mxu0 %v497
    %606 = vmatprep.subr.bf16.mxu0 0
    %607 = vmatpush1.bf16.msra.mxu0 %v498
    %608 = vmatprep.subr.bf16.mxu0 0
    %609 = vmatpush1.bf16.msra.mxu0 %v499
    %610 = vmatprep.mubr.bf16.mxu0 %v278
    %611 = vmatmul.mubr.bf16.gmra.mrb[0].mxu0 %v277
    %v612 = vpop.f32.mrb[0].mxu0
    %v613 = vadd.f32 %v171, %v612
    %v614 = vpop.f32.mrb[0].mxu0
    %v615 = vpop.f32.mrb[0].mxu0
    %v616 = vadd.f32 %v171, %v615
    %v617 = vpop.f32.mrb[0].mxu0
    %618 = vmatprep.mubr.bf16.mxu0 %v283
    %619 = vmatmul.mubr.bf16.gmra.mrb[0].mxu0 %v282
    %v620 = vpop.f32.mrb[0].mxu0
    %v621 = vadd.f32 %v171, %v620
    %v622 = vpop.f32.mrb[0].mxu0
    %v623 = vpop.f32.mrb[0].mxu0
    %v624 = vadd.f32 %v171, %v623
    %v625 = vpop.f32.mrb[0].mxu0
    %626 = vmatprep.mubr.bf16.mxu0 %v288
    %627 = vmatmul.mubr.bf16.gmra.mrb[0].mxu0 %v287
    %v628 = vpop.f32.mrb[0].mxu0
    %v629 = vadd.f32 %v171, %v628
    %v630 = vpop.f32.mrb[0].mxu0
    %v631 = vpop.f32.mrb[0].mxu0
    %v632 = vadd.f32 %v171, %v631
    %v633 = vpop.f32.mrb[0].mxu0
    %634 = vmatprep.mubr.bf16.mxu0 %v293
    %635 = vmatmul.mubr.bf16.gmra.mrb[0].mxu0 %v292
    %v636 = vpop.f32.mrb[0].mxu0
    %v637 = vadd.f32 %v171, %v636
    %v638 = vpop.f32.mrb[0].mxu0
    %v639 = vpop.f32.mrb[0].mxu0
    %v640 = vadd.f32 %v171, %v639
    %v641 = vpop.f32.mrb[0].mxu0
    %642 = vmatprep.mubr.bf16.mxu0 %v298
    %643 = vmatmul.mubr.bf16.gmra.mrb[0].mxu0 %v297
    %v644 = vpop.f32.mrb[0].mxu0
    %v645 = vadd.f32 %v171, %v644
    %v646 = vpop.f32.mrb[0].mxu0
    %v647 = vpop.f32.mrb[0].mxu0
    %v648 = vadd.f32 %v171, %v647
    %v649 = vpop.f32.mrb[0].mxu0
    %650 = vmatprep.mubr.bf16.mxu0 %v303
    %651 = vmatmul.mubr.bf16.gmra.mrb[0].mxu0 %v302
    %v652 = vpop.f32.mrb[0].mxu0
    %v653 = vadd.f32 %v171, %v652
    %v654 = vpop.f32.mrb[0].mxu0
    %v655 = vpop.f32.mrb[0].mxu0
    %v656 = vadd.f32 %v171, %v655
    %v657 = vpop.f32.mrb[0].mxu0
    %658 = vmatprep.mubr.bf16.mxu0 %v308
    %659 = vmatmul.mubr.bf16.gmra.mrb[0].mxu0 %v307
    %v660 = vpop.f32.mrb[0].mxu0
    %v661 = vadd.f32 %v171, %v660
    %v662 = vpop.f32.mrb[0].mxu0
    %v663 = vpop.f32.mrb[0].mxu0
    %v664 = vpop.f32.mrb[0].mxu0
    %665 = vdwg.mxu0
    %666 = vmatprep.subr.bf16.mxu0 0
    %667 = vmatpush1.bf16.msra.mxu0 %v500
    %668 = vmatprep.subr.bf16.mxu0 0
    %669 = vmatpush1.bf16.msra.mxu0 %v501
    %670 = vmatprep.subr.bf16.mxu0 0
    %671 = vmatpush1.bf16.msra.mxu0 %v502
    %672 = vmatprep.subr.bf16.mxu0 0
    %673 = vmatpush1.bf16.msra.mxu0 %v503
    %674 = vmatprep.subr.bf16.mxu0 0
    %675 = vmatpush1.bf16.msra.mxu0 %v504
    %676 = vmatprep.subr.bf16.mxu0 0
    %677 = vmatpush1.bf16.msra.mxu0 %v505
    %678 = vmatprep.subr.bf16.mxu0 0
    %679 = vmatpush1.bf16.msra.mxu0 %v506
    %680 = vmatprep.subr.bf16.mxu0 0
    %681 = vmatpush1.bf16.msra.mxu0 %v507
    %682 = vmatprep.subr.bf16.mxu0 0
    %683 = vmatpush1.bf16.msra.mxu0 %v508
    %684 = vmatprep.subr.bf16.mxu0 0
    %685 = vmatpush1.bf16.msra.mxu0 %v509
    %686 = vmatprep.subr.bf16.mxu0 0
    %687 = vmatpush1.bf16.msra.mxu0 %v510
    %688 = vmatprep.subr.bf16.mxu0 0
    %689 = vmatpush1.bf16.msra.mxu0 %v511
    %690 = vmatprep.subr.bf16.mxu0 0
    %691 = vmatpush1.bf16.msra.mxu0 %v512
    %692 = vmatprep.subr.bf16.mxu0 0
    %693 = vmatpush1.bf16.msra.mxu0 %v513
    %694 = vmatprep.subr.bf16.mxu0 0
    %695 = vmatpush1.bf16.msra.mxu0 %v514
    %696 = vmatprep.subr.bf16.mxu0 0
    %697 = vmatpush1.bf16.msra.mxu0 %v515
    %698 = vmatprep.mubr.bf16.mxu0 %v280
    %699 = vmatmul.mubr.bf16.gmra.mrb[0].mxu0 %v279
    %v700 = vpop.f32.mrb[0].mxu0
    %v701 = vadd.f32 %v613, %v700
    %v702 = vpop.f32.mrb[0].mxu0
    %v703 = vpop.f32.mrb[0].mxu0
    %v704 = vadd.f32 %v616, %v703
    %v705 = vpop.f32.mrb[0].mxu0
    %706 = vmatprep.mubr.bf16.mxu0 %v285
    %707 = vmatmul.mubr.bf16.gmra.mrb[0].mxu0 %v284
    %v708 = vpop.f32.mrb[0].mxu0
    %v709 = vadd.f32 %v621, %v708
    %v710 = vpop.f32.mrb[0].mxu0
    %v711 = vpop.f32.mrb[0].mxu0
    %v712 = vadd.f32 %v624, %v711
    %v713 = vpop.f32.mrb[0].mxu0
    %714 = vmatprep.mubr.bf16.mxu0 %v290
    %715 = vmatmul.mubr.bf16.gmra.mrb[0].mxu0 %v289
    %v716 = vpop.f32.mrb[0].mxu0
    %v717 = vadd.f32 %v629, %v716
    %v718 = vpop.f32.mrb[0].mxu0
    %v719 = vpop.f32.mrb[0].mxu0
    %v720 = vadd.f32 %v632, %v719
    %v721 = vpop.f32.mrb[0].mxu0
    %722 = vmatprep.mubr.bf16.mxu0 %v295
    %723 = vmatmul.mubr.bf16.gmra.mrb[0].mxu0 %v294
    %v724 = vpop.f32.mrb[0].mxu0
    %v725 = vadd.f32 %v637, %v724
    %v726 = vpop.f32.mrb[0].mxu0
    %v727 = vpop.f32.mrb[0].mxu0
    %v728 = vadd.f32 %v640, %v727
    %v729 = vpop.f32.mrb[0].mxu0
    %730 = vmatprep.mubr.bf16.mxu0 %v300
    %731 = vmatmul.mubr.bf16.gmra.mrb[0].mxu0 %v299
    %v732 = vpop.f32.mrb[0].mxu0
    %v733 = vadd.f32 %v645, %v732
    %v734 = vpop.f32.mrb[0].mxu0
    %v735 = vpop.f32.mrb[0].mxu0
    %v736 = vadd.f32 %v648, %v735
    %v737 = vpop.f32.mrb[0].mxu0
    %738 = vmatprep.mubr.bf16.mxu0 %v305
    %739 = vmatmul.mubr.bf16.gmra.mrb[0].mxu0 %v304
    %v740 = vpop.f32.mrb[0].mxu0
    %v741 = vadd.f32 %v653, %v740
    %v742 = vpop.f32.mrb[0].mxu0
    %v743 = vpop.f32.mrb[0].mxu0
    %v744 = vadd.f32 %v656, %v743
    %v745 = vpop.f32.mrb[0].mxu0
    %746 = vmatprep.mubr.bf16.mxu0 %v310
    %747 = vmatmul.mubr.bf16.gmra.mrb[0].mxu0 %v309
    %v748 = vpop.f32.mrb[0].mxu0
    %v749 = vadd.f32 %v661, %v748
    %v750 = vpop.f32.mrb[0].mxu0
    %v751 = vpop.f32.mrb[0].mxu0
    %v752 = vpop.f32.mrb[0].mxu0
    %753 = vdwg.mxu0
    %754 = vmatprep.subr.bf16.mxu0 0
    %755 = vmatpush1.bf16.msra.mxu0 %v516
    %756 = vmatprep.subr.bf16.mxu0 0
    %757 = vmatpush1.bf16.msra.mxu0 %v517
    %758 = vmatprep.subr.bf16.mxu0 0
    %759 = vmatpush1.bf16.msra.mxu0 %v518
    %760 = vmatprep.subr.bf16.mxu0 0
    %761 = vmatpush1.bf16.msra.mxu0 %v519
    %762 = vmatprep.subr.bf16.mxu0 0
    %763 = vmatpush1.bf16.msra.mxu0 0
    %764 = vmatprep.subr.bf16.mxu0 0
    %765 = vmatpush1.bf16.msra.mxu0 0
    %766 = vmatprep.subr.bf16.mxu0 0
    %767 = vmatpush1.bf16.msra.mxu0 0
    %768 = vmatprep.subr.bf16.mxu0 0
    %769 = vmatpush1.bf16.msra.mxu0 0
    %770 = vmatprep.subr.bf16.mxu0 0
    %771 = vmatpush1.bf16.msra.mxu0 0
    %772 = vmatprep.subr.bf16.mxu0 0
    %773 = vmatpush1.bf16.msra.mxu0 0
    %774 = vmatprep.subr.bf16.mxu0 0
    %775 = vmatpush1.bf16.msra.mxu0 0
    %776 = vmatprep.subr.bf16.mxu0 0
    %777 = vmatpush1.bf16.msra.mxu0 0
    %778 = vmatprep.subr.bf16.mxu0 0
    %779 = vmatpush1.bf16.msra.mxu0 0
    %780 = vmatprep.subr.bf16.mxu0 0
    %781 = vmatpush1.bf16.msra.mxu0 0
    %782 = vmatprep.subr.bf16.mxu0 0
    %783 = vmatpush1.bf16.msra.mxu0 0
    %784 = vmatprep.subr.bf16.mxu0 0
    %785 = vmatpush1.bf16.msra.mxu0 0
    %786 = vmatprep.mubr.bf16.mxu0 0
    %787 = vmatmul.mubr.bf16.gmra.mrb[0].mxu0 %v558
    %v788 = vpop.f32.mrb[0].mxu0
    %v789 = vadd.f32 %v701, %v788
    %v790 = vpop.f32.mrb[0].mxu0
    %v791 = vpop.f32.mrb[0].mxu0
    %v792 = vadd.f32 %v704, %v791
    %v793 = vpop.f32.mrb[0].mxu0
    %794 = vmatprep.mubr.bf16.mxu0 0
    %795 = vmatmul.mubr.bf16.gmra.mrb[0].mxu0 %v561
    %v796 = vpop.f32.mrb[0].mxu0
    %v797 = vadd.f32 %v709, %v796
    %v798 = vpop.f32.mrb[0].mxu0
    %v799 = vpop.f32.mrb[0].mxu0
    %v800 = vadd.f32 %v712, %v799
    %v801 = vpop.f32.mrb[0].mxu0
    %802 = vmatprep.mubr.bf16.mxu0 0
    %803 = vmatmul.mubr.bf16.gmra.mrb[0].mxu0 %v564
    %v804 = vpop.f32.mrb[0].mxu0
    %v805 = vadd.f32 %v717, %v804
    %v806 = vpop.f32.mrb[0].mxu0
    %v807 = vpop.f32.mrb[0].mxu0
    %v808 = vadd.f32 %v720, %v807
    %v809 = vpop.f32.mrb[0].mxu0
    %810 = vmatprep.mubr.bf16.mxu0 0
    %811 = vmatmul.mubr.bf16.gmra.mrb[0].mxu0 %v567
    %v812 = vpop.f32.mrb[0].mxu0
    %v813 = vadd.f32 %v725, %v812
    %v814 = vpop.f32.mrb[0].mxu0
    %v815 = vpop.f32.mrb[0].mxu0
    %v816 = vadd.f32 %v728, %v815
    %v817 = vpop.f32.mrb[0].mxu0
    %818 = vmatprep.mubr.bf16.mxu0 0
    %819 = vmatmul.mubr.bf16.gmra.mrb[0].mxu0 %v570
    %v820 = vpop.f32.mrb[0].mxu0
    %v821 = vadd.f32 %v733, %v820
    %v822 = vpop.f32.mrb[0].mxu0
    %v823 = vpop.f32.mrb[0].mxu0
    %v824 = vadd.f32 %v736, %v823
    %v825 = vpop.f32.mrb[0].mxu0
    %826 = vmatprep.mubr.bf16.mxu0 0
    %827 = vmatmul.mubr.bf16.gmra.mrb[0].mxu0 %v573
    %v828 = vpop.f32.mrb[0].mxu0
    %v829 = vadd.f32 %v741, %v828
    %v830 = vpop.f32.mrb[0].mxu0
    %v831 = vpop.f32.mrb[0].mxu0
    %v832 = vadd.f32 %v744, %v831
    %v833 = vpop.f32.mrb[0].mxu0
    %834 = vmatprep.mubr.bf16.mxu0 0
    %835 = vmatmul.mubr.bf16.gmra.mrb[0].mxu0 %v576
    %v836 = vpop.f32.mrb[0].mxu0
    %v837 = vadd.f32 %v749, %v836
    %v838 = vpop.f32.mrb[0].mxu0
    %v839 = vpop.f32.mrb[0].mxu0
    %v840 = vpop.f32.mrb[0].mxu0
    %841 = vdwg.mxu0
    %v842 = vmax.f32 %v789, 0.0
    %v843 = vmax.f32 %v792, 0.0
    %v844 = vmax.f32 %v797, 0.0
    %v845 = vmax.f32 %v800, 0.0
    %v846 = vmax.f32 %v805, 0.0
    %v847 = vmax.f32 %v808, 0.0
    %v848 = vmax.f32 %v813, 0.0
    %v849 = vmax.f32 %v816, 0.0
    %v850 = vmax.f32 %v821, 0.0
    %v851 = vmax.f32 %v824, 0.0
    %v852 = vmax.f32 %v829, 0.0
    %v853 = vmax.f32 %v832, 0.0
    %v854 = vmax.f32 %v837, 0.0
    %v855 = vpack.c.bf16 %v843, %v842
    %v856 = vpack.c.bf16 %v845, %v844
    %v857 = vpack.c.bf16 %v847, %v846
    %v858 = vpack.c.bf16 %v849, %v848
    %v859 = vpack.c.bf16 %v851, %v850
    %v860 = vpack.c.bf16 %v853, %v852
    %v861 = vpack.c.bf16 %v854, %v854
    %v869 = vunpack.c.l.b16 %v855
    %v870 = vunpack.c.h.b16 %v855
    %v871 = vunpack.c.l.b16 %v856
    %v872 = vunpack.c.h.b16 %v856
    %v873 = vunpack.c.l.b16 %v857
    %v874 = vunpack.c.h.b16 %v857
    %v875 = vunpack.c.l.b16 %v858
    %v876 = vunpack.c.h.b16 %v858
    %v877 = vunpack.c.l.b16 %v859
    %v878 = vunpack.c.h.b16 %v859
    %v879 = vunpack.c.l.b16 %v860
    %v880 = vunpack.c.h.b16 %v860
    %v881 = vunpack.c.l.b16 %v861
    %v882 = vpack.c.b16 %v869, %v869
    %v883 = vpack.c.b16 %v870, %v870
    %v884 = vpack.c.b16 %v871, %v871
    %v885 = vpack.c.b16 %v872, %v872
    %v886 = vpack.c.b16 %v873, %v873
    %v887 = vpack.c.b16 %v874, %v874
    %v888 = vpack.c.b16 %v875, %v875
    %v889 = vpack.c.b16 %v876, %v876
    %v890 = vpack.c.b16 %v877, %v877
    %v891 = vpack.c.b16 %v878, %v878
    %v892 = vpack.c.b16 %v879, %v879
    %v893 = vpack.c.b16 %v880, %v880
    %v894 = vpack.c.b16 %v881, %v881
    %vm908 = vcmask 519168
    %909 = vst.msk [vmem:[#allocation8] sm:$0xf] %vm908, %v882
    %910 = vst.msk [vmem:[#allocation8 + $0x4] sm:$0xf] %vm908, %v883
    %911 = vst.msk [vmem:[#allocation8 + $0x8] sm:$0xf] %vm908, %v884
    %912 = vst.msk [vmem:[#allocation8 + $0xc] sm:$0xf] %vm908, %v885
    %913 = vst.msk [vmem:[#allocation8 + $0x10] sm:$0xf] %vm908, %v886
    %914 = vst.msk [vmem:[#allocation8 + $0x14] sm:$0xf] %vm908, %v887
    %915 = vst.msk [vmem:[#allocation8 + $0x18] sm:$0xf] %vm908, %v888
    %916 = vst.msk [vmem:[#allocation8 + $0x1c] sm:$0xf] %vm908, %v889
    %917 = vst.msk [vmem:[#allocation8 + $0x20] sm:$0xf] %vm908, %v890
    %918 = vst.msk [vmem:[#allocation8 + $0x24] sm:$0xf] %vm908, %v891
    %919 = vst.msk [vmem:[#allocation8 + $0x28] sm:$0xf] %vm908, %v892
    %920 = vst.msk [vmem:[#allocation8 + $0x2c] sm:$0xf] %vm908, %v893
    %vm921 = vcmask 516096
    %922 = vst.msk [vmem:[#allocation8 + $0x30] sm:$0x1] %vm921, %v894
    // Predicated region
    $region26: #{simple_cnn_forward.6} parent=1 // pred_check
      _
    $region27: #{simple_cnn_forward.6} parent=1 // pred_check_branch
      %924 = sbr.rel (0) target = $region29
    $region28: #{simple_cnn_forward.6} parent=1 // pred_region
      %s926 = ssub.s32 832, 832
      %927 = vsyncadd [#allocation4], %s926
      %s928 = sshll.u32 [#allocation8], 4
      %s929 = int_to_ptr.vmem [resolvable:$true] %s928
      %934 = dma.vmem_to_hbm [thread:$0]  %s929, 832, %s3, [#allocation4], 64, 64, 4
    $region29: #{simple_cnn_forward.6} parent=1 // pred_fallthru
      _
    // Predicated region
    $region30: #{simple_cnn_forward.6} parent=1 // pred_check
      _
    $region31: #{simple_cnn_forward.6} parent=1 // pred_check_branch
      %936 = sbr.rel (0) target = $region33
    $region32: #{simple_cnn_forward.6} parent=1 // pred_region
      %937 = dma.done [#allocation4], 832
    $region33: #{simple_cnn_forward.6} parent=1 // pred_fallthru
      _
    %938 = vsyncpa [#allocation3], 1
    %939 = vsyncpa [#allocation6], 1
    %940 = vsyncpa [#allocation4], 1

// kernel: simple_cnn_forward.7
$region0: #{simple_cnn_forward.7}
  #allocation0 [shape = 'u32[]', space=smem, size = 0x4, offset = 0x4, fixed_abs, tag = 'smem constant byte address 0x4 - core index']
  #allocation1 [shape = 'u32[144,128]{1,0:T(1,128)}', space=vmem, size = 0x12000, scoped, tag = 'internal scratch']
  %s0 = inlined_call_operand.hbm [shape: bf16[2,3136], index: 0, kind: input, shape index: {}]
  %s1 = inlined_call_operand.hbm [shape: bf16[3136,512], index: 1, kind: input, shape index: {}]
  %s2 = inlined_call_operand.hbm [shape: f32[1,512], index: 2, kind: input, shape index: {}]
  %s3 = inlined_call_operand.hbm [shape: bf16[512,128], index: 3, kind: input, shape index: {}]
  %s4 = inlined_call_operand.hbm [shape: f32[1,128], index: 4, kind: input, shape index: {}]
  %s5 = inlined_call_operand.hbm [shape: f32[2,128], index: 5, kind: output, shape index: {}]
  %s6 = sld [smem:[#allocation0]]
  $region50: #{simple_cnn_forward.7} parent=0
    _
  %s8 = ssub.s32 1, %s6
  %s9 = scalar_select 0, %s8, %s6
  $region1: #{simple_cnn_forward.7} parent=0
    #allocation2 [shape = 'u8[12800]{0}', space=vmem, size = 0x3400, scoped, tag = 'input window, operand 0, single buffered']
    #allocation3 [shape = 's32[1]{0}', space=sflag, size = 0x4, scoped, tag = 'scoped memory for simple_cnn_forward.7']
    #allocation4 [shape = 's32[1]{0}', space=sflag, size = 0x4, scoped, tag = 'scoped memory for simple_cnn_forward.7']
    #allocation5 [shape = 'u8[3211264]{0}', space=vmem, size = 0x310000, scoped, tag = 'input window, operand 1, single buffered']
    #allocation6 [shape = 's32[1]{0}', space=sflag, size = 0x4, scoped, tag = 'scoped memory for simple_cnn_forward.7']
    #allocation7 [shape = 'u8[2048]{0}', space=vmem, size = 0x800, scoped, tag = 'input window, operand 2, single buffered']
    #allocation8 [shape = 'u8[131072]{0}', space=vmem, size = 0x20000, scoped, tag = 'input window, operand 3, single buffered']
    #allocation9 [shape = 's32[1]{0}', space=sflag, size = 0x4, scoped, tag = 'scoped memory for simple_cnn_forward.7']
    #allocation10 [shape = 'u8[512]{0}', space=vmem, size = 0x400, scoped, tag = 'input window, operand 4, single buffered']
    #allocation11 [shape = 'u8[1024]{0}', space=vmem, size = 0x400, scoped, tag = 'output window, operand 0, single buffered']
    %10 = vsyncpa [#allocation3], 0
    %11 = vsyncpa [#allocation6], 0
    %12 = vsyncpa [#allocation9], 0
    %13 = vsyncpa [#allocation4], 0
    // Predicated region
    $region2: #{simple_cnn_forward.7} parent=1 // pred_check
      _
    $region3: #{simple_cnn_forward.7} parent=1 // pred_check_branch
      %15 = sbr.rel (0) target = $region5
    $region4: #{simple_cnn_forward.7} parent=1 // pred_region
      %s17 = ssub.s32 400, 400
      %18 = vsyncadd [#allocation3], %s17
      %s20 = sshll.u32 [#allocation2], 4
      %s21 = int_to_ptr.vmem [resolvable:$true] %s20
      %23 = dma.hbm_to_vmem [thread:$0]  %s0, 400, %s21, [#allocation3]
    $region5: #{simple_cnn_forward.7} parent=1 // pred_fallthru
      _
    // Predicated region
    $region6: #{simple_cnn_forward.7} parent=1 // pred_check
      _
    $region7: #{simple_cnn_forward.7} parent=1 // pred_check_branch
      %25 = sbr.rel (0) target = $region9
    $region8: #{simple_cnn_forward.7} parent=1 // pred_region
      %s27 = ssub.s32 100352, 100352
      %28 = vsyncadd [#allocation6], %s27
      %s29 = sshll.u32 [#allocation5], 4
      %s30 = int_to_ptr.vmem [resolvable:$true] %s29
      %35 = dma.hbm_to_vmem [thread:$0]  %s1, 100352, %s30, [#allocation6], 256, 256, 16
    $region9: #{simple_cnn_forward.7} parent=1 // pred_fallthru
      _
    // Predicated region
    $region10: #{simple_cnn_forward.7} parent=1 // pred_check
      _
    $region11: #{simple_cnn_forward.7} parent=1 // pred_check_branch
      %37 = sbr.rel (0) target = $region13
    $region12: #{simple_cnn_forward.7} parent=1 // pred_region
      %s39 = ssub.s32 64, 64
      %40 = vsyncadd [#allocation6], %s39
      %s42 = sshll.u32 [#allocation7], 4
      %s43 = int_to_ptr.vmem [resolvable:$true] %s42
      %45 = dma.hbm_to_vmem [thread:$0]  %s2, 64, %s43, [#allocation6]
    $region13: #{simple_cnn_forward.7} parent=1 // pred_fallthru
      _
    // Predicated region
    $region14: #{simple_cnn_forward.7} parent=1 // pred_check
      _
    $region15: #{simple_cnn_forward.7} parent=1 // pred_check_branch
      %47 = sbr.rel (0) target = $region17
    $region16: #{simple_cnn_forward.7} parent=1 // pred_region
      %s49 = ssub.s32 4096, 4096
      %50 = vsyncadd [#allocation9], %s49
      %s51 = sshll.u32 [#allocation8], 4
      %s52 = int_to_ptr.vmem [resolvable:$true] %s51
      %57 = dma.hbm_to_vmem [thread:$0]  %s3, 4096, %s52, [#allocation9], 64, 64, 4
    $region17: #{simple_cnn_forward.7} parent=1 // pred_fallthru
      _
    // Predicated region
    $region18: #{simple_cnn_forward.7} parent=1 // pred_check
      _
    $region19: #{simple_cnn_forward.7} parent=1 // pred_check_branch
      %59 = sbr.rel (0) target = $region21
    $region20: #{simple_cnn_forward.7} parent=1 // pred_region
      %s61 = ssub.s32 16, 16
      %62 = vsyncadd [#allocation9], %s61
      %s64 = sshll.u32 [#allocation10], 4
      %s65 = int_to_ptr.vmem [resolvable:$true] %s64
      %67 = dma.hbm_to_vmem [thread:$0]  %s4, 16, %s65, [#allocation9]
    $region21: #{simple_cnn_forward.7} parent=1 // pred_fallthru
      _
    // Predicated region
    $region22: #{simple_cnn_forward.7} parent=1 // pred_check
      _
    $region23: #{simple_cnn_forward.7} parent=1 // pred_check_branch
      %69 = sbr.rel (0) target = $region25
    $region24: #{simple_cnn_forward.7} parent=1 // pred_region
      %70 = dma.done [#allocation3], 400
    $region25: #{simple_cnn_forward.7} parent=1 // pred_fallthru
      _
    // Predicated region
    $region26: #{simple_cnn_forward.7} parent=1 // pred_check
      _
    $region27: #{simple_cnn_forward.7} parent=1 // pred_check_branch
      %72 = sbr.rel (0) target = $region29
    $region28: #{simple_cnn_forward.7} parent=1 // pred_region
      %73 = dma.done [#allocation6], 100352
    $region29: #{simple_cnn_forward.7} parent=1 // pred_fallthru
      _
    // Predicated region
    $region30: #{simple_cnn_forward.7} parent=1 // pred_check
      _
    $region31: #{simple_cnn_forward.7} parent=1 // pred_check_branch
      %75 = sbr.rel (0) target = $region33
    $region32: #{simple_cnn_forward.7} parent=1 // pred_region
      %76 = dma.done [#allocation6], 64
    $region33: #{simple_cnn_forward.7} parent=1 // pred_fallthru
      _
    // Predicated region
    $region34: #{simple_cnn_forward.7} parent=1 // pred_check
      _
    $region35: #{simple_cnn_forward.7} parent=1 // pred_check_branch
      %78 = sbr.rel (0) target = $region37
    $region36: #{simple_cnn_forward.7} parent=1 // pred_region
      %79 = dma.done [#allocation9], 4096
    $region37: #{simple_cnn_forward.7} parent=1 // pred_fallthru
      _
    // Predicated region
    $region38: #{simple_cnn_forward.7} parent=1 // pred_check
      _
    $region39: #{simple_cnn_forward.7} parent=1 // pred_check_branch
      %81 = sbr.rel (0) target = $region41
    $region40: #{simple_cnn_forward.7} parent=1 // pred_region
      %82 = dma.done [#allocation9], 16
    $region41: #{simple_cnn_forward.7} parent=1 // pred_fallthru
      _
    %v84 = vld [vmem:[#allocation2] sm:$0xff]
    %v85 = vld [vmem:[#allocation2 + $0x8] sm:$0xff]
    %v86 = vld [vmem:[#allocation2 + $0x10] sm:$0xff]
    %v87 = vld [vmem:[#allocation2 + $0x18] sm:$0x1]
    %v88 = vld [vmem:[#allocation5] sm:$0xff]
    %v89 = vld [vmem:[#allocation5 + $0x8] sm:$0xff]
    %v90 = vld [vmem:[#allocation5 + $0x10] sm:$0xff]
    %v91 = vld [vmem:[#allocation5 + $0x18] sm:$0xff]
    %v92 = vld [vmem:[#allocation5 + $0x20] sm:$0xff]
    %v93 = vld [vmem:[#allocation5 + $0x28] sm:$0xff]
    %v94 = vld [vmem:[#allocation5 + $0x30] sm:$0xff]
    %v95 = vld [vmem:[#allocation5 + $0x38] sm:$0xff]
    %v96 = vld [vmem:[#allocation5 + $0x40] sm:$0xff]
    %v97 = vld [vmem:[#allocation5 + $0x48] sm:$0xff]
    %v98 = vld [vmem:[#allocation5 + $0x50] sm:$0xff]
    %v99 = vld [vmem:[#allocation5 + $0x58] sm:$0xff]
    %v100 = vld [vmem:[#allocation5 + $0x60] sm:$0xff]
    %v101 = vld [vmem:[#allocation5 + $0x68] sm:$0xff]
    %v102 = vld [vmem:[#allocation5 + $0x70] sm:$0xff]
    %v103 = vld [vmem:[#allocation5 + $0x78] sm:$0xff]
    %v104 = vld [vmem:[#allocation5 + $0x80] sm:$0xff]
    %v105 = vld [vmem:[#allocation5 + $0x88] sm:$0xff]
    %v106 = vld [vmem:[#allocation5 + $0x90] sm:$0xff]
    %v107 = vld [vmem:[#allocation5 + $0x98] sm:$0xff]
    %v108 = vld [vmem:[#allocation5 + $0xa0] sm:$0xff]
    %v109 = vld [vmem:[#allocation5 + $0xa8] sm:$0xff]
    %v110 = vld [vmem:[#allocation5 + $0xb0] sm:$0xff]
    %v111 = vld [vmem:[#allocation5 + $0xb8] sm:$0xff]
    %v112 = vld [vmem:[#allocation5 + $0xc0] sm:$0xff]
    %v113 = vld [vmem:[#allocation5 + $0xc8] sm:$0xff]
    %v114 = vld [vmem:[#allocation5 + $0xd0] sm:$0xff]
    %v115 = vld [vmem:[#allocation5 + $0xd8] sm:$0xff]
    %v116 = vld [vmem:[#allocation5 + $0xe0] sm:$0xff]
    %v117 = vld [vmem:[#allocation5 + $0xe8] sm:$0xff]
    %v118 = vld [vmem:[#allocation5 + $0xf0] sm:$0xff]
    %v119 = vld [vmem:[#allocation5 + $0xf8] sm:$0xff]
    %v120 = vld [vmem:[#allocation5 + $0x100] sm:$0xff]
    %v121 = vld [vmem:[#allocation5 + $0x108] sm:$0xff]
    %v122 = vld [vmem:[#allocation5 + $0x110] sm:$0xff]
    %v123 = vld [vmem:[#allocation5 + $0x118] sm:$0xff]
    %v124 = vld [vmem:[#allocation5 + $0x120] sm:$0xff]
    %v125 = vld [vmem:[#allocation5 + $0x128] sm:$0xff]
    %v126 = vld [vmem:[#allocation5 + $0x130] sm:$0xff]
    %v127 = vld [vmem:[#allocation5 + $0x138] sm:$0xff]
    %v128 = vld [vmem:[#allocation5 + $0x140] sm:$0xff]
    %v129 = vld [vmem:[#allocation5 + $0x148] sm:$0xff]
    %v130 = vld [vmem:[#allocation5 + $0x150] sm:$0xff]
    %v131 = vld [vmem:[#allocation5 + $0x158] sm:$0xff]
    %v132 = vld [vmem:[#allocation5 + $0x160] sm:$0xff]
    %v133 = vld [vmem:[#allocation5 + $0x168] sm:$0xff]
    %v134 = vld [vmem:[#allocation5 + $0x170] sm:$0xff]
    %v135 = vld [vmem:[#allocation5 + $0x178] sm:$0xff]
    %v136 = vld [vmem:[#allocation5 + $0x180] sm:$0xff]
    %v137 = vld [vmem:[#allocation5 + $0x188] sm:$0xff]
    %v138 = vld [vmem:[#allocation5 + $0x190] sm:$0xff]
    %v139 = vld [vmem:[#allocation5 + $0x198] sm:$0xff]
    %v140 = vld [vmem:[#allocation5 + $0x1a0] sm:$0xff]
    %v141 = vld [vmem:[#allocation5 + $0x1a8] sm:$0xff]
    %v142 = vld [vmem:[#allocation5 + $0x1b0] sm:$0xff]
    %v143 = vld [vmem:[#allocation5 + $0x1b8] sm:$0xff]
    %v144 = vld [vmem:[#allocation5 + $0x1c0] sm:$0xff]
    %v145 = vld [vmem:[#allocation5 + $0x1c8] sm:$0xff]
    %v146 = vld [vmem:[#allocation5 + $0x1d0] sm:$0xff]
    %v147 = vld [vmem:[#allocation5 + $0x1d8] sm:$0xff]
    %v148 = vld [vmem:[#allocation5 + $0x1e0] sm:$0xff]
    %v149 = vld [vmem:[#allocation5 + $0x1e8] sm:$0xff]
    %v150 = vld [vmem:[#allocation5 + $0x1f0] sm:$0xff]
    %v151 = vld [vmem:[#allocation5 + $0x1f8] sm:$0xff]
    %v152 = vld [vmem:[#allocation5 + $0x200] sm:$0xff]
    %v153 = vld [vmem:[#allocation5 + $0x208] sm:$0xff]
    %v154 = vld [vmem:[#allocation5 + $0x210] sm:$0xff]
    %v155 = vld [vmem:[#allocation5 + $0x218] sm:$0xff]
    %v156 = vld [vmem:[#allocation5 + $0x220] sm:$0xff]
    %v157 = vld [vmem:[#allocation5 + $0x228] sm:$0xff]
    %v158 = vld [vmem:[#allocation5 + $0x230] sm:$0xff]
    %v159 = vld [vmem:[#allocation5 + $0x238] sm:$0xff]
    %v160 = vld [vmem:[#allocation5 + $0x240] sm:$0xff]
    %v161 = vld [vmem:[#allocation5 + $0x248] sm:$0xff]
    %v162 = vld [vmem:[#allocation5 + $0x250] sm:$0xff]
    %v163 = vld [vmem:[#allocation5 + $0x258] sm:$0xff]
    %v164 = vld [vmem:[#allocation5 + $0x260] sm:$0xff]
    %v165 = vld [vmem:[#allocation5 + $0x268] sm:$0xff]
    %v166 = vld [vmem:[#allocation5 + $0x270] sm:$0xff]
    %v167 = vld [vmem:[#allocation5 + $0x278] sm:$0xff]
    %v168 = vld [vmem:[#allocation5 + $0x280] sm:$0xff]
    %v169 = vld [vmem:[#allocation5 + $0x288] sm:$0xff]
    %v170 = vld [vmem:[#allocation5 + $0x290] sm:$0xff]
    %v171 = vld [vmem:[#allocation5 + $0x298] sm:$0xff]
    %v172 = vld [vmem:[#allocation5 + $0x2a0] sm:$0xff]
    %v173 = vld [vmem:[#allocation5 + $0x2a8] sm:$0xff]
    %v174 = vld [vmem:[#allocation5 + $0x2b0] sm:$0xff]
    %v175 = vld [vmem:[#allocation5 + $0x2b8] sm:$0xff]
    %v176 = vld [vmem:[#allocation5 + $0x2c0] sm:$0xff]
    %v177 = vld [vmem:[#allocation5 + $0x2c8] sm:$0xff]
    %v178 = vld [vmem:[#allocation5 + $0x2d0] sm:$0xff]
    %v179 = vld [vmem:[#allocation5 + $0x2d8] sm:$0xff]
    %v180 = vld [vmem:[#allocation5 + $0x2e0] sm:$0xff]
    %v181 = vld [vmem:[#allocation5 + $0x2e8] sm:$0xff]
    %v182 = vld [vmem:[#allocation5 + $0x2f0] sm:$0xff]
    %v183 = vld [vmem:[#allocation5 + $0x2f8] sm:$0xff]
    %v184 = vld [vmem:[#allocation5 + $0x300] sm:$0xff]
    %v185 = vld [vmem:[#allocation5 + $0x308] sm:$0xff]
    %v186 = vld [vmem:[#allocation5 + $0x310] sm:$0xff]
    %v187 = vld [vmem:[#allocation5 + $0x318] sm:$0xff]
    %v188 = vld [vmem:[#allocation5 + $0x320] sm:$0xff]
    %v189 = vld [vmem:[#allocation5 + $0x328] sm:$0xff]
    %v190 = vld [vmem:[#allocation5 + $0x330] sm:$0xff]
    %v191 = vld [vmem:[#allocation5 + $0x338] sm:$0xff]
    %v192 = vld [vmem:[#allocation5 + $0x340] sm:$0xff]
    %v193 = vld [vmem:[#allocation5 + $0x348] sm:$0xff]
    %v194 = vld [vmem:[#allocation5 + $0x350] sm:$0xff]
    %v195 = vld [vmem:[#allocation5 + $0x358] sm:$0xff]
    %v196 = vld [vmem:[#allocation5 + $0x360] sm:$0xff]
    %v197 = vld [vmem:[#allocation5 + $0x368] sm:$0xff]
    %v198 = vld [vmem:[#allocation5 + $0x370] sm:$0xff]
    %v199 = vld [vmem:[#allocation5 + $0x378] sm:$0xff]
    %v200 = vld [vmem:[#allocation5 + $0x380] sm:$0xff]
    %v201 = vld [vmem:[#allocation5 + $0x388] sm:$0xff]
    %v202 = vld [vmem:[#allocation5 + $0x390] sm:$0xff]
    %v203 = vld [vmem:[#allocation5 + $0x398] sm:$0xff]
    %v204 = vld [vmem:[#allocation5 + $0x3a0] sm:$0xff]
    %v205 = vld [vmem:[#allocation5 + $0x3a8] sm:$0xff]
    %v206 = vld [vmem:[#allocation5 + $0x3b0] sm:$0xff]
    %v207 = vld [vmem:[#allocation5 + $0x3b8] sm:$0xff]
    %v208 = vld [vmem:[#allocation5 + $0x3c0] sm:$0xff]
    %v209 = vld [vmem:[#allocation5 + $0x3c8] sm:$0xff]
    %v210 = vld [vmem:[#allocation5 + $0x3d0] sm:$0xff]
    %v211 = vld [vmem:[#allocation5 + $0x3d8] sm:$0xff]
    %v212 = vld [vmem:[#allocation5 + $0x3e0] sm:$0xff]
    %v213 = vld [vmem:[#allocation5 + $0x3e8] sm:$0xff]
    %v214 = vld [vmem:[#allocation5 + $0x3f0] sm:$0xff]
    %v215 = vld [vmem:[#allocation5 + $0x3f8] sm:$0xff]
    %v216 = vld [vmem:[#allocation5 + $0x400] sm:$0xff]
    %v217 = vld [vmem:[#allocation5 + $0x408] sm:$0xff]
    %v218 = vld [vmem:[#allocation5 + $0x410] sm:$0xff]
    %v219 = vld [vmem:[#allocation5 + $0x418] sm:$0xff]
    %v220 = vld [vmem:[#allocation5 + $0x420] sm:$0xff]
    %v221 = vld [vmem:[#allocation5 + $0x428] sm:$0xff]
    %v222 = vld [vmem:[#allocation5 + $0x430] sm:$0xff]
    %v223 = vld [vmem:[#allocation5 + $0x438] sm:$0xff]
    %v224 = vld [vmem:[#allocation5 + $0x440] sm:$0xff]
    %v225 = vld [vmem:[#allocation5 + $0x448] sm:$0xff]
    %v226 = vld [vmem:[#allocation5 + $0x450] sm:$0xff]
    %v227 = vld [vmem:[#allocation5 + $0x458] sm:$0xff]
    %v228 = vld [vmem:[#allocation5 + $0x460] sm:$0xff]
    %v229 = vld [vmem:[#allocation5 + $0x468] sm:$0xff]
    %v230 = vld [vmem:[#allocation5 + $0x470] sm:$0xff]
    %v231 = vld [vmem:[#allocation5 + $0x478] sm:$0xff]
    %v232 = vld [vmem:[#allocation5 + $0x480] sm:$0xff]
    %v233 = vld [vmem:[#allocation5 + $0x488] sm:$0xff]
    %v234 = vld [vmem:[#allocation5 + $0x490] sm:$0xff]
    %v235 = vld [vmem:[#allocation5 + $0x498] sm:$0xff]
    %v236 = vld [vmem:[#allocation5 + $0x4a0] sm:$0xff]
    %v237 = vld [vmem:[#allocation5 + $0x4a8] sm:$0xff]
    %v238 = vld [vmem:[#allocation5 + $0x4b0] sm:$0xff]
    %v239 = vld [vmem:[#allocation5 + $0x4b8] sm:$0xff]
    %v240 = vld [vmem:[#allocation5 + $0x4c0] sm:$0xff]
    %v241 = vld [vmem:[#allocation5 + $0x4c8] sm:$0xff]
    %v242 = vld [vmem:[#allocation5 + $0x4d0] sm:$0xff]
    %v243 = vld [vmem:[#allocation5 + $0x4d8] sm:$0xff]
    %v244 = vld [vmem:[#allocation5 + $0x4e0] sm:$0xff]
    %v245 = vld [vmem:[#allocation5 + $0x4e8] sm:$0xff]
    %v246 = vld [vmem:[#allocation5 + $0x4f0] sm:$0xff]
    %v247 = vld [vmem:[#allocation5 + $0x4f8] sm:$0xff]
    %v248 = vld [vmem:[#allocation5 + $0x500] sm:$0xff]
    %v249 = vld [vmem:[#allocation5 + $0x508] sm:$0xff]
    %v250 = vld [vmem:[#allocation5 + $0x510] sm:$0xff]
    %v251 = vld [vmem:[#allocation5 + $0x518] sm:$0xff]
    %v252 = vld [vmem:[#allocation5 + $0x520] sm:$0xff]
    %v253 = vld [vmem:[#allocation5 + $0x528] sm:$0xff]
    %v254 = vld [vmem:[#allocation5 + $0x530] sm:$0xff]
    %v255 = vld [vmem:[#allocation5 + $0x538] sm:$0xff]
    %v256 = vld [vmem:[#allocation5 + $0x540] sm:$0xff]
    %v257 = vld [vmem:[#allocation5 + $0x548] sm:$0xff]
    %v258 = vld [vmem:[#allocation5 + $0x550] sm:$0xff]
    %v259 = vld [vmem:[#allocation5 + $0x558] sm:$0xff]
    %v260 = vld [vmem:[#allocation5 + $0x560] sm:$0xff]
    %v261 = vld [vmem:[#allocation5 + $0x568] sm:$0xff]
    %v262 = vld [vmem:[#allocation5 + $0x570] sm:$0xff]
    %v263 = vld [vmem:[#allocation5 + $0x578] sm:$0xff]
    %v264 = vld [vmem:[#allocation5 + $0x580] sm:$0xff]
    %v265 = vld [vmem:[#allocation5 + $0x588] sm:$0xff]
    %v266 = vld [vmem:[#allocation5 + $0x590] sm:$0xff]
    %v267 = vld [vmem:[#allocation5 + $0x598] sm:$0xff]
    %v268 = vld [vmem:[#allocation5 + $0x5a0] sm:$0xff]
    %v269 = vld [vmem:[#allocation5 + $0x5a8] sm:$0xff]
    %v270 = vld [vmem:[#allocation5 + $0x5b0] sm:$0xff]
    %v271 = vld [vmem:[#allocation5 + $0x5b8] sm:$0xff]
    %v272 = vld [vmem:[#allocation5 + $0x5c0] sm:$0xff]
    %v273 = vld [vmem:[#allocation5 + $0x5c8] sm:$0xff]
    %v274 = vld [vmem:[#allocation5 + $0x5d0] sm:$0xff]
    %v275 = vld [vmem:[#allocation5 + $0x5d8] sm:$0xff]
    %v276 = vld [vmem:[#allocation5 + $0x5e0] sm:$0xff]
    %v277 = vld [vmem:[#allocation5 + $0x5e8] sm:$0xff]
    %v278 = vld [vmem:[#allocation5 + $0x5f0] sm:$0xff]
    %v279 = vld [vmem:[#allocation5 + $0x5f8] sm:$0xff]
    %v280 = vld [vmem:[#allocation5 + $0x600] sm:$0xff]
    %v281 = vld [vmem:[#allocation5 + $0x608] sm:$0xff]
    %v282 = vld [vmem:[#allocation5 + $0x610] sm:$0xff]
    %v283 = vld [vmem:[#allocation5 + $0x618] sm:$0xff]
    %v284 = vld [vmem:[#allocation5 + $0x620] sm:$0xff]
    %v285 = vld [vmem:[#allocation5 + $0x628] sm:$0xff]
    %v286 = vld [vmem:[#allocation5 + $0x630] sm:$0xff]
    %v287 = vld [vmem:[#allocation5 + $0x638] sm:$0xff]
    %v288 = vld [vmem:[#allocation5 + $0x640] sm:$0xff]
    %v289 = vld [vmem:[#allocation5 + $0x648] sm:$0xff]
    %v290 = vld [vmem:[#allocation5 + $0x650] sm:$0xff]
    %v291 = vld [vmem:[#allocation5 + $0x658] sm:$0xff]
    %v292 = vld [vmem:[#allocation5 + $0x660] sm:$0xff]
    %v293 = vld [vmem:[#allocation5 + $0x668] sm:$0xff]
    %v294 = vld [vmem:[#allocation5 + $0x670] sm:$0xff]
    %v295 = vld [vmem:[#allocation5 + $0x678] sm:$0xff]
    %v296 = vld [vmem:[#allocation5 + $0x680] sm:$0xff]
    %v297 = vld [vmem:[#allocation5 + $0x688] sm:$0xff]
    %v298 = vld [vmem:[#allocation5 + $0x690] sm:$0xff]
    %v299 = vld [vmem:[#allocation5 + $0x698] sm:$0xff]
    %v300 = vld [vmem:[#allocation5 + $0x6a0] sm:$0xff]
    %v301 = vld [vmem:[#allocation5 + $0x6a8] sm:$0xff]
    %v302 = vld [vmem:[#allocation5 + $0x6b0] sm:$0xff]
    %v303 = vld [vmem:[#allocation5 + $0x6b8] sm:$0xff]
    %v304 = vld [vmem:[#allocation5 + $0x6c0] sm:$0xff]
    %v305 = vld [vmem:[#allocation5 + $0x6c8] sm:$0xff]
    %v306 = vld [vmem:[#allocation5 + $0x6d0] sm:$0xff]
    %v307 = vld [vmem:[#allocation5 + $0x6d8] sm:$0xff]
    %v308 = vld [vmem:[#allocation5 + $0x6e0] sm:$0xff]
    %v309 = vld [vmem:[#allocation5 + $0x6e8] sm:$0xff]
    %v310 = vld [vmem:[#allocation5 + $0x6f0] sm:$0xff]
    %v311 = vld [vmem:[#allocation5 + $0x6f8] sm:$0xff]
    %v312 = vld [vmem:[#allocation5 + $0x700] sm:$0xff]
    %v313 = vld [vmem:[#allocation5 + $0x708] sm:$0xff]
    %v314 = vld [vmem:[#allocation5 + $0x710] sm:$0xff]
    %v315 = vld [vmem:[#allocation5 + $0x718] sm:$0xff]
    %v316 = vld [vmem:[#allocation5 + $0x720] sm:$0xff]
    %v317 = vld [vmem:[#allocation5 + $0x728] sm:$0xff]
    %v318 = vld [vmem:[#allocation5 + $0x730] sm:$0xff]
    %v319 = vld [vmem:[#allocation5 + $0x738] sm:$0xff]
    %v320 = vld [vmem:[#allocation5 + $0x740] sm:$0xff]
    %v321 = vld [vmem:[#allocation5 + $0x748] sm:$0xff]
    %v322 = vld [vmem:[#allocation5 + $0x750] sm:$0xff]
    %v323 = vld [vmem:[#allocation5 + $0x758] sm:$0xff]
    %v324 = vld [vmem:[#allocation5 + $0x760] sm:$0xff]
    %v325 = vld [vmem:[#allocation5 + $0x768] sm:$0xff]
    %v326 = vld [vmem:[#allocation5 + $0x770] sm:$0xff]
    %v327 = vld [vmem:[#allocation5 + $0x778] sm:$0xff]
    %v328 = vld [vmem:[#allocation5 + $0x780] sm:$0xff]
    %v329 = vld [vmem:[#allocation5 + $0x788] sm:$0xff]
    %v330 = vld [vmem:[#allocation5 + $0x790] sm:$0xff]
    %v331 = vld [vmem:[#allocation5 + $0x798] sm:$0xff]
    %v332 = vld [vmem:[#allocation5 + $0x7a0] sm:$0xff]
    %v333 = vld [vmem:[#allocation5 + $0x7a8] sm:$0xff]
    %v334 = vld [vmem:[#allocation5 + $0x7b0] sm:$0xff]
    %v335 = vld [vmem:[#allocation5 + $0x7b8] sm:$0xff]
    %v336 = vld [vmem:[#allocation5 + $0x7c0] sm:$0xff]
    %v337 = vld [vmem:[#allocation5 + $0x7c8] sm:$0xff]
    %v338 = vld [vmem:[#allocation5 + $0x7d0] sm:$0xff]
    %v339 = vld [vmem:[#allocation5 + $0x7d8] sm:$0xff]
    %v340 = vld [vmem:[#allocation5 + $0x7e0] sm:$0xff]
    %v341 = vld [vmem:[#allocation5 + $0x7e8] sm:$0xff]
    %v342 = vld [vmem:[#allocation5 + $0x7f0] sm:$0xff]
    %v343 = vld [vmem:[#allocation5 + $0x7f8] sm:$0xff]
    %v344 = vld [vmem:[#allocation5 + $0x800] sm:$0xff]
    %v345 = vld [vmem:[#allocation5 + $0x808] sm:$0xff]
    %v346 = vld [vmem:[#allocation5 + $0x810] sm:$0xff]
    %v347 = vld [vmem:[#allocation5 + $0x818] sm:$0xff]
    %v348 = vld [vmem:[#allocation5 + $0x820] sm:$0xff]
    %v349 = vld [vmem:[#allocation5 + $0x828] sm:$0xff]
    %v350 = vld [vmem:[#allocation5 + $0x830] sm:$0xff]
    %v351 = vld [vmem:[#allocation5 + $0x838] sm:$0xff]
    %v352 = vld [vmem:[#allocation5 + $0x840] sm:$0xff]
    %v353 = vld [vmem:[#allocation5 + $0x848] sm:$0xff]
    %v354 = vld [vmem:[#allocation5 + $0x850] sm:$0xff]
    %v355 = vld [vmem:[#allocation5 + $0x858] sm:$0xff]
    %v356 = vld [vmem:[#allocation5 + $0x860] sm:$0xff]
    %v357 = vld [vmem:[#allocation5 + $0x868] sm:$0xff]
    %v358 = vld [vmem:[#allocation5 + $0x870] sm:$0xff]
    %v359 = vld [vmem:[#allocation5 + $0x878] sm:$0xff]
    %v360 = vld [vmem:[#allocation5 + $0x880] sm:$0xff]
    %v361 = vld [vmem:[#allocation5 + $0x888] sm:$0xff]
    %v362 = vld [vmem:[#allocation5 + $0x890] sm:$0xff]
    %v363 = vld [vmem:[#allocation5 + $0x898] sm:$0xff]
    %v364 = vld [vmem:[#allocation5 + $0x8a0] sm:$0xff]
    %v365 = vld [vmem:[#allocation5 + $0x8a8] sm:$0xff]
    %v366 = vld [vmem:[#allocation5 + $0x8b0] sm:$0xff]
    %v367 = vld [vmem:[#allocation5 + $0x8b8] sm:$0xff]
    %v368 = vld [vmem:[#allocation5 + $0x8c0] sm:$0xff]
    %v369 = vld [vmem:[#allocation5 + $0x8c8] sm:$0xff]
    %v370 = vld [vmem:[#allocation5 + $0x8d0] sm:$0xff]
    %v371 = vld [vmem:[#allocation5 + $0x8d8] sm:$0xff]
    %v372 = vld [vmem:[#allocation5 + $0x8e0] sm:$0xff]
    %v373 = vld [vmem:[#allocation5 + $0x8e8] sm:$0xff]
    %v374 = vld [vmem:[#allocation5 + $0x8f0] sm:$0xff]
    %v375 = vld [vmem:[#allocation5 + $0x8f8] sm:$0xff]
    %v376 = vld [vmem:[#allocation5 + $0x900] sm:$0xff]
    %v377 = vld [vmem:[#allocation5 + $0x908] sm:$0xff]
    %v378 = vld [vmem:[#allocation5 + $0x910] sm:$0xff]
    %v379 = vld [vmem:[#allocation5 + $0x918] sm:$0xff]
    %v380 = vld [vmem:[#allocation5 + $0x920] sm:$0xff]
    %v381 = vld [vmem:[#allocation5 + $0x928] sm:$0xff]
    %v382 = vld [vmem:[#allocation5 + $0x930] sm:$0xff]
    %v383 = vld [vmem:[#allocation5 + $0x938] sm:$0xff]
    %v384 = vld [vmem:[#allocation5 + $0x940] sm:$0xff]
    %v385 = vld [vmem:[#allocation5 + $0x948] sm:$0xff]
    %v386 = vld [vmem:[#allocation5 + $0x950] sm:$0xff]
    %v387 = vld [vmem:[#allocation5 + $0x958] sm:$0xff]
    %v388 = vld [vmem:[#allocation5 + $0x960] sm:$0xff]
    %v389 = vld [vmem:[#allocation5 + $0x968] sm:$0xff]
    %v390 = vld [vmem:[#allocation5 + $0x970] sm:$0xff]
    %v391 = vld [vmem:[#allocation5 + $0x978] sm:$0xff]
    %v392 = vld [vmem:[#allocation5 + $0x980] sm:$0xff]
    %v393 = vld [vmem:[#allocation5 + $0x988] sm:$0xff]
    %v394 = vld [vmem:[#allocation5 + $0x990] sm:$0xff]
    %v395 = vld [vmem:[#allocation5 + $0x998] sm:$0xff]
    %v396 = vld [vmem:[#allocation5 + $0x9a0] sm:$0xff]
    %v397 = vld [vmem:[#allocation5 + $0x9a8] sm:$0xff]
    %v398 = vld [vmem:[#allocation5 + $0x9b0] sm:$0xff]
    %v399 = vld [vmem:[#allocation5 + $0x9b8] sm:$0xff]
    %v400 = vld [vmem:[#allocation5 + $0x9c0] sm:$0xff]
    %v401 = vld [vmem:[#allocation5 + $0x9c8] sm:$0xff]
    %v402 = vld [vmem:[#allocation5 + $0x9d0] sm:$0xff]
    %v403 = vld [vmem:[#allocation5 + $0x9d8] sm:$0xff]
    %v404 = vld [vmem:[#allocation5 + $0x9e0] sm:$0xff]
    %v405 = vld [vmem:[#allocation5 + $0x9e8] sm:$0xff]
    %v406 = vld [vmem:[#allocation5 + $0x9f0] sm:$0xff]
    %v407 = vld [vmem:[#allocation5 + $0x9f8] sm:$0xff]
    %v408 = vld [vmem:[#allocation5 + $0xa00] sm:$0xff]
    %v409 = vld [vmem:[#allocation5 + $0xa08] sm:$0xff]
    %v410 = vld [vmem:[#allocation5 + $0xa10] sm:$0xff]
    %v411 = vld [vmem:[#allocation5 + $0xa18] sm:$0xff]
    %v412 = vld [vmem:[#allocation5 + $0xa20] sm:$0xff]
    %v413 = vld [vmem:[#allocation5 + $0xa28] sm:$0xff]
    %v414 = vld [vmem:[#allocation5 + $0xa30] sm:$0xff]
    %v415 = vld [vmem:[#allocation5 + $0xa38] sm:$0xff]
    %v416 = vld [vmem:[#allocation5 + $0xa40] sm:$0xff]
    %v417 = vld [vmem:[#allocation5 + $0xa48] sm:$0xff]
    %v418 = vld [vmem:[#allocation5 + $0xa50] sm:$0xff]
    %v419 = vld [vmem:[#allocation5 + $0xa58] sm:$0xff]
    %v420 = vld [vmem:[#allocation5 + $0xa60] sm:$0xff]
    %v421 = vld [vmem:[#allocation5 + $0xa68] sm:$0xff]
    %v422 = vld [vmem:[#allocation5 + $0xa70] sm:$0xff]
    %v423 = vld [vmem:[#allocation5 + $0xa78] sm:$0xff]
    %v424 = vld [vmem:[#allocation5 + $0xa80] sm:$0xff]
    %v425 = vld [vmem:[#allocation5 + $0xa88] sm:$0xff]
    %v426 = vld [vmem:[#allocation5 + $0xa90] sm:$0xff]
    %v427 = vld [vmem:[#allocation5 + $0xa98] sm:$0xff]
    %v428 = vld [vmem:[#allocation5 + $0xaa0] sm:$0xff]
    %v429 = vld [vmem:[#allocation5 + $0xaa8] sm:$0xff]
    %v430 = vld [vmem:[#allocation5 + $0xab0] sm:$0xff]
    %v431 = vld [vmem:[#allocation5 + $0xab8] sm:$0xff]
    %v432 = vld [vmem:[#allocation5 + $0xac0] sm:$0xff]
    %v433 = vld [vmem:[#allocation5 + $0xac8] sm:$0xff]
    %v434 = vld [vmem:[#allocation5 + $0xad0] sm:$0xff]
    %v435 = vld [vmem:[#allocation5 + $0xad8] sm:$0xff]
    %v436 = vld [vmem:[#allocation5 + $0xae0] sm:$0xff]
    %v437 = vld [vmem:[#allocation5 + $0xae8] sm:$0xff]
    %v438 = vld [vmem:[#allocation5 + $0xaf0] sm:$0xff]
    %v439 = vld [vmem:[#allocation5 + $0xaf8] sm:$0xff]
    %v440 = vld [vmem:[#allocation5 + $0xb00] sm:$0xff]
    %v441 = vld [vmem:[#allocation5 + $0xb08] sm:$0xff]
    %v442 = vld [vmem:[#allocation5 + $0xb10] sm:$0xff]
    %v443 = vld [vmem:[#allocation5 + $0xb18] sm:$0xff]
    %v444 = vld [vmem:[#allocation5 + $0xb20] sm:$0xff]
    %v445 = vld [vmem:[#allocation5 + $0xb28] sm:$0xff]
    %v446 = vld [vmem:[#allocation5 + $0xb30] sm:$0xff]
    %v447 = vld [vmem:[#allocation5 + $0xb38] sm:$0xff]
    %v448 = vld [vmem:[#allocation5 + $0xb40] sm:$0xff]
    %v449 = vld [vmem:[#allocation5 + $0xb48] sm:$0xff]
    %v450 = vld [vmem:[#allocation5 + $0xb50] sm:$0xff]
    %v451 = vld [vmem:[#allocation5 + $0xb58] sm:$0xff]
    %v452 = vld [vmem:[#allocation5 + $0xb60] sm:$0xff]
    %v453 = vld [vmem:[#allocation5 + $0xb68] sm:$0xff]
    %v454 = vld [vmem:[#allocation5 + $0xb70] sm:$0xff]
    %v455 = vld [vmem:[#allocation5 + $0xb78] sm:$0xff]
    %v456 = vld [vmem:[#allocation5 + $0xb80] sm:$0xff]
    %v457 = vld [vmem:[#allocation5 + $0xb88] sm:$0xff]
    %v458 = vld [vmem:[#allocation5 + $0xb90] sm:$0xff]
    %v459 = vld [vmem:[#allocation5 + $0xb98] sm:$0xff]
    %v460 = vld [vmem:[#allocation5 + $0xba0] sm:$0xff]
    %v461 = vld [vmem:[#allocation5 + $0xba8] sm:$0xff]
    %v462 = vld [vmem:[#allocation5 + $0xbb0] sm:$0xff]
    %v463 = vld [vmem:[#allocation5 + $0xbb8] sm:$0xff]
    %v464 = vld [vmem:[#allocation5 + $0xbc0] sm:$0xff]
    %v465 = vld [vmem:[#allocation5 + $0xbc8] sm:$0xff]
    %v466 = vld [vmem:[#allocation5 + $0xbd0] sm:$0xff]
    %v467 = vld [vmem:[#allocation5 + $0xbd8] sm:$0xff]
    %v468 = vld [vmem:[#allocation5 + $0xbe0] sm:$0xff]
    %v469 = vld [vmem:[#allocation5 + $0xbe8] sm:$0xff]
    %v470 = vld [vmem:[#allocation5 + $0xbf0] sm:$0xff]
    %v471 = vld [vmem:[#allocation5 + $0xbf8] sm:$0xff]
    %v472 = vld [vmem:[#allocation5 + $0xc00] sm:$0xff]
    %v473 = vld [vmem:[#allocation5 + $0xc08] sm:$0xff]
    %v474 = vld [vmem:[#allocation5 + $0xc10] sm:$0xff]
    %v475 = vld [vmem:[#allocation5 + $0xc18] sm:$0xff]
    %v476 = vld [vmem:[#allocation5 + $0xc20] sm:$0xff]
    %v477 = vld [vmem:[#allocation5 + $0xc28] sm:$0xff]
    %v478 = vld [vmem:[#allocation5 + $0xc30] sm:$0xff]
    %v479 = vld [vmem:[#allocation5 + $0xc38] sm:$0xff]
    %v480 = vld [vmem:[#allocation5 + $0xc40] sm:$0xff]
    %v481 = vld [vmem:[#allocation5 + $0xc48] sm:$0xff]
    %v482 = vld [vmem:[#allocation5 + $0xc50] sm:$0xff]
    %v483 = vld [vmem:[#allocation5 + $0xc58] sm:$0xff]
    %v484 = vld [vmem:[#allocation5 + $0xc60] sm:$0xff]
    %v485 = vld [vmem:[#allocation5 + $0xc68] sm:$0xff]
    %v486 = vld [vmem:[#allocation5 + $0xc70] sm:$0xff]
    %v487 = vld [vmem:[#allocation5 + $0xc78] sm:$0xff]
    %v488 = vld [vmem:[#allocation5 + $0xc80] sm:$0xff]
    %v489 = vld [vmem:[#allocation5 + $0xc88] sm:$0xff]
    %v490 = vld [vmem:[#allocation5 + $0xc90] sm:$0xff]
    %v491 = vld [vmem:[#allocation5 + $0xc98] sm:$0xff]
    %v492 = vld [vmem:[#allocation5 + $0xca0] sm:$0xff]
    %v493 = vld [vmem:[#allocation5 + $0xca8] sm:$0xff]
    %v494 = vld [vmem:[#allocation5 + $0xcb0] sm:$0xff]
    %v495 = vld [vmem:[#allocation5 + $0xcb8] sm:$0xff]
    %v496 = vld [vmem:[#allocation5 + $0xcc0] sm:$0xff]
    %v497 = vld [vmem:[#allocation5 + $0xcc8] sm:$0xff]
    %v498 = vld [vmem:[#allocation5 + $0xcd0] sm:$0xff]
    %v499 = vld [vmem:[#allocation5 + $0xcd8] sm:$0xff]
    %v500 = vld [vmem:[#allocation5 + $0xce0] sm:$0xff]
    %v501 = vld [vmem:[#allocation5 + $0xce8] sm:$0xff]
    %v502 = vld [vmem:[#allocation5 + $0xcf0] sm:$0xff]
    %v503 = vld [vmem:[#allocation5 + $0xcf8] sm:$0xff]
    %v504 = vld [vmem:[#allocation5 + $0xd00] sm:$0xff]
    %v505 = vld [vmem:[#allocation5 + $0xd08] sm:$0xff]
    %v506 = vld [vmem:[#allocation5 + $0xd10] sm:$0xff]
    %v507 = vld [vmem:[#allocation5 + $0xd18] sm:$0xff]
    %v508 = vld [vmem:[#allocation5 + $0xd20] sm:$0xff]
    %v509 = vld [vmem:[#allocation5 + $0xd28] sm:$0xff]
    %v510 = vld [vmem:[#allocation5 + $0xd30] sm:$0xff]
    %v511 = vld [vmem:[#allocation5 + $0xd38] sm:$0xff]
    %v512 = vld [vmem:[#allocation5 + $0xd40] sm:$0xff]
    %v513 = vld [vmem:[#allocation5 + $0xd48] sm:$0xff]
    %v514 = vld [vmem:[#allocation5 + $0xd50] sm:$0xff]
    %v515 = vld [vmem:[#allocation5 + $0xd58] sm:$0xff]
    %v516 = vld [vmem:[#allocation5 + $0xd60] sm:$0xff]
    %v517 = vld [vmem:[#allocation5 + $0xd68] sm:$0xff]
    %v518 = vld [vmem:[#allocation5 + $0xd70] sm:$0xff]
    %v519 = vld [vmem:[#allocation5 + $0xd78] sm:$0xff]
    %v520 = vld [vmem:[#allocation5 + $0xd80] sm:$0xff]
    %v521 = vld [vmem:[#allocation5 + $0xd88] sm:$0xff]
    %v522 = vld [vmem:[#allocation5 + $0xd90] sm:$0xff]
    %v523 = vld [vmem:[#allocation5 + $0xd98] sm:$0xff]
    %v524 = vld [vmem:[#allocation5 + $0xda0] sm:$0xff]
    %v525 = vld [vmem:[#allocation5 + $0xda8] sm:$0xff]
    %v526 = vld [vmem:[#allocation5 + $0xdb0] sm:$0xff]
    %v527 = vld [vmem:[#allocation5 + $0xdb8] sm:$0xff]
    %v528 = vld [vmem:[#allocation5 + $0xdc0] sm:$0xff]
    %v529 = vld [vmem:[#allocation5 + $0xdc8] sm:$0xff]
    %v530 = vld [vmem:[#allocation5 + $0xdd0] sm:$0xff]
    %v531 = vld [vmem:[#allocation5 + $0xdd8] sm:$0xff]
    %v532 = vld [vmem:[#allocation5 + $0xde0] sm:$0xff]
    %v533 = vld [vmem:[#allocation5 + $0xde8] sm:$0xff]
    %v534 = vld [vmem:[#allocation5 + $0xdf0] sm:$0xff]
    %v535 = vld [vmem:[#allocation5 + $0xdf8] sm:$0xff]
    %v536 = vld [vmem:[#allocation5 + $0xe00] sm:$0xff]
    %v537 = vld [vmem:[#allocation5 + $0xe08] sm:$0xff]
    %v538 = vld [vmem:[#allocation5 + $0xe10] sm:$0xff]
    %v539 = vld [vmem:[#allocation5 + $0xe18] sm:$0xff]
    %v540 = vld [vmem:[#allocation5 + $0xe20] sm:$0xff]
    %v541 = vld [vmem:[#allocation5 + $0xe28] sm:$0xff]
    %v542 = vld [vmem:[#allocation5 + $0xe30] sm:$0xff]
    %v543 = vld [vmem:[#allocation5 + $0xe38] sm:$0xff]
    %v544 = vld [vmem:[#allocation5 + $0xe40] sm:$0xff]
    %v545 = vld [vmem:[#allocation5 + $0xe48] sm:$0xff]
    %v546 = vld [vmem:[#allocation5 + $0xe50] sm:$0xff]
    %v547 = vld [vmem:[#allocation5 + $0xe58] sm:$0xff]
    %v548 = vld [vmem:[#allocation5 + $0xe60] sm:$0xff]
    %v549 = vld [vmem:[#allocation5 + $0xe68] sm:$0xff]
    %v550 = vld [vmem:[#allocation5 + $0xe70] sm:$0xff]
    %v551 = vld [vmem:[#allocation5 + $0xe78] sm:$0xff]
    %v552 = vld [vmem:[#allocation5 + $0xe80] sm:$0xff]
    %v553 = vld [vmem:[#allocation5 + $0xe88] sm:$0xff]
    %v554 = vld [vmem:[#allocation5 + $0xe90] sm:$0xff]
    %v555 = vld [vmem:[#allocation5 + $0xe98] sm:$0xff]
    %v556 = vld [vmem:[#allocation5 + $0xea0] sm:$0xff]
    %v557 = vld [vmem:[#allocation5 + $0xea8] sm:$0xff]
    %v558 = vld [vmem:[#allocation5 + $0xeb0] sm:$0xff]
    %v559 = vld [vmem:[#allocation5 + $0xeb8] sm:$0xff]
    %v560 = vld [vmem:[#allocation5 + $0xec0] sm:$0xff]
    %v561 = vld [vmem:[#allocation5 + $0xec8] sm:$0xff]
    %v562 = vld [vmem:[#allocation5 + $0xed0] sm:$0xff]
    %v563 = vld [vmem:[#allocation5 + $0xed8] sm:$0xff]
    %v564 = vld [vmem:[#allocation5 + $0xee0] sm:$0xff]
    %v565 = vld [vmem:[#allocation5 + $0xee8] sm:$0xff]
    %v566 = vld [vmem:[#allocation5 + $0xef0] sm:$0xff]
    %v567 = vld [vmem:[#allocation5 + $0xef8] sm:$0xff]
    %v568 = vld [vmem:[#allocation5 + $0xf00] sm:$0xff]
    %v569 = vld [vmem:[#allocation5 + $0xf08] sm:$0xff]
    %v570 = vld [vmem:[#allocation5 + $0xf10] sm:$0xff]
    %v571 = vld [vmem:[#allocation5 + $0xf18] sm:$0xff]
    %v572 = vld [vmem:[#allocation5 + $0xf20] sm:$0xff]
    %v573 = vld [vmem:[#allocation5 + $0xf28] sm:$0xff]
    %v574 = vld [vmem:[#allocation5 + $0xf30] sm:$0xff]
    %v575 = vld [vmem:[#allocation5 + $0xf38] sm:$0xff]
    %v576 = vld [vmem:[#allocation5 + $0xf40] sm:$0xff]
    %v577 = vld [vmem:[#allocation5 + $0xf48] sm:$0xff]
    %v578 = vld [vmem:[#allocation5 + $0xf50] sm:$0xff]
    %v579 = vld [vmem:[#allocation5 + $0xf58] sm:$0xff]
    %v580 = vld [vmem:[#allocation5 + $0xf60] sm:$0xff]
    %v581 = vld [vmem:[#allocation5 + $0xf68] sm:$0xff]
    %v582 = vld [vmem:[#allocation5 + $0xf70] sm:$0xff]
    %v583 = vld [vmem:[#allocation5 + $0xf78] sm:$0xff]
    %v584 = vld [vmem:[#allocation5 + $0xf80] sm:$0xff]
    %v585 = vld [vmem:[#allocation5 + $0xf88] sm:$0xff]
    %v586 = vld [vmem:[#allocation5 + $0xf90] sm:$0xff]
    %v587 = vld [vmem:[#allocation5 + $0xf98] sm:$0xff]
    %v588 = vld [vmem:[#allocation5 + $0xfa0] sm:$0xff]
    %v589 = vld [vmem:[#allocation5 + $0xfa8] sm:$0xff]
    %v590 = vld [vmem:[#allocation5 + $0xfb0] sm:$0xff]
    %v591 = vld [vmem:[#allocation5 + $0xfb8] sm:$0xff]
    %v592 = vld [vmem:[#allocation5 + $0xfc0] sm:$0xff]
    %v593 = vld [vmem:[#allocation5 + $0xfc8] sm:$0xff]
    %v594 = vld [vmem:[#allocation5 + $0xfd0] sm:$0xff]
    %v595 = vld [vmem:[#allocation5 + $0xfd8] sm:$0xff]
    %v596 = vld [vmem:[#allocation5 + $0xfe0] sm:$0xff]
    %v597 = vld [vmem:[#allocation5 + $0xfe8] sm:$0xff]
    %v598 = vld [vmem:[#allocation5 + $0xff0] sm:$0xff]
    %v599 = vld [vmem:[#allocation5 + $0xff8] sm:$0xff]
    %v600 = vld [vmem:[#allocation5 + $0x1000] sm:$0xff]
    %v601 = vld [vmem:[#allocation5 + $0x1008] sm:$0xff]
    %v602 = vld [vmem:[#allocation5 + $0x1010] sm:$0xff]
    %v603 = vld [vmem:[#allocation5 + $0x1018] sm:$0xff]
    %v604 = vld [vmem:[#allocation5 + $0x1020] sm:$0xff]
    %v605 = vld [vmem:[#allocation5 + $0x1028] sm:$0xff]
    %v606 = vld [vmem:[#allocation5 + $0x1030] sm:$0xff]
    %v607 = vld [vmem:[#allocation5 + $0x1038] sm:$0xff]
    %v608 = vld [vmem:[#allocation5 + $0x1040] sm:$0xff]
    %v609 = vld [vmem:[#allocation5 + $0x1048] sm:$0xff]
    %v610 = vld [vmem:[#allocation5 + $0x1050] sm:$0xff]
    %v611 = vld [vmem:[#allocation5 + $0x1058] sm:$0xff]
    %v612 = vld [vmem:[#allocation5 + $0x1060] sm:$0xff]
    %v613 = vld [vmem:[#allocation5 + $0x1068] sm:$0xff]
    %v614 = vld [vmem:[#allocation5 + $0x1070] sm:$0xff]
    %v615 = vld [vmem:[#allocation5 + $0x1078] sm:$0xff]
    %v616 = vld [vmem:[#allocation5 + $0x1080] sm:$0xff]
    %v617 = vld [vmem:[#allocation5 + $0x1088] sm:$0xff]
    %v618 = vld [vmem:[#allocation5 + $0x1090] sm:$0xff]
    %v619 = vld [vmem:[#allocation5 + $0x1098] sm:$0xff]
    %v620 = vld [vmem:[#allocation5 + $0x10a0] sm:$0xff]
    %v621 = vld [vmem:[#allocation5 + $0x10a8] sm:$0xff]
    %v622 = vld [vmem:[#allocation5 + $0x10b0] sm:$0xff]
    %v623 = vld [vmem:[#allocation5 + $0x10b8] sm:$0xff]
    %v624 = vld [vmem:[#allocation5 + $0x10c0] sm:$0xff]
    %v625 = vld [vmem:[#allocation5 + $0x10c8] sm:$0xff]
    %v626 = vld [vmem:[#allocation5 + $0x10d0] sm:$0xff]
    %v627 = vld [vmem:[#allocation5 + $0x10d8] sm:$0xff]
    %v628 = vld [vmem:[#allocation5 + $0x10e0] sm:$0xff]
    %v629 = vld [vmem:[#allocation5 + $0x10e8] sm:$0xff]
    %v630 = vld [vmem:[#allocation5 + $0x10f0] sm:$0xff]
    %v631 = vld [vmem:[#allocation5 + $0x10f8] sm:$0xff]
    %v632 = vld [vmem:[#allocation5 + $0x1100] sm:$0xff]
    %v633 = vld [vmem:[#allocation5 + $0x1108] sm:$0xff]
    %v634 = vld [vmem:[#allocation5 + $0x1110] sm:$0xff]
    %v635 = vld [vmem:[#allocation5 + $0x1118] sm:$0xff]
    %v636 = vld [vmem:[#allocation5 + $0x1120] sm:$0xff]
    %v637 = vld [vmem:[#allocation5 + $0x1128] sm:$0xff]
    %v638 = vld [vmem:[#allocation5 + $0x1130] sm:$0xff]
    %v639 = vld [vmem:[#allocation5 + $0x1138] sm:$0xff]
    %v640 = vld [vmem:[#allocation5 + $0x1140] sm:$0xff]
    %v641 = vld [vmem:[#allocation5 + $0x1148] sm:$0xff]
    %v642 = vld [vmem:[#allocation5 + $0x1150] sm:$0xff]
    %v643 = vld [vmem:[#allocation5 + $0x1158] sm:$0xff]
    %v644 = vld [vmem:[#allocation5 + $0x1160] sm:$0xff]
    %v645 = vld [vmem:[#allocation5 + $0x1168] sm:$0xff]
    %v646 = vld [vmem:[#allocation5 + $0x1170] sm:$0xff]
    %v647 = vld [vmem:[#allocation5 + $0x1178] sm:$0xff]
    %v648 = vld [vmem:[#allocation5 + $0x1180] sm:$0xff]
    %v649 = vld [vmem:[#allocation5 + $0x1188] sm:$0xff]
    %v650 = vld [vmem:[#allocation5 + $0x1190] sm:$0xff]
    %v651 = vld [vmem:[#allocation5 + $0x1198] sm:$0xff]
    %v652 = vld [vmem:[#allocation5 + $0x11a0] sm:$0xff]
    %v653 = vld [vmem:[#allocation5 + $0x11a8] sm:$0xff]
    %v654 = vld [vmem:[#allocation5 + $0x11b0] sm:$0xff]
    %v655 = vld [vmem:[#allocation5 + $0x11b8] sm:$0xff]
    %v656 = vld [vmem:[#allocation5 + $0x11c0] sm:$0xff]
    %v657 = vld [vmem:[#allocation5 + $0x11c8] sm:$0xff]
    %v658 = vld [vmem:[#allocation5 + $0x11d0] sm:$0xff]
    %v659 = vld [vmem:[#allocation5 + $0x11d8] sm:$0xff]
    %v660 = vld [vmem:[#allocation5 + $0x11e0] sm:$0xff]
    %v661 = vld [vmem:[#allocation5 + $0x11e8] sm:$0xff]
    %v662 = vld [vmem:[#allocation5 + $0x11f0] sm:$0xff]
    %v663 = vld [vmem:[#allocation5 + $0x11f8] sm:$0xff]
    %v664 = vld [vmem:[#allocation5 + $0x1200] sm:$0xff]
    %v665 = vld [vmem:[#allocation5 + $0x1208] sm:$0xff]
    %v666 = vld [vmem:[#allocation5 + $0x1210] sm:$0xff]
    %v667 = vld [vmem:[#allocation5 + $0x1218] sm:$0xff]
    %v668 = vld [vmem:[#allocation5 + $0x1220] sm:$0xff]
    %v669 = vld [vmem:[#allocation5 + $0x1228] sm:$0xff]
    %v670 = vld [vmem:[#allocation5 + $0x1230] sm:$0xff]
    %v671 = vld [vmem:[#allocation5 + $0x1238] sm:$0xff]
    %v672 = vld [vmem:[#allocation5 + $0x1240] sm:$0xff]
    %v673 = vld [vmem:[#allocation5 + $0x1248] sm:$0xff]
    %v674 = vld [vmem:[#allocation5 + $0x1250] sm:$0xff]
    %v675 = vld [vmem:[#allocation5 + $0x1258] sm:$0xff]
    %v676 = vld [vmem:[#allocation5 + $0x1260] sm:$0xff]
    %v677 = vld [vmem:[#allocation5 + $0x1268] sm:$0xff]
    %v678 = vld [vmem:[#allocation5 + $0x1270] sm:$0xff]
    %v679 = vld [vmem:[#allocation5 + $0x1278] sm:$0xff]
    %v680 = vld [vmem:[#allocation5 + $0x1280] sm:$0xff]
    %v681 = vld [vmem:[#allocation5 + $0x1288] sm:$0xff]
    %v682 = vld [vmem:[#allocation5 + $0x1290] sm:$0xff]
    %v683 = vld [vmem:[#allocation5 + $0x1298] sm:$0xff]
    %v684 = vld [vmem:[#allocation5 + $0x12a0] sm:$0xff]
    %v685 = vld [vmem:[#allocation5 + $0x12a8] sm:$0xff]
    %v686 = vld [vmem:[#allocation5 + $0x12b0] sm:$0xff]
    %v687 = vld [vmem:[#allocation5 + $0x12b8] sm:$0xff]
    %v688 = vld [vmem:[#allocation5 + $0x12c0] sm:$0xff]
    %v689 = vld [vmem:[#allocation5 + $0x12c8] sm:$0xff]
    %v690 = vld [vmem:[#allocation5 + $0x12d0] sm:$0xff]
    %v691 = vld [vmem:[#allocation5 + $0x12d8] sm:$0xff]
    %v692 = vld [vmem:[#allocation5 + $0x12e0] sm:$0xff]
    %v693 = vld [vmem:[#allocation5 + $0x12e8] sm:$0xff]
    %v694 = vld [vmem:[#allocation5 + $0x12f0] sm:$0xff]
    %v695 = vld [vmem:[#allocation5 + $0x12f8] sm:$0xff]
    %v696 = vld [vmem:[#allocation5 + $0x1300] sm:$0xff]
    %v697 = vld [vmem:[#allocation5 + $0x1308] sm:$0xff]
    %v698 = vld [vmem:[#allocation5 + $0x1310] sm:$0xff]
    %v699 = vld [vmem:[#allocation5 + $0x1318] sm:$0xff]
    %v700 = vld [vmem:[#allocation5 + $0x1320] sm:$0xff]
    %v701 = vld [vmem:[#allocation5 + $0x1328] sm:$0xff]
    %v702 = vld [vmem:[#allocation5 + $0x1330] sm:$0xff]
    %v703 = vld [vmem:[#allocation5 + $0x1338] sm:$0xff]
    %v704 = vld [vmem:[#allocation5 + $0x1340] sm:$0xff]
    %v705 = vld [vmem:[#allocation5 + $0x1348] sm:$0xff]
    %v706 = vld [vmem:[#allocation5 + $0x1350] sm:$0xff]
    %v707 = vld [vmem:[#allocation5 + $0x1358] sm:$0xff]
    %v708 = vld [vmem:[#allocation5 + $0x1360] sm:$0xff]
    %v709 = vld [vmem:[#allocation5 + $0x1368] sm:$0xff]
    %v710 = vld [vmem:[#allocation5 + $0x1370] sm:$0xff]
    %v711 = vld [vmem:[#allocation5 + $0x1378] sm:$0xff]
    %v712 = vld [vmem:[#allocation5 + $0x1380] sm:$0xff]
    %v713 = vld [vmem:[#allocation5 + $0x1388] sm:$0xff]
    %v714 = vld [vmem:[#allocation5 + $0x1390] sm:$0xff]
    %v715 = vld [vmem:[#allocation5 + $0x1398] sm:$0xff]
    %v716 = vld [vmem:[#allocation5 + $0x13a0] sm:$0xff]
    %v717 = vld [vmem:[#allocation5 + $0x13a8] sm:$0xff]
    %v718 = vld [vmem:[#allocation5 + $0x13b0] sm:$0xff]
    %v719 = vld [vmem:[#allocation5 + $0x13b8] sm:$0xff]
    %v720 = vld [vmem:[#allocation5 + $0x13c0] sm:$0xff]
    %v721 = vld [vmem:[#allocation5 + $0x13c8] sm:$0xff]
    %v722 = vld [vmem:[#allocation5 + $0x13d0] sm:$0xff]
    %v723 = vld [vmem:[#allocation5 + $0x13d8] sm:$0xff]
    %v724 = vld [vmem:[#allocation5 + $0x13e0] sm:$0xff]
    %v725 = vld [vmem:[#allocation5 + $0x13e8] sm:$0xff]
    %v726 = vld [vmem:[#allocation5 + $0x13f0] sm:$0xff]
    %v727 = vld [vmem:[#allocation5 + $0x13f8] sm:$0xff]
    %v728 = vld [vmem:[#allocation5 + $0x1400] sm:$0xff]
    %v729 = vld [vmem:[#allocation5 + $0x1408] sm:$0xff]
    %v730 = vld [vmem:[#allocation5 + $0x1410] sm:$0xff]
    %v731 = vld [vmem:[#allocation5 + $0x1418] sm:$0xff]
    %v732 = vld [vmem:[#allocation5 + $0x1420] sm:$0xff]
    %v733 = vld [vmem:[#allocation5 + $0x1428] sm:$0xff]
    %v734 = vld [vmem:[#allocation5 + $0x1430] sm:$0xff]
    %v735 = vld [vmem:[#allocation5 + $0x1438] sm:$0xff]
    %v736 = vld [vmem:[#allocation5 + $0x1440] sm:$0xff]
    %v737 = vld [vmem:[#allocation5 + $0x1448] sm:$0xff]
    %v738 = vld [vmem:[#allocation5 + $0x1450] sm:$0xff]
    %v739 = vld [vmem:[#allocation5 + $0x1458] sm:$0xff]
    %v740 = vld [vmem:[#allocation5 + $0x1460] sm:$0xff]
    %v741 = vld [vmem:[#allocation5 + $0x1468] sm:$0xff]
    %v742 = vld [vmem:[#allocation5 + $0x1470] sm:$0xff]
    %v743 = vld [vmem:[#allocation5 + $0x1478] sm:$0xff]
    %v744 = vld [vmem:[#allocation5 + $0x1480] sm:$0xff]
    %v745 = vld [vmem:[#allocation5 + $0x1488] sm:$0xff]
    %v746 = vld [vmem:[#allocation5 + $0x1490] sm:$0xff]
    %v747 = vld [vmem:[#allocation5 + $0x1498] sm:$0xff]
    %v748 = vld [vmem:[#allocation5 + $0x14a0] sm:$0xff]
    %v749 = vld [vmem:[#allocation5 + $0x14a8] sm:$0xff]
    %v750 = vld [vmem:[#allocation5 + $0x14b0] sm:$0xff]
    %v751 = vld [vmem:[#allocation5 + $0x14b8] sm:$0xff]
    %v752 = vld [vmem:[#allocation5 + $0x14c0] sm:$0xff]
    %v753 = vld [vmem:[#allocation5 + $0x14c8] sm:$0xff]
    %v754 = vld [vmem:[#allocation5 + $0x14d0] sm:$0xff]
    %v755 = vld [vmem:[#allocation5 + $0x14d8] sm:$0xff]
    %v756 = vld [vmem:[#allocation5 + $0x14e0] sm:$0xff]
    %v757 = vld [vmem:[#allocation5 + $0x14e8] sm:$0xff]
    %v758 = vld [vmem:[#allocation5 + $0x14f0] sm:$0xff]
    %v759 = vld [vmem:[#allocation5 + $0x14f8] sm:$0xff]
    %v760 = vld [vmem:[#allocation5 + $0x1500] sm:$0xff]
    %v761 = vld [vmem:[#allocation5 + $0x1508] sm:$0xff]
    %v762 = vld [vmem:[#allocation5 + $0x1510] sm:$0xff]
    %v763 = vld [vmem:[#allocation5 + $0x1518] sm:$0xff]
    %v764 = vld [vmem:[#allocation5 + $0x1520] sm:$0xff]
    %v765 = vld [vmem:[#allocation5 + $0x1528] sm:$0xff]
    %v766 = vld [vmem:[#allocation5 + $0x1530] sm:$0xff]
    %v767 = vld [vmem:[#allocation5 + $0x1538] sm:$0xff]
    %v768 = vld [vmem:[#allocation5 + $0x1540] sm:$0xff]
    %v769 = vld [vmem:[#allocation5 + $0x1548] sm:$0xff]
    %v770 = vld [vmem:[#allocation5 + $0x1550] sm:$0xff]
    %v771 = vld [vmem:[#allocation5 + $0x1558] sm:$0xff]
    %v772 = vld [vmem:[#allocation5 + $0x1560] sm:$0xff]
    %v773 = vld [vmem:[#allocation5 + $0x1568] sm:$0xff]
    %v774 = vld [vmem:[#allocation5 + $0x1570] sm:$0xff]
    %v775 = vld [vmem:[#allocation5 + $0x1578] sm:$0xff]
    %v776 = vld [vmem:[#allocation5 + $0x1580] sm:$0xff]
    %v777 = vld [vmem:[#allocation5 + $0x1588] sm:$0xff]
    %v778 = vld [vmem:[#allocation5 + $0x1590] sm:$0xff]
    %v779 = vld [vmem:[#allocation5 + $0x1598] sm:$0xff]
    %v780 = vld [vmem:[#allocation5 + $0x15a0] sm:$0xff]
    %v781 = vld [vmem:[#allocation5 + $0x15a8] sm:$0xff]
    %v782 = vld [vmem:[#allocation5 + $0x15b0] sm:$0xff]
    %v783 = vld [vmem:[#allocation5 + $0x15b8] sm:$0xff]
    %v784 = vld [vmem:[#allocation5 + $0x15c0] sm:$0xff]
    %v785 = vld [vmem:[#allocation5 + $0x15c8] sm:$0xff]
    %v786 = vld [vmem:[#allocation5 + $0x15d0] sm:$0xff]
    %v787 = vld [vmem:[#allocation5 + $0x15d8] sm:$0xff]
    %v788 = vld [vmem:[#allocation5 + $0x15e0] sm:$0xff]
    %v789 = vld [vmem:[#allocation5 + $0x15e8] sm:$0xff]
    %v790 = vld [vmem:[#allocation5 + $0x15f0] sm:$0xff]
    %v791 = vld [vmem:[#allocation5 + $0x15f8] sm:$0xff]
    %v792 = vld [vmem:[#allocation5 + $0x1600] sm:$0xff]
    %v793 = vld [vmem:[#allocation5 + $0x1608] sm:$0xff]
    %v794 = vld [vmem:[#allocation5 + $0x1610] sm:$0xff]
    %v795 = vld [vmem:[#allocation5 + $0x1618] sm:$0xff]
    %v796 = vld [vmem:[#allocation5 + $0x1620] sm:$0xff]
    %v797 = vld [vmem:[#allocation5 + $0x1628] sm:$0xff]
    %v798 = vld [vmem:[#allocation5 + $0x1630] sm:$0xff]
    %v799 = vld [vmem:[#allocation5 + $0x1638] sm:$0xff]
    %v800 = vld [vmem:[#allocation5 + $0x1640] sm:$0xff]
    %v801 = vld [vmem:[#allocation5 + $0x1648] sm:$0xff]
    %v802 = vld [vmem:[#allocation5 + $0x1650] sm:$0xff]
    %v803 = vld [vmem:[#allocation5 + $0x1658] sm:$0xff]
    %v804 = vld [vmem:[#allocation5 + $0x1660] sm:$0xff]
    %v805 = vld [vmem:[#allocation5 + $0x1668] sm:$0xff]
    %v806 = vld [vmem:[#allocation5 + $0x1670] sm:$0xff]
    %v807 = vld [vmem:[#allocation5 + $0x1678] sm:$0xff]
    %v808 = vld [vmem:[#allocation5 + $0x1680] sm:$0xff]
    %v809 = vld [vmem:[#allocation5 + $0x1688] sm:$0xff]
    %v810 = vld [vmem:[#allocation5 + $0x1690] sm:$0xff]
    %v811 = vld [vmem:[#allocation5 + $0x1698] sm:$0xff]
    %v812 = vld [vmem:[#allocation5 + $0x16a0] sm:$0xff]
    %v813 = vld [vmem:[#allocation5 + $0x16a8] sm:$0xff]
    %v814 = vld [vmem:[#allocation5 + $0x16b0] sm:$0xff]
    %v815 = vld [vmem:[#allocation5 + $0x16b8] sm:$0xff]
    %v816 = vld [vmem:[#allocation5 + $0x16c0] sm:$0xff]
    %v817 = vld [vmem:[#allocation5 + $0x16c8] sm:$0xff]
    %v818 = vld [vmem:[#allocation5 + $0x16d0] sm:$0xff]
    %v819 = vld [vmem:[#allocation5 + $0x16d8] sm:$0xff]
    %v820 = vld [vmem:[#allocation5 + $0x16e0] sm:$0xff]
    %v821 = vld [vmem:[#allocation5 + $0x16e8] sm:$0xff]
    %v822 = vld [vmem:[#allocation5 + $0x16f0] sm:$0xff]
    %v823 = vld [vmem:[#allocation5 + $0x16f8] sm:$0xff]
    %v824 = vld [vmem:[#allocation5 + $0x1700] sm:$0xff]
    %v825 = vld [vmem:[#allocation5 + $0x1708] sm:$0xff]
    %v826 = vld [vmem:[#allocation5 + $0x1710] sm:$0xff]
    %v827 = vld [vmem:[#allocation5 + $0x1718] sm:$0xff]
    %v828 = vld [vmem:[#allocation5 + $0x1720] sm:$0xff]
    %v829 = vld [vmem:[#allocation5 + $0x1728] sm:$0xff]
    %v830 = vld [vmem:[#allocation5 + $0x1730] sm:$0xff]
    %v831 = vld [vmem:[#allocation5 + $0x1738] sm:$0xff]
    %v832 = vld [vmem:[#allocation5 + $0x1740] sm:$0xff]
    %v833 = vld [vmem:[#allocation5 + $0x1748] sm:$0xff]
    %v834 = vld [vmem:[#allocation5 + $0x1750] sm:$0xff]
    %v835 = vld [vmem:[#allocation5 + $0x1758] sm:$0xff]
    %v836 = vld [vmem:[#allocation5 + $0x1760] sm:$0xff]
    %v837 = vld [vmem:[#allocation5 + $0x1768] sm:$0xff]
    %v838 = vld [vmem:[#allocation5 + $0x1770] sm:$0xff]
    %v839 = vld [vmem:[#allocation5 + $0x1778] sm:$0xff]
    %v840 = vld [vmem:[#allocation5 + $0x1780] sm:$0xff]
    %v841 = vld [vmem:[#allocation5 + $0x1788] sm:$0xff]
    %v842 = vld [vmem:[#allocation5 + $0x1790] sm:$0xff]
    %v843 = vld [vmem:[#allocation5 + $0x1798] sm:$0xff]
    %v844 = vld [vmem:[#allocation5 + $0x17a0] sm:$0xff]
    %v845 = vld [vmem:[#allocation5 + $0x17a8] sm:$0xff]
    %v846 = vld [vmem:[#allocation5 + $0x17b0] sm:$0xff]
    %v847 = vld [vmem:[#allocation5 + $0x17b8] sm:$0xff]
    %v848 = vld [vmem:[#allocation5 + $0x17c0] sm:$0xff]
    %v849 = vld [vmem:[#allocation5 + $0x17c8] sm:$0xff]
    %v850 = vld [vmem:[#allocation5 + $0x17d0] sm:$0xff]
    %v851 = vld [vmem:[#allocation5 + $0x17d8] sm:$0xff]
    %v852 = vld [vmem:[#allocation5 + $0x17e0] sm:$0xff]
    %v853 = vld [vmem:[#allocation5 + $0x17e8] sm:$0xff]
    %v854 = vld [vmem:[#allocation5 + $0x17f0] sm:$0xff]
    %v855 = vld [vmem:[#allocation5 + $0x17f8] sm:$0xff]
    %v856 = vld [vmem:[#allocation5 + $0x1800] sm:$0xff]
    %v857 = vld [vmem:[#allocation5 + $0x1808] sm:$0xff]
    %v858 = vld [vmem:[#allocation5 + $0x1810] sm:$0xff]
    %v859 = vld [vmem:[#allocation5 + $0x1818] sm:$0xff]
    %v860 = vld [vmem:[#allocation5 + $0x1820] sm:$0xff]
    %v861 = vld [vmem:[#allocation5 + $0x1828] sm:$0xff]
    %v862 = vld [vmem:[#allocation5 + $0x1830] sm:$0xff]
    %v863 = vld [vmem:[#allocation5 + $0x1838] sm:$0xff]
    %v864 = vld [vmem:[#allocation5 + $0x1840] sm:$0xff]
    %v865 = vld [vmem:[#allocation5 + $0x1848] sm:$0xff]
    %v866 = vld [vmem:[#allocation5 + $0x1850] sm:$0xff]
    %v867 = vld [vmem:[#allocation5 + $0x1858] sm:$0xff]
    %v868 = vld [vmem:[#allocation5 + $0x1860] sm:$0xff]
    %v869 = vld [vmem:[#allocation5 + $0x1868] sm:$0xff]
    %v870 = vld [vmem:[#allocation5 + $0x1870] sm:$0xff]
    %v871 = vld [vmem:[#allocation5 + $0x1878] sm:$0xff]
    %v872 = vld [vmem:[#allocation7] sm:$0xf]
    %v874 = vlaneseq
    %v875 = vshrl.u32 %v874, 7
    %v876 = vsub.s32 0, %v875
    %v877 = vrot.slane %v872, %v876
    %v878 = vlaneseq
    %v879 = vshrl.u32 %v878, 7
    %v880 = vsub.s32 1, %v879
    %v881 = vrot.slane %v872, %v880
    %v882 = vlaneseq
    %v883 = vshrl.u32 %v882, 7
    %v884 = vsub.s32 2, %v883
    %v885 = vrot.slane %v872, %v884
    %v886 = vlaneseq
    %v887 = vshrl.u32 %v886, 7
    %v888 = vsub.s32 3, %v887
    %v889 = vrot.slane %v872, %v888
    %v898 = vcombine.high %v84, %v84
    %v900 = vunpack.c.l.s4 1966171168
    %v901 = vunpack.c.0.s8 %v900
    %v902 = vlaneseq
    %v903 = vshrl.u32 %v902, 7
    %v904 = vsub.s32 %v901, %v903
    %v905 = vrot.slane %v84, %v904
    %v907 = vunpack.c.l.s4 1966171168
    %v908 = vunpack.c.0.s8 %v907
    %v909 = vlaneseq
    %v910 = vshrl.u32 %v909, 7
    %v911 = vsub.s32 %v908, %v910
    %v912 = vrot.slane %v898, %v911
    %v913 = vcombine.high %v905, %v905
    %v914 = vcombine.high %v912, %v912
    %v916 = vunpack.c.l.s4 1966171168
    %v917 = vunpack.c.0.s8 %v916
    %v918 = vlaneseq
    %v919 = vshrl.u32 %v918, 7
    %v920 = vsub.s32 %v917, %v919
    %v921 = vrot.slane %v905, %v920
    %v923 = vunpack.c.l.s4 1966171168
    %v924 = vunpack.c.0.s8 %v923
    %v925 = vlaneseq
    %v926 = vshrl.u32 %v925, 7
    %v927 = vsub.s32 %v924, %v926
    %v928 = vrot.slane %v912, %v927
    %v930 = vunpack.c.l.s4 1966171168
    %v931 = vunpack.c.0.s8 %v930
    %v932 = vlaneseq
    %v933 = vshrl.u32 %v932, 7
    %v934 = vsub.s32 %v931, %v933
    %v935 = vrot.slane %v913, %v934
    %v937 = vunpack.c.l.s4 1966171168
    %v938 = vunpack.c.0.s8 %v937
    %v939 = vlaneseq
    %v940 = vshrl.u32 %v939, 7
    %v941 = vsub.s32 %v938, %v940
    %v942 = vrot.slane %v914, %v941
    %v943 = vcombine.high %v921, %v921
    %v944 = vcombine.high %v928, %v928
    %v945 = vcombine.high %v935, %v935
    %v946 = vcombine.high %v942, %v942
    %v947 = vcombine.high %v85, %v85
    %v949 = vunpack.c.l.s4 1966171168
    %v950 = vunpack.c.0.s8 %v949
    %v951 = vlaneseq
    %v952 = vshrl.u32 %v951, 7
    %v953 = vsub.s32 %v950, %v952
    %v954 = vrot.slane %v85, %v953
    %v956 = vunpack.c.l.s4 1966171168
    %v957 = vunpack.c.0.s8 %v956
    %v958 = vlaneseq
    %v959 = vshrl.u32 %v958, 7
    %v960 = vsub.s32 %v957, %v959
    %v961 = vrot.slane %v947, %v960
    %v962 = vcombine.high %v954, %v954
    %v963 = vcombine.high %v961, %v961
    %v965 = vunpack.c.l.s4 1966171168
    %v966 = vunpack.c.0.s8 %v965
    %v967 = vlaneseq
    %v968 = vshrl.u32 %v967, 7
    %v969 = vsub.s32 %v966, %v968
    %v970 = vrot.slane %v954, %v969
    %v972 = vunpack.c.l.s4 1966171168
    %v973 = vunpack.c.0.s8 %v972
    %v974 = vlaneseq
    %v975 = vshrl.u32 %v974, 7
    %v976 = vsub.s32 %v973, %v975
    %v977 = vrot.slane %v961, %v976
    %v979 = vunpack.c.l.s4 1966171168
    %v980 = vunpack.c.0.s8 %v979
    %v981 = vlaneseq
    %v982 = vshrl.u32 %v981, 7
    %v983 = vsub.s32 %v980, %v982
    %v984 = vrot.slane %v962, %v983
    %v986 = vunpack.c.l.s4 1966171168
    %v987 = vunpack.c.0.s8 %v986
    %v988 = vlaneseq
    %v989 = vshrl.u32 %v988, 7
    %v990 = vsub.s32 %v987, %v989
    %v991 = vrot.slane %v963, %v990
    %v992 = vcombine.high %v970, %v970
    %v993 = vcombine.high %v977, %v977
    %v994 = vcombine.high %v984, %v984
    %v995 = vcombine.high %v991, %v991
    %v996 = vcombine.high %v86, %v86
    %v998 = vunpack.c.l.s4 1966171168
    %v999 = vunpack.c.0.s8 %v998
    %v1000 = vlaneseq
    %v1001 = vshrl.u32 %v1000, 7
    %v1002 = vsub.s32 %v999, %v1001
    %v1003 = vrot.slane %v86, %v1002
    %v1005 = vunpack.c.l.s4 1966171168
    %v1006 = vunpack.c.0.s8 %v1005
    %v1007 = vlaneseq
    %v1008 = vshrl.u32 %v1007, 7
    %v1009 = vsub.s32 %v1006, %v1008
    %v1010 = vrot.slane %v996, %v1009
    %v1011 = vcombine.high %v1003, %v1003
    %v1012 = vcombine.high %v1010, %v1010
    %v1014 = vunpack.c.l.s4 1966171168
    %v1015 = vunpack.c.0.s8 %v1014
    %v1016 = vlaneseq
    %v1017 = vshrl.u32 %v1016, 7
    %v1018 = vsub.s32 %v1015, %v1017
    %v1019 = vrot.slane %v1003, %v1018
    %v1021 = vunpack.c.l.s4 1966171168
    %v1022 = vunpack.c.0.s8 %v1021
    %v1023 = vlaneseq
    %v1024 = vshrl.u32 %v1023, 7
    %v1025 = vsub.s32 %v1022, %v1024
    %v1026 = vrot.slane %v1010, %v1025
    %v1028 = vunpack.c.l.s4 1966171168
    %v1029 = vunpack.c.0.s8 %v1028
    %v1030 = vlaneseq
    %v1031 = vshrl.u32 %v1030, 7
    %v1032 = vsub.s32 %v1029, %v1031
    %v1033 = vrot.slane %v1011, %v1032
    %v1035 = vunpack.c.l.s4 1966171168
    %v1036 = vunpack.c.0.s8 %v1035
    %v1037 = vlaneseq
    %v1038 = vshrl.u32 %v1037, 7
    %v1039 = vsub.s32 %v1036, %v1038
    %v1040 = vrot.slane %v1012, %v1039
    %v1041 = vcombine.high %v1019, %v1019
    %v1042 = vcombine.high %v1026, %v1026
    %v1043 = vcombine.high %v1033, %v1033
    %v1044 = vcombine.high %v1040, %v1040
    %v1046 = vunpack.c.l.s4 1966171168
    %v1047 = vunpack.c.0.s8 %v1046
    %v1048 = vlaneseq
    %v1049 = vshrl.u32 %v1048, 7
    %v1050 = vsub.s32 %v1047, %v1049
    %v1051 = vrot.slane %v87, %v1050
    %v1053 = vunpack.c.l.s4 1966171168
    %v1054 = vunpack.c.0.s8 %v1053
    %v1055 = vlaneseq
    %v1056 = vshrl.u32 %v1055, 7
    %v1057 = vsub.s32 %v1054, %v1056
    %v1058 = vrot.slane %v1051, %v1057
    %v1867 = vunpack.c.l.b16 %v88
    %v1868 = vunpack.c.h.b16 %v88
    %v1869 = vunpack.c.l.b16 %v89
    %v1870 = vunpack.c.h.b16 %v89
    %v1871 = vunpack.c.l.b16 %v90
    %v1872 = vunpack.c.h.b16 %v90
    %v1873 = vunpack.c.l.b16 %v91
    %v1874 = vunpack.c.h.b16 %v91
    %v1875 = vunpack.c.l.b16 %v92
    %v1876 = vunpack.c.h.b16 %v92
    %v1877 = vunpack.c.l.b16 %v93
    %v1878 = vunpack.c.h.b16 %v93
    %v1879 = vunpack.c.l.b16 %v94
    %v1880 = vunpack.c.h.b16 %v94
    %v1881 = vunpack.c.l.b16 %v95
    %v1882 = vunpack.c.h.b16 %v95
    %v1883 = vunpack.c.l.b16 %v96
    %v1884 = vunpack.c.h.b16 %v96
    %v1885 = vunpack.c.l.b16 %v97
    %v1886 = vunpack.c.h.b16 %v97
    %v1887 = vunpack.c.l.b16 %v98
    %v1888 = vunpack.c.h.b16 %v98
    %v1889 = vunpack.c.l.b16 %v99
    %v1890 = vunpack.c.h.b16 %v99
    %v1891 = vunpack.c.l.b16 %v100
    %v1892 = vunpack.c.h.b16 %v100
    %v1893 = vunpack.c.l.b16 %v101
    %v1894 = vunpack.c.h.b16 %v101
    %v1895 = vunpack.c.l.b16 %v102
    %v1896 = vunpack.c.h.b16 %v102
    %v1897 = vunpack.c.l.b16 %v103
    %v1898 = vunpack.c.h.b16 %v103
    %v1899 = vunpack.c.l.b16 %v104
    %v1900 = vunpack.c.h.b16 %v104
    %v1901 = vunpack.c.l.b16 %v105
    %v1902 = vunpack.c.h.b16 %v105
    %v1903 = vunpack.c.l.b16 %v106
    %v1904 = vunpack.c.h.b16 %v106
    %v1905 = vunpack.c.l.b16 %v107
    %v1906 = vunpack.c.h.b16 %v107
    %v1907 = vunpack.c.l.b16 %v108
    %v1908 = vunpack.c.h.b16 %v108
    %v1909 = vunpack.c.l.b16 %v109
    %v1910 = vunpack.c.h.b16 %v109
    %v1911 = vunpack.c.l.b16 %v110
    %v1912 = vunpack.c.h.b16 %v110
    %v1913 = vunpack.c.l.b16 %v111
    %v1914 = vunpack.c.h.b16 %v111
    %v1915 = vunpack.c.l.b16 %v112
    %v1916 = vunpack.c.h.b16 %v112
    %v1917 = vunpack.c.l.b16 %v113
    %v1918 = vunpack.c.h.b16 %v113
    %v1919 = vunpack.c.l.b16 %v114
    %v1920 = vunpack.c.h.b16 %v114
    %v1921 = vunpack.c.l.b16 %v115
    %v1922 = vunpack.c.h.b16 %v115
    %v1923 = vunpack.c.l.b16 %v116
    %v1924 = vunpack.c.h.b16 %v116
    %v1925 = vunpack.c.l.b16 %v117
    %v1926 = vunpack.c.h.b16 %v117
    %v1927 = vunpack.c.l.b16 %v118
    %v1928 = vunpack.c.h.b16 %v118
    %v1929 = vunpack.c.l.b16 %v119
    %v1930 = vunpack.c.h.b16 %v119
    %v1931 = vunpack.c.l.b16 %v120
    %v1932 = vunpack.c.h.b16 %v120
    %v1933 = vunpack.c.l.b16 %v121
    %v1934 = vunpack.c.h.b16 %v121
    %v1935 = vunpack.c.l.b16 %v122
    %v1936 = vunpack.c.h.b16 %v122
    %v1937 = vunpack.c.l.b16 %v123
    %v1938 = vunpack.c.h.b16 %v123
    %v1939 = vunpack.c.l.b16 %v124
    %v1940 = vunpack.c.h.b16 %v124
    %v1941 = vunpack.c.l.b16 %v125
    %v1942 = vunpack.c.h.b16 %v125
    %v1943 = vunpack.c.l.b16 %v126
    %v1944 = vunpack.c.h.b16 %v126
    %v1945 = vunpack.c.l.b16 %v127
    %v1946 = vunpack.c.h.b16 %v127
    %v1947 = vunpack.c.l.b16 %v128
    %v1948 = vunpack.c.h.b16 %v128
    %v1949 = vunpack.c.l.b16 %v129
    %v1950 = vunpack.c.h.b16 %v129
    %v1951 = vunpack.c.l.b16 %v130
    %v1952 = vunpack.c.h.b16 %v130
    %v1953 = vunpack.c.l.b16 %v131
    %v1954 = vunpack.c.h.b16 %v131
    %v1955 = vunpack.c.l.b16 %v132
    %v1956 = vunpack.c.h.b16 %v132
    %v1957 = vunpack.c.l.b16 %v133
    %v1958 = vunpack.c.h.b16 %v133
    %v1959 = vunpack.c.l.b16 %v134
    %v1960 = vunpack.c.h.b16 %v134
    %v1961 = vunpack.c.l.b16 %v135
    %v1962 = vunpack.c.h.b16 %v135
    %v1963 = vunpack.c.l.b16 %v136
    %v1964 = vunpack.c.h.b16 %v136
    %v1965 = vunpack.c.l.b16 %v137
    %v1966 = vunpack.c.h.b16 %v137
    %v1967 = vunpack.c.l.b16 %v138
    %v1968 = vunpack.c.h.b16 %v138
    %v1969 = vunpack.c.l.b16 %v139
    %v1970 = vunpack.c.h.b16 %v139
    %v1971 = vunpack.c.l.b16 %v140
    %v1972 = vunpack.c.h.b16 %v140
    %v1973 = vunpack.c.l.b16 %v141
    %v1974 = vunpack.c.h.b16 %v141
    %v1975 = vunpack.c.l.b16 %v142
    %v1976 = vunpack.c.h.b16 %v142
    %v1977 = vunpack.c.l.b16 %v143
    %v1978 = vunpack.c.h.b16 %v143
    %v1979 = vunpack.c.l.b16 %v144
    %v1980 = vunpack.c.h.b16 %v144
    %v1981 = vunpack.c.l.b16 %v145
    %v1982 = vunpack.c.h.b16 %v145
    %v1983 = vunpack.c.l.b16 %v146
    %v1984 = vunpack.c.h.b16 %v146
    %v1985 = vunpack.c.l.b16 %v147
    %v1986 = vunpack.c.h.b16 %v147
    %v1987 = vunpack.c.l.b16 %v148
    %v1988 = vunpack.c.h.b16 %v148
    %v1989 = vunpack.c.l.b16 %v149
    %v1990 = vunpack.c.h.b16 %v149
    %v1991 = vunpack.c.l.b16 %v150
    %v1992 = vunpack.c.h.b16 %v150
    %v1993 = vunpack.c.l.b16 %v151
    %v1994 = vunpack.c.h.b16 %v151
    %v1995 = vunpack.c.l.b16 %v152
    %v1996 = vunpack.c.h.b16 %v152
    %v1997 = vunpack.c.l.b16 %v153
    %v1998 = vunpack.c.h.b16 %v153
    %v1999 = vunpack.c.l.b16 %v154
    %v2000 = vunpack.c.h.b16 %v154
    %v2001 = vunpack.c.l.b16 %v155
    %v2002 = vunpack.c.h.b16 %v155
    %v2003 = vunpack.c.l.b16 %v156
    %v2004 = vunpack.c.h.b16 %v156
    %v2005 = vunpack.c.l.b16 %v157
    %v2006 = vunpack.c.h.b16 %v157
    %v2007 = vunpack.c.l.b16 %v158
    %v2008 = vunpack.c.h.b16 %v158
    %v2009 = vunpack.c.l.b16 %v159
    %v2010 = vunpack.c.h.b16 %v159
    %v2011 = vunpack.c.l.b16 %v160
    %v2012 = vunpack.c.h.b16 %v160
    %v2013 = vunpack.c.l.b16 %v161
    %v2014 = vunpack.c.h.b16 %v161
    %v2015 = vunpack.c.l.b16 %v162
    %v2016 = vunpack.c.h.b16 %v162
    %v2017 = vunpack.c.l.b16 %v163
    %v2018 = vunpack.c.h.b16 %v163
    %v2019 = vunpack.c.l.b16 %v164
    %v2020 = vunpack.c.h.b16 %v164
    %v2021 = vunpack.c.l.b16 %v165
    %v2022 = vunpack.c.h.b16 %v165
    %v2023 = vunpack.c.l.b16 %v166
    %v2024 = vunpack.c.h.b16 %v166
    %v2025 = vunpack.c.l.b16 %v167
    %v2026 = vunpack.c.h.b16 %v167
    %v2027 = vunpack.c.l.b16 %v168
    %v2028 = vunpack.c.h.b16 %v168
    %v2029 = vunpack.c.l.b16 %v169
    %v2030 = vunpack.c.h.b16 %v169
    %v2031 = vunpack.c.l.b16 %v170
    %v2032 = vunpack.c.h.b16 %v170
    %v2033 = vunpack.c.l.b16 %v171
    %v2034 = vunpack.c.h.b16 %v171
    %v2035 = vunpack.c.l.b16 %v172
    %v2036 = vunpack.c.h.b16 %v172
    %v2037 = vunpack.c.l.b16 %v173
    %v2038 = vunpack.c.h.b16 %v173
    %v2039 = vunpack.c.l.b16 %v174
    %v2040 = vunpack.c.h.b16 %v174
    %v2041 = vunpack.c.l.b16 %v175
    %v2042 = vunpack.c.h.b16 %v175
    %v2043 = vunpack.c.l.b16 %v176
    %v2044 = vunpack.c.h.b16 %v176
    %v2045 = vunpack.c.l.b16 %v177
    %v2046 = vunpack.c.h.b16 %v177
    %v2047 = vunpack.c.l.b16 %v178
    %v2048 = vunpack.c.h.b16 %v178
    %v2049 = vunpack.c.l.b16 %v179
    %v2050 = vunpack.c.h.b16 %v179
    %v2051 = vunpack.c.l.b16 %v180
    %v2052 = vunpack.c.h.b16 %v180
    %v2053 = vunpack.c.l.b16 %v181
    %v2054 = vunpack.c.h.b16 %v181
    %v2055 = vunpack.c.l.b16 %v182
    %v2056 = vunpack.c.h.b16 %v182
    %v2057 = vunpack.c.l.b16 %v183
    %v2058 = vunpack.c.h.b16 %v183
    %v2059 = vunpack.c.l.b16 %v184
    %v2060 = vunpack.c.h.b16 %v184
    %v2061 = vunpack.c.l.b16 %v185
    %v2062 = vunpack.c.h.b16 %v185
    %v2063 = vunpack.c.l.b16 %v186
    %v2064 = vunpack.c.h.b16 %v186
    %v2065 = vunpack.c.l.b16 %v187
    %v2066 = vunpack.c.h.b16 %v187
    %v2067 = vunpack.c.l.b16 %v188
    %v2068 = vunpack.c.h.b16 %v188
    %v2069 = vunpack.c.l.b16 %v189
    %v2070 = vunpack.c.h.b16 %v189
    %v2071 = vunpack.c.l.b16 %v190
    %v2072 = vunpack.c.h.b16 %v190
    %v2073 = vunpack.c.l.b16 %v191
    %v2074 = vunpack.c.h.b16 %v191
    %v2075 = vunpack.c.l.b16 %v192
    %v2076 = vunpack.c.h.b16 %v192
    %v2077 = vunpack.c.l.b16 %v193
    %v2078 = vunpack.c.h.b16 %v193
    %v2079 = vunpack.c.l.b16 %v194
    %v2080 = vunpack.c.h.b16 %v194
    %v2081 = vunpack.c.l.b16 %v195
    %v2082 = vunpack.c.h.b16 %v195
    %v2083 = vunpack.c.l.b16 %v196
    %v2084 = vunpack.c.h.b16 %v196
    %v2085 = vunpack.c.l.b16 %v197
    %v2086 = vunpack.c.h.b16 %v197
    %v2087 = vunpack.c.l.b16 %v198
    %v2088 = vunpack.c.h.b16 %v198
    %v2089 = vunpack.c.l.b16 %v199
    %v2090 = vunpack.c.h.b16 %v199
    %v2091 = vunpack.c.l.b16 %v200
    %v2092 = vunpack.c.h.b16 %v200
    %v2093 = vunpack.c.l.b16 %v201
    %v2094 = vunpack.c.h.b16 %v201
    %v2095 = vunpack.c.l.b16 %v202
    %v2096 = vunpack.c.h.b16 %v202
    %v2097 = vunpack.c.l.b16 %v203
    %v2098 = vunpack.c.h.b16 %v203
    %v2099 = vunpack.c.l.b16 %v204
    %v2100 = vunpack.c.h.b16 %v204
    %v2101 = vunpack.c.l.b16 %v205
    %v2102 = vunpack.c.h.b16 %v205
    %v2103 = vunpack.c.l.b16 %v206
    %v2104 = vunpack.c.h.b16 %v206
    %v2105 = vunpack.c.l.b16 %v207
    %v2106 = vunpack.c.h.b16 %v207
    %v2107 = vunpack.c.l.b16 %v208
    %v2108 = vunpack.c.h.b16 %v208
    %v2109 = vunpack.c.l.b16 %v209
    %v2110 = vunpack.c.h.b16 %v209
    %v2111 = vunpack.c.l.b16 %v210
    %v2112 = vunpack.c.h.b16 %v210
    %v2113 = vunpack.c.l.b16 %v211
    %v2114 = vunpack.c.h.b16 %v211
    %v2115 = vunpack.c.l.b16 %v212
    %v2116 = vunpack.c.h.b16 %v212
    %v2117 = vunpack.c.l.b16 %v213
    %v2118 = vunpack.c.h.b16 %v213
    %v2119 = vunpack.c.l.b16 %v214
    %v2120 = vunpack.c.h.b16 %v214
    %v2121 = vunpack.c.l.b16 %v215
    %v2122 = vunpack.c.h.b16 %v215
    %v2123 = vunpack.c.l.b16 %v216
    %v2124 = vunpack.c.h.b16 %v216
    %v2125 = vunpack.c.l.b16 %v217
    %v2126 = vunpack.c.h.b16 %v217
    %v2127 = vunpack.c.l.b16 %v218
    %v2128 = vunpack.c.h.b16 %v218
    %v2129 = vunpack.c.l.b16 %v219
    %v2130 = vunpack.c.h.b16 %v219
    %v2131 = vunpack.c.l.b16 %v220
    %v2132 = vunpack.c.h.b16 %v220
    %v2133 = vunpack.c.l.b16 %v221
    %v2134 = vunpack.c.h.b16 %v221
    %v2135 = vunpack.c.l.b16 %v222
    %v2136 = vunpack.c.h.b16 %v222
    %v2137 = vunpack.c.l.b16 %v223
    %v2138 = vunpack.c.h.b16 %v223
    %v2139 = vunpack.c.l.b16 %v224
    %v2140 = vunpack.c.h.b16 %v224
    %v2141 = vunpack.c.l.b16 %v225
    %v2142 = vunpack.c.h.b16 %v225
    %v2143 = vunpack.c.l.b16 %v226
    %v2144 = vunpack.c.h.b16 %v226
    %v2145 = vunpack.c.l.b16 %v227
    %v2146 = vunpack.c.h.b16 %v227
    %v2147 = vunpack.c.l.b16 %v228
    %v2148 = vunpack.c.h.b16 %v228
    %v2149 = vunpack.c.l.b16 %v229
    %v2150 = vunpack.c.h.b16 %v229
    %v2151 = vunpack.c.l.b16 %v230
    %v2152 = vunpack.c.h.b16 %v230
    %v2153 = vunpack.c.l.b16 %v231
    %v2154 = vunpack.c.h.b16 %v231
    %v2155 = vunpack.c.l.b16 %v232
    %v2156 = vunpack.c.h.b16 %v232
    %v2157 = vunpack.c.l.b16 %v233
    %v2158 = vunpack.c.h.b16 %v233
    %v2159 = vunpack.c.l.b16 %v234
    %v2160 = vunpack.c.h.b16 %v234
    %v2161 = vunpack.c.l.b16 %v235
    %v2162 = vunpack.c.h.b16 %v235
    %v2163 = vunpack.c.l.b16 %v236
    %v2164 = vunpack.c.h.b16 %v236
    %v2165 = vunpack.c.l.b16 %v237
    %v2166 = vunpack.c.h.b16 %v237
    %v2167 = vunpack.c.l.b16 %v238
    %v2168 = vunpack.c.h.b16 %v238
    %v2169 = vunpack.c.l.b16 %v239
    %v2170 = vunpack.c.h.b16 %v239
    %v2171 = vunpack.c.l.b16 %v240
    %v2172 = vunpack.c.h.b16 %v240
    %v2173 = vunpack.c.l.b16 %v241
    %v2174 = vunpack.c.h.b16 %v241
    %v2175 = vunpack.c.l.b16 %v242
    %v2176 = vunpack.c.h.b16 %v242
    %v2177 = vunpack.c.l.b16 %v243
    %v2178 = vunpack.c.h.b16 %v243
    %v2179 = vunpack.c.l.b16 %v244
    %v2180 = vunpack.c.h.b16 %v244
    %v2181 = vunpack.c.l.b16 %v245
    %v2182 = vunpack.c.h.b16 %v245
    %v2183 = vunpack.c.l.b16 %v246
    %v2184 = vunpack.c.h.b16 %v246
    %v2185 = vunpack.c.l.b16 %v247
    %v2186 = vunpack.c.h.b16 %v247
    %v2187 = vunpack.c.l.b16 %v248
    %v2188 = vunpack.c.h.b16 %v248
    %v2189 = vunpack.c.l.b16 %v249
    %v2190 = vunpack.c.h.b16 %v249
    %v2191 = vunpack.c.l.b16 %v250
    %v2192 = vunpack.c.h.b16 %v250
    %v2193 = vunpack.c.l.b16 %v251
    %v2194 = vunpack.c.h.b16 %v251
    %v2195 = vunpack.c.l.b16 %v252
    %v2196 = vunpack.c.h.b16 %v252
    %v2197 = vunpack.c.l.b16 %v253
    %v2198 = vunpack.c.h.b16 %v253
    %v2199 = vunpack.c.l.b16 %v254
    %v2200 = vunpack.c.h.b16 %v254
    %v2201 = vunpack.c.l.b16 %v255
    %v2202 = vunpack.c.h.b16 %v255
    %v2203 = vunpack.c.l.b16 %v256
    %v2204 = vunpack.c.h.b16 %v256
    %v2205 = vunpack.c.l.b16 %v257
    %v2206 = vunpack.c.h.b16 %v257
    %v2207 = vunpack.c.l.b16 %v258
    %v2208 = vunpack.c.h.b16 %v258
    %v2209 = vunpack.c.l.b16 %v259
    %v2210 = vunpack.c.h.b16 %v259
    %v2211 = vunpack.c.l.b16 %v260
    %v2212 = vunpack.c.h.b16 %v260
    %v2213 = vunpack.c.l.b16 %v261
    %v2214 = vunpack.c.h.b16 %v261
    %v2215 = vunpack.c.l.b16 %v262
    %v2216 = vunpack.c.h.b16 %v262
    %v2217 = vunpack.c.l.b16 %v263
    %v2218 = vunpack.c.h.b16 %v263
    %v2219 = vunpack.c.l.b16 %v264
    %v2220 = vunpack.c.h.b16 %v264
    %v2221 = vunpack.c.l.b16 %v265
    %v2222 = vunpack.c.h.b16 %v265
    %v2223 = vunpack.c.l.b16 %v266
    %v2224 = vunpack.c.h.b16 %v266
    %v2225 = vunpack.c.l.b16 %v267
    %v2226 = vunpack.c.h.b16 %v267
    %v2227 = vunpack.c.l.b16 %v268
    %v2228 = vunpack.c.h.b16 %v268
    %v2229 = vunpack.c.l.b16 %v269
    %v2230 = vunpack.c.h.b16 %v269
    %v2231 = vunpack.c.l.b16 %v270
    %v2232 = vunpack.c.h.b16 %v270
    %v2233 = vunpack.c.l.b16 %v271
    %v2234 = vunpack.c.h.b16 %v271
    %v2235 = vunpack.c.l.b16 %v272
    %v2236 = vunpack.c.h.b16 %v272
    %v2237 = vunpack.c.l.b16 %v273
    %v2238 = vunpack.c.h.b16 %v273
    %v2239 = vunpack.c.l.b16 %v274
    %v2240 = vunpack.c.h.b16 %v274
    %v2241 = vunpack.c.l.b16 %v275
    %v2242 = vunpack.c.h.b16 %v275
    %v2243 = vunpack.c.l.b16 %v276
    %v2244 = vunpack.c.h.b16 %v276
    %v2245 = vunpack.c.l.b16 %v277
    %v2246 = vunpack.c.h.b16 %v277
    %v2247 = vunpack.c.l.b16 %v278
    %v2248 = vunpack.c.h.b16 %v278
    %v2249 = vunpack.c.l.b16 %v279
    %v2250 = vunpack.c.h.b16 %v279
    %v2251 = vunpack.c.l.b16 %v280
    %v2252 = vunpack.c.h.b16 %v280
    %v2253 = vunpack.c.l.b16 %v281
    %v2254 = vunpack.c.h.b16 %v281
    %v2255 = vunpack.c.l.b16 %v282
    %v2256 = vunpack.c.h.b16 %v282
    %v2257 = vunpack.c.l.b16 %v283
    %v2258 = vunpack.c.h.b16 %v283
    %v2259 = vunpack.c.l.b16 %v284
    %v2260 = vunpack.c.h.b16 %v284
    %v2261 = vunpack.c.l.b16 %v285
    %v2262 = vunpack.c.h.b16 %v285
    %v2263 = vunpack.c.l.b16 %v286
    %v2264 = vunpack.c.h.b16 %v286
    %v2265 = vunpack.c.l.b16 %v287
    %v2266 = vunpack.c.h.b16 %v287
    %v2267 = vunpack.c.l.b16 %v288
    %v2268 = vunpack.c.h.b16 %v288
    %v2269 = vunpack.c.l.b16 %v289
    %v2270 = vunpack.c.h.b16 %v289
    %v2271 = vunpack.c.l.b16 %v290
    %v2272 = vunpack.c.h.b16 %v290
    %v2273 = vunpack.c.l.b16 %v291
    %v2274 = vunpack.c.h.b16 %v291
    %v2275 = vunpack.c.l.b16 %v292
    %v2276 = vunpack.c.h.b16 %v292
    %v2277 = vunpack.c.l.b16 %v293
    %v2278 = vunpack.c.h.b16 %v293
    %v2279 = vunpack.c.l.b16 %v294
    %v2280 = vunpack.c.h.b16 %v294
    %v2281 = vunpack.c.l.b16 %v295
    %v2282 = vunpack.c.h.b16 %v295
    %v2283 = vunpack.c.l.b16 %v296
    %v2284 = vunpack.c.h.b16 %v296
    %v2285 = vunpack.c.l.b16 %v297
    %v2286 = vunpack.c.h.b16 %v297
    %v2287 = vunpack.c.l.b16 %v298
    %v2288 = vunpack.c.h.b16 %v298
    %v2289 = vunpack.c.l.b16 %v299
    %v2290 = vunpack.c.h.b16 %v299
    %v2291 = vunpack.c.l.b16 %v300
    %v2292 = vunpack.c.h.b16 %v300
    %v2293 = vunpack.c.l.b16 %v301
    %v2294 = vunpack.c.h.b16 %v301
    %v2295 = vunpack.c.l.b16 %v302
    %v2296 = vunpack.c.h.b16 %v302
    %v2297 = vunpack.c.l.b16 %v303
    %v2298 = vunpack.c.h.b16 %v303
    %v2299 = vunpack.c.l.b16 %v304
    %v2300 = vunpack.c.h.b16 %v304
    %v2301 = vunpack.c.l.b16 %v305
    %v2302 = vunpack.c.h.b16 %v305
    %v2303 = vunpack.c.l.b16 %v306
    %v2304 = vunpack.c.h.b16 %v306
    %v2305 = vunpack.c.l.b16 %v307
    %v2306 = vunpack.c.h.b16 %v307
    %v2307 = vunpack.c.l.b16 %v308
    %v2308 = vunpack.c.h.b16 %v308
    %v2309 = vunpack.c.l.b16 %v309
    %v2310 = vunpack.c.h.b16 %v309
    %v2311 = vunpack.c.l.b16 %v310
    %v2312 = vunpack.c.h.b16 %v310
    %v2313 = vunpack.c.l.b16 %v311
    %v2314 = vunpack.c.h.b16 %v311
    %v2315 = vunpack.c.l.b16 %v312
    %v2316 = vunpack.c.h.b16 %v312
    %v2317 = vunpack.c.l.b16 %v313
    %v2318 = vunpack.c.h.b16 %v313
    %v2319 = vunpack.c.l.b16 %v314
    %v2320 = vunpack.c.h.b16 %v314
    %v2321 = vunpack.c.l.b16 %v315
    %v2322 = vunpack.c.h.b16 %v315
    %v2323 = vunpack.c.l.b16 %v316
    %v2324 = vunpack.c.h.b16 %v316
    %v2325 = vunpack.c.l.b16 %v317
    %v2326 = vunpack.c.h.b16 %v317
    %v2327 = vunpack.c.l.b16 %v318
    %v2328 = vunpack.c.h.b16 %v318
    %v2329 = vunpack.c.l.b16 %v319
    %v2330 = vunpack.c.h.b16 %v319
    %v2331 = vunpack.c.l.b16 %v320
    %v2332 = vunpack.c.h.b16 %v320
    %v2333 = vunpack.c.l.b16 %v321
    %v2334 = vunpack.c.h.b16 %v321
    %v2335 = vunpack.c.l.b16 %v322
    %v2336 = vunpack.c.h.b16 %v322
    %v2337 = vunpack.c.l.b16 %v323
    %v2338 = vunpack.c.h.b16 %v323
    %v2339 = vunpack.c.l.b16 %v324
    %v2340 = vunpack.c.h.b16 %v324
    %v2341 = vunpack.c.l.b16 %v325
    %v2342 = vunpack.c.h.b16 %v325
    %v2343 = vunpack.c.l.b16 %v326
    %v2344 = vunpack.c.h.b16 %v326
    %v2345 = vunpack.c.l.b16 %v327
    %v2346 = vunpack.c.h.b16 %v327
    %v2347 = vunpack.c.l.b16 %v328
    %v2348 = vunpack.c.h.b16 %v328
    %v2349 = vunpack.c.l.b16 %v329
    %v2350 = vunpack.c.h.b16 %v329
    %v2351 = vunpack.c.l.b16 %v330
    %v2352 = vunpack.c.h.b16 %v330
    %v2353 = vunpack.c.l.b16 %v331
    %v2354 = vunpack.c.h.b16 %v331
    %v2355 = vunpack.c.l.b16 %v332
    %v2356 = vunpack.c.h.b16 %v332
    %v2357 = vunpack.c.l.b16 %v333
    %v2358 = vunpack.c.h.b16 %v333
    %v2359 = vunpack.c.l.b16 %v334
    %v2360 = vunpack.c.h.b16 %v334
    %v2361 = vunpack.c.l.b16 %v335
    %v2362 = vunpack.c.h.b16 %v335
    %v2363 = vunpack.c.l.b16 %v336
    %v2364 = vunpack.c.h.b16 %v336
    %v2365 = vunpack.c.l.b16 %v337
    %v2366 = vunpack.c.h.b16 %v337
    %v2367 = vunpack.c.l.b16 %v338
    %v2368 = vunpack.c.h.b16 %v338
    %v2369 = vunpack.c.l.b16 %v339
    %v2370 = vunpack.c.h.b16 %v339
    %v2371 = vunpack.c.l.b16 %v340
    %v2372 = vunpack.c.h.b16 %v340
    %v2373 = vunpack.c.l.b16 %v341
    %v2374 = vunpack.c.h.b16 %v341
    %v2375 = vunpack.c.l.b16 %v342
    %v2376 = vunpack.c.h.b16 %v342
    %v2377 = vunpack.c.l.b16 %v343
    %v2378 = vunpack.c.h.b16 %v343
    %v2379 = vunpack.c.l.b16 %v344
    %v2380 = vunpack.c.h.b16 %v344
    %v2381 = vunpack.c.l.b16 %v345
    %v2382 = vunpack.c.h.b16 %v345
    %v2383 = vunpack.c.l.b16 %v346
    %v2384 = vunpack.c.h.b16 %v346
    %v2385 = vunpack.c.l.b16 %v347
    %v2386 = vunpack.c.h.b16 %v347
    %v2387 = vunpack.c.l.b16 %v348
    %v2388 = vunpack.c.h.b16 %v348
    %v2389 = vunpack.c.l.b16 %v349
    %v2390 = vunpack.c.h.b16 %v349
    %v2391 = vunpack.c.l.b16 %v350
    %v2392 = vunpack.c.h.b16 %v350
    %v2393 = vunpack.c.l.b16 %v351
    %v2394 = vunpack.c.h.b16 %v351
    %v2395 = vunpack.c.l.b16 %v352
    %v2396 = vunpack.c.h.b16 %v352
    %v2397 = vunpack.c.l.b16 %v353
    %v2398 = vunpack.c.h.b16 %v353
    %v2399 = vunpack.c.l.b16 %v354
    %v2400 = vunpack.c.h.b16 %v354
    %v2401 = vunpack.c.l.b16 %v355
    %v2402 = vunpack.c.h.b16 %v355
    %v2403 = vunpack.c.l.b16 %v356
    %v2404 = vunpack.c.h.b16 %v356
    %v2405 = vunpack.c.l.b16 %v357
    %v2406 = vunpack.c.h.b16 %v357
    %v2407 = vunpack.c.l.b16 %v358
    %v2408 = vunpack.c.h.b16 %v358
    %v2409 = vunpack.c.l.b16 %v359
    %v2410 = vunpack.c.h.b16 %v359
    %v2411 = vunpack.c.l.b16 %v360
    %v2412 = vunpack.c.h.b16 %v360
    %v2413 = vunpack.c.l.b16 %v361
    %v2414 = vunpack.c.h.b16 %v361
    %v2415 = vunpack.c.l.b16 %v362
    %v2416 = vunpack.c.h.b16 %v362
    %v2417 = vunpack.c.l.b16 %v363
    %v2418 = vunpack.c.h.b16 %v363
    %v2419 = vunpack.c.l.b16 %v364
    %v2420 = vunpack.c.h.b16 %v364
    %v2421 = vunpack.c.l.b16 %v365
    %v2422 = vunpack.c.h.b16 %v365
    %v2423 = vunpack.c.l.b16 %v366
    %v2424 = vunpack.c.h.b16 %v366
    %v2425 = vunpack.c.l.b16 %v367
    %v2426 = vunpack.c.h.b16 %v367
    %v2427 = vunpack.c.l.b16 %v368
    %v2428 = vunpack.c.h.b16 %v368
    %v2429 = vunpack.c.l.b16 %v369
    %v2430 = vunpack.c.h.b16 %v369
    %v2431 = vunpack.c.l.b16 %v370
    %v2432 = vunpack.c.h.b16 %v370
    %v2433 = vunpack.c.l.b16 %v371
    %v2434 = vunpack.c.h.b16 %v371
    %v2435 = vunpack.c.l.b16 %v372
    %v2436 = vunpack.c.h.b16 %v372
    %v2437 = vunpack.c.l.b16 %v373
    %v2438 = vunpack.c.h.b16 %v373
    %v2439 = vunpack.c.l.b16 %v374
    %v2440 = vunpack.c.h.b16 %v374
    %v2441 = vunpack.c.l.b16 %v375
    %v2442 = vunpack.c.h.b16 %v375
    %v2443 = vunpack.c.l.b16 %v376
    %v2444 = vunpack.c.h.b16 %v376
    %v2445 = vunpack.c.l.b16 %v377
    %v2446 = vunpack.c.h.b16 %v377
    %v2447 = vunpack.c.l.b16 %v378
    %v2448 = vunpack.c.h.b16 %v378
    %v2449 = vunpack.c.l.b16 %v379
    %v2450 = vunpack.c.h.b16 %v379
    %v2451 = vunpack.c.l.b16 %v380
    %v2452 = vunpack.c.h.b16 %v380
    %v2453 = vunpack.c.l.b16 %v381
    %v2454 = vunpack.c.h.b16 %v381
    %v2455 = vunpack.c.l.b16 %v382
    %v2456 = vunpack.c.h.b16 %v382
    %v2457 = vunpack.c.l.b16 %v383
    %v2458 = vunpack.c.h.b16 %v383
    %v2459 = vunpack.c.l.b16 %v384
    %v2460 = vunpack.c.h.b16 %v384
    %v2461 = vunpack.c.l.b16 %v385
    %v2462 = vunpack.c.h.b16 %v385
    %v2463 = vunpack.c.l.b16 %v386
    %v2464 = vunpack.c.h.b16 %v386
    %v2465 = vunpack.c.l.b16 %v387
    %v2466 = vunpack.c.h.b16 %v387
    %v2467 = vunpack.c.l.b16 %v388
    %v2468 = vunpack.c.h.b16 %v388
    %v2469 = vunpack.c.l.b16 %v389
    %v2470 = vunpack.c.h.b16 %v389
    %v2471 = vunpack.c.l.b16 %v390
    %v2472 = vunpack.c.h.b16 %v390
    %v2473 = vunpack.c.l.b16 %v391
    %v2474 = vunpack.c.h.b16 %v391
    %v2475 = vunpack.c.l.b16 %v392
    %v2476 = vunpack.c.h.b16 %v392
    %v2477 = vunpack.c.l.b16 %v393
    %v2478 = vunpack.c.h.b16 %v393
    %v2479 = vunpack.c.l.b16 %v394
    %v2480 = vunpack.c.h.b16 %v394
    %v2481 = vunpack.c.l.b16 %v395
    %v2482 = vunpack.c.h.b16 %v395
    %v2483 = vunpack.c.l.b16 %v396
    %v2484 = vunpack.c.h.b16 %v396
    %v2485 = vunpack.c.l.b16 %v397
    %v2486 = vunpack.c.h.b16 %v397
    %v2487 = vunpack.c.l.b16 %v398
    %v2488 = vunpack.c.h.b16 %v398
    %v2489 = vunpack.c.l.b16 %v399
    %v2490 = vunpack.c.h.b16 %v399
    %v2491 = vunpack.c.l.b16 %v400
    %v2492 = vunpack.c.h.b16 %v400
    %v2493 = vunpack.c.l.b16 %v401
    %v2494 = vunpack.c.h.b16 %v401
    %v2495 = vunpack.c.l.b16 %v402
    %v2496 = vunpack.c.h.b16 %v402
    %v2497 = vunpack.c.l.b16 %v403
    %v2498 = vunpack.c.h.b16 %v403
    %v2499 = vunpack.c.l.b16 %v404
    %v2500 = vunpack.c.h.b16 %v404
    %v2501 = vunpack.c.l.b16 %v405
    %v2502 = vunpack.c.h.b16 %v405
    %v2503 = vunpack.c.l.b16 %v406
    %v2504 = vunpack.c.h.b16 %v406
    %v2505 = vunpack.c.l.b16 %v407
    %v2506 = vunpack.c.h.b16 %v407
    %v2507 = vunpack.c.l.b16 %v408
    %v2508 = vunpack.c.h.b16 %v408
    %v2509 = vunpack.c.l.b16 %v409
    %v2510 = vunpack.c.h.b16 %v409
    %v2511 = vunpack.c.l.b16 %v410
    %v2512 = vunpack.c.h.b16 %v410
    %v2513 = vunpack.c.l.b16 %v411
    %v2514 = vunpack.c.h.b16 %v411
    %v2515 = vunpack.c.l.b16 %v412
    %v2516 = vunpack.c.h.b16 %v412
    %v2517 = vunpack.c.l.b16 %v413
    %v2518 = vunpack.c.h.b16 %v413
    %v2519 = vunpack.c.l.b16 %v414
    %v2520 = vunpack.c.h.b16 %v414
    %v2521 = vunpack.c.l.b16 %v415
    %v2522 = vunpack.c.h.b16 %v415
    %v2523 = vunpack.c.l.b16 %v416
    %v2524 = vunpack.c.h.b16 %v416
    %v2525 = vunpack.c.l.b16 %v417
    %v2526 = vunpack.c.h.b16 %v417
    %v2527 = vunpack.c.l.b16 %v418
    %v2528 = vunpack.c.h.b16 %v418
    %v2529 = vunpack.c.l.b16 %v419
    %v2530 = vunpack.c.h.b16 %v419
    %v2531 = vunpack.c.l.b16 %v420
    %v2532 = vunpack.c.h.b16 %v420
    %v2533 = vunpack.c.l.b16 %v421
    %v2534 = vunpack.c.h.b16 %v421
    %v2535 = vunpack.c.l.b16 %v422
    %v2536 = vunpack.c.h.b16 %v422
    %v2537 = vunpack.c.l.b16 %v423
    %v2538 = vunpack.c.h.b16 %v423
    %v2539 = vunpack.c.l.b16 %v424
    %v2540 = vunpack.c.h.b16 %v424
    %v2541 = vunpack.c.l.b16 %v425
    %v2542 = vunpack.c.h.b16 %v425
    %v2543 = vunpack.c.l.b16 %v426
    %v2544 = vunpack.c.h.b16 %v426
    %v2545 = vunpack.c.l.b16 %v427
    %v2546 = vunpack.c.h.b16 %v427
    %v2547 = vunpack.c.l.b16 %v428
    %v2548 = vunpack.c.h.b16 %v428
    %v2549 = vunpack.c.l.b16 %v429
    %v2550 = vunpack.c.h.b16 %v429
    %v2551 = vunpack.c.l.b16 %v430
    %v2552 = vunpack.c.h.b16 %v430
    %v2553 = vunpack.c.l.b16 %v431
    %v2554 = vunpack.c.h.b16 %v431
    %v2555 = vunpack.c.l.b16 %v432
    %v2556 = vunpack.c.h.b16 %v432
    %v2557 = vunpack.c.l.b16 %v433
    %v2558 = vunpack.c.h.b16 %v433
    %v2559 = vunpack.c.l.b16 %v434
    %v2560 = vunpack.c.h.b16 %v434
    %v2561 = vunpack.c.l.b16 %v435
    %v2562 = vunpack.c.h.b16 %v435
    %v2563 = vunpack.c.l.b16 %v436
    %v2564 = vunpack.c.h.b16 %v436
    %v2565 = vunpack.c.l.b16 %v437
    %v2566 = vunpack.c.h.b16 %v437
    %v2567 = vunpack.c.l.b16 %v438
    %v2568 = vunpack.c.h.b16 %v438
    %v2569 = vunpack.c.l.b16 %v439
    %v2570 = vunpack.c.h.b16 %v439
    %v2571 = vunpack.c.l.b16 %v440
    %v2572 = vunpack.c.h.b16 %v440
    %v2573 = vunpack.c.l.b16 %v441
    %v2574 = vunpack.c.h.b16 %v441
    %v2575 = vunpack.c.l.b16 %v442
    %v2576 = vunpack.c.h.b16 %v442
    %v2577 = vunpack.c.l.b16 %v443
    %v2578 = vunpack.c.h.b16 %v443
    %v2579 = vunpack.c.l.b16 %v444
    %v2580 = vunpack.c.h.b16 %v444
    %v2581 = vunpack.c.l.b16 %v445
    %v2582 = vunpack.c.h.b16 %v445
    %v2583 = vunpack.c.l.b16 %v446
    %v2584 = vunpack.c.h.b16 %v446
    %v2585 = vunpack.c.l.b16 %v447
    %v2586 = vunpack.c.h.b16 %v447
    %v2587 = vunpack.c.l.b16 %v448
    %v2588 = vunpack.c.h.b16 %v448
    %v2589 = vunpack.c.l.b16 %v449
    %v2590 = vunpack.c.h.b16 %v449
    %v2591 = vunpack.c.l.b16 %v450
    %v2592 = vunpack.c.h.b16 %v450
    %v2593 = vunpack.c.l.b16 %v451
    %v2594 = vunpack.c.h.b16 %v451
    %v2595 = vunpack.c.l.b16 %v452
    %v2596 = vunpack.c.h.b16 %v452
    %v2597 = vunpack.c.l.b16 %v453
    %v2598 = vunpack.c.h.b16 %v453
    %v2599 = vunpack.c.l.b16 %v454
    %v2600 = vunpack.c.h.b16 %v454
    %v2601 = vunpack.c.l.b16 %v455
    %v2602 = vunpack.c.h.b16 %v455
    %v2603 = vunpack.c.l.b16 %v456
    %v2604 = vunpack.c.h.b16 %v456
    %v2605 = vunpack.c.l.b16 %v457
    %v2606 = vunpack.c.h.b16 %v457
    %v2607 = vunpack.c.l.b16 %v458
    %v2608 = vunpack.c.h.b16 %v458
    %v2609 = vunpack.c.l.b16 %v459
    %v2610 = vunpack.c.h.b16 %v459
    %v2611 = vunpack.c.l.b16 %v460
    %v2612 = vunpack.c.h.b16 %v460
    %v2613 = vunpack.c.l.b16 %v461
    %v2614 = vunpack.c.h.b16 %v461
    %v2615 = vunpack.c.l.b16 %v462
    %v2616 = vunpack.c.h.b16 %v462
    %v2617 = vunpack.c.l.b16 %v463
    %v2618 = vunpack.c.h.b16 %v463
    %v2619 = vunpack.c.l.b16 %v464
    %v2620 = vunpack.c.h.b16 %v464
    %v2621 = vunpack.c.l.b16 %v465
    %v2622 = vunpack.c.h.b16 %v465
    %v2623 = vunpack.c.l.b16 %v466
    %v2624 = vunpack.c.h.b16 %v466
    %v2625 = vunpack.c.l.b16 %v467
    %v2626 = vunpack.c.h.b16 %v467
    %v2627 = vunpack.c.l.b16 %v468
    %v2628 = vunpack.c.h.b16 %v468
    %v2629 = vunpack.c.l.b16 %v469
    %v2630 = vunpack.c.h.b16 %v469
    %v2631 = vunpack.c.l.b16 %v470
    %v2632 = vunpack.c.h.b16 %v470
    %v2633 = vunpack.c.l.b16 %v471
    %v2634 = vunpack.c.h.b16 %v471
    %v2635 = vunpack.c.l.b16 %v472
    %v2636 = vunpack.c.h.b16 %v472
    %v2637 = vunpack.c.l.b16 %v473
    %v2638 = vunpack.c.h.b16 %v473
    %v2639 = vunpack.c.l.b16 %v474
    %v2640 = vunpack.c.h.b16 %v474
    %v2641 = vunpack.c.l.b16 %v475
    %v2642 = vunpack.c.h.b16 %v475
    %v2643 = vunpack.c.l.b16 %v476
    %v2644 = vunpack.c.h.b16 %v476
    %v2645 = vunpack.c.l.b16 %v477
    %v2646 = vunpack.c.h.b16 %v477
    %v2647 = vunpack.c.l.b16 %v478
    %v2648 = vunpack.c.h.b16 %v478
    %v2649 = vunpack.c.l.b16 %v479
    %v2650 = vunpack.c.h.b16 %v479
    %v2651 = vunpack.c.l.b16 %v480
    %v2652 = vunpack.c.h.b16 %v480
    %v2653 = vunpack.c.l.b16 %v481
    %v2654 = vunpack.c.h.b16 %v481
    %v2655 = vunpack.c.l.b16 %v482
    %v2656 = vunpack.c.h.b16 %v482
    %v2657 = vunpack.c.l.b16 %v483
    %v2658 = vunpack.c.h.b16 %v483
    %v2659 = vunpack.c.l.b16 %v484
    %v2660 = vunpack.c.h.b16 %v484
    %v2661 = vunpack.c.l.b16 %v485
    %v2662 = vunpack.c.h.b16 %v485
    %v2663 = vunpack.c.l.b16 %v486
    %v2664 = vunpack.c.h.b16 %v486
    %v2665 = vunpack.c.l.b16 %v487
    %v2666 = vunpack.c.h.b16 %v487
    %v2667 = vunpack.c.l.b16 %v488
    %v2668 = vunpack.c.h.b16 %v488
    %v2669 = vunpack.c.l.b16 %v489
    %v2670 = vunpack.c.h.b16 %v489
    %v2671 = vunpack.c.l.b16 %v490
    %v2672 = vunpack.c.h.b16 %v490
    %v2673 = vunpack.c.l.b16 %v491
    %v2674 = vunpack.c.h.b16 %v491
    %v2675 = vunpack.c.l.b16 %v492
    %v2676 = vunpack.c.h.b16 %v492
    %v2677 = vunpack.c.l.b16 %v493
    %v2678 = vunpack.c.h.b16 %v493
    %v2679 = vunpack.c.l.b16 %v494
    %v2680 = vunpack.c.h.b16 %v494
    %v2681 = vunpack.c.l.b16 %v495
    %v2682 = vunpack.c.h.b16 %v495
    %v2683 = vunpack.c.l.b16 %v496
    %v2684 = vunpack.c.h.b16 %v496
    %v2685 = vunpack.c.l.b16 %v497
    %v2686 = vunpack.c.h.b16 %v497
    %v2687 = vunpack.c.l.b16 %v498
    %v2688 = vunpack.c.h.b16 %v498
    %v2689 = vunpack.c.l.b16 %v499
    %v2690 = vunpack.c.h.b16 %v499
    %v2691 = vunpack.c.l.b16 %v500
    %v2692 = vunpack.c.h.b16 %v500
    %v2693 = vunpack.c.l.b16 %v501
    %v2694 = vunpack.c.h.b16 %v501
    %v2695 = vunpack.c.l.b16 %v502
    %v2696 = vunpack.c.h.b16 %v502
    %v2697 = vunpack.c.l.b16 %v503
    %v2698 = vunpack.c.h.b16 %v503
    %v2699 = vunpack.c.l.b16 %v504
    %v2700 = vunpack.c.h.b16 %v504
    %v2701 = vunpack.c.l.b16 %v505
    %v2702 = vunpack.c.h.b16 %v505
    %v2703 = vunpack.c.l.b16 %v506
    %v2704 = vunpack.c.h.b16 %v506
    %v2705 = vunpack.c.l.b16 %v507
    %v2706 = vunpack.c.h.b16 %v507
    %v2707 = vunpack.c.l.b16 %v508
    %v2708 = vunpack.c.h.b16 %v508
    %v2709 = vunpack.c.l.b16 %v509
    %v2710 = vunpack.c.h.b16 %v509
    %v2711 = vunpack.c.l.b16 %v510
    %v2712 = vunpack.c.h.b16 %v510
    %v2713 = vunpack.c.l.b16 %v511
    %v2714 = vunpack.c.h.b16 %v511
    %v2715 = vunpack.c.l.b16 %v512
    %v2716 = vunpack.c.h.b16 %v512
    %v2717 = vunpack.c.l.b16 %v513
    %v2718 = vunpack.c.h.b16 %v513
    %v2719 = vunpack.c.l.b16 %v514
    %v2720 = vunpack.c.h.b16 %v514
    %v2721 = vunpack.c.l.b16 %v515
    %v2722 = vunpack.c.h.b16 %v515
    %v2723 = vunpack.c.l.b16 %v516
    %v2724 = vunpack.c.h.b16 %v516
    %v2725 = vunpack.c.l.b16 %v517
    %v2726 = vunpack.c.h.b16 %v517
    %v2727 = vunpack.c.l.b16 %v518
    %v2728 = vunpack.c.h.b16 %v518
    %v2729 = vunpack.c.l.b16 %v519
    %v2730 = vunpack.c.h.b16 %v519
    %v2731 = vunpack.c.l.b16 %v520
    %v2732 = vunpack.c.h.b16 %v520
    %v2733 = vunpack.c.l.b16 %v521
    %v2734 = vunpack.c.h.b16 %v521
    %v2735 = vunpack.c.l.b16 %v522
    %v2736 = vunpack.c.h.b16 %v522
    %v2737 = vunpack.c.l.b16 %v523
    %v2738 = vunpack.c.h.b16 %v523
    %v2739 = vunpack.c.l.b16 %v524
    %v2740 = vunpack.c.h.b16 %v524
    %v2741 = vunpack.c.l.b16 %v525
    %v2742 = vunpack.c.h.b16 %v525
    %v2743 = vunpack.c.l.b16 %v526
    %v2744 = vunpack.c.h.b16 %v526
    %v2745 = vunpack.c.l.b16 %v527
    %v2746 = vunpack.c.h.b16 %v527
    %v2747 = vunpack.c.l.b16 %v528
    %v2748 = vunpack.c.h.b16 %v528
    %v2749 = vunpack.c.l.b16 %v529
    %v2750 = vunpack.c.h.b16 %v529
    %v2751 = vunpack.c.l.b16 %v530
    %v2752 = vunpack.c.h.b16 %v530
    %v2753 = vunpack.c.l.b16 %v531
    %v2754 = vunpack.c.h.b16 %v531
    %v2755 = vunpack.c.l.b16 %v532
    %v2756 = vunpack.c.h.b16 %v532
    %v2757 = vunpack.c.l.b16 %v533
    %v2758 = vunpack.c.h.b16 %v533
    %v2759 = vunpack.c.l.b16 %v534
    %v2760 = vunpack.c.h.b16 %v534
    %v2761 = vunpack.c.l.b16 %v535
    %v2762 = vunpack.c.h.b16 %v535
    %v2763 = vunpack.c.l.b16 %v536
    %v2764 = vunpack.c.h.b16 %v536
    %v2765 = vunpack.c.l.b16 %v537
    %v2766 = vunpack.c.h.b16 %v537
    %v2767 = vunpack.c.l.b16 %v538
    %v2768 = vunpack.c.h.b16 %v538
    %v2769 = vunpack.c.l.b16 %v539
    %v2770 = vunpack.c.h.b16 %v539
    %v2771 = vunpack.c.l.b16 %v540
    %v2772 = vunpack.c.h.b16 %v540
    %v2773 = vunpack.c.l.b16 %v541
    %v2774 = vunpack.c.h.b16 %v541
    %v2775 = vunpack.c.l.b16 %v542
    %v2776 = vunpack.c.h.b16 %v542
    %v2777 = vunpack.c.l.b16 %v543
    %v2778 = vunpack.c.h.b16 %v543
    %v2779 = vunpack.c.l.b16 %v544
    %v2780 = vunpack.c.h.b16 %v544
    %v2781 = vunpack.c.l.b16 %v545
    %v2782 = vunpack.c.h.b16 %v545
    %v2783 = vunpack.c.l.b16 %v546
    %v2784 = vunpack.c.h.b16 %v546
    %v2785 = vunpack.c.l.b16 %v547
    %v2786 = vunpack.c.h.b16 %v547
    %v2787 = vunpack.c.l.b16 %v548
    %v2788 = vunpack.c.h.b16 %v548
    %v2789 = vunpack.c.l.b16 %v549
    %v2790 = vunpack.c.h.b16 %v549
    %v2791 = vunpack.c.l.b16 %v550
    %v2792 = vunpack.c.h.b16 %v550
    %v2793 = vunpack.c.l.b16 %v551
    %v2794 = vunpack.c.h.b16 %v551
    %v2795 = vunpack.c.l.b16 %v552
    %v2796 = vunpack.c.h.b16 %v552
    %v2797 = vunpack.c.l.b16 %v553
    %v2798 = vunpack.c.h.b16 %v553
    %v2799 = vunpack.c.l.b16 %v554
    %v2800 = vunpack.c.h.b16 %v554
    %v2801 = vunpack.c.l.b16 %v555
    %v2802 = vunpack.c.h.b16 %v555
    %v2803 = vunpack.c.l.b16 %v556
    %v2804 = vunpack.c.h.b16 %v556
    %v2805 = vunpack.c.l.b16 %v557
    %v2806 = vunpack.c.h.b16 %v557
    %v2807 = vunpack.c.l.b16 %v558
    %v2808 = vunpack.c.h.b16 %v558
    %v2809 = vunpack.c.l.b16 %v559
    %v2810 = vunpack.c.h.b16 %v559
    %v2811 = vunpack.c.l.b16 %v560
    %v2812 = vunpack.c.h.b16 %v560
    %v2813 = vunpack.c.l.b16 %v561
    %v2814 = vunpack.c.h.b16 %v561
    %v2815 = vunpack.c.l.b16 %v562
    %v2816 = vunpack.c.h.b16 %v562
    %v2817 = vunpack.c.l.b16 %v563
    %v2818 = vunpack.c.h.b16 %v563
    %v2819 = vunpack.c.l.b16 %v564
    %v2820 = vunpack.c.h.b16 %v564
    %v2821 = vunpack.c.l.b16 %v565
    %v2822 = vunpack.c.h.b16 %v565
    %v2823 = vunpack.c.l.b16 %v566
    %v2824 = vunpack.c.h.b16 %v566
    %v2825 = vunpack.c.l.b16 %v567
    %v2826 = vunpack.c.h.b16 %v567
    %v2827 = vunpack.c.l.b16 %v568
    %v2828 = vunpack.c.h.b16 %v568
    %v2829 = vunpack.c.l.b16 %v569
    %v2830 = vunpack.c.h.b16 %v569
    %v2831 = vunpack.c.l.b16 %v570
    %v2832 = vunpack.c.h.b16 %v570
    %v2833 = vunpack.c.l.b16 %v571
    %v2834 = vunpack.c.h.b16 %v571
    %v2835 = vunpack.c.l.b16 %v572
    %v2836 = vunpack.c.h.b16 %v572
    %v2837 = vunpack.c.l.b16 %v573
    %v2838 = vunpack.c.h.b16 %v573
    %v2839 = vunpack.c.l.b16 %v574
    %v2840 = vunpack.c.h.b16 %v574
    %v2841 = vunpack.c.l.b16 %v575
    %v2842 = vunpack.c.h.b16 %v575
    %v2843 = vunpack.c.l.b16 %v576
    %v2844 = vunpack.c.h.b16 %v576
    %v2845 = vunpack.c.l.b16 %v577
    %v2846 = vunpack.c.h.b16 %v577
    %v2847 = vunpack.c.l.b16 %v578
    %v2848 = vunpack.c.h.b16 %v578
    %v2849 = vunpack.c.l.b16 %v579
    %v2850 = vunpack.c.h.b16 %v579
    %v2851 = vunpack.c.l.b16 %v580
    %v2852 = vunpack.c.h.b16 %v580
    %v2853 = vunpack.c.l.b16 %v581
    %v2854 = vunpack.c.h.b16 %v581
    %v2855 = vunpack.c.l.b16 %v582
    %v2856 = vunpack.c.h.b16 %v582
    %v2857 = vunpack.c.l.b16 %v583
    %v2858 = vunpack.c.h.b16 %v583
    %v2859 = vunpack.c.l.b16 %v584
    %v2860 = vunpack.c.h.b16 %v584
    %v2861 = vunpack.c.l.b16 %v585
    %v2862 = vunpack.c.h.b16 %v585
    %v2863 = vunpack.c.l.b16 %v586
    %v2864 = vunpack.c.h.b16 %v586
    %v2865 = vunpack.c.l.b16 %v587
    %v2866 = vunpack.c.h.b16 %v587
    %v2867 = vunpack.c.l.b16 %v588
    %v2868 = vunpack.c.h.b16 %v588
    %v2869 = vunpack.c.l.b16 %v589
    %v2870 = vunpack.c.h.b16 %v589
    %v2871 = vunpack.c.l.b16 %v590
    %v2872 = vunpack.c.h.b16 %v590
    %v2873 = vunpack.c.l.b16 %v591
    %v2874 = vunpack.c.h.b16 %v591
    %v2875 = vunpack.c.l.b16 %v592
    %v2876 = vunpack.c.h.b16 %v592
    %v2877 = vunpack.c.l.b16 %v593
    %v2878 = vunpack.c.h.b16 %v593
    %v2879 = vunpack.c.l.b16 %v594
    %v2880 = vunpack.c.h.b16 %v594
    %v2881 = vunpack.c.l.b16 %v595
    %v2882 = vunpack.c.h.b16 %v595
    %v2883 = vunpack.c.l.b16 %v596
    %v2884 = vunpack.c.h.b16 %v596
    %v2885 = vunpack.c.l.b16 %v597
    %v2886 = vunpack.c.h.b16 %v597
    %v2887 = vunpack.c.l.b16 %v598
    %v2888 = vunpack.c.h.b16 %v598
    %v2889 = vunpack.c.l.b16 %v599
    %v2890 = vunpack.c.h.b16 %v599
    %v2891 = vunpack.c.l.b16 %v600
    %v2892 = vunpack.c.h.b16 %v600
    %v2893 = vunpack.c.l.b16 %v601
    %v2894 = vunpack.c.h.b16 %v601
    %v2895 = vunpack.c.l.b16 %v602
    %v2896 = vunpack.c.h.b16 %v602
    %v2897 = vunpack.c.l.b16 %v603
    %v2898 = vunpack.c.h.b16 %v603
    %v2899 = vunpack.c.l.b16 %v604
    %v2900 = vunpack.c.h.b16 %v604
    %v2901 = vunpack.c.l.b16 %v605
    %v2902 = vunpack.c.h.b16 %v605
    %v2903 = vunpack.c.l.b16 %v606
    %v2904 = vunpack.c.h.b16 %v606
    %v2905 = vunpack.c.l.b16 %v607
    %v2906 = vunpack.c.h.b16 %v607
    %v2907 = vunpack.c.l.b16 %v608
    %v2908 = vunpack.c.h.b16 %v608
    %v2909 = vunpack.c.l.b16 %v609
    %v2910 = vunpack.c.h.b16 %v609
    %v2911 = vunpack.c.l.b16 %v610
    %v2912 = vunpack.c.h.b16 %v610
    %v2913 = vunpack.c.l.b16 %v611
    %v2914 = vunpack.c.h.b16 %v611
    %v2915 = vunpack.c.l.b16 %v612
    %v2916 = vunpack.c.h.b16 %v612
    %v2917 = vunpack.c.l.b16 %v613
    %v2918 = vunpack.c.h.b16 %v613
    %v2919 = vunpack.c.l.b16 %v614
    %v2920 = vunpack.c.h.b16 %v614
    %v2921 = vunpack.c.l.b16 %v615
    %v2922 = vunpack.c.h.b16 %v615
    %v2923 = vunpack.c.l.b16 %v616
    %v2924 = vunpack.c.h.b16 %v616
    %v2925 = vunpack.c.l.b16 %v617
    %v2926 = vunpack.c.h.b16 %v617
    %v2927 = vunpack.c.l.b16 %v618
    %v2928 = vunpack.c.h.b16 %v618
    %v2929 = vunpack.c.l.b16 %v619
    %v2930 = vunpack.c.h.b16 %v619
    %v2931 = vunpack.c.l.b16 %v620
    %v2932 = vunpack.c.h.b16 %v620
    %v2933 = vunpack.c.l.b16 %v621
    %v2934 = vunpack.c.h.b16 %v621
    %v2935 = vunpack.c.l.b16 %v622
    %v2936 = vunpack.c.h.b16 %v622
    %v2937 = vunpack.c.l.b16 %v623
    %v2938 = vunpack.c.h.b16 %v623
    %v2939 = vunpack.c.l.b16 %v624
    %v2940 = vunpack.c.h.b16 %v624
    %v2941 = vunpack.c.l.b16 %v625
    %v2942 = vunpack.c.h.b16 %v625
    %v2943 = vunpack.c.l.b16 %v626
    %v2944 = vunpack.c.h.b16 %v626
    %v2945 = vunpack.c.l.b16 %v627
    %v2946 = vunpack.c.h.b16 %v627
    %v2947 = vunpack.c.l.b16 %v628
    %v2948 = vunpack.c.h.b16 %v628
    %v2949 = vunpack.c.l.b16 %v629
    %v2950 = vunpack.c.h.b16 %v629
    %v2951 = vunpack.c.l.b16 %v630
    %v2952 = vunpack.c.h.b16 %v630
    %v2953 = vunpack.c.l.b16 %v631
    %v2954 = vunpack.c.h.b16 %v631
    %v2955 = vunpack.c.l.b16 %v632
    %v2956 = vunpack.c.h.b16 %v632
    %v2957 = vunpack.c.l.b16 %v633
    %v2958 = vunpack.c.h.b16 %v633
    %v2959 = vunpack.c.l.b16 %v634
    %v2960 = vunpack.c.h.b16 %v634
    %v2961 = vunpack.c.l.b16 %v635
    %v2962 = vunpack.c.h.b16 %v635
    %v2963 = vunpack.c.l.b16 %v636
    %v2964 = vunpack.c.h.b16 %v636
    %v2965 = vunpack.c.l.b16 %v637
    %v2966 = vunpack.c.h.b16 %v637
    %v2967 = vunpack.c.l.b16 %v638
    %v2968 = vunpack.c.h.b16 %v638
    %v2969 = vunpack.c.l.b16 %v639
    %v2970 = vunpack.c.h.b16 %v639
    %v2971 = vunpack.c.l.b16 %v640
    %v2972 = vunpack.c.h.b16 %v640
    %v2973 = vunpack.c.l.b16 %v641
    %v2974 = vunpack.c.h.b16 %v641
    %v2975 = vunpack.c.l.b16 %v642
    %v2976 = vunpack.c.h.b16 %v642
    %v2977 = vunpack.c.l.b16 %v643
    %v2978 = vunpack.c.h.b16 %v643
    %v2979 = vunpack.c.l.b16 %v644
    %v2980 = vunpack.c.h.b16 %v644
    %v2981 = vunpack.c.l.b16 %v645
    %v2982 = vunpack.c.h.b16 %v645
    %v2983 = vunpack.c.l.b16 %v646
    %v2984 = vunpack.c.h.b16 %v646
    %v2985 = vunpack.c.l.b16 %v647
    %v2986 = vunpack.c.h.b16 %v647
    %v2987 = vunpack.c.l.b16 %v648
    %v2988 = vunpack.c.h.b16 %v648
    %v2989 = vunpack.c.l.b16 %v649
    %v2990 = vunpack.c.h.b16 %v649
    %v2991 = vunpack.c.l.b16 %v650
    %v2992 = vunpack.c.h.b16 %v650
    %v2993 = vunpack.c.l.b16 %v651
    %v2994 = vunpack.c.h.b16 %v651
    %v2995 = vunpack.c.l.b16 %v652
    %v2996 = vunpack.c.h.b16 %v652
    %v2997 = vunpack.c.l.b16 %v653
    %v2998 = vunpack.c.h.b16 %v653
    %v2999 = vunpack.c.l.b16 %v654
    %v3000 = vunpack.c.h.b16 %v654
    %v3001 = vunpack.c.l.b16 %v655
    %v3002 = vunpack.c.h.b16 %v655
    %v3003 = vunpack.c.l.b16 %v656
    %v3004 = vunpack.c.h.b16 %v656
    %v3005 = vunpack.c.l.b16 %v657
    %v3006 = vunpack.c.h.b16 %v657
    %v3007 = vunpack.c.l.b16 %v658
    %v3008 = vunpack.c.h.b16 %v658
    %v3009 = vunpack.c.l.b16 %v659
    %v3010 = vunpack.c.h.b16 %v659
    %v3011 = vunpack.c.l.b16 %v660
    %v3012 = vunpack.c.h.b16 %v660
    %v3013 = vunpack.c.l.b16 %v661
    %v3014 = vunpack.c.h.b16 %v661
    %v3015 = vunpack.c.l.b16 %v662
    %v3016 = vunpack.c.h.b16 %v662
    %v3017 = vunpack.c.l.b16 %v663
    %v3018 = vunpack.c.h.b16 %v663
    %v3019 = vunpack.c.l.b16 %v664
    %v3020 = vunpack.c.h.b16 %v664
    %v3021 = vunpack.c.l.b16 %v665
    %v3022 = vunpack.c.h.b16 %v665
    %v3023 = vunpack.c.l.b16 %v666
    %v3024 = vunpack.c.h.b16 %v666
    %v3025 = vunpack.c.l.b16 %v667
    %v3026 = vunpack.c.h.b16 %v667
    %v3027 = vunpack.c.l.b16 %v668
    %v3028 = vunpack.c.h.b16 %v668
    %v3029 = vunpack.c.l.b16 %v669
    %v3030 = vunpack.c.h.b16 %v669
    %v3031 = vunpack.c.l.b16 %v670
    %v3032 = vunpack.c.h.b16 %v670
    %v3033 = vunpack.c.l.b16 %v671
    %v3034 = vunpack.c.h.b16 %v671
    %v3035 = vunpack.c.l.b16 %v672
    %v3036 = vunpack.c.h.b16 %v672
    %v3037 = vunpack.c.l.b16 %v673
    %v3038 = vunpack.c.h.b16 %v673
    %v3039 = vunpack.c.l.b16 %v674
    %v3040 = vunpack.c.h.b16 %v674
    %v3041 = vunpack.c.l.b16 %v675
    %v3042 = vunpack.c.h.b16 %v675
    %v3043 = vunpack.c.l.b16 %v676
    %v3044 = vunpack.c.h.b16 %v676
    %v3045 = vunpack.c.l.b16 %v677
    %v3046 = vunpack.c.h.b16 %v677
    %v3047 = vunpack.c.l.b16 %v678
    %v3048 = vunpack.c.h.b16 %v678
    %v3049 = vunpack.c.l.b16 %v679
    %v3050 = vunpack.c.h.b16 %v679
    %v3051 = vunpack.c.l.b16 %v680
    %v3052 = vunpack.c.h.b16 %v680
    %v3053 = vunpack.c.l.b16 %v681
    %v3054 = vunpack.c.h.b16 %v681
    %v3055 = vunpack.c.l.b16 %v682
    %v3056 = vunpack.c.h.b16 %v682
    %v3057 = vunpack.c.l.b16 %v683
    %v3058 = vunpack.c.h.b16 %v683
    %v3059 = vunpack.c.l.b16 %v684
    %v3060 = vunpack.c.h.b16 %v684
    %v3061 = vunpack.c.l.b16 %v685
    %v3062 = vunpack.c.h.b16 %v685
    %v3063 = vunpack.c.l.b16 %v686
    %v3064 = vunpack.c.h.b16 %v686
    %v3065 = vunpack.c.l.b16 %v687
    %v3066 = vunpack.c.h.b16 %v687
    %v3067 = vunpack.c.l.b16 %v688
    %v3068 = vunpack.c.h.b16 %v688
    %v3069 = vunpack.c.l.b16 %v689
    %v3070 = vunpack.c.h.b16 %v689
    %v3071 = vunpack.c.l.b16 %v690
    %v3072 = vunpack.c.h.b16 %v690
    %v3073 = vunpack.c.l.b16 %v691
    %v3074 = vunpack.c.h.b16 %v691
    %v3075 = vunpack.c.l.b16 %v692
    %v3076 = vunpack.c.h.b16 %v692
    %v3077 = vunpack.c.l.b16 %v693
    %v3078 = vunpack.c.h.b16 %v693
    %v3079 = vunpack.c.l.b16 %v694
    %v3080 = vunpack.c.h.b16 %v694
    %v3081 = vunpack.c.l.b16 %v695
    %v3082 = vunpack.c.h.b16 %v695
    %v3083 = vunpack.c.l.b16 %v696
    %v3084 = vunpack.c.h.b16 %v696
    %v3085 = vunpack.c.l.b16 %v697
    %v3086 = vunpack.c.h.b16 %v697
    %v3087 = vunpack.c.l.b16 %v698
    %v3088 = vunpack.c.h.b16 %v698
    %v3089 = vunpack.c.l.b16 %v699
    %v3090 = vunpack.c.h.b16 %v699
    %v3091 = vunpack.c.l.b16 %v700
    %v3092 = vunpack.c.h.b16 %v700
    %v3093 = vunpack.c.l.b16 %v701
    %v3094 = vunpack.c.h.b16 %v701
    %v3095 = vunpack.c.l.b16 %v702
    %v3096 = vunpack.c.h.b16 %v702
    %v3097 = vunpack.c.l.b16 %v703
    %v3098 = vunpack.c.h.b16 %v703
    %v3099 = vunpack.c.l.b16 %v704
    %v3100 = vunpack.c.h.b16 %v704
    %v3101 = vunpack.c.l.b16 %v705
    %v3102 = vunpack.c.h.b16 %v705
    %v3103 = vunpack.c.l.b16 %v706
    %v3104 = vunpack.c.h.b16 %v706
    %v3105 = vunpack.c.l.b16 %v707
    %v3106 = vunpack.c.h.b16 %v707
    %v3107 = vunpack.c.l.b16 %v708
    %v3108 = vunpack.c.h.b16 %v708
    %v3109 = vunpack.c.l.b16 %v709
    %v3110 = vunpack.c.h.b16 %v709
    %v3111 = vunpack.c.l.b16 %v710
    %v3112 = vunpack.c.h.b16 %v710
    %v3113 = vunpack.c.l.b16 %v711
    %v3114 = vunpack.c.h.b16 %v711
    %v3115 = vunpack.c.l.b16 %v712
    %v3116 = vunpack.c.h.b16 %v712
    %v3117 = vunpack.c.l.b16 %v713
    %v3118 = vunpack.c.h.b16 %v713
    %v3119 = vunpack.c.l.b16 %v714
    %v3120 = vunpack.c.h.b16 %v714
    %v3121 = vunpack.c.l.b16 %v715
    %v3122 = vunpack.c.h.b16 %v715
    %v3123 = vunpack.c.l.b16 %v716
    %v3124 = vunpack.c.h.b16 %v716
    %v3125 = vunpack.c.l.b16 %v717
    %v3126 = vunpack.c.h.b16 %v717
    %v3127 = vunpack.c.l.b16 %v718
    %v3128 = vunpack.c.h.b16 %v718
    %v3129 = vunpack.c.l.b16 %v719
    %v3130 = vunpack.c.h.b16 %v719
    %v3131 = vunpack.c.l.b16 %v720
    %v3132 = vunpack.c.h.b16 %v720
    %v3133 = vunpack.c.l.b16 %v721
    %v3134 = vunpack.c.h.b16 %v721
    %v3135 = vunpack.c.l.b16 %v722
    %v3136 = vunpack.c.h.b16 %v722
    %v3137 = vunpack.c.l.b16 %v723
    %v3138 = vunpack.c.h.b16 %v723
    %v3139 = vunpack.c.l.b16 %v724
    %v3140 = vunpack.c.h.b16 %v724
    %v3141 = vunpack.c.l.b16 %v725
    %v3142 = vunpack.c.h.b16 %v725
    %v3143 = vunpack.c.l.b16 %v726
    %v3144 = vunpack.c.h.b16 %v726
    %v3145 = vunpack.c.l.b16 %v727
    %v3146 = vunpack.c.h.b16 %v727
    %v3147 = vunpack.c.l.b16 %v728
    %v3148 = vunpack.c.h.b16 %v728
    %v3149 = vunpack.c.l.b16 %v729
    %v3150 = vunpack.c.h.b16 %v729
    %v3151 = vunpack.c.l.b16 %v730
    %v3152 = vunpack.c.h.b16 %v730
    %v3153 = vunpack.c.l.b16 %v731
    %v3154 = vunpack.c.h.b16 %v731
    %v3155 = vunpack.c.l.b16 %v732
    %v3156 = vunpack.c.h.b16 %v732
    %v3157 = vunpack.c.l.b16 %v733
    %v3158 = vunpack.c.h.b16 %v733
    %v3159 = vunpack.c.l.b16 %v734
    %v3160 = vunpack.c.h.b16 %v734
    %v3161 = vunpack.c.l.b16 %v735
    %v3162 = vunpack.c.h.b16 %v735
    %v3163 = vunpack.c.l.b16 %v736
    %v3164 = vunpack.c.h.b16 %v736
    %v3165 = vunpack.c.l.b16 %v737
    %v3166 = vunpack.c.h.b16 %v737
    %v3167 = vunpack.c.l.b16 %v738
    %v3168 = vunpack.c.h.b16 %v738
    %v3169 = vunpack.c.l.b16 %v739
    %v3170 = vunpack.c.h.b16 %v739
    %v3171 = vunpack.c.l.b16 %v740
    %v3172 = vunpack.c.h.b16 %v740
    %v3173 = vunpack.c.l.b16 %v741
    %v3174 = vunpack.c.h.b16 %v741
    %v3175 = vunpack.c.l.b16 %v742
    %v3176 = vunpack.c.h.b16 %v742
    %v3177 = vunpack.c.l.b16 %v743
    %v3178 = vunpack.c.h.b16 %v743
    %v3179 = vunpack.c.l.b16 %v744
    %v3180 = vunpack.c.h.b16 %v744
    %v3181 = vunpack.c.l.b16 %v745
    %v3182 = vunpack.c.h.b16 %v745
    %v3183 = vunpack.c.l.b16 %v746
    %v3184 = vunpack.c.h.b16 %v746
    %v3185 = vunpack.c.l.b16 %v747
    %v3186 = vunpack.c.h.b16 %v747
    %v3187 = vunpack.c.l.b16 %v748
    %v3188 = vunpack.c.h.b16 %v748
    %v3189 = vunpack.c.l.b16 %v749
    %v3190 = vunpack.c.h.b16 %v749
    %v3191 = vunpack.c.l.b16 %v750
    %v3192 = vunpack.c.h.b16 %v750
    %v3193 = vunpack.c.l.b16 %v751
    %v3194 = vunpack.c.h.b16 %v751
    %v3195 = vunpack.c.l.b16 %v752
    %v3196 = vunpack.c.h.b16 %v752
    %v3197 = vunpack.c.l.b16 %v753
    %v3198 = vunpack.c.h.b16 %v753
    %v3199 = vunpack.c.l.b16 %v754
    %v3200 = vunpack.c.h.b16 %v754
    %v3201 = vunpack.c.l.b16 %v755
    %v3202 = vunpack.c.h.b16 %v755
    %v3203 = vunpack.c.l.b16 %v756
    %v3204 = vunpack.c.h.b16 %v756
    %v3205 = vunpack.c.l.b16 %v757
    %v3206 = vunpack.c.h.b16 %v757
    %v3207 = vunpack.c.l.b16 %v758
    %v3208 = vunpack.c.h.b16 %v758
    %v3209 = vunpack.c.l.b16 %v759
    %v3210 = vunpack.c.h.b16 %v759
    %v3211 = vunpack.c.l.b16 %v760
    %v3212 = vunpack.c.h.b16 %v760
    %v3213 = vunpack.c.l.b16 %v761
    %v3214 = vunpack.c.h.b16 %v761
    %v3215 = vunpack.c.l.b16 %v762
    %v3216 = vunpack.c.h.b16 %v762
    %v3217 = vunpack.c.l.b16 %v763
    %v3218 = vunpack.c.h.b16 %v763
    %v3219 = vunpack.c.l.b16 %v764
    %v3220 = vunpack.c.h.b16 %v764
    %v3221 = vunpack.c.l.b16 %v765
    %v3222 = vunpack.c.h.b16 %v765
    %v3223 = vunpack.c.l.b16 %v766
    %v3224 = vunpack.c.h.b16 %v766
    %v3225 = vunpack.c.l.b16 %v767
    %v3226 = vunpack.c.h.b16 %v767
    %v3227 = vunpack.c.l.b16 %v768
    %v3228 = vunpack.c.h.b16 %v768
    %v3229 = vunpack.c.l.b16 %v769
    %v3230 = vunpack.c.h.b16 %v769
    %v3231 = vunpack.c.l.b16 %v770
    %v3232 = vunpack.c.h.b16 %v770
    %v3233 = vunpack.c.l.b16 %v771
    %v3234 = vunpack.c.h.b16 %v771
    %v3235 = vunpack.c.l.b16 %v772
    %v3236 = vunpack.c.h.b16 %v772
    %v3237 = vunpack.c.l.b16 %v773
    %v3238 = vunpack.c.h.b16 %v773
    %v3239 = vunpack.c.l.b16 %v774
    %v3240 = vunpack.c.h.b16 %v774
    %v3241 = vunpack.c.l.b16 %v775
    %v3242 = vunpack.c.h.b16 %v775
    %v3243 = vunpack.c.l.b16 %v776
    %v3244 = vunpack.c.h.b16 %v776
    %v3245 = vunpack.c.l.b16 %v777
    %v3246 = vunpack.c.h.b16 %v777
    %v3247 = vunpack.c.l.b16 %v778
    %v3248 = vunpack.c.h.b16 %v778
    %v3249 = vunpack.c.l.b16 %v779
    %v3250 = vunpack.c.h.b16 %v779
    %v3251 = vunpack.c.l.b16 %v780
    %v3252 = vunpack.c.h.b16 %v780
    %v3253 = vunpack.c.l.b16 %v781
    %v3254 = vunpack.c.h.b16 %v781
    %v3255 = vunpack.c.l.b16 %v782
    %v3256 = vunpack.c.h.b16 %v782
    %v3257 = vunpack.c.l.b16 %v783
    %v3258 = vunpack.c.h.b16 %v783
    %v3259 = vunpack.c.l.b16 %v784
    %v3260 = vunpack.c.h.b16 %v784
    %v3261 = vunpack.c.l.b16 %v785
    %v3262 = vunpack.c.h.b16 %v785
    %v3263 = vunpack.c.l.b16 %v786
    %v3264 = vunpack.c.h.b16 %v786
    %v3265 = vunpack.c.l.b16 %v787
    %v3266 = vunpack.c.h.b16 %v787
    %v3267 = vunpack.c.l.b16 %v788
    %v3268 = vunpack.c.h.b16 %v788
    %v3269 = vunpack.c.l.b16 %v789
    %v3270 = vunpack.c.h.b16 %v789
    %v3271 = vunpack.c.l.b16 %v790
    %v3272 = vunpack.c.h.b16 %v790
    %v3273 = vunpack.c.l.b16 %v791
    %v3274 = vunpack.c.h.b16 %v791
    %v3275 = vunpack.c.l.b16 %v792
    %v3276 = vunpack.c.h.b16 %v792
    %v3277 = vunpack.c.l.b16 %v793
    %v3278 = vunpack.c.h.b16 %v793
    %v3279 = vunpack.c.l.b16 %v794
    %v3280 = vunpack.c.h.b16 %v794
    %v3281 = vunpack.c.l.b16 %v795
    %v3282 = vunpack.c.h.b16 %v795
    %v3283 = vunpack.c.l.b16 %v796
    %v3284 = vunpack.c.h.b16 %v796
    %v3285 = vunpack.c.l.b16 %v797
    %v3286 = vunpack.c.h.b16 %v797
    %v3287 = vunpack.c.l.b16 %v798
    %v3288 = vunpack.c.h.b16 %v798
    %v3289 = vunpack.c.l.b16 %v799
    %v3290 = vunpack.c.h.b16 %v799
    %v3291 = vunpack.c.l.b16 %v800
    %v3292 = vunpack.c.h.b16 %v800
    %v3293 = vunpack.c.l.b16 %v801
    %v3294 = vunpack.c.h.b16 %v801
    %v3295 = vunpack.c.l.b16 %v802
    %v3296 = vunpack.c.h.b16 %v802
    %v3297 = vunpack.c.l.b16 %v803
    %v3298 = vunpack.c.h.b16 %v803
    %v3299 = vunpack.c.l.b16 %v804
    %v3300 = vunpack.c.h.b16 %v804
    %v3301 = vunpack.c.l.b16 %v805
    %v3302 = vunpack.c.h.b16 %v805
    %v3303 = vunpack.c.l.b16 %v806
    %v3304 = vunpack.c.h.b16 %v806
    %v3305 = vunpack.c.l.b16 %v807
    %v3306 = vunpack.c.h.b16 %v807
    %v3307 = vunpack.c.l.b16 %v808
    %v3308 = vunpack.c.h.b16 %v808
    %v3309 = vunpack.c.l.b16 %v809
    %v3310 = vunpack.c.h.b16 %v809
    %v3311 = vunpack.c.l.b16 %v810
    %v3312 = vunpack.c.h.b16 %v810
    %v3313 = vunpack.c.l.b16 %v811
    %v3314 = vunpack.c.h.b16 %v811
    %v3315 = vunpack.c.l.b16 %v812
    %v3316 = vunpack.c.h.b16 %v812
    %v3317 = vunpack.c.l.b16 %v813
    %v3318 = vunpack.c.h.b16 %v813
    %v3319 = vunpack.c.l.b16 %v814
    %v3320 = vunpack.c.h.b16 %v814
    %v3321 = vunpack.c.l.b16 %v815
    %v3322 = vunpack.c.h.b16 %v815
    %v3323 = vunpack.c.l.b16 %v816
    %v3324 = vunpack.c.h.b16 %v816
    %v3325 = vunpack.c.l.b16 %v817
    %v3326 = vunpack.c.h.b16 %v817
    %v3327 = vunpack.c.l.b16 %v818
    %v3328 = vunpack.c.h.b16 %v818
    %v3329 = vunpack.c.l.b16 %v819
    %v3330 = vunpack.c.h.b16 %v819
    %v3331 = vunpack.c.l.b16 %v820
    %v3332 = vunpack.c.h.b16 %v820
    %v3333 = vunpack.c.l.b16 %v821
    %v3334 = vunpack.c.h.b16 %v821
    %v3335 = vunpack.c.l.b16 %v822
    %v3336 = vunpack.c.h.b16 %v822
    %v3337 = vunpack.c.l.b16 %v823
    %v3338 = vunpack.c.h.b16 %v823
    %v3339 = vunpack.c.l.b16 %v824
    %v3340 = vunpack.c.h.b16 %v824
    %v3341 = vunpack.c.l.b16 %v825
    %v3342 = vunpack.c.h.b16 %v825
    %v3343 = vunpack.c.l.b16 %v826
    %v3344 = vunpack.c.h.b16 %v826
    %v3345 = vunpack.c.l.b16 %v827
    %v3346 = vunpack.c.h.b16 %v827
    %v3347 = vunpack.c.l.b16 %v828
    %v3348 = vunpack.c.h.b16 %v828
    %v3349 = vunpack.c.l.b16 %v829
    %v3350 = vunpack.c.h.b16 %v829
    %v3351 = vunpack.c.l.b16 %v830
    %v3352 = vunpack.c.h.b16 %v830
    %v3353 = vunpack.c.l.b16 %v831
    %v3354 = vunpack.c.h.b16 %v831
    %v3355 = vunpack.c.l.b16 %v832
    %v3356 = vunpack.c.h.b16 %v832
    %v3357 = vunpack.c.l.b16 %v833
    %v3358 = vunpack.c.h.b16 %v833
    %v3359 = vunpack.c.l.b16 %v834
    %v3360 = vunpack.c.h.b16 %v834
    %v3361 = vunpack.c.l.b16 %v835
    %v3362 = vunpack.c.h.b16 %v835
    %v3363 = vunpack.c.l.b16 %v836
    %v3364 = vunpack.c.h.b16 %v836
    %v3365 = vunpack.c.l.b16 %v837
    %v3366 = vunpack.c.h.b16 %v837
    %v3367 = vunpack.c.l.b16 %v838
    %v3368 = vunpack.c.h.b16 %v838
    %v3369 = vunpack.c.l.b16 %v839
    %v3370 = vunpack.c.h.b16 %v839
    %v3371 = vunpack.c.l.b16 %v840
    %v3372 = vunpack.c.h.b16 %v840
    %v3373 = vunpack.c.l.b16 %v841
    %v3374 = vunpack.c.h.b16 %v841
    %v3375 = vunpack.c.l.b16 %v842
    %v3376 = vunpack.c.h.b16 %v842
    %v3377 = vunpack.c.l.b16 %v843
    %v3378 = vunpack.c.h.b16 %v843
    %v3379 = vunpack.c.l.b16 %v844
    %v3380 = vunpack.c.h.b16 %v844
    %v3381 = vunpack.c.l.b16 %v845
    %v3382 = vunpack.c.h.b16 %v845
    %v3383 = vunpack.c.l.b16 %v846
    %v3384 = vunpack.c.h.b16 %v846
    %v3385 = vunpack.c.l.b16 %v847
    %v3386 = vunpack.c.h.b16 %v847
    %v3387 = vunpack.c.l.b16 %v848
    %v3388 = vunpack.c.h.b16 %v848
    %v3389 = vunpack.c.l.b16 %v849
    %v3390 = vunpack.c.h.b16 %v849
    %v3391 = vunpack.c.l.b16 %v850
    %v3392 = vunpack.c.h.b16 %v850
    %v3393 = vunpack.c.l.b16 %v851
    %v3394 = vunpack.c.h.b16 %v851
    %v3395 = vunpack.c.l.b16 %v852
    %v3396 = vunpack.c.h.b16 %v852
    %v3397 = vunpack.c.l.b16 %v853
    %v3398 = vunpack.c.h.b16 %v853
    %v3399 = vunpack.c.l.b16 %v854
    %v3400 = vunpack.c.h.b16 %v854
    %v3401 = vunpack.c.l.b16 %v855
    %v3402 = vunpack.c.h.b16 %v855
    %v3403 = vunpack.c.l.b16 %v856
    %v3404 = vunpack.c.h.b16 %v856
    %v3405 = vunpack.c.l.b16 %v857
    %v3406 = vunpack.c.h.b16 %v857
    %v3407 = vunpack.c.l.b16 %v858
    %v3408 = vunpack.c.h.b16 %v858
    %v3409 = vunpack.c.l.b16 %v859
    %v3410 = vunpack.c.h.b16 %v859
    %v3411 = vunpack.c.l.b16 %v860
    %v3412 = vunpack.c.h.b16 %v860
    %v3413 = vunpack.c.l.b16 %v861
    %v3414 = vunpack.c.h.b16 %v861
    %v3415 = vunpack.c.l.b16 %v862
    %v3416 = vunpack.c.h.b16 %v862
    %v3417 = vunpack.c.l.b16 %v863
    %v3418 = vunpack.c.h.b16 %v863
    %v3419 = vunpack.c.l.b16 %v864
    %v3420 = vunpack.c.h.b16 %v864
    %v3421 = vunpack.c.l.b16 %v865
    %v3422 = vunpack.c.h.b16 %v865
    %v3423 = vunpack.c.l.b16 %v866
    %v3424 = vunpack.c.h.b16 %v866
    %v3425 = vunpack.c.l.b16 %v867
    %v3426 = vunpack.c.h.b16 %v867
    %v3427 = vunpack.c.l.b16 %v868
    %v3428 = vunpack.c.h.b16 %v868
    %v3429 = vunpack.c.l.b16 %v869
    %v3430 = vunpack.c.h.b16 %v869
    %v3431 = vunpack.c.l.b16 %v870
    %v3432 = vunpack.c.h.b16 %v870
    %v3433 = vunpack.c.l.b16 %v871
    %v3434 = vunpack.c.h.b16 %v871
    %v3435 = vpack.c.b16 %v1871, %v1867
    %v3436 = vpack.c.b16 %v1872, %v1868
    %v3437 = vpack.c.b16 %v1873, %v1869
    %v3438 = vpack.c.b16 %v1874, %v1870
    %v3439 = vpack.c.b16 %v1879, %v1875
    %v3440 = vpack.c.b16 %v1880, %v1876
    %v3441 = vpack.c.b16 %v1881, %v1877
    %v3442 = vpack.c.b16 %v1882, %v1878
    %v3443 = vpack.c.b16 %v1887, %v1883
    %v3444 = vpack.c.b16 %v1888, %v1884
    %v3445 = vpack.c.b16 %v1889, %v1885
    %v3446 = vpack.c.b16 %v1890, %v1886
    %v3447 = vpack.c.b16 %v1895, %v1891
    %v3448 = vpack.c.b16 %v1896, %v1892
    %v3449 = vpack.c.b16 %v1897, %v1893
    %v3450 = vpack.c.b16 %v1898, %v1894
    %v3451 = vpack.c.b16 %v1903, %v1899
    %v3452 = vpack.c.b16 %v1904, %v1900
    %v3453 = vpack.c.b16 %v1905, %v1901
    %v3454 = vpack.c.b16 %v1906, %v1902
    %v3455 = vpack.c.b16 %v1911, %v1907
    %v3456 = vpack.c.b16 %v1912, %v1908
    %v3457 = vpack.c.b16 %v1913, %v1909
    %v3458 = vpack.c.b16 %v1914, %v1910
    %v3459 = vpack.c.b16 %v1919, %v1915
    %v3460 = vpack.c.b16 %v1920, %v1916
    %v3461 = vpack.c.b16 %v1921, %v1917
    %v3462 = vpack.c.b16 %v1922, %v1918
    %v3463 = vpack.c.b16 %v1927, %v1923
    %v3464 = vpack.c.b16 %v1928, %v1924
    %v3465 = vpack.c.b16 %v1929, %v1925
    %v3466 = vpack.c.b16 %v1930, %v1926
    %v3467 = vpack.c.b16 %v1935, %v1931
    %v3468 = vpack.c.b16 %v1936, %v1932
    %v3469 = vpack.c.b16 %v1937, %v1933
    %v3470 = vpack.c.b16 %v1938, %v1934
    %v3471 = vpack.c.b16 %v1943, %v1939
    %v3472 = vpack.c.b16 %v1944, %v1940
    %v3473 = vpack.c.b16 %v1945, %v1941
    %v3474 = vpack.c.b16 %v1946, %v1942
    %v3475 = vpack.c.b16 %v1951, %v1947
    %v3476 = vpack.c.b16 %v1952, %v1948
    %v3477 = vpack.c.b16 %v1953, %v1949
    %v3478 = vpack.c.b16 %v1954, %v1950
    %v3479 = vpack.c.b16 %v1959, %v1955
    %v3480 = vpack.c.b16 %v1960, %v1956
    %v3481 = vpack.c.b16 %v1961, %v1957
    %v3482 = vpack.c.b16 %v1962, %v1958
    %v3483 = vpack.c.b16 %v1967, %v1963
    %v3484 = vpack.c.b16 %v1968, %v1964
    %v3485 = vpack.c.b16 %v1969, %v1965
    %v3486 = vpack.c.b16 %v1970, %v1966
    %v3487 = vpack.c.b16 %v1975, %v1971
    %v3488 = vpack.c.b16 %v1976, %v1972
    %v3489 = vpack.c.b16 %v1977, %v1973
    %v3490 = vpack.c.b16 %v1978, %v1974
    %v3491 = vpack.c.b16 %v1983, %v1979
    %v3492 = vpack.c.b16 %v1984, %v1980
    %v3493 = vpack.c.b16 %v1985, %v1981
    %v3494 = vpack.c.b16 %v1986, %v1982
    %v3495 = vpack.c.b16 %v1991, %v1987
    %v3496 = vpack.c.b16 %v1992, %v1988
    %v3497 = vpack.c.b16 %v1993, %v1989
    %v3498 = vpack.c.b16 %v1994, %v1990
    %v3499 = vpack.c.b16 %v1999, %v1995
    %v3500 = vpack.c.b16 %v2000, %v1996
    %v3501 = vpack.c.b16 %v2001, %v1997
    %v3502 = vpack.c.b16 %v2002, %v1998
    %v3503 = vpack.c.b16 %v2007, %v2003
    %v3504 = vpack.c.b16 %v2008, %v2004
    %v3505 = vpack.c.b16 %v2009, %v2005
    %v3506 = vpack.c.b16 %v2010, %v2006
    %v3507 = vpack.c.b16 %v2015, %v2011
    %v3508 = vpack.c.b16 %v2016, %v2012
    %v3509 = vpack.c.b16 %v2017, %v2013
    %v3510 = vpack.c.b16 %v2018, %v2014
    %v3511 = vpack.c.b16 %v2023, %v2019
    %v3512 = vpack.c.b16 %v2024, %v2020
    %v3513 = vpack.c.b16 %v2025, %v2021
    %v3514 = vpack.c.b16 %v2026, %v2022
    %v3515 = vpack.c.b16 %v2031, %v2027
    %v3516 = vpack.c.b16 %v2032, %v2028
    %v3517 = vpack.c.b16 %v2033, %v2029
    %v3518 = vpack.c.b16 %v2034, %v2030
    %v3519 = vpack.c.b16 %v2039, %v2035
    %v3520 = vpack.c.b16 %v2040, %v2036
    %v3521 = vpack.c.b16 %v2041, %v2037
    %v3522 = vpack.c.b16 %v2042, %v2038
    %v3523 = vpack.c.b16 %v2047, %v2043
    %v3524 = vpack.c.b16 %v2048, %v2044
    %v3525 = vpack.c.b16 %v2049, %v2045
    %v3526 = vpack.c.b16 %v2050, %v2046
    %v3527 = vpack.c.b16 %v2055, %v2051
    %v3528 = vpack.c.b16 %v2056, %v2052
    %v3529 = vpack.c.b16 %v2057, %v2053
    %v3530 = vpack.c.b16 %v2058, %v2054
    %v3531 = vpack.c.b16 %v2063, %v2059
    %v3532 = vpack.c.b16 %v2064, %v2060
    %v3533 = vpack.c.b16 %v2065, %v2061
    %v3534 = vpack.c.b16 %v2066, %v2062
    %v3535 = vpack.c.b16 %v2071, %v2067
    %v3536 = vpack.c.b16 %v2072, %v2068
    %v3537 = vpack.c.b16 %v2073, %v2069
    %v3538 = vpack.c.b16 %v2074, %v2070
    %v3539 = vpack.c.b16 %v2079, %v2075
    %v3540 = vpack.c.b16 %v2080, %v2076
    %v3541 = vpack.c.b16 %v2081, %v2077
    %v3542 = vpack.c.b16 %v2082, %v2078
    %v3543 = vpack.c.b16 %v2087, %v2083
    %v3544 = vpack.c.b16 %v2088, %v2084
    %v3545 = vpack.c.b16 %v2089, %v2085
    %v3546 = vpack.c.b16 %v2090, %v2086
    %v3547 = vpack.c.b16 %v2095, %v2091
    %v3548 = vpack.c.b16 %v2096, %v2092
    %v3549 = vpack.c.b16 %v2097, %v2093
    %v3550 = vpack.c.b16 %v2098, %v2094
    %v3551 = vpack.c.b16 %v2103, %v2099
    %v3552 = vpack.c.b16 %v2104, %v2100
    %v3553 = vpack.c.b16 %v2105, %v2101
    %v3554 = vpack.c.b16 %v2106, %v2102
    %v3555 = vpack.c.b16 %v2111, %v2107
    %v3556 = vpack.c.b16 %v2112, %v2108
    %v3557 = vpack.c.b16 %v2113, %v2109
    %v3558 = vpack.c.b16 %v2114, %v2110
    %v3559 = vpack.c.b16 %v2119, %v2115
    %v3560 = vpack.c.b16 %v2120, %v2116
    %v3561 = vpack.c.b16 %v2121, %v2117
    %v3562 = vpack.c.b16 %v2122, %v2118
    %v3563 = vpack.c.b16 %v2127, %v2123
    %v3564 = vpack.c.b16 %v2128, %v2124
    %v3565 = vpack.c.b16 %v2129, %v2125
    %v3566 = vpack.c.b16 %v2130, %v2126
    %v3567 = vpack.c.b16 %v2135, %v2131
    %v3568 = vpack.c.b16 %v2136, %v2132
    %v3569 = vpack.c.b16 %v2137, %v2133
    %v3570 = vpack.c.b16 %v2138, %v2134
    %v3571 = vpack.c.b16 %v2143, %v2139
    %v3572 = vpack.c.b16 %v2144, %v2140
    %v3573 = vpack.c.b16 %v2145, %v2141
    %v3574 = vpack.c.b16 %v2146, %v2142
    %v3575 = vpack.c.b16 %v2151, %v2147
    %v3576 = vpack.c.b16 %v2152, %v2148
    %v3577 = vpack.c.b16 %v2153, %v2149
    %v3578 = vpack.c.b16 %v2154, %v2150
    %v3579 = vpack.c.b16 %v2159, %v2155
    %v3580 = vpack.c.b16 %v2160, %v2156
    %v3581 = vpack.c.b16 %v2161, %v2157
    %v3582 = vpack.c.b16 %v2162, %v2158
    %v3583 = vpack.c.b16 %v2167, %v2163
    %v3584 = vpack.c.b16 %v2168, %v2164
    %v3585 = vpack.c.b16 %v2169, %v2165
    %v3586 = vpack.c.b16 %v2170, %v2166
    %v3587 = vpack.c.b16 %v2175, %v2171
    %v3588 = vpack.c.b16 %v2176, %v2172
    %v3589 = vpack.c.b16 %v2177, %v2173
    %v3590 = vpack.c.b16 %v2178, %v2174
    %v3591 = vpack.c.b16 %v2183, %v2179
    %v3592 = vpack.c.b16 %v2184, %v2180
    %v3593 = vpack.c.b16 %v2185, %v2181
    %v3594 = vpack.c.b16 %v2186, %v2182
    %v3595 = vpack.c.b16 %v2191, %v2187
    %v3596 = vpack.c.b16 %v2192, %v2188
    %v3597 = vpack.c.b16 %v2193, %v2189
    %v3598 = vpack.c.b16 %v2194, %v2190
    %v3599 = vpack.c.b16 %v2199, %v2195
    %v3600 = vpack.c.b16 %v2200, %v2196
    %v3601 = vpack.c.b16 %v2201, %v2197
    %v3602 = vpack.c.b16 %v2202, %v2198
    %v3603 = vpack.c.b16 %v2207, %v2203
    %v3604 = vpack.c.b16 %v2208, %v2204
    %v3605 = vpack.c.b16 %v2209, %v2205
    %v3606 = vpack.c.b16 %v2210, %v2206
    %v3607 = vpack.c.b16 %v2215, %v2211
    %v3608 = vpack.c.b16 %v2216, %v2212
    %v3609 = vpack.c.b16 %v2217, %v2213
    %v3610 = vpack.c.b16 %v2218, %v2214
    %v3611 = vpack.c.b16 %v2223, %v2219
    %v3612 = vpack.c.b16 %v2224, %v2220
    %v3613 = vpack.c.b16 %v2225, %v2221
    %v3614 = vpack.c.b16 %v2226, %v2222
    %v3615 = vpack.c.b16 %v2231, %v2227
    %v3616 = vpack.c.b16 %v2232, %v2228
    %v3617 = vpack.c.b16 %v2233, %v2229
    %v3618 = vpack.c.b16 %v2234, %v2230
    %v3619 = vpack.c.b16 %v2239, %v2235
    %v3620 = vpack.c.b16 %v2240, %v2236
    %v3621 = vpack.c.b16 %v2241, %v2237
    %v3622 = vpack.c.b16 %v2242, %v2238
    %v3623 = vpack.c.b16 %v2247, %v2243
    %v3624 = vpack.c.b16 %v2248, %v2244
    %v3625 = vpack.c.b16 %v2249, %v2245
    %v3626 = vpack.c.b16 %v2250, %v2246
    %v3627 = vpack.c.b16 %v2255, %v2251
    %v3628 = vpack.c.b16 %v2256, %v2252
    %v3629 = vpack.c.b16 %v2257, %v2253
    %v3630 = vpack.c.b16 %v2258, %v2254
    %v3631 = vpack.c.b16 %v2263, %v2259
    %v3632 = vpack.c.b16 %v2264, %v2260
    %v3633 = vpack.c.b16 %v2265, %v2261
    %v3634 = vpack.c.b16 %v2266, %v2262
    %v3635 = vpack.c.b16 %v2271, %v2267
    %v3636 = vpack.c.b16 %v2272, %v2268
    %v3637 = vpack.c.b16 %v2273, %v2269
    %v3638 = vpack.c.b16 %v2274, %v2270
    %v3639 = vpack.c.b16 %v2279, %v2275
    %v3640 = vpack.c.b16 %v2280, %v2276
    %v3641 = vpack.c.b16 %v2281, %v2277
    %v3642 = vpack.c.b16 %v2282, %v2278
    %v3643 = vpack.c.b16 %v2287, %v2283
    %v3644 = vpack.c.b16 %v2288, %v2284
    %v3645 = vpack.c.b16 %v2289, %v2285
    %v3646 = vpack.c.b16 %v2290, %v2286
    %v3647 = vpack.c.b16 %v2295, %v2291
    %v3648 = vpack.c.b16 %v2296, %v2292
    %v3649 = vpack.c.b16 %v2297, %v2293
    %v3650 = vpack.c.b16 %v2298, %v2294
    %v3651 = vpack.c.b16 %v2303, %v2299
    %v3652 = vpack.c.b16 %v2304, %v2300
    %v3653 = vpack.c.b16 %v2305, %v2301
    %v3654 = vpack.c.b16 %v2306, %v2302
    %v3655 = vpack.c.b16 %v2311, %v2307
    %v3656 = vpack.c.b16 %v2312, %v2308
    %v3657 = vpack.c.b16 %v2313, %v2309
    %v3658 = vpack.c.b16 %v2314, %v2310
    %v3659 = vpack.c.b16 %v2319, %v2315
    %v3660 = vpack.c.b16 %v2320, %v2316
    %v3661 = vpack.c.b16 %v2321, %v2317
    %v3662 = vpack.c.b16 %v2322, %v2318
    %v3663 = vpack.c.b16 %v2327, %v2323
    %v3664 = vpack.c.b16 %v2328, %v2324
    %v3665 = vpack.c.b16 %v2329, %v2325
    %v3666 = vpack.c.b16 %v2330, %v2326
    %v3667 = vpack.c.b16 %v2335, %v2331
    %v3668 = vpack.c.b16 %v2336, %v2332
    %v3669 = vpack.c.b16 %v2337, %v2333
    %v3670 = vpack.c.b16 %v2338, %v2334
    %v3671 = vpack.c.b16 %v2343, %v2339
    %v3672 = vpack.c.b16 %v2344, %v2340
    %v3673 = vpack.c.b16 %v2345, %v2341
    %v3674 = vpack.c.b16 %v2346, %v2342
    %v3675 = vpack.c.b16 %v2351, %v2347
    %v3676 = vpack.c.b16 %v2352, %v2348
    %v3677 = vpack.c.b16 %v2353, %v2349
    %v3678 = vpack.c.b16 %v2354, %v2350
    %v3679 = vpack.c.b16 %v2359, %v2355
    %v3680 = vpack.c.b16 %v2360, %v2356
    %v3681 = vpack.c.b16 %v2361, %v2357
    %v3682 = vpack.c.b16 %v2362, %v2358
    %v3683 = vpack.c.b16 %v2367, %v2363
    %v3684 = vpack.c.b16 %v2368, %v2364
    %v3685 = vpack.c.b16 %v2369, %v2365
    %v3686 = vpack.c.b16 %v2370, %v2366
    %v3687 = vpack.c.b16 %v2375, %v2371
    %v3688 = vpack.c.b16 %v2376, %v2372
    %v3689 = vpack.c.b16 %v2377, %v2373
    %v3690 = vpack.c.b16 %v2378, %v2374
    %v3691 = vpack.c.b16 %v2383, %v2379
    %v3692 = vpack.c.b16 %v2384, %v2380
    %v3693 = vpack.c.b16 %v2385, %v2381
    %v3694 = vpack.c.b16 %v2386, %v2382
    %v3695 = vpack.c.b16 %v2391, %v2387
    %v3696 = vpack.c.b16 %v2392, %v2388
    %v3697 = vpack.c.b16 %v2393, %v2389
    %v3698 = vpack.c.b16 %v2394, %v2390
    %v3699 = vpack.c.b16 %v2399, %v2395
    %v3700 = vpack.c.b16 %v2400, %v2396
    %v3701 = vpack.c.b16 %v2401, %v2397
    %v3702 = vpack.c.b16 %v2402, %v2398
    %v3703 = vpack.c.b16 %v2407, %v2403
    %v3704 = vpack.c.b16 %v2408, %v2404
    %v3705 = vpack.c.b16 %v2409, %v2405
    %v3706 = vpack.c.b16 %v2410, %v2406
    %v3707 = vpack.c.b16 %v2415, %v2411
    %v3708 = vpack.c.b16 %v2416, %v2412
    %v3709 = vpack.c.b16 %v2417, %v2413
    %v3710 = vpack.c.b16 %v2418, %v2414
    %v3711 = vpack.c.b16 %v2423, %v2419
    %v3712 = vpack.c.b16 %v2424, %v2420
    %v3713 = vpack.c.b16 %v2425, %v2421
    %v3714 = vpack.c.b16 %v2426, %v2422
    %v3715 = vpack.c.b16 %v2431, %v2427
    %v3716 = vpack.c.b16 %v2432, %v2428
    %v3717 = vpack.c.b16 %v2433, %v2429
    %v3718 = vpack.c.b16 %v2434, %v2430
    %v3719 = vpack.c.b16 %v2439, %v2435
    %v3720 = vpack.c.b16 %v2440, %v2436
    %v3721 = vpack.c.b16 %v2441, %v2437
    %v3722 = vpack.c.b16 %v2442, %v2438
    %v3723 = vpack.c.b16 %v2447, %v2443
    %v3724 = vpack.c.b16 %v2448, %v2444
    %v3725 = vpack.c.b16 %v2449, %v2445
    %v3726 = vpack.c.b16 %v2450, %v2446
    %v3727 = vpack.c.b16 %v2455, %v2451
    %v3728 = vpack.c.b16 %v2456, %v2452
    %v3729 = vpack.c.b16 %v2457, %v2453
    %v3730 = vpack.c.b16 %v2458, %v2454
    %v3731 = vpack.c.b16 %v2463, %v2459
    %v3732 = vpack.c.b16 %v2464, %v2460
    %v3733 = vpack.c.b16 %v2465, %v2461
    %v3734 = vpack.c.b16 %v2466, %v2462
    %v3735 = vpack.c.b16 %v2471, %v2467
    %v3736 = vpack.c.b16 %v2472, %v2468
    %v3737 = vpack.c.b16 %v2473, %v2469
    %v3738 = vpack.c.b16 %v2474, %v2470
    %v3739 = vpack.c.b16 %v2479, %v2475
    %v3740 = vpack.c.b16 %v2480, %v2476
    %v3741 = vpack.c.b16 %v2481, %v2477
    %v3742 = vpack.c.b16 %v2482, %v2478
    %v3743 = vpack.c.b16 %v2487, %v2483
    %v3744 = vpack.c.b16 %v2488, %v2484
    %v3745 = vpack.c.b16 %v2489, %v2485
    %v3746 = vpack.c.b16 %v2490, %v2486
    %v3747 = vpack.c.b16 %v2495, %v2491
    %v3748 = vpack.c.b16 %v2496, %v2492
    %v3749 = vpack.c.b16 %v2497, %v2493
    %v3750 = vpack.c.b16 %v2498, %v2494
    %v3751 = vpack.c.b16 %v2503, %v2499
    %v3752 = vpack.c.b16 %v2504, %v2500
    %v3753 = vpack.c.b16 %v2505, %v2501
    %v3754 = vpack.c.b16 %v2506, %v2502
    %v3755 = vpack.c.b16 %v2511, %v2507
    %v3756 = vpack.c.b16 %v2512, %v2508
    %v3757 = vpack.c.b16 %v2513, %v2509
    %v3758 = vpack.c.b16 %v2514, %v2510
    %v3759 = vpack.c.b16 %v2519, %v2515
    %v3760 = vpack.c.b16 %v2520, %v2516
    %v3761 = vpack.c.b16 %v2521, %v2517
    %v3762 = vpack.c.b16 %v2522, %v2518
    %v3763 = vpack.c.b16 %v2527, %v2523
    %v3764 = vpack.c.b16 %v2528, %v2524
    %v3765 = vpack.c.b16 %v2529, %v2525
    %v3766 = vpack.c.b16 %v2530, %v2526
    %v3767 = vpack.c.b16 %v2535, %v2531
    %v3768 = vpack.c.b16 %v2536, %v2532
    %v3769 = vpack.c.b16 %v2537, %v2533
    %v3770 = vpack.c.b16 %v2538, %v2534
    %v3771 = vpack.c.b16 %v2543, %v2539
    %v3772 = vpack.c.b16 %v2544, %v2540
    %v3773 = vpack.c.b16 %v2545, %v2541
    %v3774 = vpack.c.b16 %v2546, %v2542
    %v3775 = vpack.c.b16 %v2551, %v2547
    %v3776 = vpack.c.b16 %v2552, %v2548
    %v3777 = vpack.c.b16 %v2553, %v2549
    %v3778 = vpack.c.b16 %v2554, %v2550
    %v3779 = vpack.c.b16 %v2559, %v2555
    %v3780 = vpack.c.b16 %v2560, %v2556
    %v3781 = vpack.c.b16 %v2561, %v2557
    %v3782 = vpack.c.b16 %v2562, %v2558
    %v3783 = vpack.c.b16 %v2567, %v2563
    %v3784 = vpack.c.b16 %v2568, %v2564
    %v3785 = vpack.c.b16 %v2569, %v2565
    %v3786 = vpack.c.b16 %v2570, %v2566
    %v3787 = vpack.c.b16 %v2575, %v2571
    %v3788 = vpack.c.b16 %v2576, %v2572
    %v3789 = vpack.c.b16 %v2577, %v2573
    %v3790 = vpack.c.b16 %v2578, %v2574
    %v3791 = vpack.c.b16 %v2583, %v2579
    %v3792 = vpack.c.b16 %v2584, %v2580
    %v3793 = vpack.c.b16 %v2585, %v2581
    %v3794 = vpack.c.b16 %v2586, %v2582
    %v3795 = vpack.c.b16 %v2591, %v2587
    %v3796 = vpack.c.b16 %v2592, %v2588
    %v3797 = vpack.c.b16 %v2593, %v2589
    %v3798 = vpack.c.b16 %v2594, %v2590
    %v3799 = vpack.c.b16 %v2599, %v2595
    %v3800 = vpack.c.b16 %v2600, %v2596
    %v3801 = vpack.c.b16 %v2601, %v2597
    %v3802 = vpack.c.b16 %v2602, %v2598
    %v3803 = vpack.c.b16 %v2607, %v2603
    %v3804 = vpack.c.b16 %v2608, %v2604
    %v3805 = vpack.c.b16 %v2609, %v2605
    %v3806 = vpack.c.b16 %v2610, %v2606
    %v3807 = vpack.c.b16 %v2615, %v2611
    %v3808 = vpack.c.b16 %v2616, %v2612
    %v3809 = vpack.c.b16 %v2617, %v2613
    %v3810 = vpack.c.b16 %v2618, %v2614
    %v3811 = vpack.c.b16 %v2623, %v2619
    %v3812 = vpack.c.b16 %v2624, %v2620
    %v3813 = vpack.c.b16 %v2625, %v2621
    %v3814 = vpack.c.b16 %v2626, %v2622
    %v3815 = vpack.c.b16 %v2631, %v2627
    %v3816 = vpack.c.b16 %v2632, %v2628
    %v3817 = vpack.c.b16 %v2633, %v2629
    %v3818 = vpack.c.b16 %v2634, %v2630
    %v3819 = vpack.c.b16 %v2639, %v2635
    %v3820 = vpack.c.b16 %v2640, %v2636
    %v3821 = vpack.c.b16 %v2641, %v2637
    %v3822 = vpack.c.b16 %v2642, %v2638
    %v3823 = vpack.c.b16 %v2647, %v2643
    %v3824 = vpack.c.b16 %v2648, %v2644
    %v3825 = vpack.c.b16 %v2649, %v2645
    %v3826 = vpack.c.b16 %v2650, %v2646
    %v3827 = vpack.c.b16 %v2655, %v2651
    %v3828 = vpack.c.b16 %v2656, %v2652
    %v3829 = vpack.c.b16 %v2657, %v2653
    %v3830 = vpack.c.b16 %v2658, %v2654
    %v3831 = vpack.c.b16 %v2663, %v2659
    %v3832 = vpack.c.b16 %v2664, %v2660
    %v3833 = vpack.c.b16 %v2665, %v2661
    %v3834 = vpack.c.b16 %v2666, %v2662
    %v3835 = vpack.c.b16 %v2671, %v2667
    %v3836 = vpack.c.b16 %v2672, %v2668
    %v3837 = vpack.c.b16 %v2673, %v2669
    %v3838 = vpack.c.b16 %v2674, %v2670
    %v3839 = vpack.c.b16 %v2679, %v2675
    %v3840 = vpack.c.b16 %v2680, %v2676
    %v3841 = vpack.c.b16 %v2681, %v2677
    %v3842 = vpack.c.b16 %v2682, %v2678
    %v3843 = vpack.c.b16 %v2687, %v2683
    %v3844 = vpack.c.b16 %v2688, %v2684
    %v3845 = vpack.c.b16 %v2689, %v2685
    %v3846 = vpack.c.b16 %v2690, %v2686
    %v3847 = vpack.c.b16 %v2695, %v2691
    %v3848 = vpack.c.b16 %v2696, %v2692
    %v3849 = vpack.c.b16 %v2697, %v2693
    %v3850 = vpack.c.b16 %v2698, %v2694
    %v3851 = vpack.c.b16 %v2703, %v2699
    %v3852 = vpack.c.b16 %v2704, %v2700
    %v3853 = vpack.c.b16 %v2705, %v2701
    %v3854 = vpack.c.b16 %v2706, %v2702
    %v3855 = vpack.c.b16 %v2711, %v2707
    %v3856 = vpack.c.b16 %v2712, %v2708
    %v3857 = vpack.c.b16 %v2713, %v2709
    %v3858 = vpack.c.b16 %v2714, %v2710
    %v3859 = vpack.c.b16 %v2719, %v2715
    %v3860 = vpack.c.b16 %v2720, %v2716
    %v3861 = vpack.c.b16 %v2721, %v2717
    %v3862 = vpack.c.b16 %v2722, %v2718
    %v3863 = vpack.c.b16 %v2727, %v2723
    %v3864 = vpack.c.b16 %v2728, %v2724
    %v3865 = vpack.c.b16 %v2729, %v2725
    %v3866 = vpack.c.b16 %v2730, %v2726
    %v3867 = vpack.c.b16 %v2735, %v2731
    %v3868 = vpack.c.b16 %v2736, %v2732
    %v3869 = vpack.c.b16 %v2737, %v2733
    %v3870 = vpack.c.b16 %v2738, %v2734
    %v3871 = vpack.c.b16 %v2743, %v2739
    %v3872 = vpack.c.b16 %v2744, %v2740
    %v3873 = vpack.c.b16 %v2745, %v2741
    %v3874 = vpack.c.b16 %v2746, %v2742
    %v3875 = vpack.c.b16 %v2751, %v2747
    %v3876 = vpack.c.b16 %v2752, %v2748
    %v3877 = vpack.c.b16 %v2753, %v2749
    %v3878 = vpack.c.b16 %v2754, %v2750
    %v3879 = vpack.c.b16 %v2759, %v2755
    %v3880 = vpack.c.b16 %v2760, %v2756
    %v3881 = vpack.c.b16 %v2761, %v2757
    %v3882 = vpack.c.b16 %v2762, %v2758
    %v3883 = vpack.c.b16 %v2767, %v2763
    %v3884 = vpack.c.b16 %v2768, %v2764
    %v3885 = vpack.c.b16 %v2769, %v2765
    %v3886 = vpack.c.b16 %v2770, %v2766
    %v3887 = vpack.c.b16 %v2775, %v2771
    %v3888 = vpack.c.b16 %v2776, %v2772
    %v3889 = vpack.c.b16 %v2777, %v2773
    %v3890 = vpack.c.b16 %v2778, %v2774
    %v3891 = vpack.c.b16 %v2783, %v2779
    %v3892 = vpack.c.b16 %v2784, %v2780
    %v3893 = vpack.c.b16 %v2785, %v2781
    %v3894 = vpack.c.b16 %v2786, %v2782
    %v3895 = vpack.c.b16 %v2791, %v2787
    %v3896 = vpack.c.b16 %v2792, %v2788
    %v3897 = vpack.c.b16 %v2793, %v2789
    %v3898 = vpack.c.b16 %v2794, %v2790
    %v3899 = vpack.c.b16 %v2799, %v2795
    %v3900 = vpack.c.b16 %v2800, %v2796
    %v3901 = vpack.c.b16 %v2801, %v2797
    %v3902 = vpack.c.b16 %v2802, %v2798
    %v3903 = vpack.c.b16 %v2807, %v2803
    %v3904 = vpack.c.b16 %v2808, %v2804
    %v3905 = vpack.c.b16 %v2809, %v2805
    %v3906 = vpack.c.b16 %v2810, %v2806
    %v3907 = vpack.c.b16 %v2815, %v2811
    %v3908 = vpack.c.b16 %v2816, %v2812
    %v3909 = vpack.c.b16 %v2817, %v2813
    %v3910 = vpack.c.b16 %v2818, %v2814
    %v3911 = vpack.c.b16 %v2823, %v2819
    %v3912 = vpack.c.b16 %v2824, %v2820
    %v3913 = vpack.c.b16 %v2825, %v2821
    %v3914 = vpack.c.b16 %v2826, %v2822
    %v3915 = vpack.c.b16 %v2831, %v2827
    %v3916 = vpack.c.b16 %v2832, %v2828
    %v3917 = vpack.c.b16 %v2833, %v2829
    %v3918 = vpack.c.b16 %v2834, %v2830
    %v3919 = vpack.c.b16 %v2839, %v2835
    %v3920 = vpack.c.b16 %v2840, %v2836
    %v3921 = vpack.c.b16 %v2841, %v2837
    %v3922 = vpack.c.b16 %v2842, %v2838
    %v3923 = vpack.c.b16 %v2847, %v2843
    %v3924 = vpack.c.b16 %v2848, %v2844
    %v3925 = vpack.c.b16 %v2849, %v2845
    %v3926 = vpack.c.b16 %v2850, %v2846
    %v3927 = vpack.c.b16 %v2855, %v2851
    %v3928 = vpack.c.b16 %v2856, %v2852
    %v3929 = vpack.c.b16 %v2857, %v2853
    %v3930 = vpack.c.b16 %v2858, %v2854
    %v3931 = vpack.c.b16 %v2863, %v2859
    %v3932 = vpack.c.b16 %v2864, %v2860
    %v3933 = vpack.c.b16 %v2865, %v2861
    %v3934 = vpack.c.b16 %v2866, %v2862
    %v3935 = vpack.c.b16 %v2871, %v2867
    %v3936 = vpack.c.b16 %v2872, %v2868
    %v3937 = vpack.c.b16 %v2873, %v2869
    %v3938 = vpack.c.b16 %v2874, %v2870
    %v3939 = vpack.c.b16 %v2879, %v2875
    %v3940 = vpack.c.b16 %v2880, %v2876
    %v3941 = vpack.c.b16 %v2881, %v2877
    %v3942 = vpack.c.b16 %v2882, %v2878
    %v3943 = vpack.c.b16 %v2887, %v2883
    %v3944 = vpack.c.b16 %v2888, %v2884
    %v3945 = vpack.c.b16 %v2889, %v2885
    %v3946 = vpack.c.b16 %v2890, %v2886
    %v3947 = vpack.c.b16 %v2895, %v2891
    %v3948 = vpack.c.b16 %v2896, %v2892
    %v3949 = vpack.c.b16 %v2897, %v2893
    %v3950 = vpack.c.b16 %v2898, %v2894
    %v3951 = vpack.c.b16 %v2903, %v2899
    %v3952 = vpack.c.b16 %v2904, %v2900
    %v3953 = vpack.c.b16 %v2905, %v2901
    %v3954 = vpack.c.b16 %v2906, %v2902
    %v3955 = vpack.c.b16 %v2911, %v2907
    %v3956 = vpack.c.b16 %v2912, %v2908
    %v3957 = vpack.c.b16 %v2913, %v2909
    %v3958 = vpack.c.b16 %v2914, %v2910
    %v3959 = vpack.c.b16 %v2919, %v2915
    %v3960 = vpack.c.b16 %v2920, %v2916
    %v3961 = vpack.c.b16 %v2921, %v2917
    %v3962 = vpack.c.b16 %v2922, %v2918
    %v3963 = vpack.c.b16 %v2927, %v2923
    %v3964 = vpack.c.b16 %v2928, %v2924
    %v3965 = vpack.c.b16 %v2929, %v2925
    %v3966 = vpack.c.b16 %v2930, %v2926
    %v3967 = vpack.c.b16 %v2935, %v2931
    %v3968 = vpack.c.b16 %v2936, %v2932
    %v3969 = vpack.c.b16 %v2937, %v2933
    %v3970 = vpack.c.b16 %v2938, %v2934
    %v3971 = vpack.c.b16 %v2943, %v2939
    %v3972 = vpack.c.b16 %v2944, %v2940
    %v3973 = vpack.c.b16 %v2945, %v2941
    %v3974 = vpack.c.b16 %v2946, %v2942
    %v3975 = vpack.c.b16 %v2951, %v2947
    %v3976 = vpack.c.b16 %v2952, %v2948
    %v3977 = vpack.c.b16 %v2953, %v2949
    %v3978 = vpack.c.b16 %v2954, %v2950
    %v3979 = vpack.c.b16 %v2959, %v2955
    %v3980 = vpack.c.b16 %v2960, %v2956
    %v3981 = vpack.c.b16 %v2961, %v2957
    %v3982 = vpack.c.b16 %v2962, %v2958
    %v3983 = vpack.c.b16 %v2967, %v2963
    %v3984 = vpack.c.b16 %v2968, %v2964
    %v3985 = vpack.c.b16 %v2969, %v2965
    %v3986 = vpack.c.b16 %v2970, %v2966
    %v3987 = vpack.c.b16 %v2975, %v2971
    %v3988 = vpack.c.b16 %v2976, %v2972
    %v3989 = vpack.c.b16 %v2977, %v2973
    %v3990 = vpack.c.b16 %v2978, %v2974
    %v3991 = vpack.c.b16 %v2983, %v2979
    %v3992 = vpack.c.b16 %v2984, %v2980
    %v3993 = vpack.c.b16 %v2985, %v2981
    %v3994 = vpack.c.b16 %v2986, %v2982
    %v3995 = vpack.c.b16 %v2991, %v2987
    %v3996 = vpack.c.b16 %v2992, %v2988
    %v3997 = vpack.c.b16 %v2993, %v2989
    %v3998 = vpack.c.b16 %v2994, %v2990
    %v3999 = vpack.c.b16 %v2999, %v2995
    %v4000 = vpack.c.b16 %v3000, %v2996
    %v4001 = vpack.c.b16 %v3001, %v2997
    %v4002 = vpack.c.b16 %v3002, %v2998
    %v4003 = vpack.c.b16 %v3007, %v3003
    %v4004 = vpack.c.b16 %v3008, %v3004
    %v4005 = vpack.c.b16 %v3009, %v3005
    %v4006 = vpack.c.b16 %v3010, %v3006
    %v4007 = vpack.c.b16 %v3015, %v3011
    %v4008 = vpack.c.b16 %v3016, %v3012
    %v4009 = vpack.c.b16 %v3017, %v3013
    %v4010 = vpack.c.b16 %v3018, %v3014
    %v4011 = vpack.c.b16 %v3023, %v3019
    %v4012 = vpack.c.b16 %v3024, %v3020
    %v4013 = vpack.c.b16 %v3025, %v3021
    %v4014 = vpack.c.b16 %v3026, %v3022
    %v4015 = vpack.c.b16 %v3031, %v3027
    %v4016 = vpack.c.b16 %v3032, %v3028
    %v4017 = vpack.c.b16 %v3033, %v3029
    %v4018 = vpack.c.b16 %v3034, %v3030
    %v4019 = vpack.c.b16 %v3039, %v3035
    %v4020 = vpack.c.b16 %v3040, %v3036
    %v4021 = vpack.c.b16 %v3041, %v3037
    %v4022 = vpack.c.b16 %v3042, %v3038
    %v4023 = vpack.c.b16 %v3047, %v3043
    %v4024 = vpack.c.b16 %v3048, %v3044
    %v4025 = vpack.c.b16 %v3049, %v3045
    %v4026 = vpack.c.b16 %v3050, %v3046
    %v4027 = vpack.c.b16 %v3055, %v3051
    %v4028 = vpack.c.b16 %v3056, %v3052
    %v4029 = vpack.c.b16 %v3057, %v3053
    %v4030 = vpack.c.b16 %v3058, %v3054
    %v4031 = vpack.c.b16 %v3063, %v3059
    %v4032 = vpack.c.b16 %v3064, %v3060
    %v4033 = vpack.c.b16 %v3065, %v3061
    %v4034 = vpack.c.b16 %v3066, %v3062
    %v4035 = vpack.c.b16 %v3071, %v3067
    %v4036 = vpack.c.b16 %v3072, %v3068
    %v4037 = vpack.c.b16 %v3073, %v3069
    %v4038 = vpack.c.b16 %v3074, %v3070
    %v4039 = vpack.c.b16 %v3079, %v3075
    %v4040 = vpack.c.b16 %v3080, %v3076
    %v4041 = vpack.c.b16 %v3081, %v3077
    %v4042 = vpack.c.b16 %v3082, %v3078
    %v4043 = vpack.c.b16 %v3087, %v3083
    %v4044 = vpack.c.b16 %v3088, %v3084
    %v4045 = vpack.c.b16 %v3089, %v3085
    %v4046 = vpack.c.b16 %v3090, %v3086
    %v4047 = vpack.c.b16 %v3095, %v3091
    %v4048 = vpack.c.b16 %v3096, %v3092
    %v4049 = vpack.c.b16 %v3097, %v3093
    %v4050 = vpack.c.b16 %v3098, %v3094
    %v4051 = vpack.c.b16 %v3103, %v3099
    %v4052 = vpack.c.b16 %v3104, %v3100
    %v4053 = vpack.c.b16 %v3105, %v3101
    %v4054 = vpack.c.b16 %v3106, %v3102
    %v4055 = vpack.c.b16 %v3111, %v3107
    %v4056 = vpack.c.b16 %v3112, %v3108
    %v4057 = vpack.c.b16 %v3113, %v3109
    %v4058 = vpack.c.b16 %v3114, %v3110
    %v4059 = vpack.c.b16 %v3119, %v3115
    %v4060 = vpack.c.b16 %v3120, %v3116
    %v4061 = vpack.c.b16 %v3121, %v3117
    %v4062 = vpack.c.b16 %v3122, %v3118
    %v4063 = vpack.c.b16 %v3127, %v3123
    %v4064 = vpack.c.b16 %v3128, %v3124
    %v4065 = vpack.c.b16 %v3129, %v3125
    %v4066 = vpack.c.b16 %v3130, %v3126
    %v4067 = vpack.c.b16 %v3135, %v3131
    %v4068 = vpack.c.b16 %v3136, %v3132
    %v4069 = vpack.c.b16 %v3137, %v3133
    %v4070 = vpack.c.b16 %v3138, %v3134
    %v4071 = vpack.c.b16 %v3143, %v3139
    %v4072 = vpack.c.b16 %v3144, %v3140
    %v4073 = vpack.c.b16 %v3145, %v3141
    %v4074 = vpack.c.b16 %v3146, %v3142
    %v4075 = vpack.c.b16 %v3151, %v3147
    %v4076 = vpack.c.b16 %v3152, %v3148
    %v4077 = vpack.c.b16 %v3153, %v3149
    %v4078 = vpack.c.b16 %v3154, %v3150
    %v4079 = vpack.c.b16 %v3159, %v3155
    %v4080 = vpack.c.b16 %v3160, %v3156
    %v4081 = vpack.c.b16 %v3161, %v3157
    %v4082 = vpack.c.b16 %v3162, %v3158
    %v4083 = vpack.c.b16 %v3167, %v3163
    %v4084 = vpack.c.b16 %v3168, %v3164
    %v4085 = vpack.c.b16 %v3169, %v3165
    %v4086 = vpack.c.b16 %v3170, %v3166
    %v4087 = vpack.c.b16 %v3175, %v3171
    %v4088 = vpack.c.b16 %v3176, %v3172
    %v4089 = vpack.c.b16 %v3177, %v3173
    %v4090 = vpack.c.b16 %v3178, %v3174
    %v4091 = vpack.c.b16 %v3183, %v3179
    %v4092 = vpack.c.b16 %v3184, %v3180
    %v4093 = vpack.c.b16 %v3185, %v3181
    %v4094 = vpack.c.b16 %v3186, %v3182
    %v4095 = vpack.c.b16 %v3191, %v3187
    %v4096 = vpack.c.b16 %v3192, %v3188
    %v4097 = vpack.c.b16 %v3193, %v3189
    %v4098 = vpack.c.b16 %v3194, %v3190
    %v4099 = vpack.c.b16 %v3199, %v3195
    %v4100 = vpack.c.b16 %v3200, %v3196
    %v4101 = vpack.c.b16 %v3201, %v3197
    %v4102 = vpack.c.b16 %v3202, %v3198
    %v4103 = vpack.c.b16 %v3207, %v3203
    %v4104 = vpack.c.b16 %v3208, %v3204
    %v4105 = vpack.c.b16 %v3209, %v3205
    %v4106 = vpack.c.b16 %v3210, %v3206
    %v4107 = vpack.c.b16 %v3215, %v3211
    %v4108 = vpack.c.b16 %v3216, %v3212
    %v4109 = vpack.c.b16 %v3217, %v3213
    %v4110 = vpack.c.b16 %v3218, %v3214
    %v4111 = vpack.c.b16 %v3223, %v3219
    %v4112 = vpack.c.b16 %v3224, %v3220
    %v4113 = vpack.c.b16 %v3225, %v3221
    %v4114 = vpack.c.b16 %v3226, %v3222
    %v4115 = vpack.c.b16 %v3231, %v3227
    %v4116 = vpack.c.b16 %v3232, %v3228
    %v4117 = vpack.c.b16 %v3233, %v3229
    %v4118 = vpack.c.b16 %v3234, %v3230
    %v4119 = vpack.c.b16 %v3239, %v3235
    %v4120 = vpack.c.b16 %v3240, %v3236
    %v4121 = vpack.c.b16 %v3241, %v3237
    %v4122 = vpack.c.b16 %v3242, %v3238
    %v4123 = vpack.c.b16 %v3247, %v3243
    %v4124 = vpack.c.b16 %v3248, %v3244
    %v4125 = vpack.c.b16 %v3249, %v3245
    %v4126 = vpack.c.b16 %v3250, %v3246
    %v4127 = vpack.c.b16 %v3255, %v3251
    %v4128 = vpack.c.b16 %v3256, %v3252
    %v4129 = vpack.c.b16 %v3257, %v3253
    %v4130 = vpack.c.b16 %v3258, %v3254
    %v4131 = vpack.c.b16 %v3263, %v3259
    %v4132 = vpack.c.b16 %v3264, %v3260
    %v4133 = vpack.c.b16 %v3265, %v3261
    %v4134 = vpack.c.b16 %v3266, %v3262
    %v4135 = vpack.c.b16 %v3271, %v3267
    %v4136 = vpack.c.b16 %v3272, %v3268
    %v4137 = vpack.c.b16 %v3273, %v3269
    %v4138 = vpack.c.b16 %v3274, %v3270
    %v4139 = vpack.c.b16 %v3279, %v3275
    %v4140 = vpack.c.b16 %v3280, %v3276
    %v4141 = vpack.c.b16 %v3281, %v3277
    %v4142 = vpack.c.b16 %v3282, %v3278
    %v4143 = vpack.c.b16 %v3287, %v3283
    %v4144 = vpack.c.b16 %v3288, %v3284
    %v4145 = vpack.c.b16 %v3289, %v3285
    %v4146 = vpack.c.b16 %v3290, %v3286
    %v4147 = vpack.c.b16 %v3295, %v3291
    %v4148 = vpack.c.b16 %v3296, %v3292
    %v4149 = vpack.c.b16 %v3297, %v3293
    %v4150 = vpack.c.b16 %v3298, %v3294
    %v4151 = vpack.c.b16 %v3303, %v3299
    %v4152 = vpack.c.b16 %v3304, %v3300
    %v4153 = vpack.c.b16 %v3305, %v3301
    %v4154 = vpack.c.b16 %v3306, %v3302
    %v4155 = vpack.c.b16 %v3311, %v3307
    %v4156 = vpack.c.b16 %v3312, %v3308
    %v4157 = vpack.c.b16 %v3313, %v3309
    %v4158 = vpack.c.b16 %v3314, %v3310
    %v4159 = vpack.c.b16 %v3319, %v3315
    %v4160 = vpack.c.b16 %v3320, %v3316
    %v4161 = vpack.c.b16 %v3321, %v3317
    %v4162 = vpack.c.b16 %v3322, %v3318
    %v4163 = vpack.c.b16 %v3327, %v3323
    %v4164 = vpack.c.b16 %v3328, %v3324
    %v4165 = vpack.c.b16 %v3329, %v3325
    %v4166 = vpack.c.b16 %v3330, %v3326
    %v4167 = vpack.c.b16 %v3335, %v3331
    %v4168 = vpack.c.b16 %v3336, %v3332
    %v4169 = vpack.c.b16 %v3337, %v3333
    %v4170 = vpack.c.b16 %v3338, %v3334
    %v4171 = vpack.c.b16 %v3343, %v3339
    %v4172 = vpack.c.b16 %v3344, %v3340
    %v4173 = vpack.c.b16 %v3345, %v3341
    %v4174 = vpack.c.b16 %v3346, %v3342
    %v4175 = vpack.c.b16 %v3351, %v3347
    %v4176 = vpack.c.b16 %v3352, %v3348
    %v4177 = vpack.c.b16 %v3353, %v3349
    %v4178 = vpack.c.b16 %v3354, %v3350
    %v4179 = vpack.c.b16 %v3359, %v3355
    %v4180 = vpack.c.b16 %v3360, %v3356
    %v4181 = vpack.c.b16 %v3361, %v3357
    %v4182 = vpack.c.b16 %v3362, %v3358
    %v4183 = vpack.c.b16 %v3367, %v3363
    %v4184 = vpack.c.b16 %v3368, %v3364
    %v4185 = vpack.c.b16 %v3369, %v3365
    %v4186 = vpack.c.b16 %v3370, %v3366
    %v4187 = vpack.c.b16 %v3375, %v3371
    %v4188 = vpack.c.b16 %v3376, %v3372
    %v4189 = vpack.c.b16 %v3377, %v3373
    %v4190 = vpack.c.b16 %v3378, %v3374
    %v4191 = vpack.c.b16 %v3383, %v3379
    %v4192 = vpack.c.b16 %v3384, %v3380
    %v4193 = vpack.c.b16 %v3385, %v3381
    %v4194 = vpack.c.b16 %v3386, %v3382
    %v4195 = vpack.c.b16 %v3391, %v3387
    %v4196 = vpack.c.b16 %v3392, %v3388
    %v4197 = vpack.c.b16 %v3393, %v3389
    %v4198 = vpack.c.b16 %v3394, %v3390
    %v4199 = vpack.c.b16 %v3399, %v3395
    %v4200 = vpack.c.b16 %v3400, %v3396
    %v4201 = vpack.c.b16 %v3401, %v3397
    %v4202 = vpack.c.b16 %v3402, %v3398
    %v4203 = vpack.c.b16 %v3407, %v3403
    %v4204 = vpack.c.b16 %v3408, %v3404
    %v4205 = vpack.c.b16 %v3409, %v3405
    %v4206 = vpack.c.b16 %v3410, %v3406
    %v4207 = vpack.c.b16 %v3415, %v3411
    %v4208 = vpack.c.b16 %v3416, %v3412
    %v4209 = vpack.c.b16 %v3417, %v3413
    %v4210 = vpack.c.b16 %v3418, %v3414
    %v4211 = vpack.c.b16 %v3423, %v3419
    %v4212 = vpack.c.b16 %v3424, %v3420
    %v4213 = vpack.c.b16 %v3425, %v3421
    %v4214 = vpack.c.b16 %v3426, %v3422
    %v4215 = vpack.c.b16 %v3431, %v3427
    %v4216 = vpack.c.b16 %v3432, %v3428
    %v4217 = vpack.c.b16 %v3433, %v3429
    %v4218 = vpack.c.b16 %v3434, %v3430
    %vm5003 = vcmask 523264
    %v5005 = vsel %vm5003, %v1058, 0
    %5007 = vmatprep.subr.bf16.mxu0 %v3436
    %5008 = vmatpush1.bf16.msra.mxu0 %v3435
    %5009 = vmatprep.subr.bf16.mxu0 %v3440
    %5010 = vmatpush1.bf16.msra.mxu0 %v3439
    %5011 = vmatprep.subr.bf16.mxu0 %v3444
    %5012 = vmatpush1.bf16.msra.mxu0 %v3443
    %5013 = vmatprep.subr.bf16.mxu0 %v3448
    %5014 = vmatpush1.bf16.msra.mxu0 %v3447
    %5015 = vmatprep.subr.bf16.mxu0 %v3452
    %5016 = vmatpush1.bf16.msra.mxu0 %v3451
    %5017 = vmatprep.subr.bf16.mxu0 %v3456
    %5018 = vmatpush1.bf16.msra.mxu0 %v3455
    %5019 = vmatprep.subr.bf16.mxu0 %v3460
    %5020 = vmatpush1.bf16.msra.mxu0 %v3459
    %5021 = vmatprep.subr.bf16.mxu0 %v3464
    %5022 = vmatpush1.bf16.msra.mxu0 %v3463
    %5023 = vmatprep.subr.bf16.mxu0 %v3468
    %5024 = vmatpush1.bf16.msra.mxu0 %v3467
    %5025 = vmatprep.subr.bf16.mxu0 %v3472
    %5026 = vmatpush1.bf16.msra.mxu0 %v3471
    %5027 = vmatprep.subr.bf16.mxu0 %v3476
    %5028 = vmatpush1.bf16.msra.mxu0 %v3475
    %5029 = vmatprep.subr.bf16.mxu0 %v3480
    %5030 = vmatpush1.bf16.msra.mxu0 %v3479
    %5031 = vmatprep.subr.bf16.mxu0 %v3484
    %5032 = vmatpush1.bf16.msra.mxu0 %v3483
    %5033 = vmatprep.subr.bf16.mxu0 %v3488
    %5034 = vmatpush1.bf16.msra.mxu0 %v3487
    %5035 = vmatprep.subr.bf16.mxu0 %v3492
    %5036 = vmatpush1.bf16.msra.mxu0 %v3491
    %5037 = vmatprep.subr.bf16.mxu0 %v3496
    %5038 = vmatpush1.bf16.msra.mxu0 %v3495
    %5039 = vmatprep.mubr.bf16.mxu0 %v935
    %5040 = vmatmul.mubr.bf16.gmra.mrb[0].mxu0 %v921
    %v5041 = vpop.f32.mrb[0].mxu0
    %v5042 = vadd.f32 %v877, %v5041
    %v5043 = vpop.f32.mrb[0].mxu0
    %v5044 = vadd.f32 %v881, %v5043
    %v5045 = vpop.f32.mrb[0].mxu0
    %v5046 = vpop.f32.mrb[0].mxu0
    %5047 = vdwg.mxu0
    %5048 = vmatprep.subr.bf16.mxu0 %v3500
    %5049 = vmatpush1.bf16.msra.mxu0 %v3499
    %5050 = vmatprep.subr.bf16.mxu0 %v3504
    %5051 = vmatpush1.bf16.msra.mxu0 %v3503
    %5052 = vmatprep.subr.bf16.mxu0 %v3508
    %5053 = vmatpush1.bf16.msra.mxu0 %v3507
    %5054 = vmatprep.subr.bf16.mxu0 %v3512
    %5055 = vmatpush1.bf16.msra.mxu0 %v3511
    %5056 = vmatprep.subr.bf16.mxu0 %v3516
    %5057 = vmatpush1.bf16.msra.mxu0 %v3515
    %5058 = vmatprep.subr.bf16.mxu0 %v3520
    %5059 = vmatpush1.bf16.msra.mxu0 %v3519
    %5060 = vmatprep.subr.bf16.mxu0 %v3524
    %5061 = vmatpush1.bf16.msra.mxu0 %v3523
    %5062 = vmatprep.subr.bf16.mxu0 %v3528
    %5063 = vmatpush1.bf16.msra.mxu0 %v3527
    %5064 = vmatprep.subr.bf16.mxu0 %v3532
    %5065 = vmatpush1.bf16.msra.mxu0 %v3531
    %5066 = vmatprep.subr.bf16.mxu0 %v3536
    %5067 = vmatpush1.bf16.msra.mxu0 %v3535
    %5068 = vmatprep.subr.bf16.mxu0 %v3540
    %5069 = vmatpush1.bf16.msra.mxu0 %v3539
    %5070 = vmatprep.subr.bf16.mxu0 %v3544
    %5071 = vmatpush1.bf16.msra.mxu0 %v3543
    %5072 = vmatprep.subr.bf16.mxu0 %v3548
    %5073 = vmatpush1.bf16.msra.mxu0 %v3547
    %5074 = vmatprep.subr.bf16.mxu0 %v3552
    %5075 = vmatpush1.bf16.msra.mxu0 %v3551
    %5076 = vmatprep.subr.bf16.mxu0 %v3556
    %5077 = vmatpush1.bf16.msra.mxu0 %v3555
    %5078 = vmatprep.subr.bf16.mxu0 %v3560
    %5079 = vmatpush1.bf16.msra.mxu0 %v3559
    %5080 = vmatprep.mubr.bf16.mxu0 %v945
    %5081 = vmatmul.mubr.bf16.gmra.mrb[0].mxu0 %v943
    %v5082 = vpop.f32.mrb[0].mxu0
    %v5083 = vadd.f32 %v5042, %v5082
    %v5084 = vpop.f32.mrb[0].mxu0
    %v5085 = vadd.f32 %v5044, %v5084
    %v5086 = vpop.f32.mrb[0].mxu0
    %v5087 = vpop.f32.mrb[0].mxu0
    %5088 = vdwg.mxu0
    %5089 = vmatprep.subr.bf16.mxu0 %v3564
    %5090 = vmatpush1.bf16.msra.mxu0 %v3563
    %5091 = vmatprep.subr.bf16.mxu0 %v3568
    %5092 = vmatpush1.bf16.msra.mxu0 %v3567
    %5093 = vmatprep.subr.bf16.mxu0 %v3572
    %5094 = vmatpush1.bf16.msra.mxu0 %v3571
    %5095 = vmatprep.subr.bf16.mxu0 %v3576
    %5096 = vmatpush1.bf16.msra.mxu0 %v3575
    %5097 = vmatprep.subr.bf16.mxu0 %v3580
    %5098 = vmatpush1.bf16.msra.mxu0 %v3579
    %5099 = vmatprep.subr.bf16.mxu0 %v3584
    %5100 = vmatpush1.bf16.msra.mxu0 %v3583
    %5101 = vmatprep.subr.bf16.mxu0 %v3588
    %5102 = vmatpush1.bf16.msra.mxu0 %v3587
    %5103 = vmatprep.subr.bf16.mxu0 %v3592
    %5104 = vmatpush1.bf16.msra.mxu0 %v3591
    %5105 = vmatprep.subr.bf16.mxu0 %v3596
    %5106 = vmatpush1.bf16.msra.mxu0 %v3595
    %5107 = vmatprep.subr.bf16.mxu0 %v3600
    %5108 = vmatpush1.bf16.msra.mxu0 %v3599
    %5109 = vmatprep.subr.bf16.mxu0 %v3604
    %5110 = vmatpush1.bf16.msra.mxu0 %v3603
    %5111 = vmatprep.subr.bf16.mxu0 %v3608
    %5112 = vmatpush1.bf16.msra.mxu0 %v3607
    %5113 = vmatprep.subr.bf16.mxu0 %v3612
    %5114 = vmatpush1.bf16.msra.mxu0 %v3611
    %5115 = vmatprep.subr.bf16.mxu0 %v3616
    %5116 = vmatpush1.bf16.msra.mxu0 %v3615
    %5117 = vmatprep.subr.bf16.mxu0 %v3620
    %5118 = vmatpush1.bf16.msra.mxu0 %v3619
    %5119 = vmatprep.subr.bf16.mxu0 %v3624
    %5120 = vmatpush1.bf16.msra.mxu0 %v3623
    %5121 = vmatprep.mubr.bf16.mxu0 %v942
    %5122 = vmatmul.mubr.bf16.gmra.mrb[0].mxu0 %v928
    %v5123 = vpop.f32.mrb[0].mxu0
    %v5124 = vadd.f32 %v5083, %v5123
    %v5125 = vpop.f32.mrb[0].mxu0
    %v5126 = vadd.f32 %v5085, %v5125
    %v5127 = vpop.f32.mrb[0].mxu0
    %v5128 = vpop.f32.mrb[0].mxu0
    %5129 = vdwg.mxu0
    %5130 = vmatprep.subr.bf16.mxu0 %v3628
    %5131 = vmatpush1.bf16.msra.mxu0 %v3627
    %5132 = vmatprep.subr.bf16.mxu0 %v3632
    %5133 = vmatpush1.bf16.msra.mxu0 %v3631
    %5134 = vmatprep.subr.bf16.mxu0 %v3636
    %5135 = vmatpush1.bf16.msra.mxu0 %v3635
    %5136 = vmatprep.subr.bf16.mxu0 %v3640
    %5137 = vmatpush1.bf16.msra.mxu0 %v3639
    %5138 = vmatprep.subr.bf16.mxu0 %v3644
    %5139 = vmatpush1.bf16.msra.mxu0 %v3643
    %5140 = vmatprep.subr.bf16.mxu0 %v3648
    %5141 = vmatpush1.bf16.msra.mxu0 %v3647
    %5142 = vmatprep.subr.bf16.mxu0 %v3652
    %5143 = vmatpush1.bf16.msra.mxu0 %v3651
    %5144 = vmatprep.subr.bf16.mxu0 %v3656
    %5145 = vmatpush1.bf16.msra.mxu0 %v3655
    %5146 = vmatprep.subr.bf16.mxu0 %v3660
    %5147 = vmatpush1.bf16.msra.mxu0 %v3659
    %5148 = vmatprep.subr.bf16.mxu0 %v3664
    %5149 = vmatpush1.bf16.msra.mxu0 %v3663
    %5150 = vmatprep.subr.bf16.mxu0 %v3668
    %5151 = vmatpush1.bf16.msra.mxu0 %v3667
    %5152 = vmatprep.subr.bf16.mxu0 %v3672
    %5153 = vmatpush1.bf16.msra.mxu0 %v3671
    %5154 = vmatprep.subr.bf16.mxu0 %v3676
    %5155 = vmatpush1.bf16.msra.mxu0 %v3675
    %5156 = vmatprep.subr.bf16.mxu0 %v3680
    %5157 = vmatpush1.bf16.msra.mxu0 %v3679
    %5158 = vmatprep.subr.bf16.mxu0 %v3684
    %5159 = vmatpush1.bf16.msra.mxu0 %v3683
    %5160 = vmatprep.subr.bf16.mxu0 %v3688
    %5161 = vmatpush1.bf16.msra.mxu0 %v3687
    %5162 = vmatprep.mubr.bf16.mxu0 %v946
    %5163 = vmatmul.mubr.bf16.gmra.mrb[0].mxu0 %v944
    %v5164 = vpop.f32.mrb[0].mxu0
    %v5165 = vadd.f32 %v5124, %v5164
    %v5166 = vpop.f32.mrb[0].mxu0
    %v5167 = vadd.f32 %v5126, %v5166
    %v5168 = vpop.f32.mrb[0].mxu0
    %v5169 = vpop.f32.mrb[0].mxu0
    %5170 = vdwg.mxu0
    %5171 = vmatprep.subr.bf16.mxu0 %v3692
    %5172 = vmatpush1.bf16.msra.mxu0 %v3691
    %5173 = vmatprep.subr.bf16.mxu0 %v3696
    %5174 = vmatpush1.bf16.msra.mxu0 %v3695
    %5175 = vmatprep.subr.bf16.mxu0 %v3700
    %5176 = vmatpush1.bf16.msra.mxu0 %v3699
    %5177 = vmatprep.subr.bf16.mxu0 %v3704
    %5178 = vmatpush1.bf16.msra.mxu0 %v3703
    %5179 = vmatprep.subr.bf16.mxu0 %v3708
    %5180 = vmatpush1.bf16.msra.mxu0 %v3707
    %5181 = vmatprep.subr.bf16.mxu0 %v3712
    %5182 = vmatpush1.bf16.msra.mxu0 %v3711
    %5183 = vmatprep.subr.bf16.mxu0 %v3716
    %5184 = vmatpush1.bf16.msra.mxu0 %v3715
    %5185 = vmatprep.subr.bf16.mxu0 %v3720
    %5186 = vmatpush1.bf16.msra.mxu0 %v3719
    %5187 = vmatprep.subr.bf16.mxu0 %v3724
    %5188 = vmatpush1.bf16.msra.mxu0 %v3723
    %5189 = vmatprep.subr.bf16.mxu0 %v3728
    %5190 = vmatpush1.bf16.msra.mxu0 %v3727
    %5191 = vmatprep.subr.bf16.mxu0 %v3732
    %5192 = vmatpush1.bf16.msra.mxu0 %v3731
    %5193 = vmatprep.subr.bf16.mxu0 %v3736
    %5194 = vmatpush1.bf16.msra.mxu0 %v3735
    %5195 = vmatprep.subr.bf16.mxu0 %v3740
    %5196 = vmatpush1.bf16.msra.mxu0 %v3739
    %5197 = vmatprep.subr.bf16.mxu0 %v3744
    %5198 = vmatpush1.bf16.msra.mxu0 %v3743
    %5199 = vmatprep.subr.bf16.mxu0 %v3748
    %5200 = vmatpush1.bf16.msra.mxu0 %v3747
    %5201 = vmatprep.subr.bf16.mxu0 %v3752
    %5202 = vmatpush1.bf16.msra.mxu0 %v3751
    %5203 = vmatprep.mubr.bf16.mxu0 %v984
    %5204 = vmatmul.mubr.bf16.gmra.mrb[0].mxu0 %v970
    %v5205 = vpop.f32.mrb[0].mxu0
    %v5206 = vadd.f32 %v5165, %v5205
    %v5207 = vpop.f32.mrb[0].mxu0
    %v5208 = vadd.f32 %v5167, %v5207
    %v5209 = vpop.f32.mrb[0].mxu0
    %v5210 = vpop.f32.mrb[0].mxu0
    %5211 = vdwg.mxu0
    %5212 = vmatprep.subr.bf16.mxu0 %v3756
    %5213 = vmatpush1.bf16.msra.mxu0 %v3755
    %5214 = vmatprep.subr.bf16.mxu0 %v3760
    %5215 = vmatpush1.bf16.msra.mxu0 %v3759
    %5216 = vmatprep.subr.bf16.mxu0 %v3764
    %5217 = vmatpush1.bf16.msra.mxu0 %v3763
    %5218 = vmatprep.subr.bf16.mxu0 %v3768
    %5219 = vmatpush1.bf16.msra.mxu0 %v3767
    %5220 = vmatprep.subr.bf16.mxu0 %v3772
    %5221 = vmatpush1.bf16.msra.mxu0 %v3771
    %5222 = vmatprep.subr.bf16.mxu0 %v3776
    %5223 = vmatpush1.bf16.msra.mxu0 %v3775
    %5224 = vmatprep.subr.bf16.mxu0 %v3780
    %5225 = vmatpush1.bf16.msra.mxu0 %v3779
    %5226 = vmatprep.subr.bf16.mxu0 %v3784
    %5227 = vmatpush1.bf16.msra.mxu0 %v3783
    %5228 = vmatprep.subr.bf16.mxu0 %v3788
    %5229 = vmatpush1.bf16.msra.mxu0 %v3787
    %5230 = vmatprep.subr.bf16.mxu0 %v3792
    %5231 = vmatpush1.bf16.msra.mxu0 %v3791
    %5232 = vmatprep.subr.bf16.mxu0 %v3796
    %5233 = vmatpush1.bf16.msra.mxu0 %v3795
    %5234 = vmatprep.subr.bf16.mxu0 %v3800
    %5235 = vmatpush1.bf16.msra.mxu0 %v3799
    %5236 = vmatprep.subr.bf16.mxu0 %v3804
    %5237 = vmatpush1.bf16.msra.mxu0 %v3803
    %5238 = vmatprep.subr.bf16.mxu0 %v3808
    %5239 = vmatpush1.bf16.msra.mxu0 %v3807
    %5240 = vmatprep.subr.bf16.mxu0 %v3812
    %5241 = vmatpush1.bf16.msra.mxu0 %v3811
    %5242 = vmatprep.subr.bf16.mxu0 %v3816
    %5243 = vmatpush1.bf16.msra.mxu0 %v3815
    %5244 = vmatprep.mubr.bf16.mxu0 %v994
    %5245 = vmatmul.mubr.bf16.gmra.mrb[0].mxu0 %v992
    %v5246 = vpop.f32.mrb[0].mxu0
    %v5247 = vadd.f32 %v5206, %v5246
    %v5248 = vpop.f32.mrb[0].mxu0
    %v5249 = vadd.f32 %v5208, %v5248
    %v5250 = vpop.f32.mrb[0].mxu0
    %v5251 = vpop.f32.mrb[0].mxu0
    %5252 = vdwg.mxu0
    %5253 = vmatprep.subr.bf16.mxu0 %v3820
    %5254 = vmatpush1.bf16.msra.mxu0 %v3819
    %5255 = vmatprep.subr.bf16.mxu0 %v3824
    %5256 = vmatpush1.bf16.msra.mxu0 %v3823
    %5257 = vmatprep.subr.bf16.mxu0 %v3828
    %5258 = vmatpush1.bf16.msra.mxu0 %v3827
    %5259 = vmatprep.subr.bf16.mxu0 %v3832
    %5260 = vmatpush1.bf16.msra.mxu0 %v3831
    %5261 = vmatprep.subr.bf16.mxu0 %v3836
    %5262 = vmatpush1.bf16.msra.mxu0 %v3835
    %5263 = vmatprep.subr.bf16.mxu0 %v3840
    %5264 = vmatpush1.bf16.msra.mxu0 %v3839
    %5265 = vmatprep.subr.bf16.mxu0 %v3844
    %5266 = vmatpush1.bf16.msra.mxu0 %v3843
    %5267 = vmatprep.subr.bf16.mxu0 %v3848
    %5268 = vmatpush1.bf16.msra.mxu0 %v3847
    %5269 = vmatprep.subr.bf16.mxu0 %v3852
    %5270 = vmatpush1.bf16.msra.mxu0 %v3851
    %5271 = vmatprep.subr.bf16.mxu0 %v3856
    %5272 = vmatpush1.bf16.msra.mxu0 %v3855
    %5273 = vmatprep.subr.bf16.mxu0 %v3860
    %5274 = vmatpush1.bf16.msra.mxu0 %v3859
    %5275 = vmatprep.subr.bf16.mxu0 %v3864
    %5276 = vmatpush1.bf16.msra.mxu0 %v3863
    %5277 = vmatprep.subr.bf16.mxu0 %v3868
    %5278 = vmatpush1.bf16.msra.mxu0 %v3867
    %5279 = vmatprep.subr.bf16.mxu0 %v3872
    %5280 = vmatpush1.bf16.msra.mxu0 %v3871
    %5281 = vmatprep.subr.bf16.mxu0 %v3876
    %5282 = vmatpush1.bf16.msra.mxu0 %v3875
    %5283 = vmatprep.subr.bf16.mxu0 %v3880
    %5284 = vmatpush1.bf16.msra.mxu0 %v3879
    %5285 = vmatprep.mubr.bf16.mxu0 %v991
    %5286 = vmatmul.mubr.bf16.gmra.mrb[0].mxu0 %v977
    %v5287 = vpop.f32.mrb[0].mxu0
    %v5288 = vadd.f32 %v5247, %v5287
    %v5289 = vpop.f32.mrb[0].mxu0
    %v5290 = vadd.f32 %v5249, %v5289
    %v5291 = vpop.f32.mrb[0].mxu0
    %v5292 = vpop.f32.mrb[0].mxu0
    %5293 = vdwg.mxu0
    %5294 = vmatprep.subr.bf16.mxu0 %v3884
    %5295 = vmatpush1.bf16.msra.mxu0 %v3883
    %5296 = vmatprep.subr.bf16.mxu0 %v3888
    %5297 = vmatpush1.bf16.msra.mxu0 %v3887
    %5298 = vmatprep.subr.bf16.mxu0 %v3892
    %5299 = vmatpush1.bf16.msra.mxu0 %v3891
    %5300 = vmatprep.subr.bf16.mxu0 %v3896
    %5301 = vmatpush1.bf16.msra.mxu0 %v3895
    %5302 = vmatprep.subr.bf16.mxu0 %v3900
    %5303 = vmatpush1.bf16.msra.mxu0 %v3899
    %5304 = vmatprep.subr.bf16.mxu0 %v3904
    %5305 = vmatpush1.bf16.msra.mxu0 %v3903
    %5306 = vmatprep.subr.bf16.mxu0 %v3908
    %5307 = vmatpush1.bf16.msra.mxu0 %v3907
    %5308 = vmatprep.subr.bf16.mxu0 %v3912
    %5309 = vmatpush1.bf16.msra.mxu0 %v3911
    %5310 = vmatprep.subr.bf16.mxu0 %v3916
    %5311 = vmatpush1.bf16.msra.mxu0 %v3915
    %5312 = vmatprep.subr.bf16.mxu0 %v3920
    %5313 = vmatpush1.bf16.msra.mxu0 %v3919
    %5314 = vmatprep.subr.bf16.mxu0 %v3924
    %5315 = vmatpush1.bf16.msra.mxu0 %v3923
    %5316 = vmatprep.subr.bf16.mxu0 %v3928
    %5317 = vmatpush1.bf16.msra.mxu0 %v3927
    %5318 = vmatprep.subr.bf16.mxu0 %v3932
    %5319 = vmatpush1.bf16.msra.mxu0 %v3931
    %5320 = vmatprep.subr.bf16.mxu0 %v3936
    %5321 = vmatpush1.bf16.msra.mxu0 %v3935
    %5322 = vmatprep.subr.bf16.mxu0 %v3940
    %5323 = vmatpush1.bf16.msra.mxu0 %v3939
    %5324 = vmatprep.subr.bf16.mxu0 %v3944
    %5325 = vmatpush1.bf16.msra.mxu0 %v3943
    %5326 = vmatprep.mubr.bf16.mxu0 %v995
    %5327 = vmatmul.mubr.bf16.gmra.mrb[0].mxu0 %v993
    %v5328 = vpop.f32.mrb[0].mxu0
    %v5329 = vadd.f32 %v5288, %v5328
    %v5330 = vpop.f32.mrb[0].mxu0
    %v5331 = vadd.f32 %v5290, %v5330
    %v5332 = vpop.f32.mrb[0].mxu0
    %v5333 = vpop.f32.mrb[0].mxu0
    %5334 = vdwg.mxu0
    %5335 = vmatprep.subr.bf16.mxu0 %v3948
    %5336 = vmatpush1.bf16.msra.mxu0 %v3947
    %5337 = vmatprep.subr.bf16.mxu0 %v3952
    %5338 = vmatpush1.bf16.msra.mxu0 %v3951
    %5339 = vmatprep.subr.bf16.mxu0 %v3956
    %5340 = vmatpush1.bf16.msra.mxu0 %v3955
    %5341 = vmatprep.subr.bf16.mxu0 %v3960
    %5342 = vmatpush1.bf16.msra.mxu0 %v3959
    %5343 = vmatprep.subr.bf16.mxu0 %v3964
    %5344 = vmatpush1.bf16.msra.mxu0 %v3963
    %5345 = vmatprep.subr.bf16.mxu0 %v3968
    %5346 = vmatpush1.bf16.msra.mxu0 %v3967
    %5347 = vmatprep.subr.bf16.mxu0 %v3972
    %5348 = vmatpush1.bf16.msra.mxu0 %v3971
    %5349 = vmatprep.subr.bf16.mxu0 %v3976
    %5350 = vmatpush1.bf16.msra.mxu0 %v3975
    %5351 = vmatprep.subr.bf16.mxu0 %v3980
    %5352 = vmatpush1.bf16.msra.mxu0 %v3979
    %5353 = vmatprep.subr.bf16.mxu0 %v3984
    %5354 = vmatpush1.bf16.msra.mxu0 %v3983
    %5355 = vmatprep.subr.bf16.mxu0 %v3988
    %5356 = vmatpush1.bf16.msra.mxu0 %v3987
    %5357 = vmatprep.subr.bf16.mxu0 %v3992
    %5358 = vmatpush1.bf16.msra.mxu0 %v3991
    %5359 = vmatprep.subr.bf16.mxu0 %v3996
    %5360 = vmatpush1.bf16.msra.mxu0 %v3995
    %5361 = vmatprep.subr.bf16.mxu0 %v4000
    %5362 = vmatpush1.bf16.msra.mxu0 %v3999
    %5363 = vmatprep.subr.bf16.mxu0 %v4004
    %5364 = vmatpush1.bf16.msra.mxu0 %v4003
    %5365 = vmatprep.subr.bf16.mxu0 %v4008
    %5366 = vmatpush1.bf16.msra.mxu0 %v4007
    %5367 = vmatprep.mubr.bf16.mxu0 %v1033
    %5368 = vmatmul.mubr.bf16.gmra.mrb[0].mxu0 %v1019
    %v5369 = vpop.f32.mrb[0].mxu0
    %v5370 = vadd.f32 %v5329, %v5369
    %v5371 = vpop.f32.mrb[0].mxu0
    %v5372 = vadd.f32 %v5331, %v5371
    %v5373 = vpop.f32.mrb[0].mxu0
    %v5374 = vpop.f32.mrb[0].mxu0
    %5375 = vdwg.mxu0
    %5376 = vmatprep.subr.bf16.mxu0 %v4012
    %5377 = vmatpush1.bf16.msra.mxu0 %v4011
    %5378 = vmatprep.subr.bf16.mxu0 %v4016
    %5379 = vmatpush1.bf16.msra.mxu0 %v4015
    %5380 = vmatprep.subr.bf16.mxu0 %v4020
    %5381 = vmatpush1.bf16.msra.mxu0 %v4019
    %5382 = vmatprep.subr.bf16.mxu0 %v4024
    %5383 = vmatpush1.bf16.msra.mxu0 %v4023
    %5384 = vmatprep.subr.bf16.mxu0 %v4028
    %5385 = vmatpush1.bf16.msra.mxu0 %v4027
    %5386 = vmatprep.subr.bf16.mxu0 %v4032
    %5387 = vmatpush1.bf16.msra.mxu0 %v4031
    %5388 = vmatprep.subr.bf16.mxu0 %v4036
    %5389 = vmatpush1.bf16.msra.mxu0 %v4035
    %5390 = vmatprep.subr.bf16.mxu0 %v4040
    %5391 = vmatpush1.bf16.msra.mxu0 %v4039
    %5392 = vmatprep.subr.bf16.mxu0 %v4044
    %5393 = vmatpush1.bf16.msra.mxu0 %v4043
    %5394 = vmatprep.subr.bf16.mxu0 %v4048
    %5395 = vmatpush1.bf16.msra.mxu0 %v4047
    %5396 = vmatprep.subr.bf16.mxu0 %v4052
    %5397 = vmatpush1.bf16.msra.mxu0 %v4051
    %5398 = vmatprep.subr.bf16.mxu0 %v4056
    %5399 = vmatpush1.bf16.msra.mxu0 %v4055
    %5400 = vmatprep.subr.bf16.mxu0 %v4060
    %5401 = vmatpush1.bf16.msra.mxu0 %v4059
    %5402 = vmatprep.subr.bf16.mxu0 %v4064
    %5403 = vmatpush1.bf16.msra.mxu0 %v4063
    %5404 = vmatprep.subr.bf16.mxu0 %v4068
    %5405 = vmatpush1.bf16.msra.mxu0 %v4067
    %5406 = vmatprep.subr.bf16.mxu0 %v4072
    %5407 = vmatpush1.bf16.msra.mxu0 %v4071
    %5408 = vmatprep.mubr.bf16.mxu0 %v1043
    %5409 = vmatmul.mubr.bf16.gmra.mrb[0].mxu0 %v1041
    %v5410 = vpop.f32.mrb[0].mxu0
    %v5411 = vadd.f32 %v5370, %v5410
    %v5412 = vpop.f32.mrb[0].mxu0
    %v5413 = vadd.f32 %v5372, %v5412
    %v5414 = vpop.f32.mrb[0].mxu0
    %v5415 = vpop.f32.mrb[0].mxu0
    %5416 = vdwg.mxu0
    %5417 = vmatprep.subr.bf16.mxu0 %v4076
    %5418 = vmatpush1.bf16.msra.mxu0 %v4075
    %5419 = vmatprep.subr.bf16.mxu0 %v4080
    %5420 = vmatpush1.bf16.msra.mxu0 %v4079
    %5421 = vmatprep.subr.bf16.mxu0 %v4084
    %5422 = vmatpush1.bf16.msra.mxu0 %v4083
    %5423 = vmatprep.subr.bf16.mxu0 %v4088
    %5424 = vmatpush1.bf16.msra.mxu0 %v4087
    %5425 = vmatprep.subr.bf16.mxu0 %v4092
    %5426 = vmatpush1.bf16.msra.mxu0 %v4091
    %5427 = vmatprep.subr.bf16.mxu0 %v4096
    %5428 = vmatpush1.bf16.msra.mxu0 %v4095
    %5429 = vmatprep.subr.bf16.mxu0 %v4100
    %5430 = vmatpush1.bf16.msra.mxu0 %v4099
    %5431 = vmatprep.subr.bf16.mxu0 %v4104
    %5432 = vmatpush1.bf16.msra.mxu0 %v4103
    %5433 = vmatprep.subr.bf16.mxu0 %v4108
    %5434 = vmatpush1.bf16.msra.mxu0 %v4107
    %5435 = vmatprep.subr.bf16.mxu0 %v4112
    %5436 = vmatpush1.bf16.msra.mxu0 %v4111
    %5437 = vmatprep.subr.bf16.mxu0 %v4116
    %5438 = vmatpush1.bf16.msra.mxu0 %v4115
    %5439 = vmatprep.subr.bf16.mxu0 %v4120
    %5440 = vmatpush1.bf16.msra.mxu0 %v4119
    %5441 = vmatprep.subr.bf16.mxu0 %v4124
    %5442 = vmatpush1.bf16.msra.mxu0 %v4123
    %5443 = vmatprep.subr.bf16.mxu0 %v4128
    %5444 = vmatpush1.bf16.msra.mxu0 %v4127
    %5445 = vmatprep.subr.bf16.mxu0 %v4132
    %5446 = vmatpush1.bf16.msra.mxu0 %v4131
    %5447 = vmatprep.subr.bf16.mxu0 %v4136
    %5448 = vmatpush1.bf16.msra.mxu0 %v4135
    %5449 = vmatprep.mubr.bf16.mxu0 %v1040
    %5450 = vmatmul.mubr.bf16.gmra.mrb[0].mxu0 %v1026
    %v5451 = vpop.f32.mrb[0].mxu0
    %v5452 = vadd.f32 %v5411, %v5451
    %v5453 = vpop.f32.mrb[0].mxu0
    %v5454 = vadd.f32 %v5413, %v5453
    %v5455 = vpop.f32.mrb[0].mxu0
    %v5456 = vpop.f32.mrb[0].mxu0
    %5457 = vdwg.mxu0
    %5458 = vmatprep.subr.bf16.mxu0 %v4140
    %5459 = vmatpush1.bf16.msra.mxu0 %v4139
    %5460 = vmatprep.subr.bf16.mxu0 %v4144
    %5461 = vmatpush1.bf16.msra.mxu0 %v4143
    %5462 = vmatprep.subr.bf16.mxu0 %v4148
    %5463 = vmatpush1.bf16.msra.mxu0 %v4147
    %5464 = vmatprep.subr.bf16.mxu0 %v4152
    %5465 = vmatpush1.bf16.msra.mxu0 %v4151
    %5466 = vmatprep.subr.bf16.mxu0 %v4156
    %5467 = vmatpush1.bf16.msra.mxu0 %v4155
    %5468 = vmatprep.subr.bf16.mxu0 %v4160
    %5469 = vmatpush1.bf16.msra.mxu0 %v4159
    %5470 = vmatprep.subr.bf16.mxu0 %v4164
    %5471 = vmatpush1.bf16.msra.mxu0 %v4163
    %5472 = vmatprep.subr.bf16.mxu0 %v4168
    %5473 = vmatpush1.bf16.msra.mxu0 %v4167
    %5474 = vmatprep.subr.bf16.mxu0 %v4172
    %5475 = vmatpush1.bf16.msra.mxu0 %v4171
    %5476 = vmatprep.subr.bf16.mxu0 %v4176
    %5477 = vmatpush1.bf16.msra.mxu0 %v4175
    %5478 = vmatprep.subr.bf16.mxu0 %v4180
    %5479 = vmatpush1.bf16.msra.mxu0 %v4179
    %5480 = vmatprep.subr.bf16.mxu0 %v4184
    %5481 = vmatpush1.bf16.msra.mxu0 %v4183
    %5482 = vmatprep.subr.bf16.mxu0 %v4188
    %5483 = vmatpush1.bf16.msra.mxu0 %v4187
    %5484 = vmatprep.subr.bf16.mxu0 %v4192
    %5485 = vmatpush1.bf16.msra.mxu0 %v4191
    %5486 = vmatprep.subr.bf16.mxu0 %v4196
    %5487 = vmatpush1.bf16.msra.mxu0 %v4195
    %5488 = vmatprep.subr.bf16.mxu0 %v4200
    %5489 = vmatpush1.bf16.msra.mxu0 %v4199
    %5490 = vmatprep.mubr.bf16.mxu0 %v1044
    %5491 = vmatmul.mubr.bf16.gmra.mrb[0].mxu0 %v1042
    %v5492 = vpop.f32.mrb[0].mxu0
    %v5493 = vadd.f32 %v5452, %v5492
    %v5494 = vpop.f32.mrb[0].mxu0
    %v5495 = vadd.f32 %v5454, %v5494
    %v5496 = vpop.f32.mrb[0].mxu0
    %v5497 = vpop.f32.mrb[0].mxu0
    %5498 = vdwg.mxu0
    %5499 = vmatprep.subr.bf16.mxu0 %v4204
    %5500 = vmatpush1.bf16.msra.mxu0 %v4203
    %5501 = vmatprep.subr.bf16.mxu0 %v4208
    %5502 = vmatpush1.bf16.msra.mxu0 %v4207
    %5503 = vmatprep.subr.bf16.mxu0 %v4212
    %5504 = vmatpush1.bf16.msra.mxu0 %v4211
    %5505 = vmatprep.subr.bf16.mxu0 %v4216
    %5506 = vmatpush1.bf16.msra.mxu0 %v4215
    %5507 = vmatprep.subr.bf16.mxu0 0
    %5508 = vmatpush1.bf16.msra.mxu0 0
    %5509 = vmatprep.subr.bf16.mxu0 0
    %5510 = vmatpush1.bf16.msra.mxu0 0
    %5511 = vmatprep.subr.bf16.mxu0 0
    %5512 = vmatpush1.bf16.msra.mxu0 0
    %5513 = vmatprep.subr.bf16.mxu0 0
    %5514 = vmatpush1.bf16.msra.mxu0 0
    %5515 = vmatprep.subr.bf16.mxu0 0
    %5516 = vmatpush1.bf16.msra.mxu0 0
    %5517 = vmatprep.subr.bf16.mxu0 0
    %5518 = vmatpush1.bf16.msra.mxu0 0
    %5519 = vmatprep.subr.bf16.mxu0 0
    %5520 = vmatpush1.bf16.msra.mxu0 0
    %5521 = vmatprep.subr.bf16.mxu0 0
    %5522 = vmatpush1.bf16.msra.mxu0 0
    %5523 = vmatprep.subr.bf16.mxu0 0
    %5524 = vmatpush1.bf16.msra.mxu0 0
    %5525 = vmatprep.subr.bf16.mxu0 0
    %5526 = vmatpush1.bf16.msra.mxu0 0
    %5527 = vmatprep.subr.bf16.mxu0 0
    %5528 = vmatpush1.bf16.msra.mxu0 0
    %5529 = vmatprep.subr.bf16.mxu0 0
    %5530 = vmatpush1.bf16.msra.mxu0 0
    %5531 = vmatprep.mubr.bf16.mxu0 0
    %5532 = vmatmul.mubr.bf16.gmra.mrb[0].mxu0 %v5005
    %v5533 = vpop.f32.mrb[0].mxu0
    %v5534 = vadd.f32 %v5493, %v5533
    %v5535 = vpop.f32.mrb[0].mxu0
    %v5536 = vadd.f32 %v5495, %v5535
    %v5537 = vpop.f32.mrb[0].mxu0
    %v5538 = vpop.f32.mrb[0].mxu0
    %5539 = vdwg.mxu0
    %5540 = vmatprep.subr.bf16.mxu0 %v3438
    %5541 = vmatpush1.bf16.msra.mxu0 %v3437
    %5542 = vmatprep.subr.bf16.mxu0 %v3442
    %5543 = vmatpush1.bf16.msra.mxu0 %v3441
    %5544 = vmatprep.subr.bf16.mxu0 %v3446
    %5545 = vmatpush1.bf16.msra.mxu0 %v3445
    %5546 = vmatprep.subr.bf16.mxu0 %v3450
    %5547 = vmatpush1.bf16.msra.mxu0 %v3449
    %5548 = vmatprep.subr.bf16.mxu0 %v3454
    %5549 = vmatpush1.bf16.msra.mxu0 %v3453
    %5550 = vmatprep.subr.bf16.mxu0 %v3458
    %5551 = vmatpush1.bf16.msra.mxu0 %v3457
    %5552 = vmatprep.subr.bf16.mxu0 %v3462
    %5553 = vmatpush1.bf16.msra.mxu0 %v3461
    %5554 = vmatprep.subr.bf16.mxu0 %v3466
    %5555 = vmatpush1.bf16.msra.mxu0 %v3465
    %5556 = vmatprep.subr.bf16.mxu0 %v3470
    %5557 = vmatpush1.bf16.msra.mxu0 %v3469
    %5558 = vmatprep.subr.bf16.mxu0 %v3474
    %5559 = vmatpush1.bf16.msra.mxu0 %v3473
    %5560 = vmatprep.subr.bf16.mxu0 %v3478
    %5561 = vmatpush1.bf16.msra.mxu0 %v3477
    %5562 = vmatprep.subr.bf16.mxu0 %v3482
    %5563 = vmatpush1.bf16.msra.mxu0 %v3481
    %5564 = vmatprep.subr.bf16.mxu0 %v3486
    %5565 = vmatpush1.bf16.msra.mxu0 %v3485
    %5566 = vmatprep.subr.bf16.mxu0 %v3490
    %5567 = vmatpush1.bf16.msra.mxu0 %v3489
    %5568 = vmatprep.subr.bf16.mxu0 %v3494
    %5569 = vmatpush1.bf16.msra.mxu0 %v3493
    %5570 = vmatprep.subr.bf16.mxu0 %v3498
    %5571 = vmatpush1.bf16.msra.mxu0 %v3497
    %5572 = vmatprep.mubr.bf16.mxu0 %v935
    %5573 = vmatmul.mubr.bf16.gmra.mrb[0].mxu0 %v921
    %v5574 = vpop.f32.mrb[0].mxu0
    %v5575 = vadd.f32 %v885, %v5574
    %v5576 = vpop.f32.mrb[0].mxu0
    %v5577 = vadd.f32 %v889, %v5576
    %v5578 = vpop.f32.mrb[0].mxu0
    %v5579 = vpop.f32.mrb[0].mxu0
    %5580 = vdwg.mxu0
    %5581 = vmatprep.subr.bf16.mxu0 %v3502
    %5582 = vmatpush1.bf16.msra.mxu0 %v3501
    %5583 = vmatprep.subr.bf16.mxu0 %v3506
    %5584 = vmatpush1.bf16.msra.mxu0 %v3505
    %5585 = vmatprep.subr.bf16.mxu0 %v3510
    %5586 = vmatpush1.bf16.msra.mxu0 %v3509
    %5587 = vmatprep.subr.bf16.mxu0 %v3514
    %5588 = vmatpush1.bf16.msra.mxu0 %v3513
    %5589 = vmatprep.subr.bf16.mxu0 %v3518
    %5590 = vmatpush1.bf16.msra.mxu0 %v3517
    %5591 = vmatprep.subr.bf16.mxu0 %v3522
    %5592 = vmatpush1.bf16.msra.mxu0 %v3521
    %5593 = vmatprep.subr.bf16.mxu0 %v3526
    %5594 = vmatpush1.bf16.msra.mxu0 %v3525
    %5595 = vmatprep.subr.bf16.mxu0 %v3530
    %5596 = vmatpush1.bf16.msra.mxu0 %v3529
    %5597 = vmatprep.subr.bf16.mxu0 %v3534
    %5598 = vmatpush1.bf16.msra.mxu0 %v3533
    %5599 = vmatprep.subr.bf16.mxu0 %v3538
    %5600 = vmatpush1.bf16.msra.mxu0 %v3537
    %5601 = vmatprep.subr.bf16.mxu0 %v3542
    %5602 = vmatpush1.bf16.msra.mxu0 %v3541
    %5603 = vmatprep.subr.bf16.mxu0 %v3546
    %5604 = vmatpush1.bf16.msra.mxu0 %v3545
    %5605 = vmatprep.subr.bf16.mxu0 %v3550
    %5606 = vmatpush1.bf16.msra.mxu0 %v3549
    %5607 = vmatprep.subr.bf16.mxu0 %v3554
    %5608 = vmatpush1.bf16.msra.mxu0 %v3553
    %5609 = vmatprep.subr.bf16.mxu0 %v3558
    %5610 = vmatpush1.bf16.msra.mxu0 %v3557
    %5611 = vmatprep.subr.bf16.mxu0 %v3562
    %5612 = vmatpush1.bf16.msra.mxu0 %v3561
    %5613 = vmatprep.mubr.bf16.mxu0 %v945
    %5614 = vmatmul.mubr.bf16.gmra.mrb[0].mxu0 %v943
    %v5615 = vpop.f32.mrb[0].mxu0
    %v5616 = vadd.f32 %v5575, %v5615
    %v5617 = vpop.f32.mrb[0].mxu0
    %v5618 = vadd.f32 %v5577, %v5617
    %v5619 = vpop.f32.mrb[0].mxu0
    %v5620 = vpop.f32.mrb[0].mxu0
    %5621 = vdwg.mxu0
    %5622 = vmatprep.subr.bf16.mxu0 %v3566
    %5623 = vmatpush1.bf16.msra.mxu0 %v3565
    %5624 = vmatprep.subr.bf16.mxu0 %v3570
    %5625 = vmatpush1.bf16.msra.mxu0 %v3569
    %5626 = vmatprep.subr.bf16.mxu0 %v3574
    %5627 = vmatpush1.bf16.msra.mxu0 %v3573
    %5628 = vmatprep.subr.bf16.mxu0 %v3578
    %5629 = vmatpush1.bf16.msra.mxu0 %v3577
    %5630 = vmatprep.subr.bf16.mxu0 %v3582
    %5631 = vmatpush1.bf16.msra.mxu0 %v3581
    %5632 = vmatprep.subr.bf16.mxu0 %v3586
    %5633 = vmatpush1.bf16.msra.mxu0 %v3585
    %5634 = vmatprep.subr.bf16.mxu0 %v3590
    %5635 = vmatpush1.bf16.msra.mxu0 %v3589
    %5636 = vmatprep.subr.bf16.mxu0 %v3594
    %5637 = vmatpush1.bf16.msra.mxu0 %v3593
    %5638 = vmatprep.subr.bf16.mxu0 %v3598
    %5639 = vmatpush1.bf16.msra.mxu0 %v3597
    %5640 = vmatprep.subr.bf16.mxu0 %v3602
    %5641 = vmatpush1.bf16.msra.mxu0 %v3601
    %5642 = vmatprep.subr.bf16.mxu0 %v3606
    %5643 = vmatpush1.bf16.msra.mxu0 %v3605
    %5644 = vmatprep.subr.bf16.mxu0 %v3610
    %5645 = vmatpush1.bf16.msra.mxu0 %v3609
    %5646 = vmatprep.subr.bf16.mxu0 %v3614
    %5647 = vmatpush1.bf16.msra.mxu0 %v3613
    %5648 = vmatprep.subr.bf16.mxu0 %v3618
    %5649 = vmatpush1.bf16.msra.mxu0 %v3617
    %5650 = vmatprep.subr.bf16.mxu0 %v3622
    %5651 = vmatpush1.bf16.msra.mxu0 %v3621
    %5652 = vmatprep.subr.bf16.mxu0 %v3626
    %5653 = vmatpush1.bf16.msra.mxu0 %v3625
    %5654 = vmatprep.mubr.bf16.mxu0 %v942
    %5655 = vmatmul.mubr.bf16.gmra.mrb[0].mxu0 %v928
    %v5656 = vpop.f32.mrb[0].mxu0
    %v5657 = vadd.f32 %v5616, %v5656
    %v5658 = vpop.f32.mrb[0].mxu0
    %v5659 = vadd.f32 %v5618, %v5658
    %v5660 = vpop.f32.mrb[0].mxu0
    %v5661 = vpop.f32.mrb[0].mxu0
    %5662 = vdwg.mxu0
    %5663 = vmatprep.subr.bf16.mxu0 %v3630
    %5664 = vmatpush1.bf16.msra.mxu0 %v3629
    %5665 = vmatprep.subr.bf16.mxu0 %v3634
    %5666 = vmatpush1.bf16.msra.mxu0 %v3633
    %5667 = vmatprep.subr.bf16.mxu0 %v3638
    %5668 = vmatpush1.bf16.msra.mxu0 %v3637
    %5669 = vmatprep.subr.bf16.mxu0 %v3642
    %5670 = vmatpush1.bf16.msra.mxu0 %v3641
    %5671 = vmatprep.subr.bf16.mxu0 %v3646
    %5672 = vmatpush1.bf16.msra.mxu0 %v3645
    %5673 = vmatprep.subr.bf16.mxu0 %v3650
    %5674 = vmatpush1.bf16.msra.mxu0 %v3649
    %5675 = vmatprep.subr.bf16.mxu0 %v3654
    %5676 = vmatpush1.bf16.msra.mxu0 %v3653
    %5677 = vmatprep.subr.bf16.mxu0 %v3658
    %5678 = vmatpush1.bf16.msra.mxu0 %v3657
    %5679 = vmatprep.subr.bf16.mxu0 %v3662
    %5680 = vmatpush1.bf16.msra.mxu0 %v3661
    %5681 = vmatprep.subr.bf16.mxu0 %v3666
    %5682 = vmatpush1.bf16.msra.mxu0 %v3665
    %5683 = vmatprep.subr.bf16.mxu0 %v3670
    %5684 = vmatpush1.bf16.msra.mxu0 %v3669
    %5685 = vmatprep.subr.bf16.mxu0 %v3674
    %5686 = vmatpush1.bf16.msra.mxu0 %v3673
    %5687 = vmatprep.subr.bf16.mxu0 %v3678
    %5688 = vmatpush1.bf16.msra.mxu0 %v3677
    %5689 = vmatprep.subr.bf16.mxu0 %v3682
    %5690 = vmatpush1.bf16.msra.mxu0 %v3681
    %5691 = vmatprep.subr.bf16.mxu0 %v3686
    %5692 = vmatpush1.bf16.msra.mxu0 %v3685
    %5693 = vmatprep.subr.bf16.mxu0 %v3690
    %5694 = vmatpush1.bf16.msra.mxu0 %v3689
    %5695 = vmatprep.mubr.bf16.mxu0 %v946
    %5696 = vmatmul.mubr.bf16.gmra.mrb[0].mxu0 %v944
    %v5697 = vpop.f32.mrb[0].mxu0
    %v5698 = vadd.f32 %v5657, %v5697
    %v5699 = vpop.f32.mrb[0].mxu0
    %v5700 = vadd.f32 %v5659, %v5699
    %v5701 = vpop.f32.mrb[0].mxu0
    %v5702 = vpop.f32.mrb[0].mxu0
    %5703 = vdwg.mxu0
    %5704 = vmatprep.subr.bf16.mxu0 %v3694
    %5705 = vmatpush1.bf16.msra.mxu0 %v3693
    %5706 = vmatprep.subr.bf16.mxu0 %v3698
    %5707 = vmatpush1.bf16.msra.mxu0 %v3697
    %5708 = vmatprep.subr.bf16.mxu0 %v3702
    %5709 = vmatpush1.bf16.msra.mxu0 %v3701
    %5710 = vmatprep.subr.bf16.mxu0 %v3706
    %5711 = vmatpush1.bf16.msra.mxu0 %v3705
    %5712 = vmatprep.subr.bf16.mxu0 %v3710
    %5713 = vmatpush1.bf16.msra.mxu0 %v3709
    %5714 = vmatprep.subr.bf16.mxu0 %v3714
    %5715 = vmatpush1.bf16.msra.mxu0 %v3713
    %5716 = vmatprep.subr.bf16.mxu0 %v3718
    %5717 = vmatpush1.bf16.msra.mxu0 %v3717
    %5718 = vmatprep.subr.bf16.mxu0 %v3722
    %5719 = vmatpush1.bf16.msra.mxu0 %v3721
    %5720 = vmatprep.subr.bf16.mxu0 %v3726
    %5721 = vmatpush1.bf16.msra.mxu0 %v3725
    %5722 = vmatprep.subr.bf16.mxu0 %v3730
    %5723 = vmatpush1.bf16.msra.mxu0 %v3729
    %5724 = vmatprep.subr.bf16.mxu0 %v3734
    %5725 = vmatpush1.bf16.msra.mxu0 %v3733
    %5726 = vmatprep.subr.bf16.mxu0 %v3738
    %5727 = vmatpush1.bf16.msra.mxu0 %v3737
    %5728 = vmatprep.subr.bf16.mxu0 %v3742
    %5729 = vmatpush1.bf16.msra.mxu0 %v3741
    %5730 = vmatprep.subr.bf16.mxu0 %v3746
    %5731 = vmatpush1.bf16.msra.mxu0 %v3745
    %5732 = vmatprep.subr.bf16.mxu0 %v3750
    %5733 = vmatpush1.bf16.msra.mxu0 %v3749
    %5734 = vmatprep.subr.bf16.mxu0 %v3754
    %5735 = vmatpush1.bf16.msra.mxu0 %v3753
    %5736 = vmatprep.mubr.bf16.mxu0 %v984
    %5737 = vmatmul.mubr.bf16.gmra.mrb[0].mxu0 %v970
    %v5738 = vpop.f32.mrb[0].mxu0
    %v5739 = vadd.f32 %v5698, %v5738
    %v5740 = vpop.f32.mrb[0].mxu0
    %v5741 = vadd.f32 %v5700, %v5740
    %v5742 = vpop.f32.mrb[0].mxu0
    %v5743 = vpop.f32.mrb[0].mxu0
    %5744 = vdwg.mxu0
    %5745 = vmatprep.subr.bf16.mxu0 %v3758
    %5746 = vmatpush1.bf16.msra.mxu0 %v3757
    %5747 = vmatprep.subr.bf16.mxu0 %v3762
    %5748 = vmatpush1.bf16.msra.mxu0 %v3761
    %5749 = vmatprep.subr.bf16.mxu0 %v3766
    %5750 = vmatpush1.bf16.msra.mxu0 %v3765
    %5751 = vmatprep.subr.bf16.mxu0 %v3770
    %5752 = vmatpush1.bf16.msra.mxu0 %v3769
    %5753 = vmatprep.subr.bf16.mxu0 %v3774
    %5754 = vmatpush1.bf16.msra.mxu0 %v3773
    %5755 = vmatprep.subr.bf16.mxu0 %v3778
    %5756 = vmatpush1.bf16.msra.mxu0 %v3777
    %5757 = vmatprep.subr.bf16.mxu0 %v3782
    %5758 = vmatpush1.bf16.msra.mxu0 %v3781
    %5759 = vmatprep.subr.bf16.mxu0 %v3786
    %5760 = vmatpush1.bf16.msra.mxu0 %v3785
    %5761 = vmatprep.subr.bf16.mxu0 %v3790
    %5762 = vmatpush1.bf16.msra.mxu0 %v3789
    %5763 = vmatprep.subr.bf16.mxu0 %v3794
    %5764 = vmatpush1.bf16.msra.mxu0 %v3793
    %5765 = vmatprep.subr.bf16.mxu0 %v3798
    %5766 = vmatpush1.bf16.msra.mxu0 %v3797
    %5767 = vmatprep.subr.bf16.mxu0 %v3802
    %5768 = vmatpush1.bf16.msra.mxu0 %v3801
    %5769 = vmatprep.subr.bf16.mxu0 %v3806
    %5770 = vmatpush1.bf16.msra.mxu0 %v3805
    %5771 = vmatprep.subr.bf16.mxu0 %v3810
    %5772 = vmatpush1.bf16.msra.mxu0 %v3809
    %5773 = vmatprep.subr.bf16.mxu0 %v3814
    %5774 = vmatpush1.bf16.msra.mxu0 %v3813
    %5775 = vmatprep.subr.bf16.mxu0 %v3818
    %5776 = vmatpush1.bf16.msra.mxu0 %v3817
    %5777 = vmatprep.mubr.bf16.mxu0 %v994
    %5778 = vmatmul.mubr.bf16.gmra.mrb[0].mxu0 %v992
    %v5779 = vpop.f32.mrb[0].mxu0
    %v5780 = vadd.f32 %v5739, %v5779
    %v5781 = vpop.f32.mrb[0].mxu0
    %v5782 = vadd.f32 %v5741, %v5781
    %v5783 = vpop.f32.mrb[0].mxu0
    %v5784 = vpop.f32.mrb[0].mxu0
    %5785 = vdwg.mxu0
    %5786 = vmatprep.subr.bf16.mxu0 %v3822
    %5787 = vmatpush1.bf16.msra.mxu0 %v3821
    %5788 = vmatprep.subr.bf16.mxu0 %v3826
    %5789 = vmatpush1.bf16.msra.mxu0 %v3825
    %5790 = vmatprep.subr.bf16.mxu0 %v3830
    %5791 = vmatpush1.bf16.msra.mxu0 %v3829
    %5792 = vmatprep.subr.bf16.mxu0 %v3834
    %5793 = vmatpush1.bf16.msra.mxu0 %v3833
    %5794 = vmatprep.subr.bf16.mxu0 %v3838
    %5795 = vmatpush1.bf16.msra.mxu0 %v3837
    %5796 = vmatprep.subr.bf16.mxu0 %v3842
    %5797 = vmatpush1.bf16.msra.mxu0 %v3841
    %5798 = vmatprep.subr.bf16.mxu0 %v3846
    %5799 = vmatpush1.bf16.msra.mxu0 %v3845
    %5800 = vmatprep.subr.bf16.mxu0 %v3850
    %5801 = vmatpush1.bf16.msra.mxu0 %v3849
    %5802 = vmatprep.subr.bf16.mxu0 %v3854
    %5803 = vmatpush1.bf16.msra.mxu0 %v3853
    %5804 = vmatprep.subr.bf16.mxu0 %v3858
    %5805 = vmatpush1.bf16.msra.mxu0 %v3857
    %5806 = vmatprep.subr.bf16.mxu0 %v3862
    %5807 = vmatpush1.bf16.msra.mxu0 %v3861
    %5808 = vmatprep.subr.bf16.mxu0 %v3866
    %5809 = vmatpush1.bf16.msra.mxu0 %v3865
    %5810 = vmatprep.subr.bf16.mxu0 %v3870
    %5811 = vmatpush1.bf16.msra.mxu0 %v3869
    %5812 = vmatprep.subr.bf16.mxu0 %v3874
    %5813 = vmatpush1.bf16.msra.mxu0 %v3873
    %5814 = vmatprep.subr.bf16.mxu0 %v3878
    %5815 = vmatpush1.bf16.msra.mxu0 %v3877
    %5816 = vmatprep.subr.bf16.mxu0 %v3882
    %5817 = vmatpush1.bf16.msra.mxu0 %v3881
    %5818 = vmatprep.mubr.bf16.mxu0 %v991
    %5819 = vmatmul.mubr.bf16.gmra.mrb[0].mxu0 %v977
    %v5820 = vpop.f32.mrb[0].mxu0
    %v5821 = vadd.f32 %v5780, %v5820
    %v5822 = vpop.f32.mrb[0].mxu0
    %v5823 = vadd.f32 %v5782, %v5822
    %v5824 = vpop.f32.mrb[0].mxu0
    %v5825 = vpop.f32.mrb[0].mxu0
    %5826 = vdwg.mxu0
    %5827 = vmatprep.subr.bf16.mxu0 %v3886
    %5828 = vmatpush1.bf16.msra.mxu0 %v3885
    %5829 = vmatprep.subr.bf16.mxu0 %v3890
    %5830 = vmatpush1.bf16.msra.mxu0 %v3889
    %5831 = vmatprep.subr.bf16.mxu0 %v3894
    %5832 = vmatpush1.bf16.msra.mxu0 %v3893
    %5833 = vmatprep.subr.bf16.mxu0 %v3898
    %5834 = vmatpush1.bf16.msra.mxu0 %v3897
    %5835 = vmatprep.subr.bf16.mxu0 %v3902
    %5836 = vmatpush1.bf16.msra.mxu0 %v3901
    %5837 = vmatprep.subr.bf16.mxu0 %v3906
    %5838 = vmatpush1.bf16.msra.mxu0 %v3905
    %5839 = vmatprep.subr.bf16.mxu0 %v3910
    %5840 = vmatpush1.bf16.msra.mxu0 %v3909
    %5841 = vmatprep.subr.bf16.mxu0 %v3914
    %5842 = vmatpush1.bf16.msra.mxu0 %v3913
    %5843 = vmatprep.subr.bf16.mxu0 %v3918
    %5844 = vmatpush1.bf16.msra.mxu0 %v3917
    %5845 = vmatprep.subr.bf16.mxu0 %v3922
    %5846 = vmatpush1.bf16.msra.mxu0 %v3921
    %5847 = vmatprep.subr.bf16.mxu0 %v3926
    %5848 = vmatpush1.bf16.msra.mxu0 %v3925
    %5849 = vmatprep.subr.bf16.mxu0 %v3930
    %5850 = vmatpush1.bf16.msra.mxu0 %v3929
    %5851 = vmatprep.subr.bf16.mxu0 %v3934
    %5852 = vmatpush1.bf16.msra.mxu0 %v3933
    %5853 = vmatprep.subr.bf16.mxu0 %v3938
    %5854 = vmatpush1.bf16.msra.mxu0 %v3937
    %5855 = vmatprep.subr.bf16.mxu0 %v3942
    %5856 = vmatpush1.bf16.msra.mxu0 %v3941
    %5857 = vmatprep.subr.bf16.mxu0 %v3946
    %5858 = vmatpush1.bf16.msra.mxu0 %v3945
    %5859 = vmatprep.mubr.bf16.mxu0 %v995
    %5860 = vmatmul.mubr.bf16.gmra.mrb[0].mxu0 %v993
    %v5861 = vpop.f32.mrb[0].mxu0
    %v5862 = vadd.f32 %v5821, %v5861
    %v5863 = vpop.f32.mrb[0].mxu0
    %v5864 = vadd.f32 %v5823, %v5863
    %v5865 = vpop.f32.mrb[0].mxu0
    %v5866 = vpop.f32.mrb[0].mxu0
    %5867 = vdwg.mxu0
    %5868 = vmatprep.subr.bf16.mxu0 %v3950
    %5869 = vmatpush1.bf16.msra.mxu0 %v3949
    %5870 = vmatprep.subr.bf16.mxu0 %v3954
    %5871 = vmatpush1.bf16.msra.mxu0 %v3953
    %5872 = vmatprep.subr.bf16.mxu0 %v3958
    %5873 = vmatpush1.bf16.msra.mxu0 %v3957
    %5874 = vmatprep.subr.bf16.mxu0 %v3962
    %5875 = vmatpush1.bf16.msra.mxu0 %v3961
    %5876 = vmatprep.subr.bf16.mxu0 %v3966
    %5877 = vmatpush1.bf16.msra.mxu0 %v3965
    %5878 = vmatprep.subr.bf16.mxu0 %v3970
    %5879 = vmatpush1.bf16.msra.mxu0 %v3969
    %5880 = vmatprep.subr.bf16.mxu0 %v3974
    %5881 = vmatpush1.bf16.msra.mxu0 %v3973
    %5882 = vmatprep.subr.bf16.mxu0 %v3978
    %5883 = vmatpush1.bf16.msra.mxu0 %v3977
    %5884 = vmatprep.subr.bf16.mxu0 %v3982
    %5885 = vmatpush1.bf16.msra.mxu0 %v3981
    %5886 = vmatprep.subr.bf16.mxu0 %v3986
    %5887 = vmatpush1.bf16.msra.mxu0 %v3985
    %5888 = vmatprep.subr.bf16.mxu0 %v3990
    %5889 = vmatpush1.bf16.msra.mxu0 %v3989
    %5890 = vmatprep.subr.bf16.mxu0 %v3994
    %5891 = vmatpush1.bf16.msra.mxu0 %v3993
    %5892 = vmatprep.subr.bf16.mxu0 %v3998
    %5893 = vmatpush1.bf16.msra.mxu0 %v3997
    %5894 = vmatprep.subr.bf16.mxu0 %v4002
    %5895 = vmatpush1.bf16.msra.mxu0 %v4001
    %5896 = vmatprep.subr.bf16.mxu0 %v4006
    %5897 = vmatpush1.bf16.msra.mxu0 %v4005
    %5898 = vmatprep.subr.bf16.mxu0 %v4010
    %5899 = vmatpush1.bf16.msra.mxu0 %v4009
    %5900 = vmatprep.mubr.bf16.mxu0 %v1033
    %5901 = vmatmul.mubr.bf16.gmra.mrb[0].mxu0 %v1019
    %v5902 = vpop.f32.mrb[0].mxu0
    %v5903 = vadd.f32 %v5862, %v5902
    %v5904 = vpop.f32.mrb[0].mxu0
    %v5905 = vadd.f32 %v5864, %v5904
    %v5906 = vpop.f32.mrb[0].mxu0
    %v5907 = vpop.f32.mrb[0].mxu0
    %5908 = vdwg.mxu0
    %5909 = vmatprep.subr.bf16.mxu0 %v4014
    %5910 = vmatpush1.bf16.msra.mxu0 %v4013
    %5911 = vmatprep.subr.bf16.mxu0 %v4018
    %5912 = vmatpush1.bf16.msra.mxu0 %v4017
    %5913 = vmatprep.subr.bf16.mxu0 %v4022
    %5914 = vmatpush1.bf16.msra.mxu0 %v4021
    %5915 = vmatprep.subr.bf16.mxu0 %v4026
    %5916 = vmatpush1.bf16.msra.mxu0 %v4025
    %5917 = vmatprep.subr.bf16.mxu0 %v4030
    %5918 = vmatpush1.bf16.msra.mxu0 %v4029
    %5919 = vmatprep.subr.bf16.mxu0 %v4034
    %5920 = vmatpush1.bf16.msra.mxu0 %v4033
    %5921 = vmatprep.subr.bf16.mxu0 %v4038
    %5922 = vmatpush1.bf16.msra.mxu0 %v4037
    %5923 = vmatprep.subr.bf16.mxu0 %v4042
    %5924 = vmatpush1.bf16.msra.mxu0 %v4041
    %5925 = vmatprep.subr.bf16.mxu0 %v4046
    %5926 = vmatpush1.bf16.msra.mxu0 %v4045
    %5927 = vmatprep.subr.bf16.mxu0 %v4050
    %5928 = vmatpush1.bf16.msra.mxu0 %v4049
    %5929 = vmatprep.subr.bf16.mxu0 %v4054
    %5930 = vmatpush1.bf16.msra.mxu0 %v4053
    %5931 = vmatprep.subr.bf16.mxu0 %v4058
    %5932 = vmatpush1.bf16.msra.mxu0 %v4057
    %5933 = vmatprep.subr.bf16.mxu0 %v4062
    %5934 = vmatpush1.bf16.msra.mxu0 %v4061
    %5935 = vmatprep.subr.bf16.mxu0 %v4066
    %5936 = vmatpush1.bf16.msra.mxu0 %v4065
    %5937 = vmatprep.subr.bf16.mxu0 %v4070
    %5938 = vmatpush1.bf16.msra.mxu0 %v4069
    %5939 = vmatprep.subr.bf16.mxu0 %v4074
    %5940 = vmatpush1.bf16.msra.mxu0 %v4073
    %5941 = vmatprep.mubr.bf16.mxu0 %v1043
    %5942 = vmatmul.mubr.bf16.gmra.mrb[0].mxu0 %v1041
    %v5943 = vpop.f32.mrb[0].mxu0
    %v5944 = vadd.f32 %v5903, %v5943
    %v5945 = vpop.f32.mrb[0].mxu0
    %v5946 = vadd.f32 %v5905, %v5945
    %v5947 = vpop.f32.mrb[0].mxu0
    %v5948 = vpop.f32.mrb[0].mxu0
    %5949 = vdwg.mxu0
    %5950 = vmatprep.subr.bf16.mxu0 %v4078
    %5951 = vmatpush1.bf16.msra.mxu0 %v4077
    %5952 = vmatprep.subr.bf16.mxu0 %v4082
    %5953 = vmatpush1.bf16.msra.mxu0 %v4081
    %5954 = vmatprep.subr.bf16.mxu0 %v4086
    %5955 = vmatpush1.bf16.msra.mxu0 %v4085
    %5956 = vmatprep.subr.bf16.mxu0 %v4090
    %5957 = vmatpush1.bf16.msra.mxu0 %v4089
    %5958 = vmatprep.subr.bf16.mxu0 %v4094
    %5959 = vmatpush1.bf16.msra.mxu0 %v4093
    %5960 = vmatprep.subr.bf16.mxu0 %v4098
    %5961 = vmatpush1.bf16.msra.mxu0 %v4097
    %5962 = vmatprep.subr.bf16.mxu0 %v4102
    %5963 = vmatpush1.bf16.msra.mxu0 %v4101
    %5964 = vmatprep.subr.bf16.mxu0 %v4106
    %5965 = vmatpush1.bf16.msra.mxu0 %v4105
    %5966 = vmatprep.subr.bf16.mxu0 %v4110
    %5967 = vmatpush1.bf16.msra.mxu0 %v4109
    %5968 = vmatprep.subr.bf16.mxu0 %v4114
    %5969 = vmatpush1.bf16.msra.mxu0 %v4113
    %5970 = vmatprep.subr.bf16.mxu0 %v4118
    %5971 = vmatpush1.bf16.msra.mxu0 %v4117
    %5972 = vmatprep.subr.bf16.mxu0 %v4122
    %5973 = vmatpush1.bf16.msra.mxu0 %v4121
    %5974 = vmatprep.subr.bf16.mxu0 %v4126
    %5975 = vmatpush1.bf16.msra.mxu0 %v4125
    %5976 = vmatprep.subr.bf16.mxu0 %v4130
    %5977 = vmatpush1.bf16.msra.mxu0 %v4129
    %5978 = vmatprep.subr.bf16.mxu0 %v4134
    %5979 = vmatpush1.bf16.msra.mxu0 %v4133
    %5980 = vmatprep.subr.bf16.mxu0 %v4138
    %5981 = vmatpush1.bf16.msra.mxu0 %v4137
    %5982 = vmatprep.mubr.bf16.mxu0 %v1040
    %5983 = vmatmul.mubr.bf16.gmra.mrb[0].mxu0 %v1026
    %v5984 = vpop.f32.mrb[0].mxu0
    %v5985 = vadd.f32 %v5944, %v5984
    %v5986 = vpop.f32.mrb[0].mxu0
    %v5987 = vadd.f32 %v5946, %v5986
    %v5988 = vpop.f32.mrb[0].mxu0
    %v5989 = vpop.f32.mrb[0].mxu0
    %5990 = vdwg.mxu0
    %5991 = vmatprep.subr.bf16.mxu0 %v4142
    %5992 = vmatpush1.bf16.msra.mxu0 %v4141
    %5993 = vmatprep.subr.bf16.mxu0 %v4146
    %5994 = vmatpush1.bf16.msra.mxu0 %v4145
    %5995 = vmatprep.subr.bf16.mxu0 %v4150
    %5996 = vmatpush1.bf16.msra.mxu0 %v4149
    %5997 = vmatprep.subr.bf16.mxu0 %v4154
    %5998 = vmatpush1.bf16.msra.mxu0 %v4153
    %5999 = vmatprep.subr.bf16.mxu0 %v4158
    %6000 = vmatpush1.bf16.msra.mxu0 %v4157
    %6001 = vmatprep.subr.bf16.mxu0 %v4162
    %6002 = vmatpush1.bf16.msra.mxu0 %v4161
    %6003 = vmatprep.subr.bf16.mxu0 %v4166
    %6004 = vmatpush1.bf16.msra.mxu0 %v4165
    %6005 = vmatprep.subr.bf16.mxu0 %v4170
    %6006 = vmatpush1.bf16.msra.mxu0 %v4169
    %6007 = vmatprep.subr.bf16.mxu0 %v4174
    %6008 = vmatpush1.bf16.msra.mxu0 %v4173
    %6009 = vmatprep.subr.bf16.mxu0 %v4178
    %6010 = vmatpush1.bf16.msra.mxu0 %v4177
    %6011 = vmatprep.subr.bf16.mxu0 %v4182
    %6012 = vmatpush1.bf16.msra.mxu0 %v4181
    %6013 = vmatprep.subr.bf16.mxu0 %v4186
    %6014 = vmatpush1.bf16.msra.mxu0 %v4185
    %6015 = vmatprep.subr.bf16.mxu0 %v4190
    %6016 = vmatpush1.bf16.msra.mxu0 %v4189
    %6017 = vmatprep.subr.bf16.mxu0 %v4194
    %6018 = vmatpush1.bf16.msra.mxu0 %v4193
    %6019 = vmatprep.subr.bf16.mxu0 %v4198
    %6020 = vmatpush1.bf16.msra.mxu0 %v4197
    %6021 = vmatprep.subr.bf16.mxu0 %v4202
    %6022 = vmatpush1.bf16.msra.mxu0 %v4201
    %6023 = vmatprep.mubr.bf16.mxu0 %v1044
    %6024 = vmatmul.mubr.bf16.gmra.mrb[0].mxu0 %v1042
    %v6025 = vpop.f32.mrb[0].mxu0
    %v6026 = vadd.f32 %v5985, %v6025
    %v6027 = vpop.f32.mrb[0].mxu0
    %v6028 = vadd.f32 %v5987, %v6027
    %v6029 = vpop.f32.mrb[0].mxu0
    %v6030 = vpop.f32.mrb[0].mxu0
    %6031 = vdwg.mxu0
    %6032 = vmatprep.subr.bf16.mxu0 %v4206
    %6033 = vmatpush1.bf16.msra.mxu0 %v4205
    %6034 = vmatprep.subr.bf16.mxu0 %v4210
    %6035 = vmatpush1.bf16.msra.mxu0 %v4209
    %6036 = vmatprep.subr.bf16.mxu0 %v4214
    %6037 = vmatpush1.bf16.msra.mxu0 %v4213
    %6038 = vmatprep.subr.bf16.mxu0 %v4218
    %6039 = vmatpush1.bf16.msra.mxu0 %v4217
    %6040 = vmatprep.subr.bf16.mxu0 0
    %6041 = vmatpush1.bf16.msra.mxu0 0
    %6042 = vmatprep.subr.bf16.mxu0 0
    %6043 = vmatpush1.bf16.msra.mxu0 0
    %6044 = vmatprep.subr.bf16.mxu0 0
    %6045 = vmatpush1.bf16.msra.mxu0 0
    %6046 = vmatprep.subr.bf16.mxu0 0
    %6047 = vmatpush1.bf16.msra.mxu0 0
    %6048 = vmatprep.subr.bf16.mxu0 0
    %6049 = vmatpush1.bf16.msra.mxu0 0
    %6050 = vmatprep.subr.bf16.mxu0 0
    %6051 = vmatpush1.bf16.msra.mxu0 0
    %6052 = vmatprep.subr.bf16.mxu0 0
    %6053 = vmatpush1.bf16.msra.mxu0 0
    %6054 = vmatprep.subr.bf16.mxu0 0
    %6055 = vmatpush1.bf16.msra.mxu0 0
    %6056 = vmatprep.subr.bf16.mxu0 0
    %6057 = vmatpush1.bf16.msra.mxu0 0
    %6058 = vmatprep.subr.bf16.mxu0 0
    %6059 = vmatpush1.bf16.msra.mxu0 0
    %6060 = vmatprep.subr.bf16.mxu0 0
    %6061 = vmatpush1.bf16.msra.mxu0 0
    %6062 = vmatprep.subr.bf16.mxu0 0
    %6063 = vmatpush1.bf16.msra.mxu0 0
    %6064 = vmatprep.mubr.bf16.mxu0 0
    %6065 = vmatmul.mubr.bf16.gmra.mrb[0].mxu0 %v5005
    %v6066 = vpop.f32.mrb[0].mxu0
    %v6067 = vadd.f32 %v6026, %v6066
    %v6068 = vpop.f32.mrb[0].mxu0
    %v6069 = vadd.f32 %v6028, %v6068
    %v6070 = vpop.f32.mrb[0].mxu0
    %v6071 = vpop.f32.mrb[0].mxu0
    %6072 = vdwg.mxu0
    %v6073 = vmax.f32 %v5534, 0.0
    %v6074 = vmax.f32 %v5536, 0.0
    %v6075 = vmax.f32 %v6067, 0.0
    %v6076 = vmax.f32 %v6069, 0.0
    %v6077 = vpack.c.bf16 %v6073, %v6073
    %v6078 = vpack.c.bf16 %v6074, %v6074
    %v6079 = vpack.c.bf16 %v6075, %v6075
    %v6080 = vpack.c.bf16 %v6076, %v6076
    %v6081 = vld [vmem:[#allocation8] sm:$0xf]
    %v6082 = vld [vmem:[#allocation8 + $0x4] sm:$0xf]
    %v6083 = vld [vmem:[#allocation8 + $0x8] sm:$0xf]
    %v6084 = vld [vmem:[#allocation8 + $0xc] sm:$0xf]
    %v6085 = vld [vmem:[#allocation8 + $0x10] sm:$0xf]
    %v6086 = vld [vmem:[#allocation8 + $0x14] sm:$0xf]
    %v6087 = vld [vmem:[#allocation8 + $0x18] sm:$0xf]
    %v6088 = vld [vmem:[#allocation8 + $0x1c] sm:$0xf]
    %v6089 = vld [vmem:[#allocation8 + $0x20] sm:$0xf]
    %v6090 = vld [vmem:[#allocation8 + $0x24] sm:$0xf]
    %v6091 = vld [vmem:[#allocation8 + $0x28] sm:$0xf]
    %v6092 = vld [vmem:[#allocation8 + $0x2c] sm:$0xf]
    %v6093 = vld [vmem:[#allocation8 + $0x30] sm:$0xf]
    %v6094 = vld [vmem:[#allocation8 + $0x34] sm:$0xf]
    %v6095 = vld [vmem:[#allocation8 + $0x38] sm:$0xf]
    %v6096 = vld [vmem:[#allocation8 + $0x3c] sm:$0xf]
    %v6097 = vld [vmem:[#allocation8 + $0x40] sm:$0xf]
    %v6098 = vld [vmem:[#allocation8 + $0x44] sm:$0xf]
    %v6099 = vld [vmem:[#allocation8 + $0x48] sm:$0xf]
    %v6100 = vld [vmem:[#allocation8 + $0x4c] sm:$0xf]
    %v6101 = vld [vmem:[#allocation8 + $0x50] sm:$0xf]
    %v6102 = vld [vmem:[#allocation8 + $0x54] sm:$0xf]
    %v6103 = vld [vmem:[#allocation8 + $0x58] sm:$0xf]
    %v6104 = vld [vmem:[#allocation8 + $0x5c] sm:$0xf]
    %v6105 = vld [vmem:[#allocation8 + $0x60] sm:$0xf]
    %v6106 = vld [vmem:[#allocation8 + $0x64] sm:$0xf]
    %v6107 = vld [vmem:[#allocation8 + $0x68] sm:$0xf]
    %v6108 = vld [vmem:[#allocation8 + $0x6c] sm:$0xf]
    %v6109 = vld [vmem:[#allocation8 + $0x70] sm:$0xf]
    %v6110 = vld [vmem:[#allocation8 + $0x74] sm:$0xf]
    %v6111 = vld [vmem:[#allocation8 + $0x78] sm:$0xf]
    %v6112 = vld [vmem:[#allocation8 + $0x7c] sm:$0xf]
    %v6113 = vld [vmem:[#allocation8 + $0x80] sm:$0xf]
    %v6114 = vld [vmem:[#allocation8 + $0x84] sm:$0xf]
    %v6115 = vld [vmem:[#allocation8 + $0x88] sm:$0xf]
    %v6116 = vld [vmem:[#allocation8 + $0x8c] sm:$0xf]
    %v6117 = vld [vmem:[#allocation8 + $0x90] sm:$0xf]
    %v6118 = vld [vmem:[#allocation8 + $0x94] sm:$0xf]
    %v6119 = vld [vmem:[#allocation8 + $0x98] sm:$0xf]
    %v6120 = vld [vmem:[#allocation8 + $0x9c] sm:$0xf]
    %v6121 = vld [vmem:[#allocation8 + $0xa0] sm:$0xf]
    %v6122 = vld [vmem:[#allocation8 + $0xa4] sm:$0xf]
    %v6123 = vld [vmem:[#allocation8 + $0xa8] sm:$0xf]
    %v6124 = vld [vmem:[#allocation8 + $0xac] sm:$0xf]
    %v6125 = vld [vmem:[#allocation8 + $0xb0] sm:$0xf]
    %v6126 = vld [vmem:[#allocation8 + $0xb4] sm:$0xf]
    %v6127 = vld [vmem:[#allocation8 + $0xb8] sm:$0xf]
    %v6128 = vld [vmem:[#allocation8 + $0xbc] sm:$0xf]
    %v6129 = vld [vmem:[#allocation8 + $0xc0] sm:$0xf]
    %v6130 = vld [vmem:[#allocation8 + $0xc4] sm:$0xf]
    %v6131 = vld [vmem:[#allocation8 + $0xc8] sm:$0xf]
    %v6132 = vld [vmem:[#allocation8 + $0xcc] sm:$0xf]
    %v6133 = vld [vmem:[#allocation8 + $0xd0] sm:$0xf]
    %v6134 = vld [vmem:[#allocation8 + $0xd4] sm:$0xf]
    %v6135 = vld [vmem:[#allocation8 + $0xd8] sm:$0xf]
    %v6136 = vld [vmem:[#allocation8 + $0xdc] sm:$0xf]
    %v6137 = vld [vmem:[#allocation8 + $0xe0] sm:$0xf]
    %v6138 = vld [vmem:[#allocation8 + $0xe4] sm:$0xf]
    %v6139 = vld [vmem:[#allocation8 + $0xe8] sm:$0xf]
    %v6140 = vld [vmem:[#allocation8 + $0xec] sm:$0xf]
    %v6141 = vld [vmem:[#allocation8 + $0xf0] sm:$0xf]
    %v6142 = vld [vmem:[#allocation8 + $0xf4] sm:$0xf]
    %v6143 = vld [vmem:[#allocation8 + $0xf8] sm:$0xf]
    %v6144 = vld [vmem:[#allocation8 + $0xfc] sm:$0xf]
    %v6145 = vld [vmem:[#allocation10] sm:$0x1]
    %v6147 = vlaneseq
    %v6148 = vshrl.u32 %v6147, 7
    %v6149 = vsub.s32 0, %v6148
    %v6150 = vrot.slane %v6145, %v6149
    %v6216 = vunpack.c.l.b16 %v6081
    %v6217 = vunpack.c.l.b16 %v6082
    %v6218 = vunpack.c.l.b16 %v6083
    %v6219 = vunpack.c.l.b16 %v6084
    %v6220 = vunpack.c.l.b16 %v6085
    %v6221 = vunpack.c.l.b16 %v6086
    %v6222 = vunpack.c.l.b16 %v6087
    %v6223 = vunpack.c.l.b16 %v6088
    %v6224 = vunpack.c.l.b16 %v6089
    %v6225 = vunpack.c.l.b16 %v6090
    %v6226 = vunpack.c.l.b16 %v6091
    %v6227 = vunpack.c.l.b16 %v6092
    %v6228 = vunpack.c.l.b16 %v6093
    %v6229 = vunpack.c.l.b16 %v6094
    %v6230 = vunpack.c.l.b16 %v6095
    %v6231 = vunpack.c.l.b16 %v6096
    %v6232 = vunpack.c.l.b16 %v6097
    %v6233 = vunpack.c.l.b16 %v6098
    %v6234 = vunpack.c.l.b16 %v6099
    %v6235 = vunpack.c.l.b16 %v6100
    %v6236 = vunpack.c.l.b16 %v6101
    %v6237 = vunpack.c.l.b16 %v6102
    %v6238 = vunpack.c.l.b16 %v6103
    %v6239 = vunpack.c.l.b16 %v6104
    %v6240 = vunpack.c.l.b16 %v6105
    %v6241 = vunpack.c.l.b16 %v6106
    %v6242 = vunpack.c.l.b16 %v6107
    %v6243 = vunpack.c.l.b16 %v6108
    %v6244 = vunpack.c.l.b16 %v6109
    %v6245 = vunpack.c.l.b16 %v6110
    %v6246 = vunpack.c.l.b16 %v6111
    %v6247 = vunpack.c.l.b16 %v6112
    %v6248 = vunpack.c.l.b16 %v6113
    %v6249 = vunpack.c.l.b16 %v6114
    %v6250 = vunpack.c.l.b16 %v6115
    %v6251 = vunpack.c.l.b16 %v6116
    %v6252 = vunpack.c.l.b16 %v6117
    %v6253 = vunpack.c.l.b16 %v6118
    %v6254 = vunpack.c.l.b16 %v6119
    %v6255 = vunpack.c.l.b16 %v6120
    %v6256 = vunpack.c.l.b16 %v6121
    %v6257 = vunpack.c.l.b16 %v6122
    %v6258 = vunpack.c.l.b16 %v6123
    %v6259 = vunpack.c.l.b16 %v6124
    %v6260 = vunpack.c.l.b16 %v6125
    %v6261 = vunpack.c.l.b16 %v6126
    %v6262 = vunpack.c.l.b16 %v6127
    %v6263 = vunpack.c.l.b16 %v6128
    %v6264 = vunpack.c.l.b16 %v6129
    %v6265 = vunpack.c.l.b16 %v6130
    %v6266 = vunpack.c.l.b16 %v6131
    %v6267 = vunpack.c.l.b16 %v6132
    %v6268 = vunpack.c.l.b16 %v6133
    %v6269 = vunpack.c.l.b16 %v6134
    %v6270 = vunpack.c.l.b16 %v6135
    %v6271 = vunpack.c.l.b16 %v6136
    %v6272 = vunpack.c.l.b16 %v6137
    %v6273 = vunpack.c.l.b16 %v6138
    %v6274 = vunpack.c.l.b16 %v6139
    %v6275 = vunpack.c.l.b16 %v6140
    %v6276 = vunpack.c.l.b16 %v6141
    %v6277 = vunpack.c.l.b16 %v6142
    %v6278 = vunpack.c.l.b16 %v6143
    %v6279 = vunpack.c.l.b16 %v6144
    %v6280 = vpack.c.b16 %v6217, %v6216
    %v6281 = vpack.c.b16 %v6219, %v6218
    %v6282 = vpack.c.b16 %v6221, %v6220
    %v6283 = vpack.c.b16 %v6223, %v6222
    %v6284 = vpack.c.b16 %v6225, %v6224
    %v6285 = vpack.c.b16 %v6227, %v6226
    %v6286 = vpack.c.b16 %v6229, %v6228
    %v6287 = vpack.c.b16 %v6231, %v6230
    %v6288 = vpack.c.b16 %v6233, %v6232
    %v6289 = vpack.c.b16 %v6235, %v6234
    %v6290 = vpack.c.b16 %v6237, %v6236
    %v6291 = vpack.c.b16 %v6239, %v6238
    %v6292 = vpack.c.b16 %v6241, %v6240
    %v6293 = vpack.c.b16 %v6243, %v6242
    %v6294 = vpack.c.b16 %v6245, %v6244
    %v6295 = vpack.c.b16 %v6247, %v6246
    %v6296 = vpack.c.b16 %v6249, %v6248
    %v6297 = vpack.c.b16 %v6251, %v6250
    %v6298 = vpack.c.b16 %v6253, %v6252
    %v6299 = vpack.c.b16 %v6255, %v6254
    %v6300 = vpack.c.b16 %v6257, %v6256
    %v6301 = vpack.c.b16 %v6259, %v6258
    %v6302 = vpack.c.b16 %v6261, %v6260
    %v6303 = vpack.c.b16 %v6263, %v6262
    %v6304 = vpack.c.b16 %v6265, %v6264
    %v6305 = vpack.c.b16 %v6267, %v6266
    %v6306 = vpack.c.b16 %v6269, %v6268
    %v6307 = vpack.c.b16 %v6271, %v6270
    %v6308 = vpack.c.b16 %v6273, %v6272
    %v6309 = vpack.c.b16 %v6275, %v6274
    %v6310 = vpack.c.b16 %v6277, %v6276
    %v6311 = vpack.c.b16 %v6279, %v6278
    %6344 = vmatprep.subr.bf16.mxu0 0
    %6345 = vmatpush1.bf16.msra.mxu0 %v6280
    %6346 = vmatprep.subr.bf16.mxu0 0
    %6347 = vmatpush1.bf16.msra.mxu0 %v6281
    %6348 = vmatprep.subr.bf16.mxu0 0
    %6349 = vmatpush1.bf16.msra.mxu0 %v6282
    %6350 = vmatprep.subr.bf16.mxu0 0
    %6351 = vmatpush1.bf16.msra.mxu0 %v6283
    %6352 = vmatprep.subr.bf16.mxu0 0
    %6353 = vmatpush1.bf16.msra.mxu0 %v6284
    %6354 = vmatprep.subr.bf16.mxu0 0
    %6355 = vmatpush1.bf16.msra.mxu0 %v6285
    %6356 = vmatprep.subr.bf16.mxu0 0
    %6357 = vmatpush1.bf16.msra.mxu0 %v6286
    %6358 = vmatprep.subr.bf16.mxu0 0
    %6359 = vmatpush1.bf16.msra.mxu0 %v6287
    %6360 = vmatprep.subr.bf16.mxu0 0
    %6361 = vmatpush1.bf16.msra.mxu0 %v6288
    %6362 = vmatprep.subr.bf16.mxu0 0
    %6363 = vmatpush1.bf16.msra.mxu0 %v6289
    %6364 = vmatprep.subr.bf16.mxu0 0
    %6365 = vmatpush1.bf16.msra.mxu0 %v6290
    %6366 = vmatprep.subr.bf16.mxu0 0
    %6367 = vmatpush1.bf16.msra.mxu0 %v6291
    %6368 = vmatprep.subr.bf16.mxu0 0
    %6369 = vmatpush1.bf16.msra.mxu0 %v6292
    %6370 = vmatprep.subr.bf16.mxu0 0
    %6371 = vmatpush1.bf16.msra.mxu0 %v6293
    %6372 = vmatprep.subr.bf16.mxu0 0
    %6373 = vmatpush1.bf16.msra.mxu0 %v6294
    %6374 = vmatprep.subr.bf16.mxu0 0
    %6375 = vmatpush1.bf16.msra.mxu0 %v6295
    %6376 = vmatprep.mubr.bf16.mxu0 %v6078
    %6377 = vmatmul.mubr.bf16.gmra.mrb[0].mxu0 %v6077
    %v6378 = vpop.f32.mrb[0].mxu0
    %v6379 = vadd.f32 %v6150, %v6378
    %v6380 = vpop.f32.mrb[0].mxu0
    %v6381 = vpop.f32.mrb[0].mxu0
    %v6382 = vpop.f32.mrb[0].mxu0
    %6383 = vdwg.mxu0
    %6384 = vmatprep.subr.bf16.mxu0 0
    %6385 = vmatpush1.bf16.msra.mxu0 %v6296
    %6386 = vmatprep.subr.bf16.mxu0 0
    %6387 = vmatpush1.bf16.msra.mxu0 %v6297
    %6388 = vmatprep.subr.bf16.mxu0 0
    %6389 = vmatpush1.bf16.msra.mxu0 %v6298
    %6390 = vmatprep.subr.bf16.mxu0 0
    %6391 = vmatpush1.bf16.msra.mxu0 %v6299
    %6392 = vmatprep.subr.bf16.mxu0 0
    %6393 = vmatpush1.bf16.msra.mxu0 %v6300
    %6394 = vmatprep.subr.bf16.mxu0 0
    %6395 = vmatpush1.bf16.msra.mxu0 %v6301
    %6396 = vmatprep.subr.bf16.mxu0 0
    %6397 = vmatpush1.bf16.msra.mxu0 %v6302
    %6398 = vmatprep.subr.bf16.mxu0 0
    %6399 = vmatpush1.bf16.msra.mxu0 %v6303
    %6400 = vmatprep.subr.bf16.mxu0 0
    %6401 = vmatpush1.bf16.msra.mxu0 %v6304
    %6402 = vmatprep.subr.bf16.mxu0 0
    %6403 = vmatpush1.bf16.msra.mxu0 %v6305
    %6404 = vmatprep.subr.bf16.mxu0 0
    %6405 = vmatpush1.bf16.msra.mxu0 %v6306
    %6406 = vmatprep.subr.bf16.mxu0 0
    %6407 = vmatpush1.bf16.msra.mxu0 %v6307
    %6408 = vmatprep.subr.bf16.mxu0 0
    %6409 = vmatpush1.bf16.msra.mxu0 %v6308
    %6410 = vmatprep.subr.bf16.mxu0 0
    %6411 = vmatpush1.bf16.msra.mxu0 %v6309
    %6412 = vmatprep.subr.bf16.mxu0 0
    %6413 = vmatpush1.bf16.msra.mxu0 %v6310
    %6414 = vmatprep.subr.bf16.mxu0 0
    %6415 = vmatpush1.bf16.msra.mxu0 %v6311
    %6416 = vmatprep.mubr.bf16.mxu0 %v6080
    %6417 = vmatmul.mubr.bf16.gmra.mrb[0].mxu0 %v6079
    %v6418 = vpop.f32.mrb[0].mxu0
    %v6419 = vadd.f32 %v6379, %v6418
    %v6420 = vpop.f32.mrb[0].mxu0
    %v6421 = vpop.f32.mrb[0].mxu0
    %v6422 = vpop.f32.mrb[0].mxu0
    %6423 = vdwg.mxu0
    %6424 = vst [vmem:[#allocation11] sm:$0x3] %v6419
    // Predicated region
    $region42: #{simple_cnn_forward.7} parent=1 // pred_check
      _
    $region43: #{simple_cnn_forward.7} parent=1 // pred_check_branch
      %6426 = sbr.rel (0) target = $region45
    $region44: #{simple_cnn_forward.7} parent=1 // pred_region
      %s6428 = ssub.s32 32, 32
      %6429 = vsyncadd [#allocation4], %s6428
      %s6431 = sshll.u32 [#allocation11], 4
      %s6432 = int_to_ptr.vmem [resolvable:$true] %s6431
      %6434 = dma.vmem_to_hbm [thread:$0]  %s6432, 32, %s5, [#allocation4]
    $region45: #{simple_cnn_forward.7} parent=1 // pred_fallthru
      _
    // Predicated region
    $region46: #{simple_cnn_forward.7} parent=1 // pred_check
      _
    $region47: #{simple_cnn_forward.7} parent=1 // pred_check_branch
      %6436 = sbr.rel (0) target = $region49
    $region48: #{simple_cnn_forward.7} parent=1 // pred_region
      %6437 = dma.done [#allocation4], 32
    $region49: #{simple_cnn_forward.7} parent=1 // pred_fallthru
      _
    %6438 = vsyncpa [#allocation3], 1
    %6439 = vsyncpa [#allocation6], 1
    %6440 = vsyncpa [#allocation9], 1
    %6441 = vsyncpa [#allocation4], 1

</llo_original>
